<compile_context>
chip_gen: v6e
topology: v6e:2x2x1
jax: 0.10.0
libtpu: 0.0.40
codegen_flags: <defaults>
</compile_context>

<pallas_src>
import jax
import jax.numpy as jnp
from jax.experimental import pallas as pl
from jax.experimental.pallas import tpu as pltpu

B, T, S = 4, 8, 16      # batch, target seq len, source seq len
E = 128                 # embed_dim == encoder_embed_dim == out_embed_dim (no additional_fc)
V = 256                 # len(dictionary)
PAD = 1                 # dictionary.pad()


# ----------------------------------------------------------------------------
# Fused kernel: LSTM(1 layer) + attention recurrence + fc_out projection.
# Everything lives in VMEM (~1.2 MiB total); single invocation, no grid.
# ----------------------------------------------------------------------------
def decoder_fused_kernel(x_ref, enc_ref, h0_ref, c0_ref,
                         wihx_ref, wihf_ref, whh_ref, b_ref,
                         win_ref, woutc_ref, wouth_ref,
                         wfc_ref, bfc_ref,
                         logits_ref, attn_ref):
    Bq, Eq = h0_ref.shape
    Tq = x_ref.shape[0] // Bq
    Vq = wfc_ref.shape[1]

    # --- loop-invariant loads (hoisted; JAX does not CSE broadcasts) ---------
    enc = enc_ref[...]                         # (B, S, E)
    wihf = wihf_ref[...]                       # (E, 4E)
    whh = whh_ref[...]                         # (E, 4E)
    win = win_ref[...]                         # (E, E)
    woutc = woutc_ref[...]                     # (E, E)
    wouth = wouth_ref[...]                     # (E, E)
    wfc = wfc_ref[...]                         # (E, V)
    bfc = jnp.broadcast_to(bfc_ref[...], (Bq, Vq))

    # --- hoisted input projection: one (T*B,E)x(E,4E) matmul + fused bias ----
    pre_gates = (jnp.dot(x_ref[...], wihx_ref[...],
                         preferred_element_type=jnp.float32)
                 + b_ref[...])                 # (T*B, 4E), rows ordered t*B + b

    h = h0_ref[...]
    c = c0_ref[...]
    feed = jnp.zeros((Bq, Eq), jnp.float32)    # input feeding

    # Fully unrolled recurrence (T is small & static) -------------------------
    for j in range(Tq):
        xg = pre_gates[j * Bq:(j + 1) * Bq, :]                     # (B, 4E)

        # LSTMCell (gate order i, f, g, o); biases already folded into xg.
        gates = (xg
                 + jnp.dot(feed, wihf, preferred_element_type=jnp.float32)
                 + jnp.dot(h, whh, preferred_element_type=jnp.float32))
        i_g = jax.nn.sigmoid(gates[:, 0 * Eq:1 * Eq])
        f_g = jax.nn.sigmoid(gates[:, 1 * Eq:2 * Eq])
        g_g = jnp.tanh(gates[:, 2 * Eq:3 * Eq])
        o_g = jax.nn.sigmoid(gates[:, 3 * Eq:4 * Eq])
        c = f_g * c + i_g * g_g
        h = o_g * jnp.tanh(c)

        # AttentionLayer in (B, S) lane-dense layout.
        xp = jnp.dot(h, win, preferred_element_type=jnp.float32)   # (B, E)
        scores = jnp.sum(enc * xp[:, None, :], axis=2)             # (B, S)  lane reduce

        # Stable softmax over srclen; divide via EUP approx reciprocal.
        m = jnp.max(scores, axis=-1, keepdims=True)                # (B, 1)
        e = jnp.exp(scores - m)                                    # (B, S)
        denom = jnp.sum(e, axis=-1, keepdims=True)                 # (B, 1)
        scores = e * pl.reciprocal(denom, approx=True)             # (B, S)

        ctx = jnp.sum(scores[:, :, None] * enc, axis=1)            # (B, E)  sublane reduce
        out = jnp.tanh(jnp.dot(ctx, woutc, preferred_element_type=jnp.float32)
                       + jnp.dot(h, wouth, preferred_element_type=jnp.float32))
        feed = out                                                  # input feeding

        # Write final layouts directly (no wrapper transposes).
        attn_ref[:, j, :] = scores                                  # (B, T, S)
        logits_ref[:, j, :] = (jnp.dot(out, wfc,
                                       preferred_element_type=jnp.float32)
                               + bfc)                               # (B, T, V)


# ----------------------------------------------------------------------------
# Parameters (deterministic, uniform(-0.1, 0.1) like the torch init helpers).
# ----------------------------------------------------------------------------
def init_params(key):
    ks = jax.random.split(key, 9)
    u = lambda k, shape: jax.random.uniform(k, shape, jnp.float32, -0.1, 0.1)
    embed_w = u(ks[0], (V, E)).at[PAD].set(0.0)     # Embedding w/ padding_idx zeroed
    return dict(
        embed_w=embed_w,
        w_ih=u(ks[1], (4 * E, 2 * E)),              # LSTMCell layer 0 (input = E + E)
        w_hh=u(ks[2], (4 * E, E)),
        b_ih=u(ks[3], (4 * E,)),
        b_hh=u(ks[4], (4 * E,)),
        w_in=u(ks[5], (E, E)),                      # attention input_proj (no bias)
        w_out=u(ks[6], (E, 2 * E)),                 # attention output_proj (no bias)
        w_fc=u(ks[7], (V, E)),                      # fc_out
        b_fc=u(ks[8], (V,)),
    )


# ----------------------------------------------------------------------------
# Wrapper (glue: embedding gather, one-time transposes, weight splits).
# ----------------------------------------------------------------------------
def lstm_decoder_forward(prev_output_tokens, encoder_out, p):
    enc_outs, enc_h, enc_c = encoder_out
    bsz, seqlen = prev_output_tokens.shape
    srclen = enc_outs.shape[0]

    # embed_tokens + dropout_in(eval=identity); rows ordered t*B + b.
    x = jnp.take(p['embed_w'], prev_output_tokens, axis=0)          # (B, T, E)
    x_flat = jnp.transpose(x, (1, 0, 2)).reshape(seqlen * bsz, E)
    x_flat = x_flat.astype(jnp.float32)

    enc_bse = jnp.transpose(enc_outs, (1, 0, 2)).astype(jnp.float32)  # (B, S, E)
    h0, c0 = enc_h[0], enc_c[0]

    # Split weights so no lane-dim concatenation is needed in-kernel.
    wihx_t = p['w_ih'][:, :E].T                                     # (E, 4E)  x part
    wihf_t = p['w_ih'][:, E:].T                                     # (E, 4E)  feed part
    whh_t = p['w_hh'].T                                             # (E, 4E)
    b = (p['b_ih'] + p['b_hh']).reshape(1, 4 * E)
    win_t = p['w_in'].T                                             # (E, E)
    woutc_t = p['w_out'][:, :E].T                                   # (E, E)  ctx part
    wouth_t = p['w_out'][:, E:].T                                   # (E, E)  hidden part
    wfc_t = p['w_fc'].T                                             # (E, V)
    bfc = p['b_fc'].reshape(1, V)

    vmem = pl.BlockSpec(memory_space=pltpu.MemorySpace.VMEM)
    logits, attn_scores = pl.pallas_call(
        decoder_fused_kernel,
        out_shape=(jax.ShapeDtypeStruct((bsz, seqlen, V), jnp.float32),
                   jax.ShapeDtypeStruct((bsz, seqlen, srclen), jnp.float32)),
        in_specs=[vmem] * 13,
        out_specs=(vmem, vmem),
        compiler_params=pltpu.CompilerParams(vmem_limit_bytes=32 * 1024 * 1024),
    )(x_flat, enc_bse, h0, c0, wihx_t, wihf_t, whh_t, b,
      win_t, woutc_t, wouth_t, wfc_t, bfc)

    return logits, attn_scores                                      # (B,T,V), (B,T,S)


# ----------------------------------------------------------------------------
# Pure-JAX reference (mirrors the PyTorch math) for correctness checking.
# ----------------------------------------------------------------------------
def reference_forward(tokens, encoder_out, p):
    enc_outs, enc_h, enc_c = encoder_out
    bsz, seqlen = tokens.shape
    x = jnp.transpose(jnp.take(p['embed_w'], tokens, axis=0), (1, 0, 2))
    h, c = enc_h[0], enc_c[0]
    feed = jnp.zeros((bsz, E), jnp.float32)
    outs, attns = [], []
    for j in range(seqlen):
        inp = jnp.concatenate([x[j], feed], axis=1)
        gates = inp @ p['w_ih'].T + p['b_ih'] + h @ p['w_hh'].T + p['b_hh']
        i = jax.nn.sigmoid(gates[:, :E])
        f = jax.nn.sigmoid(gates[:, E:2 * E])
        g = jnp.tanh(gates[:, 2 * E:3 * E])
        o = jax.nn.sigmoid(gates[:, 3 * E:])
        c = f * c + i * g
        h = o * jnp.tanh(c)
        xp = h @ p['w_in'].T
        sc = jax.nn.softmax(jnp.sum(enc_outs * xp[None], axis=2), axis=0)  # (S, B)
        ctx = jnp.sum(sc[:, :, None] * enc_outs, axis=0)
        out = jnp.tanh(jnp.concatenate([ctx, h], axis=1) @ p['w_out'].T)
        feed = out
        outs.append(out)
        attns.append(sc)
    feats = jnp.stack(outs, axis=0)                               # (T, B, E)
    logits = jnp.transpose(feats, (1, 0, 2)) @ p['w_fc'].T + p['b_fc']
    attn = jnp.transpose(jnp.stack(attns, axis=0), (2, 0, 1))     # (B, T, S)
    return logits, attn


if __name__ == "__main__":
    key = jax.random.PRNGKey(0)
    kp, kt, ke, kh, kc = jax.random.split(key, 5)
    params = init_params(kp)

    tokens = jax.random.randint(kt, (B, T), 0, V, dtype=jnp.int32)
    enc_outs = 0.1 * jax.random.normal(ke, (S, B, E), jnp.float32)
    enc_h = 0.1 * jax.random.normal(kh, (1, B, E), jnp.float32)
    enc_c = 0.1 * jax.random.normal(kc, (1, B, E), jnp.float32)
    encoder_out = (enc_outs, enc_h, enc_c)

    logits, attn = jax.jit(lstm_decoder_forward)(tokens, encoder_out, params)
    jax.block_until_ready((logits, attn))

    ref_logits, ref_attn = reference_forward(tokens, encoder_out, params)
    assert logits.shape == (B, T, V) and attn.shape == (B, T, S)
    assert bool(jnp.all(jnp.isfinite(logits))) and bool(jnp.all(jnp.isfinite(attn)))
    assert bool(jnp.allclose(logits, ref_logits, atol=5e-2, rtol=5e-2))
    assert bool(jnp.allclose(attn, ref_attn, atol=5e-2, rtol=5e-2))
    print("KERNEL_OK")
</pallas_src>

<mosaic_0001>
module attributes {stable_mosaic.version = 11 : i64} {
  func.func @decoder_fused_kernel(%arg0: memref<32x128xf32, #tpu.memory_space<vmem>>, %arg1: memref<4x16x128xf32, #tpu.memory_space<vmem>>, %arg2: memref<4x128xf32, #tpu.memory_space<vmem>>, %arg3: memref<4x128xf32, #tpu.memory_space<vmem>>, %arg4: memref<128x512xf32, #tpu.memory_space<vmem>>, %arg5: memref<128x512xf32, #tpu.memory_space<vmem>>, %arg6: memref<128x512xf32, #tpu.memory_space<vmem>>, %arg7: memref<1x512xf32, #tpu.memory_space<vmem>>, %arg8: memref<128x128xf32, #tpu.memory_space<vmem>>, %arg9: memref<128x128xf32, #tpu.memory_space<vmem>>, %arg10: memref<128x128xf32, #tpu.memory_space<vmem>>, %arg11: memref<128x256xf32, #tpu.memory_space<vmem>>, %arg12: memref<1x256xf32, #tpu.memory_space<vmem>>, %arg13: memref<4x8x256xf32, #tpu.memory_space<vmem>>, %arg14: memref<4x8x16xf32, #tpu.memory_space<vmem>>) attributes {dimension_semantics = [], scalar_prefetch = 0 : i64, scratch_operands = 0 : i64, tpu.core_type = #tpu.core_type<tc>} {
    %c0 = arith.constant 0 : index
    %c0_0 = arith.constant 0 : index
    %c0_1 = arith.constant 0 : index
    %0 = vector.load %arg1[%c0, %c0_0, %c0_1] : memref<4x16x128xf32, #tpu.memory_space<vmem>>, vector<4x16x128xf32>
    %c0_2 = arith.constant 0 : index
    %c0_3 = arith.constant 0 : index
    %1 = vector.load %arg5[%c0_2, %c0_3] : memref<128x512xf32, #tpu.memory_space<vmem>>, vector<128x512xf32>
    %c0_4 = arith.constant 0 : index
    %c0_5 = arith.constant 0 : index
    %2 = vector.load %arg6[%c0_4, %c0_5] : memref<128x512xf32, #tpu.memory_space<vmem>>, vector<128x512xf32>
    %c0_6 = arith.constant 0 : index
    %c0_7 = arith.constant 0 : index
    %3 = vector.load %arg8[%c0_6, %c0_7] : memref<128x128xf32, #tpu.memory_space<vmem>>, vector<128x128xf32>
    %c0_8 = arith.constant 0 : index
    %c0_9 = arith.constant 0 : index
    %4 = vector.load %arg9[%c0_8, %c0_9] : memref<128x128xf32, #tpu.memory_space<vmem>>, vector<128x128xf32>
    %c0_10 = arith.constant 0 : index
    %c0_11 = arith.constant 0 : index
    %5 = vector.load %arg10[%c0_10, %c0_11] : memref<128x128xf32, #tpu.memory_space<vmem>>, vector<128x128xf32>
    %c0_12 = arith.constant 0 : index
    %c0_13 = arith.constant 0 : index
    %6 = vector.load %arg11[%c0_12, %c0_13] : memref<128x256xf32, #tpu.memory_space<vmem>>, vector<128x256xf32>
    %c0_14 = arith.constant 0 : index
    %c0_15 = arith.constant 0 : index
    %7 = vector.load %arg12[%c0_14, %c0_15] : memref<1x256xf32, #tpu.memory_space<vmem>>, vector<1x256xf32>
    %8 = vector.shape_cast %7 : vector<1x256xf32> to vector<1x256xf32>
    %9 = vector.broadcast %8 : vector<1x256xf32> to vector<4x256xf32>
    %c0_16 = arith.constant 0 : index
    %c0_17 = arith.constant 0 : index
    %10 = vector.load %arg0[%c0_16, %c0_17] : memref<32x128xf32, #tpu.memory_space<vmem>>, vector<32x128xf32>
    %c0_18 = arith.constant 0 : index
    %c0_19 = arith.constant 0 : index
    %11 = vector.load %arg4[%c0_18, %c0_19] : memref<128x512xf32, #tpu.memory_space<vmem>>, vector<128x512xf32>
    %cst = arith.constant dense<0.000000e+00> : vector<32x512xf32>
    %12 = tpu.matmul %10, %11, %cst {dimension_numbers = #tpu.dot_dimension_numbers<[1], [0], [0], [1], [0, 0, 1, 1], [], []>} : vector<32x128xf32>, vector<128x512xf32>, vector<32x512xf32> -> vector<32x512xf32>
    %c0_20 = arith.constant 0 : index
    %c0_21 = arith.constant 0 : index
    %13 = vector.load %arg7[%c0_20, %c0_21] : memref<1x512xf32, #tpu.memory_space<vmem>>, vector<1x512xf32>
    %14 = vector.broadcast %13 : vector<1x512xf32> to vector<32x512xf32>
    %15 = arith.addf %12, %14 : vector<32x512xf32>
    %c0_22 = arith.constant 0 : index
    %c0_23 = arith.constant 0 : index
    %16 = vector.load %arg2[%c0_22, %c0_23] : memref<4x128xf32, #tpu.memory_space<vmem>>, vector<4x128xf32>
    %c0_24 = arith.constant 0 : index
    %c0_25 = arith.constant 0 : index
    %17 = vector.load %arg3[%c0_24, %c0_25] : memref<4x128xf32, #tpu.memory_space<vmem>>, vector<4x128xf32>
    %cst_26 = arith.constant 0.000000e+00 : f32
    %18 = vector.broadcast %cst_26 : f32 to vector<4x128xf32>
    %19 = vector.extract_strided_slice %15 {offsets = [0, 0], sizes = [4, 512], strides = [1, 1]} : vector<32x512xf32> to vector<4x512xf32>
    %cst_27 = arith.constant dense<0.000000e+00> : vector<4x512xf32>
    %20 = tpu.matmul %18, %1, %cst_27 {dimension_numbers = #tpu.dot_dimension_numbers<[1], [0], [0], [1], [0, 0, 1, 1], [], []>} : vector<4x128xf32>, vector<128x512xf32>, vector<4x512xf32> -> vector<4x512xf32>
    %21 = arith.addf %19, %20 : vector<4x512xf32>
    %cst_28 = arith.constant dense<0.000000e+00> : vector<4x512xf32>
    %22 = tpu.matmul %16, %2, %cst_28 {dimension_numbers = #tpu.dot_dimension_numbers<[1], [0], [0], [1], [0, 0, 1, 1], [], []>} : vector<4x128xf32>, vector<128x512xf32>, vector<4x512xf32> -> vector<4x512xf32>
    %23 = arith.addf %21, %22 : vector<4x512xf32>
    %24 = vector.extract_strided_slice %23 {offsets = [0, 0], sizes = [4, 128], strides = [1, 1]} : vector<4x512xf32> to vector<4x128xf32>
    %25 = arith.negf %24 : vector<4x128xf32>
    %26 = math.exp %25 : vector<4x128xf32>
    %cst_29 = arith.constant 1.000000e+00 : f32
    %27 = vector.broadcast %cst_29 : f32 to vector<4x128xf32>
    %28 = arith.addf %27, %26 : vector<4x128xf32>
    %29 = arith.divf %27, %28 : vector<4x128xf32>
    %30 = vector.extract_strided_slice %23 {offsets = [0, 128], sizes = [4, 128], strides = [1, 1]} : vector<4x512xf32> to vector<4x128xf32>
    %31 = arith.negf %30 : vector<4x128xf32>
    %32 = math.exp %31 : vector<4x128xf32>
    %cst_30 = arith.constant 1.000000e+00 : f32
    %33 = vector.broadcast %cst_30 : f32 to vector<4x128xf32>
    %34 = arith.addf %33, %32 : vector<4x128xf32>
    %35 = arith.divf %33, %34 : vector<4x128xf32>
    %36 = vector.extract_strided_slice %23 {offsets = [0, 256], sizes = [4, 128], strides = [1, 1]} : vector<4x512xf32> to vector<4x128xf32>
    %37 = math.tanh %36 : vector<4x128xf32>
    %38 = vector.extract_strided_slice %23 {offsets = [0, 384], sizes = [4, 128], strides = [1, 1]} : vector<4x512xf32> to vector<4x128xf32>
    %39 = arith.negf %38 : vector<4x128xf32>
    %40 = math.exp %39 : vector<4x128xf32>
    %cst_31 = arith.constant 1.000000e+00 : f32
    %41 = vector.broadcast %cst_31 : f32 to vector<4x128xf32>
    %42 = arith.addf %41, %40 : vector<4x128xf32>
    %43 = arith.divf %41, %42 : vector<4x128xf32>
    %44 = arith.mulf %35, %17 : vector<4x128xf32>
    %45 = arith.mulf %29, %37 : vector<4x128xf32>
    %46 = arith.addf %44, %45 : vector<4x128xf32>
    %47 = math.tanh %46 : vector<4x128xf32>
    %48 = arith.mulf %43, %47 : vector<4x128xf32>
    %cst_32 = arith.constant dense<0.000000e+00> : vector<4x128xf32>
    %49 = tpu.matmul %48, %3, %cst_32 {dimension_numbers = #tpu.dot_dimension_numbers<[1], [0], [0], [1], [0, 0, 1, 1], [], []>} : vector<4x128xf32>, vector<128x128xf32>, vector<4x128xf32> -> vector<4x128xf32>
    %50 = vector.shape_cast %49 : vector<4x128xf32> to vector<4x1x128xf32>
    %51 = vector.broadcast %50 : vector<4x1x128xf32> to vector<4x16x128xf32>
    %52 = arith.mulf %0, %51 : vector<4x16x128xf32>
    %cst_33 = arith.constant dense<0.000000e+00> : vector<4x16xf32>
    %53 = vector.multi_reduction <add>, %52, %cst_33 [2] : vector<4x16x128xf32> to vector<4x16xf32>
    %cst_34 = arith.constant dense<0xFF800000> : vector<4xf32>
    %54 = vector.multi_reduction <maximumf>, %53, %cst_34 [1] : vector<4x16xf32> to vector<4xf32>
    %55 = vector.shape_cast %54 : vector<4xf32> to vector<4x1xf32>
    %56 = vector.broadcast %55 : vector<4x1xf32> to vector<4x16xf32>
    %57 = arith.subf %53, %56 : vector<4x16xf32>
    %58 = math.exp %57 : vector<4x16xf32>
    %cst_35 = arith.constant dense<0.000000e+00> : vector<4xf32>
    %59 = vector.multi_reduction <add>, %58, %cst_35 [1] : vector<4x16xf32> to vector<4xf32>
    %60 = vector.shape_cast %59 : vector<4xf32> to vector<4x1xf32>
    %61 = tpu.reciprocal %60 {approx = true} : vector<4x1xf32> -> vector<4x1xf32>
    %62 = vector.broadcast %61 : vector<4x1xf32> to vector<4x16xf32>
    %63 = arith.mulf %58, %62 : vector<4x16xf32>
    %64 = vector.shape_cast %63 : vector<4x16xf32> to vector<4x16x1xf32>
    %65 = vector.broadcast %64 : vector<4x16x1xf32> to vector<4x16x128xf32>
    %66 = arith.mulf %65, %0 : vector<4x16x128xf32>
    %cst_36 = arith.constant dense<0.000000e+00> : vector<4x128xf32>
    %67 = vector.multi_reduction <add>, %66, %cst_36 [1] : vector<4x16x128xf32> to vector<4x128xf32>
    %cst_37 = arith.constant dense<0.000000e+00> : vector<4x128xf32>
    %68 = tpu.matmul %67, %4, %cst_37 {dimension_numbers = #tpu.dot_dimension_numbers<[1], [0], [0], [1], [0, 0, 1, 1], [], []>} : vector<4x128xf32>, vector<128x128xf32>, vector<4x128xf32> -> vector<4x128xf32>
    %cst_38 = arith.constant dense<0.000000e+00> : vector<4x128xf32>
    %69 = tpu.matmul %48, %5, %cst_38 {dimension_numbers = #tpu.dot_dimension_numbers<[1], [0], [0], [1], [0, 0, 1, 1], [], []>} : vector<4x128xf32>, vector<128x128xf32>, vector<4x128xf32> -> vector<4x128xf32>
    %70 = arith.addf %68, %69 : vector<4x128xf32>
    %71 = math.tanh %70 : vector<4x128xf32>
    %c0_39 = arith.constant 0 : index
    %c0_40 = arith.constant 0 : index
    %c0_41 = arith.constant 0 : index
    %72 = vector.load %arg14[%c0_39, %c0_40, %c0_41] : memref<4x8x16xf32, #tpu.memory_space<vmem>>, vector<4x1x16xf32>
    %73 = vector.shape_cast %72 : vector<4x1x16xf32> to vector<4x16xf32>
    %74 = vector.shape_cast %63 : vector<4x16xf32> to vector<4x1x16xf32>
    tpu.vector_store %arg14[%c0_39, %c0_40, %c0_41], %74 {strides = array<i32>} : memref<4x8x16xf32, #tpu.memory_space<vmem>>, vector<4x1x16xf32>,
    %cst_42 = arith.constant dense<0.000000e+00> : vector<4x256xf32>
    %75 = tpu.matmul %71, %6, %cst_42 {dimension_numbers = #tpu.dot_dimension_numbers<[1], [0], [0], [1], [0, 0, 1, 1], [], []>} : vector<4x128xf32>, vector<128x256xf32>, vector<4x256xf32> -> vector<4x256xf32>
    %76 = arith.addf %75, %9 : vector<4x256xf32>
    %c0_43 = arith.constant 0 : index
    %c0_44 = arith.constant 0 : index
    %c0_45 = arith.constant 0 : index
    %77 = vector.load %arg13[%c0_43, %c0_44, %c0_45] : memref<4x8x256xf32, #tpu.memory_space<vmem>>, vector<4x1x256xf32>
    %78 = vector.shape_cast %77 : vector<4x1x256xf32> to vector<4x256xf32>
    %79 = vector.shape_cast %76 : vector<4x256xf32> to vector<4x1x256xf32>
    tpu.vector_store %arg13[%c0_43, %c0_44, %c0_45], %79 {strides = array<i32>} : memref<4x8x256xf32, #tpu.memory_space<vmem>>, vector<4x1x256xf32>,
    %80 = vector.extract_strided_slice %15 {offsets = [4, 0], sizes = [4, 512], strides = [1, 1]} : vector<32x512xf32> to vector<4x512xf32>
    %cst_46 = arith.constant dense<0.000000e+00> : vector<4x512xf32>
    %81 = tpu.matmul %71, %1, %cst_46 {dimension_numbers = #tpu.dot_dimension_numbers<[1], [0], [0], [1], [0, 0, 1, 1], [], []>} : vector<4x128xf32>, vector<128x512xf32>, vector<4x512xf32> -> vector<4x512xf32>
    %82 = arith.addf %80, %81 : vector<4x512xf32>
    %cst_47 = arith.constant dense<0.000000e+00> : vector<4x512xf32>
    %83 = tpu.matmul %48, %2, %cst_47 {dimension_numbers = #tpu.dot_dimension_numbers<[1], [0], [0], [1], [0, 0, 1, 1], [], []>} : vector<4x128xf32>, vector<128x512xf32>, vector<4x512xf32> -> vector<4x512xf32>
    %84 = arith.addf %82, %83 : vector<4x512xf32>
    %85 = vector.extract_strided_slice %84 {offsets = [0, 0], sizes = [4, 128], strides = [1, 1]} : vector<4x512xf32> to vector<4x128xf32>
    %86 = arith.negf %85 : vector<4x128xf32>
    %87 = math.exp %86 : vector<4x128xf32>
    %cst_48 = arith.constant 1.000000e+00 : f32
    %88 = vector.broadcast %cst_48 : f32 to vector<4x128xf32>
    %89 = arith.addf %88, %87 : vector<4x128xf32>
    %90 = arith.divf %88, %89 : vector<4x128xf32>
    %91 = vector.extract_strided_slice %84 {offsets = [0, 128], sizes = [4, 128], strides = [1, 1]} : vector<4x512xf32> to vector<4x128xf32>
    %92 = arith.negf %91 : vector<4x128xf32>
    %93 = math.exp %92 : vector<4x128xf32>
    %cst_49 = arith.constant 1.000000e+00 : f32
    %94 = vector.broadcast %cst_49 : f32 to vector<4x128xf32>
    %95 = arith.addf %94, %93 : vector<4x128xf32>
    %96 = arith.divf %94, %95 : vector<4x128xf32>
    %97 = vector.extract_strided_slice %84 {offsets = [0, 256], sizes = [4, 128], strides = [1, 1]} : vector<4x512xf32> to vector<4x128xf32>
    %98 = math.tanh %97 : vector<4x128xf32>
    %99 = vector.extract_strided_slice %84 {offsets = [0, 384], sizes = [4, 128], strides = [1, 1]} : vector<4x512xf32> to vector<4x128xf32>
    %100 = arith.negf %99 : vector<4x128xf32>
    %101 = math.exp %100 : vector<4x128xf32>
    %cst_50 = arith.constant 1.000000e+00 : f32
    %102 = vector.broadcast %cst_50 : f32 to vector<4x128xf32>
    %103 = arith.addf %102, %101 : vector<4x128xf32>
    %104 = arith.divf %102, %103 : vector<4x128xf32>
    %105 = arith.mulf %96, %46 : vector<4x128xf32>
    %106 = arith.mulf %90, %98 : vector<4x128xf32>
    %107 = arith.addf %105, %106 : vector<4x128xf32>
    %108 = math.tanh %107 : vector<4x128xf32>
    %109 = arith.mulf %104, %108 : vector<4x128xf32>
    %cst_51 = arith.constant dense<0.000000e+00> : vector<4x128xf32>
    %110 = tpu.matmul %109, %3, %cst_51 {dimension_numbers = #tpu.dot_dimension_numbers<[1], [0], [0], [1], [0, 0, 1, 1], [], []>} : vector<4x128xf32>, vector<128x128xf32>, vector<4x128xf32> -> vector<4x128xf32>
    %111 = vector.shape_cast %110 : vector<4x128xf32> to vector<4x1x128xf32>
    %112 = vector.broadcast %111 : vector<4x1x128xf32> to vector<4x16x128xf32>
    %113 = arith.mulf %0, %112 : vector<4x16x128xf32>
    %cst_52 = arith.constant dense<0.000000e+00> : vector<4x16xf32>
    %114 = vector.multi_reduction <add>, %113, %cst_52 [2] : vector<4x16x128xf32> to vector<4x16xf32>
    %cst_53 = arith.constant dense<0xFF800000> : vector<4xf32>
    %115 = vector.multi_reduction <maximumf>, %114, %cst_53 [1] : vector<4x16xf32> to vector<4xf32>
    %116 = vector.shape_cast %115 : vector<4xf32> to vector<4x1xf32>
    %117 = vector.broadcast %116 : vector<4x1xf32> to vector<4x16xf32>
    %118 = arith.subf %114, %117 : vector<4x16xf32>
    %119 = math.exp %118 : vector<4x16xf32>
    %cst_54 = arith.constant dense<0.000000e+00> : vector<4xf32>
    %120 = vector.multi_reduction <add>, %119, %cst_54 [1] : vector<4x16xf32> to vector<4xf32>
    %121 = vector.shape_cast %120 : vector<4xf32> to vector<4x1xf32>
    %122 = tpu.reciprocal %121 {approx = true} : vector<4x1xf32> -> vector<4x1xf32>
    %123 = vector.broadcast %122 : vector<4x1xf32> to vector<4x16xf32>
    %124 = arith.mulf %119, %123 : vector<4x16xf32>
    %125 = vector.shape_cast %124 : vector<4x16xf32> to vector<4x16x1xf32>
    %126 = vector.broadcast %125 : vector<4x16x1xf32> to vector<4x16x128xf32>
    %127 = arith.mulf %126, %0 : vector<4x16x128xf32>
    %cst_55 = arith.constant dense<0.000000e+00> : vector<4x128xf32>
    %128 = vector.multi_reduction <add>, %127, %cst_55 [1] : vector<4x16x128xf32> to vector<4x128xf32>
    %cst_56 = arith.constant dense<0.000000e+00> : vector<4x128xf32>
    %129 = tpu.matmul %128, %4, %cst_56 {dimension_numbers = #tpu.dot_dimension_numbers<[1], [0], [0], [1], [0, 0, 1, 1], [], []>} : vector<4x128xf32>, vector<128x128xf32>, vector<4x128xf32> -> vector<4x128xf32>
    %cst_57 = arith.constant dense<0.000000e+00> : vector<4x128xf32>
    %130 = tpu.matmul %109, %5, %cst_57 {dimension_numbers = #tpu.dot_dimension_numbers<[1], [0], [0], [1], [0, 0, 1, 1], [], []>} : vector<4x128xf32>, vector<128x128xf32>, vector<4x128xf32> -> vector<4x128xf32>
    %131 = arith.addf %129, %130 : vector<4x128xf32>
    %132 = math.tanh %131 : vector<4x128xf32>
    %c0_58 = arith.constant 0 : index
    %c1 = arith.constant 1 : index
    %c0_59 = arith.constant 0 : index
    %133 = vector.load %arg14[%c0_58, %c1, %c0_59] : memref<4x8x16xf32, #tpu.memory_space<vmem>>, vector<4x1x16xf32>
    %134 = vector.shape_cast %133 : vector<4x1x16xf32> to vector<4x16xf32>
    %135 = vector.shape_cast %124 : vector<4x16xf32> to vector<4x1x16xf32>
    tpu.vector_store %arg14[%c0_58, %c1, %c0_59], %135 {strides = array<i32>} : memref<4x8x16xf32, #tpu.memory_space<vmem>>, vector<4x1x16xf32>,
    %cst_60 = arith.constant dense<0.000000e+00> : vector<4x256xf32>
    %136 = tpu.matmul %132, %6, %cst_60 {dimension_numbers = #tpu.dot_dimension_numbers<[1], [0], [0], [1], [0, 0, 1, 1], [], []>} : vector<4x128xf32>, vector<128x256xf32>, vector<4x256xf32> -> vector<4x256xf32>
    %137 = arith.addf %136, %9 : vector<4x256xf32>
    %c0_61 = arith.constant 0 : index
    %c1_62 = arith.constant 1 : index
    %c0_63 = arith.constant 0 : index
    %138 = vector.load %arg13[%c0_61, %c1_62, %c0_63] : memref<4x8x256xf32, #tpu.memory_space<vmem>>, vector<4x1x256xf32>
    %139 = vector.shape_cast %138 : vector<4x1x256xf32> to vector<4x256xf32>
    %140 = vector.shape_cast %137 : vector<4x256xf32> to vector<4x1x256xf32>
    tpu.vector_store %arg13[%c0_61, %c1_62, %c0_63], %140 {strides = array<i32>} : memref<4x8x256xf32, #tpu.memory_space<vmem>>, vector<4x1x256xf32>,
    %141 = vector.extract_strided_slice %15 {offsets = [8, 0], sizes = [4, 512], strides = [1, 1]} : vector<32x512xf32> to vector<4x512xf32>
    %cst_64 = arith.constant dense<0.000000e+00> : vector<4x512xf32>
    %142 = tpu.matmul %132, %1, %cst_64 {dimension_numbers = #tpu.dot_dimension_numbers<[1], [0], [0], [1], [0, 0, 1, 1], [], []>} : vector<4x128xf32>, vector<128x512xf32>, vector<4x512xf32> -> vector<4x512xf32>
    %143 = arith.addf %141, %142 : vector<4x512xf32>
    %cst_65 = arith.constant dense<0.000000e+00> : vector<4x512xf32>
    %144 = tpu.matmul %109, %2, %cst_65 {dimension_numbers = #tpu.dot_dimension_numbers<[1], [0], [0], [1], [0, 0, 1, 1], [], []>} : vector<4x128xf32>, vector<128x512xf32>, vector<4x512xf32> -> vector<4x512xf32>
    %145 = arith.addf %143, %144 : vector<4x512xf32>
    %146 = vector.extract_strided_slice %145 {offsets = [0, 0], sizes = [4, 128], strides = [1, 1]} : vector<4x512xf32> to vector<4x128xf32>
    %147 = arith.negf %146 : vector<4x128xf32>
    %148 = math.exp %147 : vector<4x128xf32>
    %cst_66 = arith.constant 1.000000e+00 : f32
    %149 = vector.broadcast %cst_66 : f32 to vector<4x128xf32>
    %150 = arith.addf %149, %148 : vector<4x128xf32>
    %151 = arith.divf %149, %150 : vector<4x128xf32>
    %152 = vector.extract_strided_slice %145 {offsets = [0, 128], sizes = [4, 128], strides = [1, 1]} : vector<4x512xf32> to vector<4x128xf32>
    %153 = arith.negf %152 : vector<4x128xf32>
    %154 = math.exp %153 : vector<4x128xf32>
    %cst_67 = arith.constant 1.000000e+00 : f32
    %155 = vector.broadcast %cst_67 : f32 to vector<4x128xf32>
    %156 = arith.addf %155, %154 : vector<4x128xf32>
    %157 = arith.divf %155, %156 : vector<4x128xf32>
    %158 = vector.extract_strided_slice %145 {offsets = [0, 256], sizes = [4, 128], strides = [1, 1]} : vector<4x512xf32> to vector<4x128xf32>
    %159 = math.tanh %158 : vector<4x128xf32>
    %160 = vector.extract_strided_slice %145 {offsets = [0, 384], sizes = [4, 128], strides = [1, 1]} : vector<4x512xf32> to vector<4x128xf32>
    %161 = arith.negf %160 : vector<4x128xf32>
    %162 = math.exp %161 : vector<4x128xf32>
    %cst_68 = arith.constant 1.000000e+00 : f32
    %163 = vector.broadcast %cst_68 : f32 to vector<4x128xf32>
    %164 = arith.addf %163, %162 : vector<4x128xf32>
    %165 = arith.divf %163, %164 : vector<4x128xf32>
    %166 = arith.mulf %157, %107 : vector<4x128xf32>
    %167 = arith.mulf %151, %159 : vector<4x128xf32>
    %168 = arith.addf %166, %167 : vector<4x128xf32>
    %169 = math.tanh %168 : vector<4x128xf32>
    %170 = arith.mulf %165, %169 : vector<4x128xf32>
    %cst_69 = arith.constant dense<0.000000e+00> : vector<4x128xf32>
    %171 = tpu.matmul %170, %3, %cst_69 {dimension_numbers = #tpu.dot_dimension_numbers<[1], [0], [0], [1], [0, 0, 1, 1], [], []>} : vector<4x128xf32>, vector<128x128xf32>, vector<4x128xf32> -> vector<4x128xf32>
    %172 = vector.shape_cast %171 : vector<4x128xf32> to vector<4x1x128xf32>
    %173 = vector.broadcast %172 : vector<4x1x128xf32> to vector<4x16x128xf32>
    %174 = arith.mulf %0, %173 : vector<4x16x128xf32>
    %cst_70 = arith.constant dense<0.000000e+00> : vector<4x16xf32>
    %175 = vector.multi_reduction <add>, %174, %cst_70 [2] : vector<4x16x128xf32> to vector<4x16xf32>
    %cst_71 = arith.constant dense<0xFF800000> : vector<4xf32>
    %176 = vector.multi_reduction <maximumf>, %175, %cst_71 [1] : vector<4x16xf32> to vector<4xf32>
    %177 = vector.shape_cast %176 : vector<4xf32> to vector<4x1xf32>
    %178 = vector.broadcast %177 : vector<4x1xf32> to vector<4x16xf32>
    %179 = arith.subf %175, %178 : vector<4x16xf32>
    %180 = math.exp %179 : vector<4x16xf32>
    %cst_72 = arith.constant dense<0.000000e+00> : vector<4xf32>
    %181 = vector.multi_reduction <add>, %180, %cst_72 [1] : vector<4x16xf32> to vector<4xf32>
    %182 = vector.shape_cast %181 : vector<4xf32> to vector<4x1xf32>
    %183 = tpu.reciprocal %182 {approx = true} : vector<4x1xf32> -> vector<4x1xf32>
    %184 = vector.broadcast %183 : vector<4x1xf32> to vector<4x16xf32>
    %185 = arith.mulf %180, %184 : vector<4x16xf32>
    %186 = vector.shape_cast %185 : vector<4x16xf32> to vector<4x16x1xf32>
    %187 = vector.broadcast %186 : vector<4x16x1xf32> to vector<4x16x128xf32>
    %188 = arith.mulf %187, %0 : vector<4x16x128xf32>
    %cst_73 = arith.constant dense<0.000000e+00> : vector<4x128xf32>
    %189 = vector.multi_reduction <add>, %188, %cst_73 [1] : vector<4x16x128xf32> to vector<4x128xf32>
    %cst_74 = arith.constant dense<0.000000e+00> : vector<4x128xf32>
    %190 = tpu.matmul %189, %4, %cst_74 {dimension_numbers = #tpu.dot_dimension_numbers<[1], [0], [0], [1], [0, 0, 1, 1], [], []>} : vector<4x128xf32>, vector<128x128xf32>, vector<4x128xf32> -> vector<4x128xf32>
    %cst_75 = arith.constant dense<0.000000e+00> : vector<4x128xf32>
    %191 = tpu.matmul %170, %5, %cst_75 {dimension_numbers = #tpu.dot_dimension_numbers<[1], [0], [0], [1], [0, 0, 1, 1], [], []>} : vector<4x128xf32>, vector<128x128xf32>, vector<4x128xf32> -> vector<4x128xf32>
    %192 = arith.addf %190, %191 : vector<4x128xf32>
    %193 = math.tanh %192 : vector<4x128xf32>
    %c0_76 = arith.constant 0 : index
    %c2 = arith.constant 2 : index
    %c0_77 = arith.constant 0 : index
    %194 = vector.load %arg14[%c0_76, %c2, %c0_77] : memref<4x8x16xf32, #tpu.memory_space<vmem>>, vector<4x1x16xf32>
    %195 = vector.shape_cast %194 : vector<4x1x16xf32> to vector<4x16xf32>
    %196 = vector.shape_cast %185 : vector<4x16xf32> to vector<4x1x16xf32>
    tpu.vector_store %arg14[%c0_76, %c2, %c0_77], %196 {strides = array<i32>} : memref<4x8x16xf32, #tpu.memory_space<vmem>>, vector<4x1x16xf32>,
    %cst_78 = arith.constant dense<0.000000e+00> : vector<4x256xf32>
    %197 = tpu.matmul %193, %6, %cst_78 {dimension_numbers = #tpu.dot_dimension_numbers<[1], [0], [0], [1], [0, 0, 1, 1], [], []>} : vector<4x128xf32>, vector<128x256xf32>, vector<4x256xf32> -> vector<4x256xf32>
    %198 = arith.addf %197, %9 : vector<4x256xf32>
    %c0_79 = arith.constant 0 : index
    %c2_80 = arith.constant 2 : index
    %c0_81 = arith.constant 0 : index
    %199 = vector.load %arg13[%c0_79, %c2_80, %c0_81] : memref<4x8x256xf32, #tpu.memory_space<vmem>>, vector<4x1x256xf32>
    %200 = vector.shape_cast %199 : vector<4x1x256xf32> to vector<4x256xf32>
    %201 = vector.shape_cast %198 : vector<4x256xf32> to vector<4x1x256xf32>
    tpu.vector_store %arg13[%c0_79, %c2_80, %c0_81], %201 {strides = array<i32>} : memref<4x8x256xf32, #tpu.memory_space<vmem>>, vector<4x1x256xf32>,
    %202 = vector.extract_strided_slice %15 {offsets = [12, 0], sizes = [4, 512], strides = [1, 1]} : vector<32x512xf32> to vector<4x512xf32>
    %cst_82 = arith.constant dense<0.000000e+00> : vector<4x512xf32>
    %203 = tpu.matmul %193, %1, %cst_82 {dimension_numbers = #tpu.dot_dimension_numbers<[1], [0], [0], [1], [0, 0, 1, 1], [], []>} : vector<4x128xf32>, vector<128x512xf32>, vector<4x512xf32> -> vector<4x512xf32>
    %204 = arith.addf %202, %203 : vector<4x512xf32>
    %cst_83 = arith.constant dense<0.000000e+00> : vector<4x512xf32>
    %205 = tpu.matmul %170, %2, %cst_83 {dimension_numbers = #tpu.dot_dimension_numbers<[1], [0], [0], [1], [0, 0, 1, 1], [], []>} : vector<4x128xf32>, vector<128x512xf32>, vector<4x512xf32> -> vector<4x512xf32>
    %206 = arith.addf %204, %205 : vector<4x512xf32>
    %207 = vector.extract_strided_slice %206 {offsets = [0, 0], sizes = [4, 128], strides = [1, 1]} : vector<4x512xf32> to vector<4x128xf32>
    %208 = arith.negf %207 : vector<4x128xf32>
    %209 = math.exp %208 : vector<4x128xf32>
    %cst_84 = arith.constant 1.000000e+00 : f32
    %210 = vector.broadcast %cst_84 : f32 to vector<4x128xf32>
    %211 = arith.addf %210, %209 : vector<4x128xf32>
    %212 = arith.divf %210, %211 : vector<4x128xf32>
    %213 = vector.extract_strided_slice %206 {offsets = [0, 128], sizes = [4, 128], strides = [1, 1]} : vector<4x512xf32> to vector<4x128xf32>
    %214 = arith.negf %213 : vector<4x128xf32>
    %215 = math.exp %214 : vector<4x128xf32>
    %cst_85 = arith.constant 1.000000e+00 : f32
    %216 = vector.broadcast %cst_85 : f32 to vector<4x128xf32>
    %217 = arith.addf %216, %215 : vector<4x128xf32>
    %218 = arith.divf %216, %217 : vector<4x128xf32>
    %219 = vector.extract_strided_slice %206 {offsets = [0, 256], sizes = [4, 128], strides = [1, 1]} : vector<4x512xf32> to vector<4x128xf32>
    %220 = math.tanh %219 : vector<4x128xf32>
    %221 = vector.extract_strided_slice %206 {offsets = [0, 384], sizes = [4, 128], strides = [1, 1]} : vector<4x512xf32> to vector<4x128xf32>
    %222 = arith.negf %221 : vector<4x128xf32>
    %223 = math.exp %222 : vector<4x128xf32>
    %cst_86 = arith.constant 1.000000e+00 : f32
    %224 = vector.broadcast %cst_86 : f32 to vector<4x128xf32>
    %225 = arith.addf %224, %223 : vector<4x128xf32>
    %226 = arith.divf %224, %225 : vector<4x128xf32>
    %227 = arith.mulf %218, %168 : vector<4x128xf32>
    %228 = arith.mulf %212, %220 : vector<4x128xf32>
    %229 = arith.addf %227, %228 : vector<4x128xf32>
    %230 = math.tanh %229 : vector<4x128xf32>
    %231 = arith.mulf %226, %230 : vector<4x128xf32>
    %cst_87 = arith.constant dense<0.000000e+00> : vector<4x128xf32>
    %232 = tpu.matmul %231, %3, %cst_87 {dimension_numbers = #tpu.dot_dimension_numbers<[1], [0], [0], [1], [0, 0, 1, 1], [], []>} : vector<4x128xf32>, vector<128x128xf32>, vector<4x128xf32> -> vector<4x128xf32>
    %233 = vector.shape_cast %232 : vector<4x128xf32> to vector<4x1x128xf32>
    %234 = vector.broadcast %233 : vector<4x1x128xf32> to vector<4x16x128xf32>
    %235 = arith.mulf %0, %234 : vector<4x16x128xf32>
    %cst_88 = arith.constant dense<0.000000e+00> : vector<4x16xf32>
    %236 = vector.multi_reduction <add>, %235, %cst_88 [2] : vector<4x16x128xf32> to vector<4x16xf32>
    %cst_89 = arith.constant dense<0xFF800000> : vector<4xf32>
    %237 = vector.multi_reduction <maximumf>, %236, %cst_89 [1] : vector<4x16xf32> to vector<4xf32>
    %238 = vector.shape_cast %237 : vector<4xf32> to vector<4x1xf32>
    %239 = vector.broadcast %238 : vector<4x1xf32> to vector<4x16xf32>
    %240 = arith.subf %236, %239 : vector<4x16xf32>
    %241 = math.exp %240 : vector<4x16xf32>
    %cst_90 = arith.constant dense<0.000000e+00> : vector<4xf32>
    %242 = vector.multi_reduction <add>, %241, %cst_90 [1] : vector<4x16xf32> to vector<4xf32>
    %243 = vector.shape_cast %242 : vector<4xf32> to vector<4x1xf32>
    %244 = tpu.reciprocal %243 {approx = true} : vector<4x1xf32> -> vector<4x1xf32>
    %245 = vector.broadcast %244 : vector<4x1xf32> to vector<4x16xf32>
    %246 = arith.mulf %241, %245 : vector<4x16xf32>
    %247 = vector.shape_cast %246 : vector<4x16xf32> to vector<4x16x1xf32>
    %248 = vector.broadcast %247 : vector<4x16x1xf32> to vector<4x16x128xf32>
    %249 = arith.mulf %248, %0 : vector<4x16x128xf32>
    %cst_91 = arith.constant dense<0.000000e+00> : vector<4x128xf32>
    %250 = vector.multi_reduction <add>, %249, %cst_91 [1] : vector<4x16x128xf32> to vector<4x128xf32>
    %cst_92 = arith.constant dense<0.000000e+00> : vector<4x128xf32>
    %251 = tpu.matmul %250, %4, %cst_92 {dimension_numbers = #tpu.dot_dimension_numbers<[1], [0], [0], [1], [0, 0, 1, 1], [], []>} : vector<4x128xf32>, vector<128x128xf32>, vector<4x128xf32> -> vector<4x128xf32>
    %cst_93 = arith.constant dense<0.000000e+00> : vector<4x128xf32>
    %252 = tpu.matmul %231, %5, %cst_93 {dimension_numbers = #tpu.dot_dimension_numbers<[1], [0], [0], [1], [0, 0, 1, 1], [], []>} : vector<4x128xf32>, vector<128x128xf32>, vector<4x128xf32> -> vector<4x128xf32>
    %253 = arith.addf %251, %252 : vector<4x128xf32>
    %254 = math.tanh %253 : vector<4x128xf32>
    %c0_94 = arith.constant 0 : index
    %c3 = arith.constant 3 : index
    %c0_95 = arith.constant 0 : index
    %255 = vector.load %arg14[%c0_94, %c3, %c0_95] : memref<4x8x16xf32, #tpu.memory_space<vmem>>, vector<4x1x16xf32>
    %256 = vector.shape_cast %255 : vector<4x1x16xf32> to vector<4x16xf32>
    %257 = vector.shape_cast %246 : vector<4x16xf32> to vector<4x1x16xf32>
    tpu.vector_store %arg14[%c0_94, %c3, %c0_95], %257 {strides = array<i32>} : memref<4x8x16xf32, #tpu.memory_space<vmem>>, vector<4x1x16xf32>,
    %cst_96 = arith.constant dense<0.000000e+00> : vector<4x256xf32>
    %258 = tpu.matmul %254, %6, %cst_96 {dimension_numbers = #tpu.dot_dimension_numbers<[1], [0], [0], [1], [0, 0, 1, 1], [], []>} : vector<4x128xf32>, vector<128x256xf32>, vector<4x256xf32> -> vector<4x256xf32>
    %259 = arith.addf %258, %9 : vector<4x256xf32>
    %c0_97 = arith.constant 0 : index
    %c3_98 = arith.constant 3 : index
    %c0_99 = arith.constant 0 : index
    %260 = vector.load %arg13[%c0_97, %c3_98, %c0_99] : memref<4x8x256xf32, #tpu.memory_space<vmem>>, vector<4x1x256xf32>
    %261 = vector.shape_cast %260 : vector<4x1x256xf32> to vector<4x256xf32>
    %262 = vector.shape_cast %259 : vector<4x256xf32> to vector<4x1x256xf32>
    tpu.vector_store %arg13[%c0_97, %c3_98, %c0_99], %262 {strides = array<i32>} : memref<4x8x256xf32, #tpu.memory_space<vmem>>, vector<4x1x256xf32>,
    %263 = vector.extract_strided_slice %15 {offsets = [16, 0], sizes = [4, 512], strides = [1, 1]} : vector<32x512xf32> to vector<4x512xf32>
    %cst_100 = arith.constant dense<0.000000e+00> : vector<4x512xf32>
    %264 = tpu.matmul %254, %1, %cst_100 {dimension_numbers = #tpu.dot_dimension_numbers<[1], [0], [0], [1], [0, 0, 1, 1], [], []>} : vector<4x128xf32>, vector<128x512xf32>, vector<4x512xf32> -> vector<4x512xf32>
    %265 = arith.addf %263, %264 : vector<4x512xf32>
    %cst_101 = arith.constant dense<0.000000e+00> : vector<4x512xf32>
    %266 = tpu.matmul %231, %2, %cst_101 {dimension_numbers = #tpu.dot_dimension_numbers<[1], [0], [0], [1], [0, 0, 1, 1], [], []>} : vector<4x128xf32>, vector<128x512xf32>, vector<4x512xf32> -> vector<4x512xf32>
    %267 = arith.addf %265, %266 : vector<4x512xf32>
    %268 = vector.extract_strided_slice %267 {offsets = [0, 0], sizes = [4, 128], strides = [1, 1]} : vector<4x512xf32> to vector<4x128xf32>
    %269 = arith.negf %268 : vector<4x128xf32>
    %270 = math.exp %269 : vector<4x128xf32>
    %cst_102 = arith.constant 1.000000e+00 : f32
    %271 = vector.broadcast %cst_102 : f32 to vector<4x128xf32>
    %272 = arith.addf %271, %270 : vector<4x128xf32>
    %273 = arith.divf %271, %272 : vector<4x128xf32>
    %274 = vector.extract_strided_slice %267 {offsets = [0, 128], sizes = [4, 128], strides = [1, 1]} : vector<4x512xf32> to vector<4x128xf32>
    %275 = arith.negf %274 : vector<4x128xf32>
    %276 = math.exp %275 : vector<4x128xf32>
    %cst_103 = arith.constant 1.000000e+00 : f32
    %277 = vector.broadcast %cst_103 : f32 to vector<4x128xf32>
    %278 = arith.addf %277, %276 : vector<4x128xf32>
    %279 = arith.divf %277, %278 : vector<4x128xf32>
    %280 = vector.extract_strided_slice %267 {offsets = [0, 256], sizes = [4, 128], strides = [1, 1]} : vector<4x512xf32> to vector<4x128xf32>
    %281 = math.tanh %280 : vector<4x128xf32>
    %282 = vector.extract_strided_slice %267 {offsets = [0, 384], sizes = [4, 128], strides = [1, 1]} : vector<4x512xf32> to vector<4x128xf32>
    %283 = arith.negf %282 : vector<4x128xf32>
    %284 = math.exp %283 : vector<4x128xf32>
    %cst_104 = arith.constant 1.000000e+00 : f32
    %285 = vector.broadcast %cst_104 : f32 to vector<4x128xf32>
    %286 = arith.addf %285, %284 : vector<4x128xf32>
    %287 = arith.divf %285, %286 : vector<4x128xf32>
    %288 = arith.mulf %279, %229 : vector<4x128xf32>
    %289 = arith.mulf %273, %281 : vector<4x128xf32>
    %290 = arith.addf %288, %289 : vector<4x128xf32>
    %291 = math.tanh %290 : vector<4x128xf32>
    %292 = arith.mulf %287, %291 : vector<4x128xf32>
    %cst_105 = arith.constant dense<0.000000e+00> : vector<4x128xf32>
    %293 = tpu.matmul %292, %3, %cst_105 {dimension_numbers = #tpu.dot_dimension_numbers<[1], [0], [0], [1], [0, 0, 1, 1], [], []>} : vector<4x128xf32>, vector<128x128xf32>, vector<4x128xf32> -> vector<4x128xf32>
    %294 = vector.shape_cast %293 : vector<4x128xf32> to vector<4x1x128xf32>
    %295 = vector.broadcast %294 : vector<4x1x128xf32> to vector<4x16x128xf32>
    %296 = arith.mulf %0, %295 : vector<4x16x128xf32>
    %cst_106 = arith.constant dense<0.000000e+00> : vector<4x16xf32>
    %297 = vector.multi_reduction <add>, %296, %cst_106 [2] : vector<4x16x128xf32> to vector<4x16xf32>
    %cst_107 = arith.constant dense<0xFF800000> : vector<4xf32>
    %298 = vector.multi_reduction <maximumf>, %297, %cst_107 [1] : vector<4x16xf32> to vector<4xf32>
    %299 = vector.shape_cast %298 : vector<4xf32> to vector<4x1xf32>
    %300 = vector.broadcast %299 : vector<4x1xf32> to vector<4x16xf32>
    %301 = arith.subf %297, %300 : vector<4x16xf32>
    %302 = math.exp %301 : vector<4x16xf32>
    %cst_108 = arith.constant dense<0.000000e+00> : vector<4xf32>
    %303 = vector.multi_reduction <add>, %302, %cst_108 [1] : vector<4x16xf32> to vector<4xf32>
    %304 = vector.shape_cast %303 : vector<4xf32> to vector<4x1xf32>
    %305 = tpu.reciprocal %304 {approx = true} : vector<4x1xf32> -> vector<4x1xf32>
    %306 = vector.broadcast %305 : vector<4x1xf32> to vector<4x16xf32>
    %307 = arith.mulf %302, %306 : vector<4x16xf32>
    %308 = vector.shape_cast %307 : vector<4x16xf32> to vector<4x16x1xf32>
    %309 = vector.broadcast %308 : vector<4x16x1xf32> to vector<4x16x128xf32>
    %310 = arith.mulf %309, %0 : vector<4x16x128xf32>
    %cst_109 = arith.constant dense<0.000000e+00> : vector<4x128xf32>
    %311 = vector.multi_reduction <add>, %310, %cst_109 [1] : vector<4x16x128xf32> to vector<4x128xf32>
    %cst_110 = arith.constant dense<0.000000e+00> : vector<4x128xf32>
    %312 = tpu.matmul %311, %4, %cst_110 {dimension_numbers = #tpu.dot_dimension_numbers<[1], [0], [0], [1], [0, 0, 1, 1], [], []>} : vector<4x128xf32>, vector<128x128xf32>, vector<4x128xf32> -> vector<4x128xf32>
    %cst_111 = arith.constant dense<0.000000e+00> : vector<4x128xf32>
    %313 = tpu.matmul %292, %5, %cst_111 {dimension_numbers = #tpu.dot_dimension_numbers<[1], [0], [0], [1], [0, 0, 1, 1], [], []>} : vector<4x128xf32>, vector<128x128xf32>, vector<4x128xf32> -> vector<4x128xf32>
    %314 = arith.addf %312, %313 : vector<4x128xf32>
    %315 = math.tanh %314 : vector<4x128xf32>
    %c0_112 = arith.constant 0 : index
    %c4 = arith.constant 4 : index
    %c0_113 = arith.constant 0 : index
    %316 = vector.load %arg14[%c0_112, %c4, %c0_113] : memref<4x8x16xf32, #tpu.memory_space<vmem>>, vector<4x1x16xf32>
    %317 = vector.shape_cast %316 : vector<4x1x16xf32> to vector<4x16xf32>
    %318 = vector.shape_cast %307 : vector<4x16xf32> to vector<4x1x16xf32>
    tpu.vector_store %arg14[%c0_112, %c4, %c0_113], %318 {strides = array<i32>} : memref<4x8x16xf32, #tpu.memory_space<vmem>>, vector<4x1x16xf32>,
    %cst_114 = arith.constant dense<0.000000e+00> : vector<4x256xf32>
    %319 = tpu.matmul %315, %6, %cst_114 {dimension_numbers = #tpu.dot_dimension_numbers<[1], [0], [0], [1], [0, 0, 1, 1], [], []>} : vector<4x128xf32>, vector<128x256xf32>, vector<4x256xf32> -> vector<4x256xf32>
    %320 = arith.addf %319, %9 : vector<4x256xf32>
    %c0_115 = arith.constant 0 : index
    %c4_116 = arith.constant 4 : index
    %c0_117 = arith.constant 0 : index
    %321 = vector.load %arg13[%c0_115, %c4_116, %c0_117] : memref<4x8x256xf32, #tpu.memory_space<vmem>>, vector<4x1x256xf32>
    %322 = vector.shape_cast %321 : vector<4x1x256xf32> to vector<4x256xf32>
    %323 = vector.shape_cast %320 : vector<4x256xf32> to vector<4x1x256xf32>
    tpu.vector_store %arg13[%c0_115, %c4_116, %c0_117], %323 {strides = array<i32>} : memref<4x8x256xf32, #tpu.memory_space<vmem>>, vector<4x1x256xf32>,
    %324 = vector.extract_strided_slice %15 {offsets = [20, 0], sizes = [4, 512], strides = [1, 1]} : vector<32x512xf32> to vector<4x512xf32>
    %cst_118 = arith.constant dense<0.000000e+00> : vector<4x512xf32>
    %325 = tpu.matmul %315, %1, %cst_118 {dimension_numbers = #tpu.dot_dimension_numbers<[1], [0], [0], [1], [0, 0, 1, 1], [], []>} : vector<4x128xf32>, vector<128x512xf32>, vector<4x512xf32> -> vector<4x512xf32>
    %326 = arith.addf %324, %325 : vector<4x512xf32>
    %cst_119 = arith.constant dense<0.000000e+00> : vector<4x512xf32>
    %327 = tpu.matmul %292, %2, %cst_119 {dimension_numbers = #tpu.dot_dimension_numbers<[1], [0], [0], [1], [0, 0, 1, 1], [], []>} : vector<4x128xf32>, vector<128x512xf32>, vector<4x512xf32> -> vector<4x512xf32>
    %328 = arith.addf %326, %327 : vector<4x512xf32>
    %329 = vector.extract_strided_slice %328 {offsets = [0, 0], sizes = [4, 128], strides = [1, 1]} : vector<4x512xf32> to vector<4x128xf32>
    %330 = arith.negf %329 : vector<4x128xf32>
    %331 = math.exp %330 : vector<4x128xf32>
    %cst_120 = arith.constant 1.000000e+00 : f32
    %332 = vector.broadcast %cst_120 : f32 to vector<4x128xf32>
    %333 = arith.addf %332, %331 : vector<4x128xf32>
    %334 = arith.divf %332, %333 : vector<4x128xf32>
    %335 = vector.extract_strided_slice %328 {offsets = [0, 128], sizes = [4, 128], strides = [1, 1]} : vector<4x512xf32> to vector<4x128xf32>
    %336 = arith.negf %335 : vector<4x128xf32>
    %337 = math.exp %336 : vector<4x128xf32>
    %cst_121 = arith.constant 1.000000e+00 : f32
    %338 = vector.broadcast %cst_121 : f32 to vector<4x128xf32>
    %339 = arith.addf %338, %337 : vector<4x128xf32>
    %340 = arith.divf %338, %339 : vector<4x128xf32>
    %341 = vector.extract_strided_slice %328 {offsets = [0, 256], sizes = [4, 128], strides = [1, 1]} : vector<4x512xf32> to vector<4x128xf32>
    %342 = math.tanh %341 : vector<4x128xf32>
    %343 = vector.extract_strided_slice %328 {offsets = [0, 384], sizes = [4, 128], strides = [1, 1]} : vector<4x512xf32> to vector<4x128xf32>
    %344 = arith.negf %343 : vector<4x128xf32>
    %345 = math.exp %344 : vector<4x128xf32>
    %cst_122 = arith.constant 1.000000e+00 : f32
    %346 = vector.broadcast %cst_122 : f32 to vector<4x128xf32>
    %347 = arith.addf %346, %345 : vector<4x128xf32>
    %348 = arith.divf %346, %347 : vector<4x128xf32>
    %349 = arith.mulf %340, %290 : vector<4x128xf32>
    %350 = arith.mulf %334, %342 : vector<4x128xf32>
    %351 = arith.addf %349, %350 : vector<4x128xf32>
    %352 = math.tanh %351 : vector<4x128xf32>
    %353 = arith.mulf %348, %352 : vector<4x128xf32>
    %cst_123 = arith.constant dense<0.000000e+00> : vector<4x128xf32>
    %354 = tpu.matmul %353, %3, %cst_123 {dimension_numbers = #tpu.dot_dimension_numbers<[1], [0], [0], [1], [0, 0, 1, 1], [], []>} : vector<4x128xf32>, vector<128x128xf32>, vector<4x128xf32> -> vector<4x128xf32>
    %355 = vector.shape_cast %354 : vector<4x128xf32> to vector<4x1x128xf32>
    %356 = vector.broadcast %355 : vector<4x1x128xf32> to vector<4x16x128xf32>
    %357 = arith.mulf %0, %356 : vector<4x16x128xf32>
    %cst_124 = arith.constant dense<0.000000e+00> : vector<4x16xf32>
    %358 = vector.multi_reduction <add>, %357, %cst_124 [2] : vector<4x16x128xf32> to vector<4x16xf32>
    %cst_125 = arith.constant dense<0xFF800000> : vector<4xf32>
    %359 = vector.multi_reduction <maximumf>, %358, %cst_125 [1] : vector<4x16xf32> to vector<4xf32>
    %360 = vector.shape_cast %359 : vector<4xf32> to vector<4x1xf32>
    %361 = vector.broadcast %360 : vector<4x1xf32> to vector<4x16xf32>
    %362 = arith.subf %358, %361 : vector<4x16xf32>
    %363 = math.exp %362 : vector<4x16xf32>
    %cst_126 = arith.constant dense<0.000000e+00> : vector<4xf32>
    %364 = vector.multi_reduction <add>, %363, %cst_126 [1] : vector<4x16xf32> to vector<4xf32>
    %365 = vector.shape_cast %364 : vector<4xf32> to vector<4x1xf32>
    %366 = tpu.reciprocal %365 {approx = true} : vector<4x1xf32> -> vector<4x1xf32>
    %367 = vector.broadcast %366 : vector<4x1xf32> to vector<4x16xf32>
    %368 = arith.mulf %363, %367 : vector<4x16xf32>
    %369 = vector.shape_cast %368 : vector<4x16xf32> to vector<4x16x1xf32>
    %370 = vector.broadcast %369 : vector<4x16x1xf32> to vector<4x16x128xf32>
    %371 = arith.mulf %370, %0 : vector<4x16x128xf32>
    %cst_127 = arith.constant dense<0.000000e+00> : vector<4x128xf32>
    %372 = vector.multi_reduction <add>, %371, %cst_127 [1] : vector<4x16x128xf32> to vector<4x128xf32>
    %cst_128 = arith.constant dense<0.000000e+00> : vector<4x128xf32>
    %373 = tpu.matmul %372, %4, %cst_128 {dimension_numbers = #tpu.dot_dimension_numbers<[1], [0], [0], [1], [0, 0, 1, 1], [], []>} : vector<4x128xf32>, vector<128x128xf32>, vector<4x128xf32> -> vector<4x128xf32>
    %cst_129 = arith.constant dense<0.000000e+00> : vector<4x128xf32>
    %374 = tpu.matmul %353, %5, %cst_129 {dimension_numbers = #tpu.dot_dimension_numbers<[1], [0], [0], [1], [0, 0, 1, 1], [], []>} : vector<4x128xf32>, vector<128x128xf32>, vector<4x128xf32> -> vector<4x128xf32>
    %375 = arith.addf %373, %374 : vector<4x128xf32>
    %376 = math.tanh %375 : vector<4x128xf32>
    %c0_130 = arith.constant 0 : index
    %c5 = arith.constant 5 : index
    %c0_131 = arith.constant 0 : index
    %377 = vector.load %arg14[%c0_130, %c5, %c0_131] : memref<4x8x16xf32, #tpu.memory_space<vmem>>, vector<4x1x16xf32>
    %378 = vector.shape_cast %377 : vector<4x1x16xf32> to vector<4x16xf32>
    %379 = vector.shape_cast %368 : vector<4x16xf32> to vector<4x1x16xf32>
    tpu.vector_store %arg14[%c0_130, %c5, %c0_131], %379 {strides = array<i32>} : memref<4x8x16xf32, #tpu.memory_space<vmem>>, vector<4x1x16xf32>,
    %cst_132 = arith.constant dense<0.000000e+00> : vector<4x256xf32>
    %380 = tpu.matmul %376, %6, %cst_132 {dimension_numbers = #tpu.dot_dimension_numbers<[1], [0], [0], [1], [0, 0, 1, 1], [], []>} : vector<4x128xf32>, vector<128x256xf32>, vector<4x256xf32> -> vector<4x256xf32>
    %381 = arith.addf %380, %9 : vector<4x256xf32>
    %c0_133 = arith.constant 0 : index
    %c5_134 = arith.constant 5 : index
    %c0_135 = arith.constant 0 : index
    %382 = vector.load %arg13[%c0_133, %c5_134, %c0_135] : memref<4x8x256xf32, #tpu.memory_space<vmem>>, vector<4x1x256xf32>
    %383 = vector.shape_cast %382 : vector<4x1x256xf32> to vector<4x256xf32>
    %384 = vector.shape_cast %381 : vector<4x256xf32> to vector<4x1x256xf32>
    tpu.vector_store %arg13[%c0_133, %c5_134, %c0_135], %384 {strides = array<i32>} : memref<4x8x256xf32, #tpu.memory_space<vmem>>, vector<4x1x256xf32>,
    %385 = vector.extract_strided_slice %15 {offsets = [24, 0], sizes = [4, 512], strides = [1, 1]} : vector<32x512xf32> to vector<4x512xf32>
    %cst_136 = arith.constant dense<0.000000e+00> : vector<4x512xf32>
    %386 = tpu.matmul %376, %1, %cst_136 {dimension_numbers = #tpu.dot_dimension_numbers<[1], [0], [0], [1], [0, 0, 1, 1], [], []>} : vector<4x128xf32>, vector<128x512xf32>, vector<4x512xf32> -> vector<4x512xf32>
    %387 = arith.addf %385, %386 : vector<4x512xf32>
    %cst_137 = arith.constant dense<0.000000e+00> : vector<4x512xf32>
    %388 = tpu.matmul %353, %2, %cst_137 {dimension_numbers = #tpu.dot_dimension_numbers<[1], [0], [0], [1], [0, 0, 1, 1], [], []>} : vector<4x128xf32>, vector<128x512xf32>, vector<4x512xf32> -> vector<4x512xf32>
    %389 = arith.addf %387, %388 : vector<4x512xf32>
    %390 = vector.extract_strided_slice %389 {offsets = [0, 0], sizes = [4, 128], strides = [1, 1]} : vector<4x512xf32> to vector<4x128xf32>
    %391 = arith.negf %390 : vector<4x128xf32>
    %392 = math.exp %391 : vector<4x128xf32>
    %cst_138 = arith.constant 1.000000e+00 : f32
    %393 = vector.broadcast %cst_138 : f32 to vector<4x128xf32>
    %394 = arith.addf %393, %392 : vector<4x128xf32>
    %395 = arith.divf %393, %394 : vector<4x128xf32>
    %396 = vector.extract_strided_slice %389 {offsets = [0, 128], sizes = [4, 128], strides = [1, 1]} : vector<4x512xf32> to vector<4x128xf32>
    %397 = arith.negf %396 : vector<4x128xf32>
    %398 = math.exp %397 : vector<4x128xf32>
    %cst_139 = arith.constant 1.000000e+00 : f32
    %399 = vector.broadcast %cst_139 : f32 to vector<4x128xf32>
    %400 = arith.addf %399, %398 : vector<4x128xf32>
    %401 = arith.divf %399, %400 : vector<4x128xf32>
    %402 = vector.extract_strided_slice %389 {offsets = [0, 256], sizes = [4, 128], strides = [1, 1]} : vector<4x512xf32> to vector<4x128xf32>
    %403 = math.tanh %402 : vector<4x128xf32>
    %404 = vector.extract_strided_slice %389 {offsets = [0, 384], sizes = [4, 128], strides = [1, 1]} : vector<4x512xf32> to vector<4x128xf32>
    %405 = arith.negf %404 : vector<4x128xf32>
    %406 = math.exp %405 : vector<4x128xf32>
    %cst_140 = arith.constant 1.000000e+00 : f32
    %407 = vector.broadcast %cst_140 : f32 to vector<4x128xf32>
    %408 = arith.addf %407, %406 : vector<4x128xf32>
    %409 = arith.divf %407, %408 : vector<4x128xf32>
    %410 = arith.mulf %401, %351 : vector<4x128xf32>
    %411 = arith.mulf %395, %403 : vector<4x128xf32>
    %412 = arith.addf %410, %411 : vector<4x128xf32>
    %413 = math.tanh %412 : vector<4x128xf32>
    %414 = arith.mulf %409, %413 : vector<4x128xf32>
    %cst_141 = arith.constant dense<0.000000e+00> : vector<4x128xf32>
    %415 = tpu.matmul %414, %3, %cst_141 {dimension_numbers = #tpu.dot_dimension_numbers<[1], [0], [0], [1], [0, 0, 1, 1], [], []>} : vector<4x128xf32>, vector<128x128xf32>, vector<4x128xf32> -> vector<4x128xf32>
    %416 = vector.shape_cast %415 : vector<4x128xf32> to vector<4x1x128xf32>
    %417 = vector.broadcast %416 : vector<4x1x128xf32> to vector<4x16x128xf32>
    %418 = arith.mulf %0, %417 : vector<4x16x128xf32>
    %cst_142 = arith.constant dense<0.000000e+00> : vector<4x16xf32>
    %419 = vector.multi_reduction <add>, %418, %cst_142 [2] : vector<4x16x128xf32> to vector<4x16xf32>
    %cst_143 = arith.constant dense<0xFF800000> : vector<4xf32>
    %420 = vector.multi_reduction <maximumf>, %419, %cst_143 [1] : vector<4x16xf32> to vector<4xf32>
    %421 = vector.shape_cast %420 : vector<4xf32> to vector<4x1xf32>
    %422 = vector.broadcast %421 : vector<4x1xf32> to vector<4x16xf32>
    %423 = arith.subf %419, %422 : vector<4x16xf32>
    %424 = math.exp %423 : vector<4x16xf32>
    %cst_144 = arith.constant dense<0.000000e+00> : vector<4xf32>
    %425 = vector.multi_reduction <add>, %424, %cst_144 [1] : vector<4x16xf32> to vector<4xf32>
    %426 = vector.shape_cast %425 : vector<4xf32> to vector<4x1xf32>
    %427 = tpu.reciprocal %426 {approx = true} : vector<4x1xf32> -> vector<4x1xf32>
    %428 = vector.broadcast %427 : vector<4x1xf32> to vector<4x16xf32>
    %429 = arith.mulf %424, %428 : vector<4x16xf32>
    %430 = vector.shape_cast %429 : vector<4x16xf32> to vector<4x16x1xf32>
    %431 = vector.broadcast %430 : vector<4x16x1xf32> to vector<4x16x128xf32>
    %432 = arith.mulf %431, %0 : vector<4x16x128xf32>
    %cst_145 = arith.constant dense<0.000000e+00> : vector<4x128xf32>
    %433 = vector.multi_reduction <add>, %432, %cst_145 [1] : vector<4x16x128xf32> to vector<4x128xf32>
    %cst_146 = arith.constant dense<0.000000e+00> : vector<4x128xf32>
    %434 = tpu.matmul %433, %4, %cst_146 {dimension_numbers = #tpu.dot_dimension_numbers<[1], [0], [0], [1], [0, 0, 1, 1], [], []>} : vector<4x128xf32>, vector<128x128xf32>, vector<4x128xf32> -> vector<4x128xf32>
    %cst_147 = arith.constant dense<0.000000e+00> : vector<4x128xf32>
    %435 = tpu.matmul %414, %5, %cst_147 {dimension_numbers = #tpu.dot_dimension_numbers<[1], [0], [0], [1], [0, 0, 1, 1], [], []>} : vector<4x128xf32>, vector<128x128xf32>, vector<4x128xf32> -> vector<4x128xf32>
    %436 = arith.addf %434, %435 : vector<4x128xf32>
    %437 = math.tanh %436 : vector<4x128xf32>
    %c0_148 = arith.constant 0 : index
    %c6 = arith.constant 6 : index
    %c0_149 = arith.constant 0 : index
    %438 = vector.load %arg14[%c0_148, %c6, %c0_149] : memref<4x8x16xf32, #tpu.memory_space<vmem>>, vector<4x1x16xf32>
    %439 = vector.shape_cast %438 : vector<4x1x16xf32> to vector<4x16xf32>
    %440 = vector.shape_cast %429 : vector<4x16xf32> to vector<4x1x16xf32>
    tpu.vector_store %arg14[%c0_148, %c6, %c0_149], %440 {strides = array<i32>} : memref<4x8x16xf32, #tpu.memory_space<vmem>>, vector<4x1x16xf32>,
    %cst_150 = arith.constant dense<0.000000e+00> : vector<4x256xf32>
    %441 = tpu.matmul %437, %6, %cst_150 {dimension_numbers = #tpu.dot_dimension_numbers<[1], [0], [0], [1], [0, 0, 1, 1], [], []>} : vector<4x128xf32>, vector<128x256xf32>, vector<4x256xf32> -> vector<4x256xf32>
    %442 = arith.addf %441, %9 : vector<4x256xf32>
    %c0_151 = arith.constant 0 : index
    %c6_152 = arith.constant 6 : index
    %c0_153 = arith.constant 0 : index
    %443 = vector.load %arg13[%c0_151, %c6_152, %c0_153] : memref<4x8x256xf32, #tpu.memory_space<vmem>>, vector<4x1x256xf32>
    %444 = vector.shape_cast %443 : vector<4x1x256xf32> to vector<4x256xf32>
    %445 = vector.shape_cast %442 : vector<4x256xf32> to vector<4x1x256xf32>
    tpu.vector_store %arg13[%c0_151, %c6_152, %c0_153], %445 {strides = array<i32>} : memref<4x8x256xf32, #tpu.memory_space<vmem>>, vector<4x1x256xf32>,
    %446 = vector.extract_strided_slice %15 {offsets = [28, 0], sizes = [4, 512], strides = [1, 1]} : vector<32x512xf32> to vector<4x512xf32>
    %cst_154 = arith.constant dense<0.000000e+00> : vector<4x512xf32>
    %447 = tpu.matmul %437, %1, %cst_154 {dimension_numbers = #tpu.dot_dimension_numbers<[1], [0], [0], [1], [0, 0, 1, 1], [], []>} : vector<4x128xf32>, vector<128x512xf32>, vector<4x512xf32> -> vector<4x512xf32>
    %448 = arith.addf %446, %447 : vector<4x512xf32>
    %cst_155 = arith.constant dense<0.000000e+00> : vector<4x512xf32>
    %449 = tpu.matmul %414, %2, %cst_155 {dimension_numbers = #tpu.dot_dimension_numbers<[1], [0], [0], [1], [0, 0, 1, 1], [], []>} : vector<4x128xf32>, vector<128x512xf32>, vector<4x512xf32> -> vector<4x512xf32>
    %450 = arith.addf %448, %449 : vector<4x512xf32>
    %451 = vector.extract_strided_slice %450 {offsets = [0, 0], sizes = [4, 128], strides = [1, 1]} : vector<4x512xf32> to vector<4x128xf32>
    %452 = arith.negf %451 : vector<4x128xf32>
    %453 = math.exp %452 : vector<4x128xf32>
    %cst_156 = arith.constant 1.000000e+00 : f32
    %454 = vector.broadcast %cst_156 : f32 to vector<4x128xf32>
    %455 = arith.addf %454, %453 : vector<4x128xf32>
    %456 = arith.divf %454, %455 : vector<4x128xf32>
    %457 = vector.extract_strided_slice %450 {offsets = [0, 128], sizes = [4, 128], strides = [1, 1]} : vector<4x512xf32> to vector<4x128xf32>
    %458 = arith.negf %457 : vector<4x128xf32>
    %459 = math.exp %458 : vector<4x128xf32>
    %cst_157 = arith.constant 1.000000e+00 : f32
    %460 = vector.broadcast %cst_157 : f32 to vector<4x128xf32>
    %461 = arith.addf %460, %459 : vector<4x128xf32>
    %462 = arith.divf %460, %461 : vector<4x128xf32>
    %463 = vector.extract_strided_slice %450 {offsets = [0, 256], sizes = [4, 128], strides = [1, 1]} : vector<4x512xf32> to vector<4x128xf32>
    %464 = math.tanh %463 : vector<4x128xf32>
    %465 = vector.extract_strided_slice %450 {offsets = [0, 384], sizes = [4, 128], strides = [1, 1]} : vector<4x512xf32> to vector<4x128xf32>
    %466 = arith.negf %465 : vector<4x128xf32>
    %467 = math.exp %466 : vector<4x128xf32>
    %cst_158 = arith.constant 1.000000e+00 : f32
    %468 = vector.broadcast %cst_158 : f32 to vector<4x128xf32>
    %469 = arith.addf %468, %467 : vector<4x128xf32>
    %470 = arith.divf %468, %469 : vector<4x128xf32>
    %471 = arith.mulf %462, %412 : vector<4x128xf32>
    %472 = arith.mulf %456, %464 : vector<4x128xf32>
    %473 = arith.addf %471, %472 : vector<4x128xf32>
    %474 = math.tanh %473 : vector<4x128xf32>
    %475 = arith.mulf %470, %474 : vector<4x128xf32>
    %cst_159 = arith.constant dense<0.000000e+00> : vector<4x128xf32>
    %476 = tpu.matmul %475, %3, %cst_159 {dimension_numbers = #tpu.dot_dimension_numbers<[1], [0], [0], [1], [0, 0, 1, 1], [], []>} : vector<4x128xf32>, vector<128x128xf32>, vector<4x128xf32> -> vector<4x128xf32>
    %477 = vector.shape_cast %476 : vector<4x128xf32> to vector<4x1x128xf32>
    %478 = vector.broadcast %477 : vector<4x1x128xf32> to vector<4x16x128xf32>
    %479 = arith.mulf %0, %478 : vector<4x16x128xf32>
    %cst_160 = arith.constant dense<0.000000e+00> : vector<4x16xf32>
    %480 = vector.multi_reduction <add>, %479, %cst_160 [2] : vector<4x16x128xf32> to vector<4x16xf32>
    %cst_161 = arith.constant dense<0xFF800000> : vector<4xf32>
    %481 = vector.multi_reduction <maximumf>, %480, %cst_161 [1] : vector<4x16xf32> to vector<4xf32>
    %482 = vector.shape_cast %481 : vector<4xf32> to vector<4x1xf32>
    %483 = vector.broadcast %482 : vector<4x1xf32> to vector<4x16xf32>
    %484 = arith.subf %480, %483 : vector<4x16xf32>
    %485 = math.exp %484 : vector<4x16xf32>
    %cst_162 = arith.constant dense<0.000000e+00> : vector<4xf32>
    %486 = vector.multi_reduction <add>, %485, %cst_162 [1] : vector<4x16xf32> to vector<4xf32>
    %487 = vector.shape_cast %486 : vector<4xf32> to vector<4x1xf32>
    %488 = tpu.reciprocal %487 {approx = true} : vector<4x1xf32> -> vector<4x1xf32>
    %489 = vector.broadcast %488 : vector<4x1xf32> to vector<4x16xf32>
    %490 = arith.mulf %485, %489 : vector<4x16xf32>
    %491 = vector.shape_cast %490 : vector<4x16xf32> to vector<4x16x1xf32>
    %492 = vector.broadcast %491 : vector<4x16x1xf32> to vector<4x16x128xf32>
    %493 = arith.mulf %492, %0 : vector<4x16x128xf32>
    %cst_163 = arith.constant dense<0.000000e+00> : vector<4x128xf32>
    %494 = vector.multi_reduction <add>, %493, %cst_163 [1] : vector<4x16x128xf32> to vector<4x128xf32>
    %cst_164 = arith.constant dense<0.000000e+00> : vector<4x128xf32>
    %495 = tpu.matmul %494, %4, %cst_164 {dimension_numbers = #tpu.dot_dimension_numbers<[1], [0], [0], [1], [0, 0, 1, 1], [], []>} : vector<4x128xf32>, vector<128x128xf32>, vector<4x128xf32> -> vector<4x128xf32>
    %cst_165 = arith.constant dense<0.000000e+00> : vector<4x128xf32>
    %496 = tpu.matmul %475, %5, %cst_165 {dimension_numbers = #tpu.dot_dimension_numbers<[1], [0], [0], [1], [0, 0, 1, 1], [], []>} : vector<4x128xf32>, vector<128x128xf32>, vector<4x128xf32> -> vector<4x128xf32>
    %497 = arith.addf %495, %496 : vector<4x128xf32>
    %498 = math.tanh %497 : vector<4x128xf32>
    %c0_166 = arith.constant 0 : index
    %c7 = arith.constant 7 : index
    %c0_167 = arith.constant 0 : index
    %499 = vector.load %arg14[%c0_166, %c7, %c0_167] : memref<4x8x16xf32, #tpu.memory_space<vmem>>, vector<4x1x16xf32>
    %500 = vector.shape_cast %499 : vector<4x1x16xf32> to vector<4x16xf32>
    %501 = vector.shape_cast %490 : vector<4x16xf32> to vector<4x1x16xf32>
    tpu.vector_store %arg14[%c0_166, %c7, %c0_167], %501 {strides = array<i32>} : memref<4x8x16xf32, #tpu.memory_space<vmem>>, vector<4x1x16xf32>,
    %cst_168 = arith.constant dense<0.000000e+00> : vector<4x256xf32>
    %502 = tpu.matmul %498, %6, %cst_168 {dimension_numbers = #tpu.dot_dimension_numbers<[1], [0], [0], [1], [0, 0, 1, 1], [], []>} : vector<4x128xf32>, vector<128x256xf32>, vector<4x256xf32> -> vector<4x256xf32>
    %503 = arith.addf %502, %9 : vector<4x256xf32>
    %c0_169 = arith.constant 0 : index
    %c7_170 = arith.constant 7 : index
    %c0_171 = arith.constant 0 : index
    %504 = vector.load %arg13[%c0_169, %c7_170, %c0_171] : memref<4x8x256xf32, #tpu.memory_space<vmem>>, vector<4x1x256xf32>
    %505 = vector.shape_cast %504 : vector<4x1x256xf32> to vector<4x256xf32>
    %506 = vector.shape_cast %503 : vector<4x256xf32> to vector<4x1x256xf32>
    tpu.vector_store %arg13[%c0_169, %c7_170, %c0_171], %506 {strides = array<i32>} : memref<4x8x256xf32, #tpu.memory_space<vmem>>, vector<4x1x256xf32>,
    return
  }
}

</mosaic_0001>

<llo_original>
// kernel: lstm_decoder_forward.1
$region0: #{lstm_decoder_forward.1}
  #allocation0 [shape = 'u32[]', space=smem, size = 0x4, offset = 0x4, fixed_abs, tag = 'smem constant byte address 0x4 - core index']
  #allocation1 [shape = 'u32[144,128]{1,0:T(1,128)}', space=vmem, size = 0x12000, scoped, tag = 'internal scratch']
  %s0 = inlined_call_operand.vmem [shape: f32[32,128], index: 0, kind: input, shape index: {}]
  %s1 = inlined_call_operand.vmem [shape: f32[4,16,128], index: 1, kind: input, shape index: {}]
  %s2 = inlined_call_operand.vmem [shape: f32[4,128], index: 2, kind: input, shape index: {}]
  %s3 = inlined_call_operand.vmem [shape: f32[4,128], index: 3, kind: input, shape index: {}]
  %s4 = inlined_call_operand.vmem [shape: f32[128,512], index: 4, kind: input, shape index: {}]
  %s5 = inlined_call_operand.vmem [shape: f32[128,512], index: 5, kind: input, shape index: {}]
  %s6 = inlined_call_operand.vmem [shape: f32[128,512], index: 6, kind: input, shape index: {}]
  %s7 = inlined_call_operand.vmem [shape: f32[1,512], index: 7, kind: input, shape index: {}]
  %s8 = inlined_call_operand.vmem [shape: f32[128,128], index: 8, kind: input, shape index: {}]
  %s9 = inlined_call_operand.vmem [shape: f32[128,128], index: 9, kind: input, shape index: {}]
  %s10 = inlined_call_operand.vmem [shape: f32[128,128], index: 10, kind: input, shape index: {}]
  %s11 = inlined_call_operand.vmem [shape: f32[128,256], index: 11, kind: input, shape index: {}]
  %s12 = inlined_call_operand.vmem [shape: f32[1,256], index: 12, kind: input, shape index: {}]
  %s13 = inlined_call_operand.hbm [shape: f32[4,8,256], index: 13, kind: output, shape index: {0}]
  %s14 = inlined_call_operand.hbm [shape: f32[4,8,16], index: 14, kind: output, shape index: {1}]
  %15 = xla_tuple %s13, %s14
  %s16 = sld [smem:[#allocation0]]
  $region70: #{lstm_decoder_forward.1} parent=0
    _
  %s18 = ssub.s32 1, %s16
  %s19 = scalar_select 0, %s18, %s16
  $region1: #{lstm_decoder_forward.1} parent=0
    #allocation2 [shape = 'u8[32768]{0}', space=vmem, size = 0x8000, scoped, tag = 'output window, operand 0, single buffered']
    #allocation3 [shape = 's32[1]{0}', space=sflag, size = 0x4, scoped, tag = 'scoped memory for lstm_decoder_forward.1']
    #allocation4 [shape = 'u8[16384]{0}', space=vmem, size = 0x4000, scoped, tag = 'output window, operand 1, single buffered']
    #allocation5 [shape = 's32[1]{0}', space=sflag, size = 0x4, scoped, tag = 'scoped memory for lstm_decoder_forward.1']
    %20 = vsyncpa [#allocation3], 0
    %21 = vsyncpa [#allocation5], 0
    // Predicated region
    $region2: #{lstm_decoder_forward.1} parent=1 // pred_check
      _
    $region3: #{lstm_decoder_forward.1} parent=1 // pred_check_branch
      %23 = sbr.rel (0) target = $region5
    $region4: #{lstm_decoder_forward.1} parent=1 // pred_region
      _
    $region5: #{lstm_decoder_forward.1} parent=1 // pred_fallthru
      _
    // Predicated region
    $region6: #{lstm_decoder_forward.1} parent=1 // pred_check
      _
    $region7: #{lstm_decoder_forward.1} parent=1 // pred_check_branch
      %25 = sbr.rel (0) target = $region9
    $region8: #{lstm_decoder_forward.1} parent=1 // pred_region
      _
    $region9: #{lstm_decoder_forward.1} parent=1 // pred_fallthru
      _
    // Predicated region
    $region10: #{lstm_decoder_forward.1} parent=1 // pred_check
      _
    $region11: #{lstm_decoder_forward.1} parent=1 // pred_check_branch
      %27 = sbr.rel (0) target = $region13
    $region12: #{lstm_decoder_forward.1} parent=1 // pred_region
      _
    $region13: #{lstm_decoder_forward.1} parent=1 // pred_fallthru
      _
    // Predicated region
    $region14: #{lstm_decoder_forward.1} parent=1 // pred_check
      _
    $region15: #{lstm_decoder_forward.1} parent=1 // pred_check_branch
      %29 = sbr.rel (0) target = $region17
    $region16: #{lstm_decoder_forward.1} parent=1 // pred_region
      _
    $region17: #{lstm_decoder_forward.1} parent=1 // pred_fallthru
      _
    // Predicated region
    $region18: #{lstm_decoder_forward.1} parent=1 // pred_check
      _
    $region19: #{lstm_decoder_forward.1} parent=1 // pred_check_branch
      %31 = sbr.rel (0) target = $region21
    $region20: #{lstm_decoder_forward.1} parent=1 // pred_region
      _
    $region21: #{lstm_decoder_forward.1} parent=1 // pred_fallthru
      _
    // Predicated region
    $region22: #{lstm_decoder_forward.1} parent=1 // pred_check
      _
    $region23: #{lstm_decoder_forward.1} parent=1 // pred_check_branch
      %33 = sbr.rel (0) target = $region25
    $region24: #{lstm_decoder_forward.1} parent=1 // pred_region
      _
    $region25: #{lstm_decoder_forward.1} parent=1 // pred_fallthru
      _
    // Predicated region
    $region26: #{lstm_decoder_forward.1} parent=1 // pred_check
      _
    $region27: #{lstm_decoder_forward.1} parent=1 // pred_check_branch
      %35 = sbr.rel (0) target = $region29
    $region28: #{lstm_decoder_forward.1} parent=1 // pred_region
      _
    $region29: #{lstm_decoder_forward.1} parent=1 // pred_fallthru
      _
    // Predicated region
    $region30: #{lstm_decoder_forward.1} parent=1 // pred_check
      _
    $region31: #{lstm_decoder_forward.1} parent=1 // pred_check_branch
      %37 = sbr.rel (0) target = $region33
    $region32: #{lstm_decoder_forward.1} parent=1 // pred_region
      _
    $region33: #{lstm_decoder_forward.1} parent=1 // pred_fallthru
      _
    // Predicated region
    $region34: #{lstm_decoder_forward.1} parent=1 // pred_check
      _
    $region35: #{lstm_decoder_forward.1} parent=1 // pred_check_branch
      %39 = sbr.rel (0) target = $region37
    $region36: #{lstm_decoder_forward.1} parent=1 // pred_region
      _
    $region37: #{lstm_decoder_forward.1} parent=1 // pred_fallthru
      _
    // Predicated region
    $region38: #{lstm_decoder_forward.1} parent=1 // pred_check
      _
    $region39: #{lstm_decoder_forward.1} parent=1 // pred_check_branch
      %41 = sbr.rel (0) target = $region41
    $region40: #{lstm_decoder_forward.1} parent=1 // pred_region
      _
    $region41: #{lstm_decoder_forward.1} parent=1 // pred_fallthru
      _
    // Predicated region
    $region42: #{lstm_decoder_forward.1} parent=1 // pred_check
      _
    $region43: #{lstm_decoder_forward.1} parent=1 // pred_check_branch
      %43 = sbr.rel (0) target = $region45
    $region44: #{lstm_decoder_forward.1} parent=1 // pred_region
      _
    $region45: #{lstm_decoder_forward.1} parent=1 // pred_fallthru
      _
    // Predicated region
    $region46: #{lstm_decoder_forward.1} parent=1 // pred_check
      _
    $region47: #{lstm_decoder_forward.1} parent=1 // pred_check_branch
      %45 = sbr.rel (0) target = $region49
    $region48: #{lstm_decoder_forward.1} parent=1 // pred_region
      _
    $region49: #{lstm_decoder_forward.1} parent=1 // pred_fallthru
      _
    // Predicated region
    $region50: #{lstm_decoder_forward.1} parent=1 // pred_check
      _
    $region51: #{lstm_decoder_forward.1} parent=1 // pred_check_branch
      %47 = sbr.rel (0) target = $region53
    $region52: #{lstm_decoder_forward.1} parent=1 // pred_region
      _
    $region53: #{lstm_decoder_forward.1} parent=1 // pred_fallthru
      _
    %v48 = vld [vmem:[%s1] sm:$0xff]
    %v49 = vld [vmem:[%s1 + $0x8] sm:$0xff]
    %v50 = vld [vmem:[%s1 + $0x10] sm:$0xff]
    %v51 = vld [vmem:[%s1 + $0x18] sm:$0xff]
    %v52 = vld [vmem:[%s1 + $0x20] sm:$0xff]
    %v53 = vld [vmem:[%s1 + $0x28] sm:$0xff]
    %v54 = vld [vmem:[%s1 + $0x30] sm:$0xff]
    %v55 = vld [vmem:[%s1 + $0x38] sm:$0xff]
    %v56 = vld [vmem:[%s5] sm:$0xff]
    %v57 = vld [vmem:[%s5 + $0x8] sm:$0xff]
    %v58 = vld [vmem:[%s5 + $0x10] sm:$0xff]
    %v59 = vld [vmem:[%s5 + $0x18] sm:$0xff]
    %v60 = vld [vmem:[%s5 + $0x20] sm:$0xff]
    %v61 = vld [vmem:[%s5 + $0x28] sm:$0xff]
    %v62 = vld [vmem:[%s5 + $0x30] sm:$0xff]
    %v63 = vld [vmem:[%s5 + $0x38] sm:$0xff]
    %v64 = vld [vmem:[%s5 + $0x40] sm:$0xff]
    %v65 = vld [vmem:[%s5 + $0x48] sm:$0xff]
    %v66 = vld [vmem:[%s5 + $0x50] sm:$0xff]
    %v67 = vld [vmem:[%s5 + $0x58] sm:$0xff]
    %v68 = vld [vmem:[%s5 + $0x60] sm:$0xff]
    %v69 = vld [vmem:[%s5 + $0x68] sm:$0xff]
    %v70 = vld [vmem:[%s5 + $0x70] sm:$0xff]
    %v71 = vld [vmem:[%s5 + $0x78] sm:$0xff]
    %v72 = vld [vmem:[%s5 + $0x80] sm:$0xff]
    %v73 = vld [vmem:[%s5 + $0x88] sm:$0xff]
    %v74 = vld [vmem:[%s5 + $0x90] sm:$0xff]
    %v75 = vld [vmem:[%s5 + $0x98] sm:$0xff]
    %v76 = vld [vmem:[%s5 + $0xa0] sm:$0xff]
    %v77 = vld [vmem:[%s5 + $0xa8] sm:$0xff]
    %v78 = vld [vmem:[%s5 + $0xb0] sm:$0xff]
    %v79 = vld [vmem:[%s5 + $0xb8] sm:$0xff]
    %v80 = vld [vmem:[%s5 + $0xc0] sm:$0xff]
    %v81 = vld [vmem:[%s5 + $0xc8] sm:$0xff]
    %v82 = vld [vmem:[%s5 + $0xd0] sm:$0xff]
    %v83 = vld [vmem:[%s5 + $0xd8] sm:$0xff]
    %v84 = vld [vmem:[%s5 + $0xe0] sm:$0xff]
    %v85 = vld [vmem:[%s5 + $0xe8] sm:$0xff]
    %v86 = vld [vmem:[%s5 + $0xf0] sm:$0xff]
    %v87 = vld [vmem:[%s5 + $0xf8] sm:$0xff]
    %v88 = vld [vmem:[%s5 + $0x100] sm:$0xff]
    %v89 = vld [vmem:[%s5 + $0x108] sm:$0xff]
    %v90 = vld [vmem:[%s5 + $0x110] sm:$0xff]
    %v91 = vld [vmem:[%s5 + $0x118] sm:$0xff]
    %v92 = vld [vmem:[%s5 + $0x120] sm:$0xff]
    %v93 = vld [vmem:[%s5 + $0x128] sm:$0xff]
    %v94 = vld [vmem:[%s5 + $0x130] sm:$0xff]
    %v95 = vld [vmem:[%s5 + $0x138] sm:$0xff]
    %v96 = vld [vmem:[%s5 + $0x140] sm:$0xff]
    %v97 = vld [vmem:[%s5 + $0x148] sm:$0xff]
    %v98 = vld [vmem:[%s5 + $0x150] sm:$0xff]
    %v99 = vld [vmem:[%s5 + $0x158] sm:$0xff]
    %v100 = vld [vmem:[%s5 + $0x160] sm:$0xff]
    %v101 = vld [vmem:[%s5 + $0x168] sm:$0xff]
    %v102 = vld [vmem:[%s5 + $0x170] sm:$0xff]
    %v103 = vld [vmem:[%s5 + $0x178] sm:$0xff]
    %v104 = vld [vmem:[%s5 + $0x180] sm:$0xff]
    %v105 = vld [vmem:[%s5 + $0x188] sm:$0xff]
    %v106 = vld [vmem:[%s5 + $0x190] sm:$0xff]
    %v107 = vld [vmem:[%s5 + $0x198] sm:$0xff]
    %v108 = vld [vmem:[%s5 + $0x1a0] sm:$0xff]
    %v109 = vld [vmem:[%s5 + $0x1a8] sm:$0xff]
    %v110 = vld [vmem:[%s5 + $0x1b0] sm:$0xff]
    %v111 = vld [vmem:[%s5 + $0x1b8] sm:$0xff]
    %v112 = vld [vmem:[%s5 + $0x1c0] sm:$0xff]
    %v113 = vld [vmem:[%s5 + $0x1c8] sm:$0xff]
    %v114 = vld [vmem:[%s5 + $0x1d0] sm:$0xff]
    %v115 = vld [vmem:[%s5 + $0x1d8] sm:$0xff]
    %v116 = vld [vmem:[%s5 + $0x1e0] sm:$0xff]
    %v117 = vld [vmem:[%s5 + $0x1e8] sm:$0xff]
    %v118 = vld [vmem:[%s5 + $0x1f0] sm:$0xff]
    %v119 = vld [vmem:[%s5 + $0x1f8] sm:$0xff]
    %v120 = vld [vmem:[%s6] sm:$0xff]
    %v121 = vld [vmem:[%s6 + $0x8] sm:$0xff]
    %v122 = vld [vmem:[%s6 + $0x10] sm:$0xff]
    %v123 = vld [vmem:[%s6 + $0x18] sm:$0xff]
    %v124 = vld [vmem:[%s6 + $0x20] sm:$0xff]
    %v125 = vld [vmem:[%s6 + $0x28] sm:$0xff]
    %v126 = vld [vmem:[%s6 + $0x30] sm:$0xff]
    %v127 = vld [vmem:[%s6 + $0x38] sm:$0xff]
    %v128 = vld [vmem:[%s6 + $0x40] sm:$0xff]
    %v129 = vld [vmem:[%s6 + $0x48] sm:$0xff]
    %v130 = vld [vmem:[%s6 + $0x50] sm:$0xff]
    %v131 = vld [vmem:[%s6 + $0x58] sm:$0xff]
    %v132 = vld [vmem:[%s6 + $0x60] sm:$0xff]
    %v133 = vld [vmem:[%s6 + $0x68] sm:$0xff]
    %v134 = vld [vmem:[%s6 + $0x70] sm:$0xff]
    %v135 = vld [vmem:[%s6 + $0x78] sm:$0xff]
    %v136 = vld [vmem:[%s6 + $0x80] sm:$0xff]
    %v137 = vld [vmem:[%s6 + $0x88] sm:$0xff]
    %v138 = vld [vmem:[%s6 + $0x90] sm:$0xff]
    %v139 = vld [vmem:[%s6 + $0x98] sm:$0xff]
    %v140 = vld [vmem:[%s6 + $0xa0] sm:$0xff]
    %v141 = vld [vmem:[%s6 + $0xa8] sm:$0xff]
    %v142 = vld [vmem:[%s6 + $0xb0] sm:$0xff]
    %v143 = vld [vmem:[%s6 + $0xb8] sm:$0xff]
    %v144 = vld [vmem:[%s6 + $0xc0] sm:$0xff]
    %v145 = vld [vmem:[%s6 + $0xc8] sm:$0xff]
    %v146 = vld [vmem:[%s6 + $0xd0] sm:$0xff]
    %v147 = vld [vmem:[%s6 + $0xd8] sm:$0xff]
    %v148 = vld [vmem:[%s6 + $0xe0] sm:$0xff]
    %v149 = vld [vmem:[%s6 + $0xe8] sm:$0xff]
    %v150 = vld [vmem:[%s6 + $0xf0] sm:$0xff]
    %v151 = vld [vmem:[%s6 + $0xf8] sm:$0xff]
    %v152 = vld [vmem:[%s6 + $0x100] sm:$0xff]
    %v153 = vld [vmem:[%s6 + $0x108] sm:$0xff]
    %v154 = vld [vmem:[%s6 + $0x110] sm:$0xff]
    %v155 = vld [vmem:[%s6 + $0x118] sm:$0xff]
    %v156 = vld [vmem:[%s6 + $0x120] sm:$0xff]
    %v157 = vld [vmem:[%s6 + $0x128] sm:$0xff]
    %v158 = vld [vmem:[%s6 + $0x130] sm:$0xff]
    %v159 = vld [vmem:[%s6 + $0x138] sm:$0xff]
    %v160 = vld [vmem:[%s6 + $0x140] sm:$0xff]
    %v161 = vld [vmem:[%s6 + $0x148] sm:$0xff]
    %v162 = vld [vmem:[%s6 + $0x150] sm:$0xff]
    %v163 = vld [vmem:[%s6 + $0x158] sm:$0xff]
    %v164 = vld [vmem:[%s6 + $0x160] sm:$0xff]
    %v165 = vld [vmem:[%s6 + $0x168] sm:$0xff]
    %v166 = vld [vmem:[%s6 + $0x170] sm:$0xff]
    %v167 = vld [vmem:[%s6 + $0x178] sm:$0xff]
    %v168 = vld [vmem:[%s6 + $0x180] sm:$0xff]
    %v169 = vld [vmem:[%s6 + $0x188] sm:$0xff]
    %v170 = vld [vmem:[%s6 + $0x190] sm:$0xff]
    %v171 = vld [vmem:[%s6 + $0x198] sm:$0xff]
    %v172 = vld [vmem:[%s6 + $0x1a0] sm:$0xff]
    %v173 = vld [vmem:[%s6 + $0x1a8] sm:$0xff]
    %v174 = vld [vmem:[%s6 + $0x1b0] sm:$0xff]
    %v175 = vld [vmem:[%s6 + $0x1b8] sm:$0xff]
    %v176 = vld [vmem:[%s6 + $0x1c0] sm:$0xff]
    %v177 = vld [vmem:[%s6 + $0x1c8] sm:$0xff]
    %v178 = vld [vmem:[%s6 + $0x1d0] sm:$0xff]
    %v179 = vld [vmem:[%s6 + $0x1d8] sm:$0xff]
    %v180 = vld [vmem:[%s6 + $0x1e0] sm:$0xff]
    %v181 = vld [vmem:[%s6 + $0x1e8] sm:$0xff]
    %v182 = vld [vmem:[%s6 + $0x1f0] sm:$0xff]
    %v183 = vld [vmem:[%s6 + $0x1f8] sm:$0xff]
    %v184 = vld [vmem:[%s8] sm:$0xff]
    %v185 = vld [vmem:[%s8 + $0x8] sm:$0xff]
    %v186 = vld [vmem:[%s8 + $0x10] sm:$0xff]
    %v187 = vld [vmem:[%s8 + $0x18] sm:$0xff]
    %v188 = vld [vmem:[%s8 + $0x20] sm:$0xff]
    %v189 = vld [vmem:[%s8 + $0x28] sm:$0xff]
    %v190 = vld [vmem:[%s8 + $0x30] sm:$0xff]
    %v191 = vld [vmem:[%s8 + $0x38] sm:$0xff]
    %v192 = vld [vmem:[%s8 + $0x40] sm:$0xff]
    %v193 = vld [vmem:[%s8 + $0x48] sm:$0xff]
    %v194 = vld [vmem:[%s8 + $0x50] sm:$0xff]
    %v195 = vld [vmem:[%s8 + $0x58] sm:$0xff]
    %v196 = vld [vmem:[%s8 + $0x60] sm:$0xff]
    %v197 = vld [vmem:[%s8 + $0x68] sm:$0xff]
    %v198 = vld [vmem:[%s8 + $0x70] sm:$0xff]
    %v199 = vld [vmem:[%s8 + $0x78] sm:$0xff]
    %v200 = vld [vmem:[%s9] sm:$0xff]
    %v201 = vld [vmem:[%s9 + $0x8] sm:$0xff]
    %v202 = vld [vmem:[%s9 + $0x10] sm:$0xff]
    %v203 = vld [vmem:[%s9 + $0x18] sm:$0xff]
    %v204 = vld [vmem:[%s9 + $0x20] sm:$0xff]
    %v205 = vld [vmem:[%s9 + $0x28] sm:$0xff]
    %v206 = vld [vmem:[%s9 + $0x30] sm:$0xff]
    %v207 = vld [vmem:[%s9 + $0x38] sm:$0xff]
    %v208 = vld [vmem:[%s9 + $0x40] sm:$0xff]
    %v209 = vld [vmem:[%s9 + $0x48] sm:$0xff]
    %v210 = vld [vmem:[%s9 + $0x50] sm:$0xff]
    %v211 = vld [vmem:[%s9 + $0x58] sm:$0xff]
    %v212 = vld [vmem:[%s9 + $0x60] sm:$0xff]
    %v213 = vld [vmem:[%s9 + $0x68] sm:$0xff]
    %v214 = vld [vmem:[%s9 + $0x70] sm:$0xff]
    %v215 = vld [vmem:[%s9 + $0x78] sm:$0xff]
    %v216 = vld [vmem:[%s10] sm:$0xff]
    %v217 = vld [vmem:[%s10 + $0x8] sm:$0xff]
    %v218 = vld [vmem:[%s10 + $0x10] sm:$0xff]
    %v219 = vld [vmem:[%s10 + $0x18] sm:$0xff]
    %v220 = vld [vmem:[%s10 + $0x20] sm:$0xff]
    %v221 = vld [vmem:[%s10 + $0x28] sm:$0xff]
    %v222 = vld [vmem:[%s10 + $0x30] sm:$0xff]
    %v223 = vld [vmem:[%s10 + $0x38] sm:$0xff]
    %v224 = vld [vmem:[%s10 + $0x40] sm:$0xff]
    %v225 = vld [vmem:[%s10 + $0x48] sm:$0xff]
    %v226 = vld [vmem:[%s10 + $0x50] sm:$0xff]
    %v227 = vld [vmem:[%s10 + $0x58] sm:$0xff]
    %v228 = vld [vmem:[%s10 + $0x60] sm:$0xff]
    %v229 = vld [vmem:[%s10 + $0x68] sm:$0xff]
    %v230 = vld [vmem:[%s10 + $0x70] sm:$0xff]
    %v231 = vld [vmem:[%s10 + $0x78] sm:$0xff]
    %v232 = vld [vmem:[%s11] sm:$0xff]
    %v233 = vld [vmem:[%s11 + $0x8] sm:$0xff]
    %v234 = vld [vmem:[%s11 + $0x10] sm:$0xff]
    %v235 = vld [vmem:[%s11 + $0x18] sm:$0xff]
    %v236 = vld [vmem:[%s11 + $0x20] sm:$0xff]
    %v237 = vld [vmem:[%s11 + $0x28] sm:$0xff]
    %v238 = vld [vmem:[%s11 + $0x30] sm:$0xff]
    %v239 = vld [vmem:[%s11 + $0x38] sm:$0xff]
    %v240 = vld [vmem:[%s11 + $0x40] sm:$0xff]
    %v241 = vld [vmem:[%s11 + $0x48] sm:$0xff]
    %v242 = vld [vmem:[%s11 + $0x50] sm:$0xff]
    %v243 = vld [vmem:[%s11 + $0x58] sm:$0xff]
    %v244 = vld [vmem:[%s11 + $0x60] sm:$0xff]
    %v245 = vld [vmem:[%s11 + $0x68] sm:$0xff]
    %v246 = vld [vmem:[%s11 + $0x70] sm:$0xff]
    %v247 = vld [vmem:[%s11 + $0x78] sm:$0xff]
    %v248 = vld [vmem:[%s11 + $0x80] sm:$0xff]
    %v249 = vld [vmem:[%s11 + $0x88] sm:$0xff]
    %v250 = vld [vmem:[%s11 + $0x90] sm:$0xff]
    %v251 = vld [vmem:[%s11 + $0x98] sm:$0xff]
    %v252 = vld [vmem:[%s11 + $0xa0] sm:$0xff]
    %v253 = vld [vmem:[%s11 + $0xa8] sm:$0xff]
    %v254 = vld [vmem:[%s11 + $0xb0] sm:$0xff]
    %v255 = vld [vmem:[%s11 + $0xb8] sm:$0xff]
    %v256 = vld [vmem:[%s11 + $0xc0] sm:$0xff]
    %v257 = vld [vmem:[%s11 + $0xc8] sm:$0xff]
    %v258 = vld [vmem:[%s11 + $0xd0] sm:$0xff]
    %v259 = vld [vmem:[%s11 + $0xd8] sm:$0xff]
    %v260 = vld [vmem:[%s11 + $0xe0] sm:$0xff]
    %v261 = vld [vmem:[%s11 + $0xe8] sm:$0xff]
    %v262 = vld [vmem:[%s11 + $0xf0] sm:$0xff]
    %v263 = vld [vmem:[%s11 + $0xf8] sm:$0xff]
    %v264 = vld [vmem:[%s12] sm:$0x3]
    %v266 = vlaneseq
    %v267 = vshrl.u32 %v266, 7
    %v268 = vsub.s32 0, %v267
    %v269 = vrot.slane %v264, %v268
    %v270 = vlaneseq
    %v271 = vshrl.u32 %v270, 7
    %v272 = vsub.s32 1, %v271
    %v273 = vrot.slane %v264, %v272
    %v276 = vld [vmem:[%s0] sm:$0xff]
    %v277 = vld [vmem:[%s0 + $0x8] sm:$0xff]
    %v278 = vld [vmem:[%s0 + $0x10] sm:$0xff]
    %v279 = vld [vmem:[%s0 + $0x18] sm:$0xff]
    %v280 = vld [vmem:[%s4] sm:$0xff]
    %v281 = vld [vmem:[%s4 + $0x8] sm:$0xff]
    %v282 = vld [vmem:[%s4 + $0x10] sm:$0xff]
    %v283 = vld [vmem:[%s4 + $0x18] sm:$0xff]
    %v284 = vld [vmem:[%s4 + $0x20] sm:$0xff]
    %v285 = vld [vmem:[%s4 + $0x28] sm:$0xff]
    %v286 = vld [vmem:[%s4 + $0x30] sm:$0xff]
    %v287 = vld [vmem:[%s4 + $0x38] sm:$0xff]
    %v288 = vld [vmem:[%s4 + $0x40] sm:$0xff]
    %v289 = vld [vmem:[%s4 + $0x48] sm:$0xff]
    %v290 = vld [vmem:[%s4 + $0x50] sm:$0xff]
    %v291 = vld [vmem:[%s4 + $0x58] sm:$0xff]
    %v292 = vld [vmem:[%s4 + $0x60] sm:$0xff]
    %v293 = vld [vmem:[%s4 + $0x68] sm:$0xff]
    %v294 = vld [vmem:[%s4 + $0x70] sm:$0xff]
    %v295 = vld [vmem:[%s4 + $0x78] sm:$0xff]
    %v296 = vld [vmem:[%s4 + $0x80] sm:$0xff]
    %v297 = vld [vmem:[%s4 + $0x88] sm:$0xff]
    %v298 = vld [vmem:[%s4 + $0x90] sm:$0xff]
    %v299 = vld [vmem:[%s4 + $0x98] sm:$0xff]
    %v300 = vld [vmem:[%s4 + $0xa0] sm:$0xff]
    %v301 = vld [vmem:[%s4 + $0xa8] sm:$0xff]
    %v302 = vld [vmem:[%s4 + $0xb0] sm:$0xff]
    %v303 = vld [vmem:[%s4 + $0xb8] sm:$0xff]
    %v304 = vld [vmem:[%s4 + $0xc0] sm:$0xff]
    %v305 = vld [vmem:[%s4 + $0xc8] sm:$0xff]
    %v306 = vld [vmem:[%s4 + $0xd0] sm:$0xff]
    %v307 = vld [vmem:[%s4 + $0xd8] sm:$0xff]
    %v308 = vld [vmem:[%s4 + $0xe0] sm:$0xff]
    %v309 = vld [vmem:[%s4 + $0xe8] sm:$0xff]
    %v310 = vld [vmem:[%s4 + $0xf0] sm:$0xff]
    %v311 = vld [vmem:[%s4 + $0xf8] sm:$0xff]
    %v312 = vld [vmem:[%s4 + $0x100] sm:$0xff]
    %v313 = vld [vmem:[%s4 + $0x108] sm:$0xff]
    %v314 = vld [vmem:[%s4 + $0x110] sm:$0xff]
    %v315 = vld [vmem:[%s4 + $0x118] sm:$0xff]
    %v316 = vld [vmem:[%s4 + $0x120] sm:$0xff]
    %v317 = vld [vmem:[%s4 + $0x128] sm:$0xff]
    %v318 = vld [vmem:[%s4 + $0x130] sm:$0xff]
    %v319 = vld [vmem:[%s4 + $0x138] sm:$0xff]
    %v320 = vld [vmem:[%s4 + $0x140] sm:$0xff]
    %v321 = vld [vmem:[%s4 + $0x148] sm:$0xff]
    %v322 = vld [vmem:[%s4 + $0x150] sm:$0xff]
    %v323 = vld [vmem:[%s4 + $0x158] sm:$0xff]
    %v324 = vld [vmem:[%s4 + $0x160] sm:$0xff]
    %v325 = vld [vmem:[%s4 + $0x168] sm:$0xff]
    %v326 = vld [vmem:[%s4 + $0x170] sm:$0xff]
    %v327 = vld [vmem:[%s4 + $0x178] sm:$0xff]
    %v328 = vld [vmem:[%s4 + $0x180] sm:$0xff]
    %v329 = vld [vmem:[%s4 + $0x188] sm:$0xff]
    %v330 = vld [vmem:[%s4 + $0x190] sm:$0xff]
    %v331 = vld [vmem:[%s4 + $0x198] sm:$0xff]
    %v332 = vld [vmem:[%s4 + $0x1a0] sm:$0xff]
    %v333 = vld [vmem:[%s4 + $0x1a8] sm:$0xff]
    %v334 = vld [vmem:[%s4 + $0x1b0] sm:$0xff]
    %v335 = vld [vmem:[%s4 + $0x1b8] sm:$0xff]
    %v336 = vld [vmem:[%s4 + $0x1c0] sm:$0xff]
    %v337 = vld [vmem:[%s4 + $0x1c8] sm:$0xff]
    %v338 = vld [vmem:[%s4 + $0x1d0] sm:$0xff]
    %v339 = vld [vmem:[%s4 + $0x1d8] sm:$0xff]
    %v340 = vld [vmem:[%s4 + $0x1e0] sm:$0xff]
    %v341 = vld [vmem:[%s4 + $0x1e8] sm:$0xff]
    %v342 = vld [vmem:[%s4 + $0x1f0] sm:$0xff]
    %v343 = vld [vmem:[%s4 + $0x1f8] sm:$0xff]
    %v344 = vld [vmem:[%s7] sm:$0xf]
    %v346 = vlaneseq
    %v347 = vshrl.u32 %v346, 7
    %v348 = vsub.s32 0, %v347
    %v349 = vrot.slane %v344, %v348
    %v350 = vlaneseq
    %v351 = vshrl.u32 %v350, 7
    %v352 = vsub.s32 1, %v351
    %v353 = vrot.slane %v344, %v352
    %v354 = vlaneseq
    %v355 = vshrl.u32 %v354, 7
    %v356 = vsub.s32 2, %v355
    %v357 = vrot.slane %v344, %v356
    %v358 = vlaneseq
    %v359 = vshrl.u32 %v358, 7
    %v360 = vsub.s32 3, %v359
    %v361 = vrot.slane %v344, %v360
    %366 = vmatprep.subr.mxu0 %v341
    %367 = vmatpush1.msra.mxu0 %v340
    %368 = vmatprep.subr.mxu0 %v337
    %369 = vmatpush1.msra.mxu0 %v336
    %370 = vmatprep.subr.mxu0 %v333
    %371 = vmatpush1.msra.mxu0 %v332
    %372 = vmatprep.subr.mxu0 %v329
    %373 = vmatpush1.msra.mxu0 %v328
    %374 = vmatprep.subr.mxu0 %v325
    %375 = vmatpush1.msra.mxu0 %v324
    %376 = vmatprep.subr.mxu0 %v321
    %377 = vmatpush1.msra.mxu0 %v320
    %378 = vmatprep.subr.mxu0 %v317
    %379 = vmatpush1.msra.mxu0 %v316
    %380 = vmatprep.subr.mxu0 %v313
    %381 = vmatpush1.msra.mxu0 %v312
    %382 = vmatprep.subr.mxu0 %v309
    %383 = vmatpush1.msra.mxu0 %v308
    %384 = vmatprep.subr.mxu0 %v305
    %385 = vmatpush1.msra.mxu0 %v304
    %386 = vmatprep.subr.mxu0 %v301
    %387 = vmatpush1.msra.mxu0 %v300
    %388 = vmatprep.subr.mxu0 %v297
    %389 = vmatpush1.msra.mxu0 %v296
    %390 = vmatprep.subr.mxu0 %v293
    %391 = vmatpush1.msra.mxu0 %v292
    %392 = vmatprep.subr.mxu0 %v289
    %393 = vmatpush1.msra.mxu0 %v288
    %394 = vmatprep.subr.mxu0 %v285
    %395 = vmatpush1.msra.mxu0 %v284
    %396 = vmatprep.subr.mxu0 %v281
    %397 = vmatpush1.msra.mxu0 %v280
    %398 = vmatprep.subr.mxu0 0.0
    %399 = vmatpush2.msra.mxu0 0.0
    %400 = vmatprep.subr.mxu0 0.0
    %401 = vmatpush2.msra.mxu0 0.0
    %402 = vmatprep.subr.mxu0 0.0
    %403 = vmatpush2.msra.mxu0 0.0
    %404 = vmatprep.subr.mxu0 0.0
    %405 = vmatpush2.msra.mxu0 0.0
    %406 = vmatprep.subr.mxu0 0.0
    %407 = vmatpush2.msra.mxu0 0.0
    %408 = vmatprep.subr.mxu0 0.0
    %409 = vmatpush2.msra.mxu0 0.0
    %410 = vmatprep.subr.mxu0 0.0
    %411 = vmatpush2.msra.mxu0 0.0
    %412 = vmatprep.subr.mxu0 0.0
    %413 = vmatpush2.msra.mxu0 0.0
    %414 = vmatprep.subr.mxu0 0.0
    %415 = vmatpush2.msra.mxu0 0.0
    %416 = vmatprep.subr.mxu0 0.0
    %417 = vmatpush2.msra.mxu0 0.0
    %418 = vmatprep.subr.mxu0 0.0
    %419 = vmatpush2.msra.mxu0 0.0
    %420 = vmatprep.subr.mxu0 0.0
    %421 = vmatpush2.msra.mxu0 0.0
    %422 = vmatprep.subr.mxu0 0.0
    %423 = vmatpush2.msra.mxu0 0.0
    %424 = vmatprep.subr.mxu0 0.0
    %425 = vmatpush2.msra.mxu0 0.0
    %426 = vmatprep.subr.mxu0 0.0
    %427 = vmatpush2.msra.mxu0 0.0
    %428 = vmatprep.subr.mxu0 0.0
    %429 = vmatpush2.msra.mxu0 0.0
    %430 = vmatprep.mubr.f32.mxu0 0.0
    %431 = vmatmul.mubr.f32.gmra.mxu0 %v276
    %v432 = vpop.f32.mrf.mxu0
    %v433 = vadd.f32 %v349, %v432
    %v434 = vpop.f32.mrf.mxu0
    %v435 = vadd.f32 %v353, %v434
    %436 = vmatprep.mubr.f32.mxu0 0.0
    %437 = vmatmul.mubr.f32.gmra.mxu0 %v277
    %v438 = vpop.f32.mrf.mxu0
    %v439 = vadd.f32 %v349, %v438
    %v440 = vpop.f32.mrf.mxu0
    %v441 = vadd.f32 %v353, %v440
    %442 = vmatprep.mubr.f32.mxu0 0.0
    %443 = vmatmul.mubr.f32.gmra.mxu0 %v278
    %v444 = vpop.f32.mrf.mxu0
    %v445 = vadd.f32 %v349, %v444
    %v446 = vpop.f32.mrf.mxu0
    %v447 = vadd.f32 %v353, %v446
    %448 = vmatprep.mubr.f32.mxu0 0.0
    %449 = vmatmul.mubr.f32.gmra.mxu0 %v279
    %v450 = vpop.f32.mrf.mxu0
    %v451 = vadd.f32 %v349, %v450
    %v452 = vpop.f32.mrf.mxu0
    %v453 = vadd.f32 %v353, %v452
    %454 = vdwg.mxu0
    %455 = vmatprep.subr.mxu0 %v343
    %456 = vmatpush1.msra.mxu0 %v342
    %457 = vmatprep.subr.mxu0 %v339
    %458 = vmatpush1.msra.mxu0 %v338
    %459 = vmatprep.subr.mxu0 %v335
    %460 = vmatpush1.msra.mxu0 %v334
    %461 = vmatprep.subr.mxu0 %v331
    %462 = vmatpush1.msra.mxu0 %v330
    %463 = vmatprep.subr.mxu0 %v327
    %464 = vmatpush1.msra.mxu0 %v326
    %465 = vmatprep.subr.mxu0 %v323
    %466 = vmatpush1.msra.mxu0 %v322
    %467 = vmatprep.subr.mxu0 %v319
    %468 = vmatpush1.msra.mxu0 %v318
    %469 = vmatprep.subr.mxu0 %v315
    %470 = vmatpush1.msra.mxu0 %v314
    %471 = vmatprep.subr.mxu0 %v311
    %472 = vmatpush1.msra.mxu0 %v310
    %473 = vmatprep.subr.mxu0 %v307
    %474 = vmatpush1.msra.mxu0 %v306
    %475 = vmatprep.subr.mxu0 %v303
    %476 = vmatpush1.msra.mxu0 %v302
    %477 = vmatprep.subr.mxu0 %v299
    %478 = vmatpush1.msra.mxu0 %v298
    %479 = vmatprep.subr.mxu0 %v295
    %480 = vmatpush1.msra.mxu0 %v294
    %481 = vmatprep.subr.mxu0 %v291
    %482 = vmatpush1.msra.mxu0 %v290
    %483 = vmatprep.subr.mxu0 %v287
    %484 = vmatpush1.msra.mxu0 %v286
    %485 = vmatprep.subr.mxu0 %v283
    %486 = vmatpush1.msra.mxu0 %v282
    %487 = vmatprep.subr.mxu0 0.0
    %488 = vmatpush2.msra.mxu0 0.0
    %489 = vmatprep.subr.mxu0 0.0
    %490 = vmatpush2.msra.mxu0 0.0
    %491 = vmatprep.subr.mxu0 0.0
    %492 = vmatpush2.msra.mxu0 0.0
    %493 = vmatprep.subr.mxu0 0.0
    %494 = vmatpush2.msra.mxu0 0.0
    %495 = vmatprep.subr.mxu0 0.0
    %496 = vmatpush2.msra.mxu0 0.0
    %497 = vmatprep.subr.mxu0 0.0
    %498 = vmatpush2.msra.mxu0 0.0
    %499 = vmatprep.subr.mxu0 0.0
    %500 = vmatpush2.msra.mxu0 0.0
    %501 = vmatprep.subr.mxu0 0.0
    %502 = vmatpush2.msra.mxu0 0.0
    %503 = vmatprep.subr.mxu0 0.0
    %504 = vmatpush2.msra.mxu0 0.0
    %505 = vmatprep.subr.mxu0 0.0
    %506 = vmatpush2.msra.mxu0 0.0
    %507 = vmatprep.subr.mxu0 0.0
    %508 = vmatpush2.msra.mxu0 0.0
    %509 = vmatprep.subr.mxu0 0.0
    %510 = vmatpush2.msra.mxu0 0.0
    %511 = vmatprep.subr.mxu0 0.0
    %512 = vmatpush2.msra.mxu0 0.0
    %513 = vmatprep.subr.mxu0 0.0
    %514 = vmatpush2.msra.mxu0 0.0
    %515 = vmatprep.subr.mxu0 0.0
    %516 = vmatpush2.msra.mxu0 0.0
    %517 = vmatprep.subr.mxu0 0.0
    %518 = vmatpush2.msra.mxu0 0.0
    %519 = vmatprep.mubr.f32.mxu0 0.0
    %520 = vmatmul.mubr.f32.gmra.mxu0 %v276
    %v521 = vpop.f32.mrf.mxu0
    %v522 = vadd.f32 %v357, %v521
    %v523 = vpop.f32.mrf.mxu0
    %v524 = vadd.f32 %v361, %v523
    %525 = vmatprep.mubr.f32.mxu0 0.0
    %526 = vmatmul.mubr.f32.gmra.mxu0 %v277
    %v527 = vpop.f32.mrf.mxu0
    %v528 = vadd.f32 %v357, %v527
    %v529 = vpop.f32.mrf.mxu0
    %v530 = vadd.f32 %v361, %v529
    %531 = vmatprep.mubr.f32.mxu0 0.0
    %532 = vmatmul.mubr.f32.gmra.mxu0 %v278
    %v533 = vpop.f32.mrf.mxu0
    %v534 = vadd.f32 %v357, %v533
    %v535 = vpop.f32.mrf.mxu0
    %v536 = vadd.f32 %v361, %v535
    %537 = vmatprep.mubr.f32.mxu0 0.0
    %538 = vmatmul.mubr.f32.gmra.mxu0 %v279
    %v539 = vpop.f32.mrf.mxu0
    %v540 = vadd.f32 %v357, %v539
    %v541 = vpop.f32.mrf.mxu0
    %v542 = vadd.f32 %v361, %v541
    %543 = vdwg.mxu0
    %v544 = vld [vmem:[%s2] sm:$0xf]
    %v545 = vld [vmem:[%s3] sm:$0xf]
    %546 = vmatprep.subr.mxu0 %v117
    %547 = vmatpush1.msra.mxu0 %v116
    %548 = vmatprep.subr.mxu0 %v113
    %549 = vmatpush1.msra.mxu0 %v112
    %550 = vmatprep.subr.mxu0 %v109
    %551 = vmatpush1.msra.mxu0 %v108
    %552 = vmatprep.subr.mxu0 %v105
    %553 = vmatpush1.msra.mxu0 %v104
    %554 = vmatprep.subr.mxu0 %v101
    %555 = vmatpush1.msra.mxu0 %v100
    %556 = vmatprep.subr.mxu0 %v97
    %557 = vmatpush1.msra.mxu0 %v96
    %558 = vmatprep.subr.mxu0 %v93
    %559 = vmatpush1.msra.mxu0 %v92
    %560 = vmatprep.subr.mxu0 %v89
    %561 = vmatpush1.msra.mxu0 %v88
    %562 = vmatprep.subr.mxu0 %v85
    %563 = vmatpush1.msra.mxu0 %v84
    %564 = vmatprep.subr.mxu0 %v81
    %565 = vmatpush1.msra.mxu0 %v80
    %566 = vmatprep.subr.mxu0 %v77
    %567 = vmatpush1.msra.mxu0 %v76
    %568 = vmatprep.subr.mxu0 %v73
    %569 = vmatpush1.msra.mxu0 %v72
    %570 = vmatprep.subr.mxu0 %v69
    %571 = vmatpush1.msra.mxu0 %v68
    %572 = vmatprep.subr.mxu0 %v65
    %573 = vmatpush1.msra.mxu0 %v64
    %574 = vmatprep.subr.mxu0 %v61
    %575 = vmatpush1.msra.mxu0 %v60
    %576 = vmatprep.subr.mxu0 %v57
    %577 = vmatpush1.msra.mxu0 %v56
    %578 = vmatprep.subr.mxu0 0.0
    %579 = vmatpush2.msra.mxu0 0.0
    %580 = vmatprep.subr.mxu0 0.0
    %581 = vmatpush2.msra.mxu0 0.0
    %582 = vmatprep.subr.mxu0 0.0
    %583 = vmatpush2.msra.mxu0 0.0
    %584 = vmatprep.subr.mxu0 0.0
    %585 = vmatpush2.msra.mxu0 0.0
    %586 = vmatprep.subr.mxu0 0.0
    %587 = vmatpush2.msra.mxu0 0.0
    %588 = vmatprep.subr.mxu0 0.0
    %589 = vmatpush2.msra.mxu0 0.0
    %590 = vmatprep.subr.mxu0 0.0
    %591 = vmatpush2.msra.mxu0 0.0
    %592 = vmatprep.subr.mxu0 0.0
    %593 = vmatpush2.msra.mxu0 0.0
    %594 = vmatprep.subr.mxu0 0.0
    %595 = vmatpush2.msra.mxu0 0.0
    %596 = vmatprep.subr.mxu0 0.0
    %597 = vmatpush2.msra.mxu0 0.0
    %598 = vmatprep.subr.mxu0 0.0
    %599 = vmatpush2.msra.mxu0 0.0
    %600 = vmatprep.subr.mxu0 0.0
    %601 = vmatpush2.msra.mxu0 0.0
    %602 = vmatprep.subr.mxu0 0.0
    %603 = vmatpush2.msra.mxu0 0.0
    %604 = vmatprep.subr.mxu0 0.0
    %605 = vmatpush2.msra.mxu0 0.0
    %606 = vmatprep.subr.mxu0 0.0
    %607 = vmatpush2.msra.mxu0 0.0
    %608 = vmatprep.subr.mxu0 0.0
    %609 = vmatpush2.msra.mxu0 0.0
    %610 = vmatprep.mubr.f32.mxu0 0.0
    %611 = vmatmul.mubr.f32.gmra.mxu0 0.0
    %v612 = vpop.f32.mrf.mxu0
    %v613 = vadd.f32 0.0, %v612
    %v614 = vpop.f32.mrf.mxu0
    %v615 = vadd.f32 0.0, %v614
    %616 = vdwg.mxu0
    %617 = vmatprep.subr.mxu0 %v119
    %618 = vmatpush1.msra.mxu0 %v118
    %619 = vmatprep.subr.mxu0 %v115
    %620 = vmatpush1.msra.mxu0 %v114
    %621 = vmatprep.subr.mxu0 %v111
    %622 = vmatpush1.msra.mxu0 %v110
    %623 = vmatprep.subr.mxu0 %v107
    %624 = vmatpush1.msra.mxu0 %v106
    %625 = vmatprep.subr.mxu0 %v103
    %626 = vmatpush1.msra.mxu0 %v102
    %627 = vmatprep.subr.mxu0 %v99
    %628 = vmatpush1.msra.mxu0 %v98
    %629 = vmatprep.subr.mxu0 %v95
    %630 = vmatpush1.msra.mxu0 %v94
    %631 = vmatprep.subr.mxu0 %v91
    %632 = vmatpush1.msra.mxu0 %v90
    %633 = vmatprep.subr.mxu0 %v87
    %634 = vmatpush1.msra.mxu0 %v86
    %635 = vmatprep.subr.mxu0 %v83
    %636 = vmatpush1.msra.mxu0 %v82
    %637 = vmatprep.subr.mxu0 %v79
    %638 = vmatpush1.msra.mxu0 %v78
    %639 = vmatprep.subr.mxu0 %v75
    %640 = vmatpush1.msra.mxu0 %v74
    %641 = vmatprep.subr.mxu0 %v71
    %642 = vmatpush1.msra.mxu0 %v70
    %643 = vmatprep.subr.mxu0 %v67
    %644 = vmatpush1.msra.mxu0 %v66
    %645 = vmatprep.subr.mxu0 %v63
    %646 = vmatpush1.msra.mxu0 %v62
    %647 = vmatprep.subr.mxu0 %v59
    %648 = vmatpush1.msra.mxu0 %v58
    %649 = vmatprep.subr.mxu0 0.0
    %650 = vmatpush2.msra.mxu0 0.0
    %651 = vmatprep.subr.mxu0 0.0
    %652 = vmatpush2.msra.mxu0 0.0
    %653 = vmatprep.subr.mxu0 0.0
    %654 = vmatpush2.msra.mxu0 0.0
    %655 = vmatprep.subr.mxu0 0.0
    %656 = vmatpush2.msra.mxu0 0.0
    %657 = vmatprep.subr.mxu0 0.0
    %658 = vmatpush2.msra.mxu0 0.0
    %659 = vmatprep.subr.mxu0 0.0
    %660 = vmatpush2.msra.mxu0 0.0
    %661 = vmatprep.subr.mxu0 0.0
    %662 = vmatpush2.msra.mxu0 0.0
    %663 = vmatprep.subr.mxu0 0.0
    %664 = vmatpush2.msra.mxu0 0.0
    %665 = vmatprep.subr.mxu0 0.0
    %666 = vmatpush2.msra.mxu0 0.0
    %667 = vmatprep.subr.mxu0 0.0
    %668 = vmatpush2.msra.mxu0 0.0
    %669 = vmatprep.subr.mxu0 0.0
    %670 = vmatpush2.msra.mxu0 0.0
    %671 = vmatprep.subr.mxu0 0.0
    %672 = vmatpush2.msra.mxu0 0.0
    %673 = vmatprep.subr.mxu0 0.0
    %674 = vmatpush2.msra.mxu0 0.0
    %675 = vmatprep.subr.mxu0 0.0
    %676 = vmatpush2.msra.mxu0 0.0
    %677 = vmatprep.subr.mxu0 0.0
    %678 = vmatpush2.msra.mxu0 0.0
    %679 = vmatprep.subr.mxu0 0.0
    %680 = vmatpush2.msra.mxu0 0.0
    %681 = vmatprep.mubr.f32.mxu0 0.0
    %682 = vmatmul.mubr.f32.gmra.mxu0 0.0
    %v683 = vpop.f32.mrf.mxu0
    %v684 = vadd.f32 0.0, %v683
    %v685 = vpop.f32.mrf.mxu0
    %v686 = vadd.f32 0.0, %v685
    %687 = vdwg.mxu0
    %v688 = vadd.f32 %v433, %v613
    %v689 = vadd.f32 %v435, %v615
    %v690 = vadd.f32 %v522, %v684
    %v691 = vadd.f32 %v524, %v686
    %692 = vmatprep.subr.mxu0 %v181
    %693 = vmatpush1.msra.mxu0 %v180
    %694 = vmatprep.subr.mxu0 %v177
    %695 = vmatpush1.msra.mxu0 %v176
    %696 = vmatprep.subr.mxu0 %v173
    %697 = vmatpush1.msra.mxu0 %v172
    %698 = vmatprep.subr.mxu0 %v169
    %699 = vmatpush1.msra.mxu0 %v168
    %700 = vmatprep.subr.mxu0 %v165
    %701 = vmatpush1.msra.mxu0 %v164
    %702 = vmatprep.subr.mxu0 %v161
    %703 = vmatpush1.msra.mxu0 %v160
    %704 = vmatprep.subr.mxu0 %v157
    %705 = vmatpush1.msra.mxu0 %v156
    %706 = vmatprep.subr.mxu0 %v153
    %707 = vmatpush1.msra.mxu0 %v152
    %708 = vmatprep.subr.mxu0 %v149
    %709 = vmatpush1.msra.mxu0 %v148
    %710 = vmatprep.subr.mxu0 %v145
    %711 = vmatpush1.msra.mxu0 %v144
    %712 = vmatprep.subr.mxu0 %v141
    %713 = vmatpush1.msra.mxu0 %v140
    %714 = vmatprep.subr.mxu0 %v137
    %715 = vmatpush1.msra.mxu0 %v136
    %716 = vmatprep.subr.mxu0 %v133
    %717 = vmatpush1.msra.mxu0 %v132
    %718 = vmatprep.subr.mxu0 %v129
    %719 = vmatpush1.msra.mxu0 %v128
    %720 = vmatprep.subr.mxu0 %v125
    %721 = vmatpush1.msra.mxu0 %v124
    %722 = vmatprep.subr.mxu0 %v121
    %723 = vmatpush1.msra.mxu0 %v120
    %724 = vmatprep.subr.mxu0 0.0
    %725 = vmatpush2.msra.mxu0 0.0
    %726 = vmatprep.subr.mxu0 0.0
    %727 = vmatpush2.msra.mxu0 0.0
    %728 = vmatprep.subr.mxu0 0.0
    %729 = vmatpush2.msra.mxu0 0.0
    %730 = vmatprep.subr.mxu0 0.0
    %731 = vmatpush2.msra.mxu0 0.0
    %732 = vmatprep.subr.mxu0 0.0
    %733 = vmatpush2.msra.mxu0 0.0
    %734 = vmatprep.subr.mxu0 0.0
    %735 = vmatpush2.msra.mxu0 0.0
    %736 = vmatprep.subr.mxu0 0.0
    %737 = vmatpush2.msra.mxu0 0.0
    %738 = vmatprep.subr.mxu0 0.0
    %739 = vmatpush2.msra.mxu0 0.0
    %740 = vmatprep.subr.mxu0 0.0
    %741 = vmatpush2.msra.mxu0 0.0
    %742 = vmatprep.subr.mxu0 0.0
    %743 = vmatpush2.msra.mxu0 0.0
    %744 = vmatprep.subr.mxu0 0.0
    %745 = vmatpush2.msra.mxu0 0.0
    %746 = vmatprep.subr.mxu0 0.0
    %747 = vmatpush2.msra.mxu0 0.0
    %748 = vmatprep.subr.mxu0 0.0
    %749 = vmatpush2.msra.mxu0 0.0
    %750 = vmatprep.subr.mxu0 0.0
    %751 = vmatpush2.msra.mxu0 0.0
    %752 = vmatprep.subr.mxu0 0.0
    %753 = vmatpush2.msra.mxu0 0.0
    %754 = vmatprep.subr.mxu0 0.0
    %755 = vmatpush2.msra.mxu0 0.0
    %756 = vmatprep.mubr.f32.mxu0 0.0
    %757 = vmatmul.mubr.f32.gmra.mxu0 %v544
    %v758 = vpop.f32.mrf.mxu0
    %v759 = vadd.f32 0.0, %v758
    %v760 = vpop.f32.mrf.mxu0
    %v761 = vadd.f32 0.0, %v760
    %762 = vdwg.mxu0
    %763 = vmatprep.subr.mxu0 %v183
    %764 = vmatpush1.msra.mxu0 %v182
    %765 = vmatprep.subr.mxu0 %v179
    %766 = vmatpush1.msra.mxu0 %v178
    %767 = vmatprep.subr.mxu0 %v175
    %768 = vmatpush1.msra.mxu0 %v174
    %769 = vmatprep.subr.mxu0 %v171
    %770 = vmatpush1.msra.mxu0 %v170
    %771 = vmatprep.subr.mxu0 %v167
    %772 = vmatpush1.msra.mxu0 %v166
    %773 = vmatprep.subr.mxu0 %v163
    %774 = vmatpush1.msra.mxu0 %v162
    %775 = vmatprep.subr.mxu0 %v159
    %776 = vmatpush1.msra.mxu0 %v158
    %777 = vmatprep.subr.mxu0 %v155
    %778 = vmatpush1.msra.mxu0 %v154
    %779 = vmatprep.subr.mxu0 %v151
    %780 = vmatpush1.msra.mxu0 %v150
    %781 = vmatprep.subr.mxu0 %v147
    %782 = vmatpush1.msra.mxu0 %v146
    %783 = vmatprep.subr.mxu0 %v143
    %784 = vmatpush1.msra.mxu0 %v142
    %785 = vmatprep.subr.mxu0 %v139
    %786 = vmatpush1.msra.mxu0 %v138
    %787 = vmatprep.subr.mxu0 %v135
    %788 = vmatpush1.msra.mxu0 %v134
    %789 = vmatprep.subr.mxu0 %v131
    %790 = vmatpush1.msra.mxu0 %v130
    %791 = vmatprep.subr.mxu0 %v127
    %792 = vmatpush1.msra.mxu0 %v126
    %793 = vmatprep.subr.mxu0 %v123
    %794 = vmatpush1.msra.mxu0 %v122
    %795 = vmatprep.subr.mxu0 0.0
    %796 = vmatpush2.msra.mxu0 0.0
    %797 = vmatprep.subr.mxu0 0.0
    %798 = vmatpush2.msra.mxu0 0.0
    %799 = vmatprep.subr.mxu0 0.0
    %800 = vmatpush2.msra.mxu0 0.0
    %801 = vmatprep.subr.mxu0 0.0
    %802 = vmatpush2.msra.mxu0 0.0
    %803 = vmatprep.subr.mxu0 0.0
    %804 = vmatpush2.msra.mxu0 0.0
    %805 = vmatprep.subr.mxu0 0.0
    %806 = vmatpush2.msra.mxu0 0.0
    %807 = vmatprep.subr.mxu0 0.0
    %808 = vmatpush2.msra.mxu0 0.0
    %809 = vmatprep.subr.mxu0 0.0
    %810 = vmatpush2.msra.mxu0 0.0
    %811 = vmatprep.subr.mxu0 0.0
    %812 = vmatpush2.msra.mxu0 0.0
    %813 = vmatprep.subr.mxu0 0.0
    %814 = vmatpush2.msra.mxu0 0.0
    %815 = vmatprep.subr.mxu0 0.0
    %816 = vmatpush2.msra.mxu0 0.0
    %817 = vmatprep.subr.mxu0 0.0
    %818 = vmatpush2.msra.mxu0 0.0
    %819 = vmatprep.subr.mxu0 0.0
    %820 = vmatpush2.msra.mxu0 0.0
    %821 = vmatprep.subr.mxu0 0.0
    %822 = vmatpush2.msra.mxu0 0.0
    %823 = vmatprep.subr.mxu0 0.0
    %824 = vmatpush2.msra.mxu0 0.0
    %825 = vmatprep.subr.mxu0 0.0
    %826 = vmatpush2.msra.mxu0 0.0
    %827 = vmatprep.mubr.f32.mxu0 0.0
    %828 = vmatmul.mubr.f32.gmra.mxu0 %v544
    %v829 = vpop.f32.mrf.mxu0
    %v830 = vadd.f32 0.0, %v829
    %v831 = vpop.f32.mrf.mxu0
    %v832 = vadd.f32 0.0, %v831
    %833 = vdwg.mxu0
    %v834 = vadd.f32 %v688, %v759
    %v835 = vadd.f32 %v689, %v761
    %v836 = vadd.f32 %v690, %v830
    %v837 = vadd.f32 %v691, %v832
    %v838 = vxor.u32 %v834, 2147483648
    %v839 = vmul.f32 %v838, 1.442695
    %v840 = vpow.pop %v839
    %v841 = vadd.f32 %v840, 1.0
    %v842 = vrcp.pop %v841
    %v843 = vmul.f32 1.0, %v842
    %v844 = vxor.u32 %v835, 2147483648
    %v845 = vmul.f32 %v844, 1.442695
    %v846 = vpow.pop %v845
    %v847 = vadd.f32 %v846, 1.0
    %v848 = vrcp.pop %v847
    %v849 = vmul.f32 1.0, %v848
    %v850 = vtanh.pop %v836
    %v851 = vxor.u32 %v837, 2147483648
    %v852 = vmul.f32 %v851, 1.442695
    %v853 = vpow.pop %v852
    %v854 = vadd.f32 %v853, 1.0
    %v855 = vrcp.pop %v854
    %v856 = vmul.f32 1.0, %v855
    %v857 = vmul.f32 %v849, %v545
    %v858 = vmul.f32 %v843, %v850
    %v859 = vadd.f32 %v857, %v858
    %v860 = vtanh.pop %v859
    %v861 = vmul.f32 %v856, %v860
    %862 = vmatprep.subr.mxu0 0.0
    %863 = vmatpush1.msra.mxu0 %v199
    %864 = vmatprep.subr.mxu0 0.0
    %865 = vmatpush1.msra.mxu0 %v198
    %866 = vmatprep.subr.mxu0 0.0
    %867 = vmatpush1.msra.mxu0 %v197
    %868 = vmatprep.subr.mxu0 0.0
    %869 = vmatpush1.msra.mxu0 %v196
    %870 = vmatprep.subr.mxu0 0.0
    %871 = vmatpush1.msra.mxu0 %v195
    %872 = vmatprep.subr.mxu0 0.0
    %873 = vmatpush1.msra.mxu0 %v194
    %874 = vmatprep.subr.mxu0 0.0
    %875 = vmatpush1.msra.mxu0 %v193
    %876 = vmatprep.subr.mxu0 0.0
    %877 = vmatpush1.msra.mxu0 %v192
    %878 = vmatprep.subr.mxu0 0.0
    %879 = vmatpush1.msra.mxu0 %v191
    %880 = vmatprep.subr.mxu0 0.0
    %881 = vmatpush1.msra.mxu0 %v190
    %882 = vmatprep.subr.mxu0 0.0
    %883 = vmatpush1.msra.mxu0 %v189
    %884 = vmatprep.subr.mxu0 0.0
    %885 = vmatpush1.msra.mxu0 %v188
    %886 = vmatprep.subr.mxu0 0.0
    %887 = vmatpush1.msra.mxu0 %v187
    %888 = vmatprep.subr.mxu0 0.0
    %889 = vmatpush1.msra.mxu0 %v186
    %890 = vmatprep.subr.mxu0 0.0
    %891 = vmatpush1.msra.mxu0 %v185
    %892 = vmatprep.subr.mxu0 0.0
    %893 = vmatpush1.msra.mxu0 %v184
    %894 = vmatprep.subr.mxu0 0.0
    %895 = vmatpush2.msra.mxu0 0.0
    %896 = vmatprep.subr.mxu0 0.0
    %897 = vmatpush2.msra.mxu0 0.0
    %898 = vmatprep.subr.mxu0 0.0
    %899 = vmatpush2.msra.mxu0 0.0
    %900 = vmatprep.subr.mxu0 0.0
    %901 = vmatpush2.msra.mxu0 0.0
    %902 = vmatprep.subr.mxu0 0.0
    %903 = vmatpush2.msra.mxu0 0.0
    %904 = vmatprep.subr.mxu0 0.0
    %905 = vmatpush2.msra.mxu0 0.0
    %906 = vmatprep.subr.mxu0 0.0
    %907 = vmatpush2.msra.mxu0 0.0
    %908 = vmatprep.subr.mxu0 0.0
    %909 = vmatpush2.msra.mxu0 0.0
    %910 = vmatprep.subr.mxu0 0.0
    %911 = vmatpush2.msra.mxu0 0.0
    %912 = vmatprep.subr.mxu0 0.0
    %913 = vmatpush2.msra.mxu0 0.0
    %914 = vmatprep.subr.mxu0 0.0
    %915 = vmatpush2.msra.mxu0 0.0
    %916 = vmatprep.subr.mxu0 0.0
    %917 = vmatpush2.msra.mxu0 0.0
    %918 = vmatprep.subr.mxu0 0.0
    %919 = vmatpush2.msra.mxu0 0.0
    %920 = vmatprep.subr.mxu0 0.0
    %921 = vmatpush2.msra.mxu0 0.0
    %922 = vmatprep.subr.mxu0 0.0
    %923 = vmatpush2.msra.mxu0 0.0
    %924 = vmatprep.subr.mxu0 0.0
    %925 = vmatpush2.msra.mxu0 0.0
    %926 = vmatprep.mubr.f32.mxu0 0.0
    %927 = vmatmul.mubr.f32.gmra.mxu0 %v861
    %v928 = vpop.f32.mrf.mxu0
    %v929 = vadd.f32 0.0, %v928
    %v930 = vpop.f32.mrf.mxu0
    %931 = vdwg.mxu0
    %v934 = vunpack.c.l.s4 1966171168
    %v935 = vunpack.c.0.s8 %v934
    %v936 = vlaneseq
    %v937 = vshrl.u32 %v936, 7
    %v938 = vsub.s32 %v935, %v937
    %v939 = vrot.slane %v929, %v938
    %v940 = vcombine.high %v939, %v939
    %v942 = vunpack.c.l.s4 1966171168
    %v943 = vunpack.c.0.s8 %v942
    %v944 = vlaneseq
    %v945 = vshrl.u32 %v944, 7
    %v946 = vsub.s32 %v943, %v945
    %v947 = vrot.slane %v939, %v946
    %v949 = vunpack.c.l.s4 1966171168
    %v950 = vunpack.c.0.s8 %v949
    %v951 = vlaneseq
    %v952 = vshrl.u32 %v951, 7
    %v953 = vsub.s32 %v950, %v952
    %v954 = vrot.slane %v940, %v953
    %v955 = vcombine.high %v947, %v947
    %v956 = vcombine.high %v954, %v954
    %v957 = vlaneseq
    %v958 = vshrl.u32 %v957, 7
    %v959 = vsub.s32 0, %v958
    %v960 = vrot.slane %v947, %v959
    %v961 = vlaneseq
    %v962 = vshrl.u32 %v961, 7
    %v963 = vsub.s32 0, %v962
    %v964 = vrot.slane %v954, %v963
    %v965 = vlaneseq
    %v966 = vshrl.u32 %v965, 7
    %v967 = vsub.s32 0, %v966
    %v968 = vrot.slane %v955, %v967
    %v969 = vlaneseq
    %v970 = vshrl.u32 %v969, 7
    %v971 = vsub.s32 0, %v970
    %v972 = vrot.slane %v956, %v971
    %v977 = vmul.f32 %v48, %v960
    %v978 = vmul.f32 %v49, %v960
    %v979 = vmul.f32 %v50, %v964
    %v980 = vmul.f32 %v51, %v964
    %v981 = vmul.f32 %v52, %v968
    %v982 = vmul.f32 %v53, %v968
    %v983 = vmul.f32 %v54, %v972
    %v984 = vmul.f32 %v55, %v972
    %985 = vadd.xlane.f32.xlu0 %v977
    %v986 = vpop.xlane.xlu0 %985
    %987 = vadd.xlane.f32.xlu0 %v978
    %v988 = vpop.xlane.xlu0 %987
    %989 = vadd.xlane.f32.xlu0 %v979
    %v990 = vpop.xlane.xlu0 %989
    %991 = vadd.xlane.f32.xlu0 %v980
    %v992 = vpop.xlane.xlu0 %991
    %993 = vadd.xlane.f32.xlu0 %v981
    %v994 = vpop.xlane.xlu0 %993
    %995 = vadd.xlane.f32.xlu0 %v982
    %v996 = vpop.xlane.xlu0 %995
    %997 = vadd.xlane.f32.xlu0 %v983
    %v998 = vpop.xlane.xlu0 %997
    %999 = vadd.xlane.f32.xlu0 %v984
    %v1000 = vpop.xlane.xlu0 %999
    %v1009 = vlaneseq
    %v1010 = vand.u32 %v1009, 127
    %v1011 = vlaneseq
    %v1012 = vshrl.u32 %v1011, 7
    %v1013 = vsub.s32 %v1010, %v1012
    %v1014 = vrot.slane %v986, %v1013
    %v1015 = vadd.s32 %v1010, 4294967288
    %v1016 = vlaneseq
    %v1017 = vshrl.u32 %v1016, 7
    %v1018 = vsub.s32 %v1015, %v1017
    %v1019 = vrot.slane %v988, %v1018
    %vm1020 = vcmask 130112
    %v1021 = vsel %vm1020, %v1019, %v1014
    %v1022 = vlaneseq
    %v1023 = vshrl.u32 %v1022, 7
    %v1024 = vsub.s32 %v1010, %v1023
    %v1025 = vrot.slane %v990, %v1024
    %v1026 = vlaneseq
    %v1027 = vshrl.u32 %v1026, 7
    %v1028 = vsub.s32 %v1015, %v1027
    %v1029 = vrot.slane %v992, %v1028
    %v1030 = vsel %vm1020, %v1029, %v1025
    %v1031 = vlaneseq
    %v1032 = vshrl.u32 %v1031, 7
    %v1033 = vsub.s32 %v1010, %v1032
    %v1034 = vrot.slane %v994, %v1033
    %v1035 = vlaneseq
    %v1036 = vshrl.u32 %v1035, 7
    %v1037 = vsub.s32 %v1015, %v1036
    %v1038 = vrot.slane %v996, %v1037
    %v1039 = vsel %vm1020, %v1038, %v1034
    %v1040 = vlaneseq
    %v1041 = vshrl.u32 %v1040, 7
    %v1042 = vsub.s32 %v1010, %v1041
    %v1043 = vrot.slane %v998, %v1042
    %v1044 = vlaneseq
    %v1045 = vshrl.u32 %v1044, 7
    %v1046 = vsub.s32 %v1015, %v1045
    %v1047 = vrot.slane %v1000, %v1046
    %v1048 = vsel %vm1020, %v1047, %v1043
    %vm1049 = vcmask 1041409
    %v1050 = vsel %vm1049, %v1030, %v1021
    %vm1051 = vcmask 1042434
    %v1052 = vsel %vm1051, %v1039, %v1050
    %vm1053 = vcmask 1043459
    %v1054 = vsel %vm1053, %v1048, %v1052
    %vm1056 = vcmask 125952
    %v1057 = vsel %vm1056, %v1054, -inf
    %1058 = vmax.xlane.f32.xlu0 %v1057
    %v1059 = vpop.xlane.xlu0 %1058
    %v1061 = vlaneseq
    %v1062 = vshrl.u32 %v1061, 7
    %v1063 = vsub.s32 0, %v1062
    %v1064 = vrot.slane %v1059, %v1063
    %v1065 = vlaneseq
    %v1066 = vshrl.u32 %v1065, 7
    %v1067 = vsub.s32 1, %v1066
    %v1068 = vrot.slane %v1059, %v1067
    %v1069 = vlaneseq
    %v1070 = vshrl.u32 %v1069, 7
    %v1071 = vsub.s32 2, %v1070
    %v1072 = vrot.slane %v1059, %v1071
    %v1073 = vlaneseq
    %v1074 = vshrl.u32 %v1073, 7
    %v1075 = vsub.s32 3, %v1074
    %v1076 = vrot.slane %v1059, %v1075
    %v1081 = vsub.f32 %v986, %v1064
    %v1082 = vsub.f32 %v988, %v1064
    %v1083 = vsub.f32 %v990, %v1068
    %v1084 = vsub.f32 %v992, %v1068
    %v1085 = vsub.f32 %v994, %v1072
    %v1086 = vsub.f32 %v996, %v1072
    %v1087 = vsub.f32 %v998, %v1076
    %v1088 = vsub.f32 %v1000, %v1076
    %v1089 = vmul.f32 %v1081, 1.442695
    %v1090 = vpow.pop %v1089
    %v1091 = vmul.f32 %v1082, 1.442695
    %v1092 = vpow.pop %v1091
    %v1093 = vmul.f32 %v1083, 1.442695
    %v1094 = vpow.pop %v1093
    %v1095 = vmul.f32 %v1084, 1.442695
    %v1096 = vpow.pop %v1095
    %v1097 = vmul.f32 %v1085, 1.442695
    %v1098 = vpow.pop %v1097
    %v1099 = vmul.f32 %v1086, 1.442695
    %v1100 = vpow.pop %v1099
    %v1101 = vmul.f32 %v1087, 1.442695
    %v1102 = vpow.pop %v1101
    %v1103 = vmul.f32 %v1088, 1.442695
    %v1104 = vpow.pop %v1103
    %1113 = vset.pattern.permute.xlu0 0
    %1114 = vperm.xlu0 %1113, %v1090
    %v1115 = vpop.permute.xlu0 %1114
    %1116 = vset.pattern.permute.xlu0 0
    %1117 = vperm.xlu0 %1116, %v1092
    %v1118 = vpop.permute.xlu0 %1117
    %1119 = vset.pattern.permute.xlu0 0
    %1120 = vperm.xlu0 %1119, %v1094
    %v1121 = vpop.permute.xlu0 %1120
    %1122 = vset.pattern.permute.xlu0 0
    %1123 = vperm.xlu0 %1122, %v1096
    %v1124 = vpop.permute.xlu0 %1123
    %1125 = vset.pattern.permute.xlu0 0
    %1126 = vperm.xlu0 %1125, %v1098
    %v1127 = vpop.permute.xlu0 %1126
    %1128 = vset.pattern.permute.xlu0 0
    %1129 = vperm.xlu0 %1128, %v1100
    %v1130 = vpop.permute.xlu0 %1129
    %1131 = vset.pattern.permute.xlu0 0
    %1132 = vperm.xlu0 %1131, %v1102
    %v1133 = vpop.permute.xlu0 %1132
    %1134 = vset.pattern.permute.xlu0 0
    %1135 = vperm.xlu0 %1134, %v1104
    %v1136 = vpop.permute.xlu0 %1135
    %v1137 = vlaneseq
    %v1138 = vshrl.u32 %v1137, 7
    %v1139 = vsub.s32 %v1010, %v1138
    %v1140 = vrot.slane %v1115, %v1139
    %v1141 = vlaneseq
    %v1142 = vshrl.u32 %v1141, 7
    %v1143 = vsub.s32 %v1015, %v1142
    %v1144 = vrot.slane %v1118, %v1143
    %v1145 = vsel %vm1020, %v1144, %v1140
    %v1146 = vlaneseq
    %v1147 = vshrl.u32 %v1146, 7
    %v1148 = vsub.s32 %v1010, %v1147
    %v1149 = vrot.slane %v1121, %v1148
    %v1150 = vlaneseq
    %v1151 = vshrl.u32 %v1150, 7
    %v1152 = vsub.s32 %v1015, %v1151
    %v1153 = vrot.slane %v1124, %v1152
    %v1154 = vsel %vm1020, %v1153, %v1149
    %v1155 = vlaneseq
    %v1156 = vshrl.u32 %v1155, 7
    %v1157 = vsub.s32 %v1010, %v1156
    %v1158 = vrot.slane %v1127, %v1157
    %v1159 = vlaneseq
    %v1160 = vshrl.u32 %v1159, 7
    %v1161 = vsub.s32 %v1015, %v1160
    %v1162 = vrot.slane %v1130, %v1161
    %v1163 = vsel %vm1020, %v1162, %v1158
    %v1164 = vlaneseq
    %v1165 = vshrl.u32 %v1164, 7
    %v1166 = vsub.s32 %v1010, %v1165
    %v1167 = vrot.slane %v1133, %v1166
    %v1168 = vlaneseq
    %v1169 = vshrl.u32 %v1168, 7
    %v1170 = vsub.s32 %v1015, %v1169
    %v1171 = vrot.slane %v1136, %v1170
    %v1172 = vsel %vm1020, %v1171, %v1167
    %v1173 = vsel %vm1049, %v1154, %v1145
    %v1174 = vsel %vm1051, %v1163, %v1173
    %v1175 = vsel %vm1053, %v1172, %v1174
    %v1177 = vsel %vm1056, %v1175, 0.0
    %1178 = vadd.xlane.f32.xlu0 %v1177
    %v1179 = vpop.xlane.xlu0 %1178
    %v1180 = vrcp.pop %v1179
    %v1182 = vlaneseq
    %v1183 = vshrl.u32 %v1182, 7
    %v1184 = vsub.s32 0, %v1183
    %v1185 = vrot.slane %v1180, %v1184
    %v1186 = vlaneseq
    %v1187 = vshrl.u32 %v1186, 7
    %v1188 = vsub.s32 1, %v1187
    %v1189 = vrot.slane %v1180, %v1188
    %v1190 = vlaneseq
    %v1191 = vshrl.u32 %v1190, 7
    %v1192 = vsub.s32 2, %v1191
    %v1193 = vrot.slane %v1180, %v1192
    %v1194 = vlaneseq
    %v1195 = vshrl.u32 %v1194, 7
    %v1196 = vsub.s32 3, %v1195
    %v1197 = vrot.slane %v1180, %v1196
    %v1202 = vmul.f32 %v1090, %v1185
    %v1203 = vmul.f32 %v1092, %v1185
    %v1204 = vmul.f32 %v1094, %v1189
    %v1205 = vmul.f32 %v1096, %v1189
    %v1206 = vmul.f32 %v1098, %v1193
    %v1207 = vmul.f32 %v1100, %v1193
    %v1208 = vmul.f32 %v1102, %v1197
    %v1209 = vmul.f32 %v1104, %v1197
    %1211 = vset.pattern.permute.xlu0 0
    %1212 = vperm.xlu0 %1211, %v1202
    %v1213 = vpop.permute.xlu0 %1212
    %1216 = vset.pattern.permute.xlu0 0
    %1217 = vperm.xlu0 %1216, %v1203
    %v1218 = vpop.permute.xlu0 %1217
    %1221 = vset.pattern.permute.xlu0 0
    %1222 = vperm.xlu0 %1221, %v1204
    %v1223 = vpop.permute.xlu0 %1222
    %1226 = vset.pattern.permute.xlu0 0
    %1227 = vperm.xlu0 %1226, %v1205
    %v1228 = vpop.permute.xlu0 %1227
    %1231 = vset.pattern.permute.xlu0 0
    %1232 = vperm.xlu0 %1231, %v1206
    %v1233 = vpop.permute.xlu0 %1232
    %1236 = vset.pattern.permute.xlu0 0
    %1237 = vperm.xlu0 %1236, %v1207
    %v1238 = vpop.permute.xlu0 %1237
    %1241 = vset.pattern.permute.xlu0 0
    %1242 = vperm.xlu0 %1241, %v1208
    %v1243 = vpop.permute.xlu0 %1242
    %1246 = vset.pattern.permute.xlu0 0
    %1247 = vperm.xlu0 %1246, %v1209
    %v1248 = vpop.permute.xlu0 %1247
    %v1250 = vmul.f32 %v1213, %v48
    %v1251 = vmul.f32 %v1218, %v49
    %v1252 = vmul.f32 %v1223, %v50
    %v1253 = vmul.f32 %v1228, %v51
    %v1254 = vmul.f32 %v1233, %v52
    %v1255 = vmul.f32 %v1238, %v53
    %v1256 = vmul.f32 %v1243, %v54
    %v1257 = vmul.f32 %v1248, %v55
    %v1258 = vadd.f32 %v1250, %v1251
    %v1259 = vrot.slane %v1258, 4
    %v1260 = vadd.f32 %v1258, %v1259
    %v1261 = vrot.slane %v1260, 2
    %v1262 = vadd.f32 %v1260, %v1261
    %v1263 = vrot.slane %v1262, 1
    %v1264 = vadd.f32 %v1262, %v1263
    %v1265 = vadd.f32 %v1252, %v1253
    %v1266 = vrot.slane %v1265, 4
    %v1267 = vadd.f32 %v1265, %v1266
    %v1268 = vrot.slane %v1267, 2
    %v1269 = vadd.f32 %v1267, %v1268
    %v1270 = vrot.slane %v1269, 1
    %v1271 = vadd.f32 %v1269, %v1270
    %v1272 = vadd.f32 %v1254, %v1255
    %v1273 = vrot.slane %v1272, 4
    %v1274 = vadd.f32 %v1272, %v1273
    %v1275 = vrot.slane %v1274, 2
    %v1276 = vadd.f32 %v1274, %v1275
    %v1277 = vrot.slane %v1276, 1
    %v1278 = vadd.f32 %v1276, %v1277
    %v1279 = vadd.f32 %v1256, %v1257
    %v1280 = vrot.slane %v1279, 4
    %v1281 = vadd.f32 %v1279, %v1280
    %v1282 = vrot.slane %v1281, 2
    %v1283 = vadd.f32 %v1281, %v1282
    %v1284 = vrot.slane %v1283, 1
    %v1285 = vadd.f32 %v1283, %v1284
    %1286 = vmatprep.subr.mxu0 0.0
    %1287 = vmatpush1.msra.mxu0 %v231
    %1288 = vmatprep.subr.mxu0 0.0
    %1289 = vmatpush1.msra.mxu0 %v230
    %1290 = vmatprep.subr.mxu0 0.0
    %1291 = vmatpush1.msra.mxu0 %v229
    %1292 = vmatprep.subr.mxu0 0.0
    %1293 = vmatpush1.msra.mxu0 %v228
    %1294 = vmatprep.subr.mxu0 0.0
    %1295 = vmatpush1.msra.mxu0 %v227
    %1296 = vmatprep.subr.mxu0 0.0
    %1297 = vmatpush1.msra.mxu0 %v226
    %1298 = vmatprep.subr.mxu0 0.0
    %1299 = vmatpush1.msra.mxu0 %v225
    %1300 = vmatprep.subr.mxu0 0.0
    %1301 = vmatpush1.msra.mxu0 %v224
    %1302 = vmatprep.subr.mxu0 0.0
    %1303 = vmatpush1.msra.mxu0 %v223
    %1304 = vmatprep.subr.mxu0 0.0
    %1305 = vmatpush1.msra.mxu0 %v222
    %1306 = vmatprep.subr.mxu0 0.0
    %1307 = vmatpush1.msra.mxu0 %v221
    %1308 = vmatprep.subr.mxu0 0.0
    %1309 = vmatpush1.msra.mxu0 %v220
    %1310 = vmatprep.subr.mxu0 0.0
    %1311 = vmatpush1.msra.mxu0 %v219
    %1312 = vmatprep.subr.mxu0 0.0
    %1313 = vmatpush1.msra.mxu0 %v218
    %1314 = vmatprep.subr.mxu0 0.0
    %1315 = vmatpush1.msra.mxu0 %v217
    %1316 = vmatprep.subr.mxu0 0.0
    %1317 = vmatpush1.msra.mxu0 %v216
    %1318 = vmatprep.subr.mxu0 0.0
    %1319 = vmatpush2.msra.mxu0 0.0
    %1320 = vmatprep.subr.mxu0 0.0
    %1321 = vmatpush2.msra.mxu0 0.0
    %1322 = vmatprep.subr.mxu0 0.0
    %1323 = vmatpush2.msra.mxu0 0.0
    %1324 = vmatprep.subr.mxu0 0.0
    %1325 = vmatpush2.msra.mxu0 0.0
    %1326 = vmatprep.subr.mxu0 0.0
    %1327 = vmatpush2.msra.mxu0 0.0
    %1328 = vmatprep.subr.mxu0 0.0
    %1329 = vmatpush2.msra.mxu0 0.0
    %1330 = vmatprep.subr.mxu0 0.0
    %1331 = vmatpush2.msra.mxu0 0.0
    %1332 = vmatprep.subr.mxu0 0.0
    %1333 = vmatpush2.msra.mxu0 0.0
    %1334 = vmatprep.subr.mxu0 0.0
    %1335 = vmatpush2.msra.mxu0 0.0
    %1336 = vmatprep.subr.mxu0 0.0
    %1337 = vmatpush2.msra.mxu0 0.0
    %1338 = vmatprep.subr.mxu0 0.0
    %1339 = vmatpush2.msra.mxu0 0.0
    %1340 = vmatprep.subr.mxu0 0.0
    %1341 = vmatpush2.msra.mxu0 0.0
    %1342 = vmatprep.subr.mxu0 0.0
    %1343 = vmatpush2.msra.mxu0 0.0
    %1344 = vmatprep.subr.mxu0 0.0
    %1345 = vmatpush2.msra.mxu0 0.0
    %1346 = vmatprep.subr.mxu0 0.0
    %1347 = vmatpush2.msra.mxu0 0.0
    %1348 = vmatprep.subr.mxu0 0.0
    %1349 = vmatpush2.msra.mxu0 0.0
    %1350 = vmatprep.mubr.f32.mxu0 0.0
    %1351 = vmatmul.mubr.f32.gmra.mxu0 %v861
    %v1352 = vpop.f32.mrf.mxu0
    %v1353 = vadd.f32 0.0, %v1352
    %v1354 = vpop.f32.mrf.mxu0
    %1355 = vdwg.mxu0
    %v1360 = vsel %vm1049, %v1271, %v1264
    %v1361 = vsel %vm1051, %v1278, %v1360
    %v1362 = vsel %vm1053, %v1285, %v1361
    %1364 = vmatprep.subr.mxu0 0.0
    %1365 = vmatpush1.msra.mxu0 %v215
    %1366 = vmatprep.subr.mxu0 0.0
    %1367 = vmatpush1.msra.mxu0 %v214
    %1368 = vmatprep.subr.mxu0 0.0
    %1369 = vmatpush1.msra.mxu0 %v213
    %1370 = vmatprep.subr.mxu0 0.0
    %1371 = vmatpush1.msra.mxu0 %v212
    %1372 = vmatprep.subr.mxu0 0.0
    %1373 = vmatpush1.msra.mxu0 %v211
    %1374 = vmatprep.subr.mxu0 0.0
    %1375 = vmatpush1.msra.mxu0 %v210
    %1376 = vmatprep.subr.mxu0 0.0
    %1377 = vmatpush1.msra.mxu0 %v209
    %1378 = vmatprep.subr.mxu0 0.0
    %1379 = vmatpush1.msra.mxu0 %v208
    %1380 = vmatprep.subr.mxu0 0.0
    %1381 = vmatpush1.msra.mxu0 %v207
    %1382 = vmatprep.subr.mxu0 0.0
    %1383 = vmatpush1.msra.mxu0 %v206
    %1384 = vmatprep.subr.mxu0 0.0
    %1385 = vmatpush1.msra.mxu0 %v205
    %1386 = vmatprep.subr.mxu0 0.0
    %1387 = vmatpush1.msra.mxu0 %v204
    %1388 = vmatprep.subr.mxu0 0.0
    %1389 = vmatpush1.msra.mxu0 %v203
    %1390 = vmatprep.subr.mxu0 0.0
    %1391 = vmatpush1.msra.mxu0 %v202
    %1392 = vmatprep.subr.mxu0 0.0
    %1393 = vmatpush1.msra.mxu0 %v201
    %1394 = vmatprep.subr.mxu0 0.0
    %1395 = vmatpush1.msra.mxu0 %v200
    %1396 = vmatprep.subr.mxu0 0.0
    %1397 = vmatpush2.msra.mxu0 0.0
    %1398 = vmatprep.subr.mxu0 0.0
    %1399 = vmatpush2.msra.mxu0 0.0
    %1400 = vmatprep.subr.mxu0 0.0
    %1401 = vmatpush2.msra.mxu0 0.0
    %1402 = vmatprep.subr.mxu0 0.0
    %1403 = vmatpush2.msra.mxu0 0.0
    %1404 = vmatprep.subr.mxu0 0.0
    %1405 = vmatpush2.msra.mxu0 0.0
    %1406 = vmatprep.subr.mxu0 0.0
    %1407 = vmatpush2.msra.mxu0 0.0
    %1408 = vmatprep.subr.mxu0 0.0
    %1409 = vmatpush2.msra.mxu0 0.0
    %1410 = vmatprep.subr.mxu0 0.0
    %1411 = vmatpush2.msra.mxu0 0.0
    %1412 = vmatprep.subr.mxu0 0.0
    %1413 = vmatpush2.msra.mxu0 0.0
    %1414 = vmatprep.subr.mxu0 0.0
    %1415 = vmatpush2.msra.mxu0 0.0
    %1416 = vmatprep.subr.mxu0 0.0
    %1417 = vmatpush2.msra.mxu0 0.0
    %1418 = vmatprep.subr.mxu0 0.0
    %1419 = vmatpush2.msra.mxu0 0.0
    %1420 = vmatprep.subr.mxu0 0.0
    %1421 = vmatpush2.msra.mxu0 0.0
    %1422 = vmatprep.subr.mxu0 0.0
    %1423 = vmatpush2.msra.mxu0 0.0
    %1424 = vmatprep.subr.mxu0 0.0
    %1425 = vmatpush2.msra.mxu0 0.0
    %1426 = vmatprep.subr.mxu0 0.0
    %1427 = vmatpush2.msra.mxu0 0.0
    %1428 = vmatprep.mubr.f32.mxu0 0.0
    %1429 = vmatmul.mubr.f32.gmra.mxu0 %v1362
    %v1430 = vpop.f32.mrf.mxu0
    %v1431 = vadd.f32 %v1353, %v1430
    %v1432 = vpop.f32.mrf.mxu0
    %1433 = vdwg.mxu0
    %v1434 = vtanh.pop %v1431
    %v1435 = vlaneseq
    %v1436 = vshrl.u32 %v1435, 7
    %v1437 = vsub.s32 %v1010, %v1436
    %v1438 = vrot.slane %v1213, %v1437
    %v1439 = vlaneseq
    %v1440 = vshrl.u32 %v1439, 7
    %v1441 = vsub.s32 %v1015, %v1440
    %v1442 = vrot.slane %v1218, %v1441
    %v1443 = vsel %vm1020, %v1442, %v1438
    %v1444 = vlaneseq
    %v1445 = vshrl.u32 %v1444, 7
    %v1446 = vsub.s32 %v1010, %v1445
    %v1447 = vrot.slane %v1223, %v1446
    %v1448 = vlaneseq
    %v1449 = vshrl.u32 %v1448, 7
    %v1450 = vsub.s32 %v1015, %v1449
    %v1451 = vrot.slane %v1228, %v1450
    %v1452 = vsel %vm1020, %v1451, %v1447
    %v1453 = vlaneseq
    %v1454 = vshrl.u32 %v1453, 7
    %v1455 = vsub.s32 %v1010, %v1454
    %v1456 = vrot.slane %v1233, %v1455
    %v1457 = vlaneseq
    %v1458 = vshrl.u32 %v1457, 7
    %v1459 = vsub.s32 %v1015, %v1458
    %v1460 = vrot.slane %v1238, %v1459
    %v1461 = vsel %vm1020, %v1460, %v1456
    %v1462 = vlaneseq
    %v1463 = vshrl.u32 %v1462, 7
    %v1464 = vsub.s32 %v1010, %v1463
    %v1465 = vrot.slane %v1243, %v1464
    %v1466 = vlaneseq
    %v1467 = vshrl.u32 %v1466, 7
    %v1468 = vsub.s32 %v1015, %v1467
    %v1469 = vrot.slane %v1248, %v1468
    %v1470 = vsel %vm1020, %v1469, %v1465
    %vm1475 = vcmask 122880
    %1476 = vst.msk [vmem:[#allocation4] sm:$0x1] %vm1475, %v1443
    %1477 = vst.msk [vmem:[#allocation4 + $0x8] sm:$0x1] %vm1475, %v1452
    %1478 = vst.msk [vmem:[#allocation4 + $0x10] sm:$0x1] %vm1475, %v1461
    %1479 = vst.msk [vmem:[#allocation4 + $0x18] sm:$0x1] %vm1475, %v1470
    %1480 = vmatprep.subr.mxu0 %v263
    %1481 = vmatpush1.msra.mxu0 %v262
    %1482 = vmatprep.subr.mxu0 %v261
    %1483 = vmatpush1.msra.mxu0 %v260
    %1484 = vmatprep.subr.mxu0 %v259
    %1485 = vmatpush1.msra.mxu0 %v258
    %1486 = vmatprep.subr.mxu0 %v257
    %1487 = vmatpush1.msra.mxu0 %v256
    %1488 = vmatprep.subr.mxu0 %v255
    %1489 = vmatpush1.msra.mxu0 %v254
    %1490 = vmatprep.subr.mxu0 %v253
    %1491 = vmatpush1.msra.mxu0 %v252
    %1492 = vmatprep.subr.mxu0 %v251
    %1493 = vmatpush1.msra.mxu0 %v250
    %1494 = vmatprep.subr.mxu0 %v249
    %1495 = vmatpush1.msra.mxu0 %v248
    %1496 = vmatprep.subr.mxu0 %v247
    %1497 = vmatpush1.msra.mxu0 %v246
    %1498 = vmatprep.subr.mxu0 %v245
    %1499 = vmatpush1.msra.mxu0 %v244
    %1500 = vmatprep.subr.mxu0 %v243
    %1501 = vmatpush1.msra.mxu0 %v242
    %1502 = vmatprep.subr.mxu0 %v241
    %1503 = vmatpush1.msra.mxu0 %v240
    %1504 = vmatprep.subr.mxu0 %v239
    %1505 = vmatpush1.msra.mxu0 %v238
    %1506 = vmatprep.subr.mxu0 %v237
    %1507 = vmatpush1.msra.mxu0 %v236
    %1508 = vmatprep.subr.mxu0 %v235
    %1509 = vmatpush1.msra.mxu0 %v234
    %1510 = vmatprep.subr.mxu0 %v233
    %1511 = vmatpush1.msra.mxu0 %v232
    %1512 = vmatprep.subr.mxu0 0.0
    %1513 = vmatpush2.msra.mxu0 0.0
    %1514 = vmatprep.subr.mxu0 0.0
    %1515 = vmatpush2.msra.mxu0 0.0
    %1516 = vmatprep.subr.mxu0 0.0
    %1517 = vmatpush2.msra.mxu0 0.0
    %1518 = vmatprep.subr.mxu0 0.0
    %1519 = vmatpush2.msra.mxu0 0.0
    %1520 = vmatprep.subr.mxu0 0.0
    %1521 = vmatpush2.msra.mxu0 0.0
    %1522 = vmatprep.subr.mxu0 0.0
    %1523 = vmatpush2.msra.mxu0 0.0
    %1524 = vmatprep.subr.mxu0 0.0
    %1525 = vmatpush2.msra.mxu0 0.0
    %1526 = vmatprep.subr.mxu0 0.0
    %1527 = vmatpush2.msra.mxu0 0.0
    %1528 = vmatprep.subr.mxu0 0.0
    %1529 = vmatpush2.msra.mxu0 0.0
    %1530 = vmatprep.subr.mxu0 0.0
    %1531 = vmatpush2.msra.mxu0 0.0
    %1532 = vmatprep.subr.mxu0 0.0
    %1533 = vmatpush2.msra.mxu0 0.0
    %1534 = vmatprep.subr.mxu0 0.0
    %1535 = vmatpush2.msra.mxu0 0.0
    %1536 = vmatprep.subr.mxu0 0.0
    %1537 = vmatpush2.msra.mxu0 0.0
    %1538 = vmatprep.subr.mxu0 0.0
    %1539 = vmatpush2.msra.mxu0 0.0
    %1540 = vmatprep.subr.mxu0 0.0
    %1541 = vmatpush2.msra.mxu0 0.0
    %1542 = vmatprep.subr.mxu0 0.0
    %1543 = vmatpush2.msra.mxu0 0.0
    %1544 = vmatprep.mubr.f32.mxu0 0.0
    %1545 = vmatmul.mubr.f32.gmra.mxu0 %v1434
    %v1546 = vpop.f32.mrf.mxu0
    %v1547 = vadd.f32 %v269, %v1546
    %v1548 = vpop.f32.mrf.mxu0
    %v1549 = vadd.f32 %v273, %v1548
    %1550 = vdwg.mxu0
    %v1553 = vcombine.low %v1547, %v1549
    %v1555 = vunpack.c.l.s4 1966171168
    %v1556 = vunpack.c.0.s8 %v1555
    %v1557 = vlaneseq
    %v1558 = vshrl.u32 %v1557, 7
    %v1559 = vsub.s32 %v1556, %v1558
    %v1560 = vrot.slane %v1553, %v1559
    %v1561 = vcombine.high %v1560, %v1560
    %v1563 = vunpack.c.l.s4 1966171168
    %v1564 = vunpack.c.0.s8 %v1563
    %v1565 = vlaneseq
    %v1566 = vshrl.u32 %v1565, 7
    %v1567 = vsub.s32 %v1564, %v1566
    %v1568 = vrot.slane %v1560, %v1567
    %v1570 = vunpack.c.l.s4 1966171168
    %v1571 = vunpack.c.0.s8 %v1570
    %v1572 = vlaneseq
    %v1573 = vshrl.u32 %v1572, 7
    %v1574 = vsub.s32 %v1571, %v1573
    %v1575 = vrot.slane %v1561, %v1574
    %v1576 = vcombine.high %v1568, %v1568
    %v1577 = vcombine.high %v1575, %v1575
    %v1582 = vlaneseq
    %vm1583 = vcmp.ge.s32.totalorder %v1582, 0
    %vm1584 = vcmp.lt.s32.totalorder %v1582, 256
    %vm1585 = vmand %vm1583, %vm1584
    %1586 = vst.msk [vmem:[#allocation2] ss:$8 sm:$0x3] %vm1585, %v1568
    %1587 = vst.msk [vmem:[#allocation2] ss:$8 sm:$0x0] %vm1585, %v1568
    %s1588 = scalar_lea.vmem [#allocation2], 16
    %1589 = vst.msk [vmem:[%s1588] ss:$8 sm:$0x3] %vm1585, %v1575
    %1590 = vst.msk [vmem:[%s1588] ss:$8 sm:$0x0] %vm1585, %v1575
    %s1591 = scalar_lea.vmem [#allocation2], 32
    %1592 = vst.msk [vmem:[%s1591] ss:$8 sm:$0x3] %vm1585, %v1576
    %1593 = vst.msk [vmem:[%s1591] ss:$8 sm:$0x0] %vm1585, %v1576
    %s1594 = scalar_lea.vmem [#allocation2], 48
    %1595 = vst.msk [vmem:[%s1594] ss:$8 sm:$0x3] %vm1585, %v1577
    %1596 = vst.msk [vmem:[%s1594] ss:$8 sm:$0x0] %vm1585, %v1577
    %1597 = vmatprep.subr.mxu0 %v117
    %1598 = vmatpush1.msra.mxu0 %v116
    %1599 = vmatprep.subr.mxu0 %v113
    %1600 = vmatpush1.msra.mxu0 %v112
    %1601 = vmatprep.subr.mxu0 %v109
    %1602 = vmatpush1.msra.mxu0 %v108
    %1603 = vmatprep.subr.mxu0 %v105
    %1604 = vmatpush1.msra.mxu0 %v104
    %1605 = vmatprep.subr.mxu0 %v101
    %1606 = vmatpush1.msra.mxu0 %v100
    %1607 = vmatprep.subr.mxu0 %v97
    %1608 = vmatpush1.msra.mxu0 %v96
    %1609 = vmatprep.subr.mxu0 %v93
    %1610 = vmatpush1.msra.mxu0 %v92
    %1611 = vmatprep.subr.mxu0 %v89
    %1612 = vmatpush1.msra.mxu0 %v88
    %1613 = vmatprep.subr.mxu0 %v85
    %1614 = vmatpush1.msra.mxu0 %v84
    %1615 = vmatprep.subr.mxu0 %v81
    %1616 = vmatpush1.msra.mxu0 %v80
    %1617 = vmatprep.subr.mxu0 %v77
    %1618 = vmatpush1.msra.mxu0 %v76
    %1619 = vmatprep.subr.mxu0 %v73
    %1620 = vmatpush1.msra.mxu0 %v72
    %1621 = vmatprep.subr.mxu0 %v69
    %1622 = vmatpush1.msra.mxu0 %v68
    %1623 = vmatprep.subr.mxu0 %v65
    %1624 = vmatpush1.msra.mxu0 %v64
    %1625 = vmatprep.subr.mxu0 %v61
    %1626 = vmatpush1.msra.mxu0 %v60
    %1627 = vmatprep.subr.mxu0 %v57
    %1628 = vmatpush1.msra.mxu0 %v56
    %1629 = vmatprep.subr.mxu0 0.0
    %1630 = vmatpush2.msra.mxu0 0.0
    %1631 = vmatprep.subr.mxu0 0.0
    %1632 = vmatpush2.msra.mxu0 0.0
    %1633 = vmatprep.subr.mxu0 0.0
    %1634 = vmatpush2.msra.mxu0 0.0
    %1635 = vmatprep.subr.mxu0 0.0
    %1636 = vmatpush2.msra.mxu0 0.0
    %1637 = vmatprep.subr.mxu0 0.0
    %1638 = vmatpush2.msra.mxu0 0.0
    %1639 = vmatprep.subr.mxu0 0.0
    %1640 = vmatpush2.msra.mxu0 0.0
    %1641 = vmatprep.subr.mxu0 0.0
    %1642 = vmatpush2.msra.mxu0 0.0
    %1643 = vmatprep.subr.mxu0 0.0
    %1644 = vmatpush2.msra.mxu0 0.0
    %1645 = vmatprep.subr.mxu0 0.0
    %1646 = vmatpush2.msra.mxu0 0.0
    %1647 = vmatprep.subr.mxu0 0.0
    %1648 = vmatpush2.msra.mxu0 0.0
    %1649 = vmatprep.subr.mxu0 0.0
    %1650 = vmatpush2.msra.mxu0 0.0
    %1651 = vmatprep.subr.mxu0 0.0
    %1652 = vmatpush2.msra.mxu0 0.0
    %1653 = vmatprep.subr.mxu0 0.0
    %1654 = vmatpush2.msra.mxu0 0.0
    %1655 = vmatprep.subr.mxu0 0.0
    %1656 = vmatpush2.msra.mxu0 0.0
    %1657 = vmatprep.subr.mxu0 0.0
    %1658 = vmatpush2.msra.mxu0 0.0
    %1659 = vmatprep.subr.mxu0 0.0
    %1660 = vmatpush2.msra.mxu0 0.0
    %1661 = vmatprep.mubr.f32.mxu0 0.0
    %1662 = vmatmul.mubr.f32.gmra.mxu0 %v1434
    %v1663 = vpop.f32.mrf.mxu0
    %v1664 = vadd.f32 0.0, %v1663
    %v1665 = vpop.f32.mrf.mxu0
    %v1666 = vadd.f32 0.0, %v1665
    %1667 = vdwg.mxu0
    %1668 = vmatprep.subr.mxu0 %v119
    %1669 = vmatpush1.msra.mxu0 %v118
    %1670 = vmatprep.subr.mxu0 %v115
    %1671 = vmatpush1.msra.mxu0 %v114
    %1672 = vmatprep.subr.mxu0 %v111
    %1673 = vmatpush1.msra.mxu0 %v110
    %1674 = vmatprep.subr.mxu0 %v107
    %1675 = vmatpush1.msra.mxu0 %v106
    %1676 = vmatprep.subr.mxu0 %v103
    %1677 = vmatpush1.msra.mxu0 %v102
    %1678 = vmatprep.subr.mxu0 %v99
    %1679 = vmatpush1.msra.mxu0 %v98
    %1680 = vmatprep.subr.mxu0 %v95
    %1681 = vmatpush1.msra.mxu0 %v94
    %1682 = vmatprep.subr.mxu0 %v91
    %1683 = vmatpush1.msra.mxu0 %v90
    %1684 = vmatprep.subr.mxu0 %v87
    %1685 = vmatpush1.msra.mxu0 %v86
    %1686 = vmatprep.subr.mxu0 %v83
    %1687 = vmatpush1.msra.mxu0 %v82
    %1688 = vmatprep.subr.mxu0 %v79
    %1689 = vmatpush1.msra.mxu0 %v78
    %1690 = vmatprep.subr.mxu0 %v75
    %1691 = vmatpush1.msra.mxu0 %v74
    %1692 = vmatprep.subr.mxu0 %v71
    %1693 = vmatpush1.msra.mxu0 %v70
    %1694 = vmatprep.subr.mxu0 %v67
    %1695 = vmatpush1.msra.mxu0 %v66
    %1696 = vmatprep.subr.mxu0 %v63
    %1697 = vmatpush1.msra.mxu0 %v62
    %1698 = vmatprep.subr.mxu0 %v59
    %1699 = vmatpush1.msra.mxu0 %v58
    %1700 = vmatprep.subr.mxu0 0.0
    %1701 = vmatpush2.msra.mxu0 0.0
    %1702 = vmatprep.subr.mxu0 0.0
    %1703 = vmatpush2.msra.mxu0 0.0
    %1704 = vmatprep.subr.mxu0 0.0
    %1705 = vmatpush2.msra.mxu0 0.0
    %1706 = vmatprep.subr.mxu0 0.0
    %1707 = vmatpush2.msra.mxu0 0.0
    %1708 = vmatprep.subr.mxu0 0.0
    %1709 = vmatpush2.msra.mxu0 0.0
    %1710 = vmatprep.subr.mxu0 0.0
    %1711 = vmatpush2.msra.mxu0 0.0
    %1712 = vmatprep.subr.mxu0 0.0
    %1713 = vmatpush2.msra.mxu0 0.0
    %1714 = vmatprep.subr.mxu0 0.0
    %1715 = vmatpush2.msra.mxu0 0.0
    %1716 = vmatprep.subr.mxu0 0.0
    %1717 = vmatpush2.msra.mxu0 0.0
    %1718 = vmatprep.subr.mxu0 0.0
    %1719 = vmatpush2.msra.mxu0 0.0
    %1720 = vmatprep.subr.mxu0 0.0
    %1721 = vmatpush2.msra.mxu0 0.0
    %1722 = vmatprep.subr.mxu0 0.0
    %1723 = vmatpush2.msra.mxu0 0.0
    %1724 = vmatprep.subr.mxu0 0.0
    %1725 = vmatpush2.msra.mxu0 0.0
    %1726 = vmatprep.subr.mxu0 0.0
    %1727 = vmatpush2.msra.mxu0 0.0
    %1728 = vmatprep.subr.mxu0 0.0
    %1729 = vmatpush2.msra.mxu0 0.0
    %1730 = vmatprep.subr.mxu0 0.0
    %1731 = vmatpush2.msra.mxu0 0.0
    %1732 = vmatprep.mubr.f32.mxu0 0.0
    %1733 = vmatmul.mubr.f32.gmra.mxu0 %v1434
    %v1734 = vpop.f32.mrf.mxu0
    %v1735 = vadd.f32 0.0, %v1734
    %v1736 = vpop.f32.mrf.mxu0
    %v1737 = vadd.f32 0.0, %v1736
    %1738 = vdwg.mxu0
    %v1743 = vrot.slane %v1664, 4
    %v1744 = vrot.slane %v1666, 4
    %v1745 = vrot.slane %v1735, 4
    %v1746 = vrot.slane %v1737, 4
    %v1751 = vadd.f32 %v433, %v1743
    %v1752 = vadd.f32 %v435, %v1744
    %v1753 = vadd.f32 %v522, %v1745
    %v1754 = vadd.f32 %v524, %v1746
    %1755 = vmatprep.subr.mxu0 %v181
    %1756 = vmatpush1.msra.mxu0 %v180
    %1757 = vmatprep.subr.mxu0 %v177
    %1758 = vmatpush1.msra.mxu0 %v176
    %1759 = vmatprep.subr.mxu0 %v173
    %1760 = vmatpush1.msra.mxu0 %v172
    %1761 = vmatprep.subr.mxu0 %v169
    %1762 = vmatpush1.msra.mxu0 %v168
    %1763 = vmatprep.subr.mxu0 %v165
    %1764 = vmatpush1.msra.mxu0 %v164
    %1765 = vmatprep.subr.mxu0 %v161
    %1766 = vmatpush1.msra.mxu0 %v160
    %1767 = vmatprep.subr.mxu0 %v157
    %1768 = vmatpush1.msra.mxu0 %v156
    %1769 = vmatprep.subr.mxu0 %v153
    %1770 = vmatpush1.msra.mxu0 %v152
    %1771 = vmatprep.subr.mxu0 %v149
    %1772 = vmatpush1.msra.mxu0 %v148
    %1773 = vmatprep.subr.mxu0 %v145
    %1774 = vmatpush1.msra.mxu0 %v144
    %1775 = vmatprep.subr.mxu0 %v141
    %1776 = vmatpush1.msra.mxu0 %v140
    %1777 = vmatprep.subr.mxu0 %v137
    %1778 = vmatpush1.msra.mxu0 %v136
    %1779 = vmatprep.subr.mxu0 %v133
    %1780 = vmatpush1.msra.mxu0 %v132
    %1781 = vmatprep.subr.mxu0 %v129
    %1782 = vmatpush1.msra.mxu0 %v128
    %1783 = vmatprep.subr.mxu0 %v125
    %1784 = vmatpush1.msra.mxu0 %v124
    %1785 = vmatprep.subr.mxu0 %v121
    %1786 = vmatpush1.msra.mxu0 %v120
    %1787 = vmatprep.subr.mxu0 0.0
    %1788 = vmatpush2.msra.mxu0 0.0
    %1789 = vmatprep.subr.mxu0 0.0
    %1790 = vmatpush2.msra.mxu0 0.0
    %1791 = vmatprep.subr.mxu0 0.0
    %1792 = vmatpush2.msra.mxu0 0.0
    %1793 = vmatprep.subr.mxu0 0.0
    %1794 = vmatpush2.msra.mxu0 0.0
    %1795 = vmatprep.subr.mxu0 0.0
    %1796 = vmatpush2.msra.mxu0 0.0
    %1797 = vmatprep.subr.mxu0 0.0
    %1798 = vmatpush2.msra.mxu0 0.0
    %1799 = vmatprep.subr.mxu0 0.0
    %1800 = vmatpush2.msra.mxu0 0.0
    %1801 = vmatprep.subr.mxu0 0.0
    %1802 = vmatpush2.msra.mxu0 0.0
    %1803 = vmatprep.subr.mxu0 0.0
    %1804 = vmatpush2.msra.mxu0 0.0
    %1805 = vmatprep.subr.mxu0 0.0
    %1806 = vmatpush2.msra.mxu0 0.0
    %1807 = vmatprep.subr.mxu0 0.0
    %1808 = vmatpush2.msra.mxu0 0.0
    %1809 = vmatprep.subr.mxu0 0.0
    %1810 = vmatpush2.msra.mxu0 0.0
    %1811 = vmatprep.subr.mxu0 0.0
    %1812 = vmatpush2.msra.mxu0 0.0
    %1813 = vmatprep.subr.mxu0 0.0
    %1814 = vmatpush2.msra.mxu0 0.0
    %1815 = vmatprep.subr.mxu0 0.0
    %1816 = vmatpush2.msra.mxu0 0.0
    %1817 = vmatprep.subr.mxu0 0.0
    %1818 = vmatpush2.msra.mxu0 0.0
    %1819 = vmatprep.mubr.f32.mxu0 0.0
    %1820 = vmatmul.mubr.f32.gmra.mxu0 %v861
    %v1821 = vpop.f32.mrf.mxu0
    %v1822 = vadd.f32 0.0, %v1821
    %v1823 = vpop.f32.mrf.mxu0
    %v1824 = vadd.f32 0.0, %v1823
    %1825 = vdwg.mxu0
    %1826 = vmatprep.subr.mxu0 %v183
    %1827 = vmatpush1.msra.mxu0 %v182
    %1828 = vmatprep.subr.mxu0 %v179
    %1829 = vmatpush1.msra.mxu0 %v178
    %1830 = vmatprep.subr.mxu0 %v175
    %1831 = vmatpush1.msra.mxu0 %v174
    %1832 = vmatprep.subr.mxu0 %v171
    %1833 = vmatpush1.msra.mxu0 %v170
    %1834 = vmatprep.subr.mxu0 %v167
    %1835 = vmatpush1.msra.mxu0 %v166
    %1836 = vmatprep.subr.mxu0 %v163
    %1837 = vmatpush1.msra.mxu0 %v162
    %1838 = vmatprep.subr.mxu0 %v159
    %1839 = vmatpush1.msra.mxu0 %v158
    %1840 = vmatprep.subr.mxu0 %v155
    %1841 = vmatpush1.msra.mxu0 %v154
    %1842 = vmatprep.subr.mxu0 %v151
    %1843 = vmatpush1.msra.mxu0 %v150
    %1844 = vmatprep.subr.mxu0 %v147
    %1845 = vmatpush1.msra.mxu0 %v146
    %1846 = vmatprep.subr.mxu0 %v143
    %1847 = vmatpush1.msra.mxu0 %v142
    %1848 = vmatprep.subr.mxu0 %v139
    %1849 = vmatpush1.msra.mxu0 %v138
    %1850 = vmatprep.subr.mxu0 %v135
    %1851 = vmatpush1.msra.mxu0 %v134
    %1852 = vmatprep.subr.mxu0 %v131
    %1853 = vmatpush1.msra.mxu0 %v130
    %1854 = vmatprep.subr.mxu0 %v127
    %1855 = vmatpush1.msra.mxu0 %v126
    %1856 = vmatprep.subr.mxu0 %v123
    %1857 = vmatpush1.msra.mxu0 %v122
    %1858 = vmatprep.subr.mxu0 0.0
    %1859 = vmatpush2.msra.mxu0 0.0
    %1860 = vmatprep.subr.mxu0 0.0
    %1861 = vmatpush2.msra.mxu0 0.0
    %1862 = vmatprep.subr.mxu0 0.0
    %1863 = vmatpush2.msra.mxu0 0.0
    %1864 = vmatprep.subr.mxu0 0.0
    %1865 = vmatpush2.msra.mxu0 0.0
    %1866 = vmatprep.subr.mxu0 0.0
    %1867 = vmatpush2.msra.mxu0 0.0
    %1868 = vmatprep.subr.mxu0 0.0
    %1869 = vmatpush2.msra.mxu0 0.0
    %1870 = vmatprep.subr.mxu0 0.0
    %1871 = vmatpush2.msra.mxu0 0.0
    %1872 = vmatprep.subr.mxu0 0.0
    %1873 = vmatpush2.msra.mxu0 0.0
    %1874 = vmatprep.subr.mxu0 0.0
    %1875 = vmatpush2.msra.mxu0 0.0
    %1876 = vmatprep.subr.mxu0 0.0
    %1877 = vmatpush2.msra.mxu0 0.0
    %1878 = vmatprep.subr.mxu0 0.0
    %1879 = vmatpush2.msra.mxu0 0.0
    %1880 = vmatprep.subr.mxu0 0.0
    %1881 = vmatpush2.msra.mxu0 0.0
    %1882 = vmatprep.subr.mxu0 0.0
    %1883 = vmatpush2.msra.mxu0 0.0
    %1884 = vmatprep.subr.mxu0 0.0
    %1885 = vmatpush2.msra.mxu0 0.0
    %1886 = vmatprep.subr.mxu0 0.0
    %1887 = vmatpush2.msra.mxu0 0.0
    %1888 = vmatprep.subr.mxu0 0.0
    %1889 = vmatpush2.msra.mxu0 0.0
    %1890 = vmatprep.mubr.f32.mxu0 0.0
    %1891 = vmatmul.mubr.f32.gmra.mxu0 %v861
    %v1892 = vpop.f32.mrf.mxu0
    %v1893 = vadd.f32 0.0, %v1892
    %v1894 = vpop.f32.mrf.mxu0
    %v1895 = vadd.f32 0.0, %v1894
    %1896 = vdwg.mxu0
    %v1901 = vrot.slane %v1822, 4
    %v1902 = vrot.slane %v1824, 4
    %v1903 = vrot.slane %v1893, 4
    %v1904 = vrot.slane %v1895, 4
    %v1909 = vadd.f32 %v1751, %v1901
    %v1910 = vadd.f32 %v1752, %v1902
    %v1911 = vadd.f32 %v1753, %v1903
    %v1912 = vadd.f32 %v1754, %v1904
    %v1913 = vxor.u32 %v1909, 2147483648
    %v1914 = vmul.f32 %v1913, 1.442695
    %v1915 = vpow.pop %v1914
    %v1916 = vadd.f32 %v1915, 1.0
    %v1917 = vrcp.pop %v1916
    %v1918 = vmul.f32 1.0, %v1917
    %v1919 = vxor.u32 %v1910, 2147483648
    %v1920 = vmul.f32 %v1919, 1.442695
    %v1921 = vpow.pop %v1920
    %v1922 = vadd.f32 %v1921, 1.0
    %v1923 = vrcp.pop %v1922
    %v1924 = vmul.f32 1.0, %v1923
    %v1925 = vtanh.pop %v1911
    %v1926 = vxor.u32 %v1912, 2147483648
    %v1927 = vmul.f32 %v1926, 1.442695
    %v1928 = vpow.pop %v1927
    %v1929 = vadd.f32 %v1928, 1.0
    %v1930 = vrcp.pop %v1929
    %v1931 = vmul.f32 1.0, %v1930
    %v1933 = vrot.slane %v859, 4
    %v1935 = vmul.f32 %v1924, %v1933
    %v1936 = vmul.f32 %v1918, %v1925
    %v1937 = vadd.f32 %v1935, %v1936
    %v1938 = vtanh.pop %v1937
    %v1939 = vmul.f32 %v1931, %v1938
    %v1941 = vrot.slane %v1939, 4
    %1943 = vmatprep.subr.mxu0 0.0
    %1944 = vmatpush1.msra.mxu0 %v199
    %1945 = vmatprep.subr.mxu0 0.0
    %1946 = vmatpush1.msra.mxu0 %v198
    %1947 = vmatprep.subr.mxu0 0.0
    %1948 = vmatpush1.msra.mxu0 %v197
    %1949 = vmatprep.subr.mxu0 0.0
    %1950 = vmatpush1.msra.mxu0 %v196
    %1951 = vmatprep.subr.mxu0 0.0
    %1952 = vmatpush1.msra.mxu0 %v195
    %1953 = vmatprep.subr.mxu0 0.0
    %1954 = vmatpush1.msra.mxu0 %v194
    %1955 = vmatprep.subr.mxu0 0.0
    %1956 = vmatpush1.msra.mxu0 %v193
    %1957 = vmatprep.subr.mxu0 0.0
    %1958 = vmatpush1.msra.mxu0 %v192
    %1959 = vmatprep.subr.mxu0 0.0
    %1960 = vmatpush1.msra.mxu0 %v191
    %1961 = vmatprep.subr.mxu0 0.0
    %1962 = vmatpush1.msra.mxu0 %v190
    %1963 = vmatprep.subr.mxu0 0.0
    %1964 = vmatpush1.msra.mxu0 %v189
    %1965 = vmatprep.subr.mxu0 0.0
    %1966 = vmatpush1.msra.mxu0 %v188
    %1967 = vmatprep.subr.mxu0 0.0
    %1968 = vmatpush1.msra.mxu0 %v187
    %1969 = vmatprep.subr.mxu0 0.0
    %1970 = vmatpush1.msra.mxu0 %v186
    %1971 = vmatprep.subr.mxu0 0.0
    %1972 = vmatpush1.msra.mxu0 %v185
    %1973 = vmatprep.subr.mxu0 0.0
    %1974 = vmatpush1.msra.mxu0 %v184
    %1975 = vmatprep.subr.mxu0 0.0
    %1976 = vmatpush2.msra.mxu0 0.0
    %1977 = vmatprep.subr.mxu0 0.0
    %1978 = vmatpush2.msra.mxu0 0.0
    %1979 = vmatprep.subr.mxu0 0.0
    %1980 = vmatpush2.msra.mxu0 0.0
    %1981 = vmatprep.subr.mxu0 0.0
    %1982 = vmatpush2.msra.mxu0 0.0
    %1983 = vmatprep.subr.mxu0 0.0
    %1984 = vmatpush2.msra.mxu0 0.0
    %1985 = vmatprep.subr.mxu0 0.0
    %1986 = vmatpush2.msra.mxu0 0.0
    %1987 = vmatprep.subr.mxu0 0.0
    %1988 = vmatpush2.msra.mxu0 0.0
    %1989 = vmatprep.subr.mxu0 0.0
    %1990 = vmatpush2.msra.mxu0 0.0
    %1991 = vmatprep.subr.mxu0 0.0
    %1992 = vmatpush2.msra.mxu0 0.0
    %1993 = vmatprep.subr.mxu0 0.0
    %1994 = vmatpush2.msra.mxu0 0.0
    %1995 = vmatprep.subr.mxu0 0.0
    %1996 = vmatpush2.msra.mxu0 0.0
    %1997 = vmatprep.subr.mxu0 0.0
    %1998 = vmatpush2.msra.mxu0 0.0
    %1999 = vmatprep.subr.mxu0 0.0
    %2000 = vmatpush2.msra.mxu0 0.0
    %2001 = vmatprep.subr.mxu0 0.0
    %2002 = vmatpush2.msra.mxu0 0.0
    %2003 = vmatprep.subr.mxu0 0.0
    %2004 = vmatpush2.msra.mxu0 0.0
    %2005 = vmatprep.subr.mxu0 0.0
    %2006 = vmatpush2.msra.mxu0 0.0
    %2007 = vmatprep.mubr.f32.mxu0 0.0
    %2008 = vmatmul.mubr.f32.gmra.mxu0 %v1941
    %v2009 = vpop.f32.mrf.mxu0
    %v2010 = vadd.f32 0.0, %v2009
    %v2011 = vpop.f32.mrf.mxu0
    %2012 = vdwg.mxu0
    %v2015 = vunpack.c.l.s4 1966171168
    %v2016 = vunpack.c.0.s8 %v2015
    %v2017 = vlaneseq
    %v2018 = vshrl.u32 %v2017, 7
    %v2019 = vsub.s32 %v2016, %v2018
    %v2020 = vrot.slane %v2010, %v2019
    %v2021 = vcombine.high %v2020, %v2020
    %v2023 = vunpack.c.l.s4 1966171168
    %v2024 = vunpack.c.0.s8 %v2023
    %v2025 = vlaneseq
    %v2026 = vshrl.u32 %v2025, 7
    %v2027 = vsub.s32 %v2024, %v2026
    %v2028 = vrot.slane %v2020, %v2027
    %v2030 = vunpack.c.l.s4 1966171168
    %v2031 = vunpack.c.0.s8 %v2030
    %v2032 = vlaneseq
    %v2033 = vshrl.u32 %v2032, 7
    %v2034 = vsub.s32 %v2031, %v2033
    %v2035 = vrot.slane %v2021, %v2034
    %v2036 = vcombine.high %v2028, %v2028
    %v2037 = vcombine.high %v2035, %v2035
    %v2038 = vlaneseq
    %v2039 = vshrl.u32 %v2038, 7
    %v2040 = vsub.s32 0, %v2039
    %v2041 = vrot.slane %v2028, %v2040
    %v2042 = vlaneseq
    %v2043 = vshrl.u32 %v2042, 7
    %v2044 = vsub.s32 0, %v2043
    %v2045 = vrot.slane %v2035, %v2044
    %v2046 = vlaneseq
    %v2047 = vshrl.u32 %v2046, 7
    %v2048 = vsub.s32 0, %v2047
    %v2049 = vrot.slane %v2036, %v2048
    %v2050 = vlaneseq
    %v2051 = vshrl.u32 %v2050, 7
    %v2052 = vsub.s32 0, %v2051
    %v2053 = vrot.slane %v2037, %v2052
    %v2058 = vmul.f32 %v48, %v2041
    %v2059 = vmul.f32 %v49, %v2041
    %v2060 = vmul.f32 %v50, %v2045
    %v2061 = vmul.f32 %v51, %v2045
    %v2062 = vmul.f32 %v52, %v2049
    %v2063 = vmul.f32 %v53, %v2049
    %v2064 = vmul.f32 %v54, %v2053
    %v2065 = vmul.f32 %v55, %v2053
    %2066 = vadd.xlane.f32.xlu0 %v2058
    %v2067 = vpop.xlane.xlu0 %2066
    %2068 = vadd.xlane.f32.xlu0 %v2059
    %v2069 = vpop.xlane.xlu0 %2068
    %2070 = vadd.xlane.f32.xlu0 %v2060
    %v2071 = vpop.xlane.xlu0 %2070
    %2072 = vadd.xlane.f32.xlu0 %v2061
    %v2073 = vpop.xlane.xlu0 %2072
    %2074 = vadd.xlane.f32.xlu0 %v2062
    %v2075 = vpop.xlane.xlu0 %2074
    %2076 = vadd.xlane.f32.xlu0 %v2063
    %v2077 = vpop.xlane.xlu0 %2076
    %2078 = vadd.xlane.f32.xlu0 %v2064
    %v2079 = vpop.xlane.xlu0 %2078
    %2080 = vadd.xlane.f32.xlu0 %v2065
    %v2081 = vpop.xlane.xlu0 %2080
    %v2090 = vlaneseq
    %v2091 = vshrl.u32 %v2090, 7
    %v2092 = vsub.s32 %v1010, %v2091
    %v2093 = vrot.slane %v2067, %v2092
    %v2094 = vlaneseq
    %v2095 = vshrl.u32 %v2094, 7
    %v2096 = vsub.s32 %v1015, %v2095
    %v2097 = vrot.slane %v2069, %v2096
    %v2098 = vsel %vm1020, %v2097, %v2093
    %v2099 = vlaneseq
    %v2100 = vshrl.u32 %v2099, 7
    %v2101 = vsub.s32 %v1010, %v2100
    %v2102 = vrot.slane %v2071, %v2101
    %v2103 = vlaneseq
    %v2104 = vshrl.u32 %v2103, 7
    %v2105 = vsub.s32 %v1015, %v2104
    %v2106 = vrot.slane %v2073, %v2105
    %v2107 = vsel %vm1020, %v2106, %v2102
    %v2108 = vlaneseq
    %v2109 = vshrl.u32 %v2108, 7
    %v2110 = vsub.s32 %v1010, %v2109
    %v2111 = vrot.slane %v2075, %v2110
    %v2112 = vlaneseq
    %v2113 = vshrl.u32 %v2112, 7
    %v2114 = vsub.s32 %v1015, %v2113
    %v2115 = vrot.slane %v2077, %v2114
    %v2116 = vsel %vm1020, %v2115, %v2111
    %v2117 = vlaneseq
    %v2118 = vshrl.u32 %v2117, 7
    %v2119 = vsub.s32 %v1010, %v2118
    %v2120 = vrot.slane %v2079, %v2119
    %v2121 = vlaneseq
    %v2122 = vshrl.u32 %v2121, 7
    %v2123 = vsub.s32 %v1015, %v2122
    %v2124 = vrot.slane %v2081, %v2123
    %v2125 = vsel %vm1020, %v2124, %v2120
    %v2126 = vsel %vm1049, %v2107, %v2098
    %v2127 = vsel %vm1051, %v2116, %v2126
    %v2128 = vsel %vm1053, %v2125, %v2127
    %v2130 = vsel %vm1056, %v2128, -inf
    %2131 = vmax.xlane.f32.xlu0 %v2130
    %v2132 = vpop.xlane.xlu0 %2131
    %v2134 = vlaneseq
    %v2135 = vshrl.u32 %v2134, 7
    %v2136 = vsub.s32 0, %v2135
    %v2137 = vrot.slane %v2132, %v2136
    %v2138 = vlaneseq
    %v2139 = vshrl.u32 %v2138, 7
    %v2140 = vsub.s32 1, %v2139
    %v2141 = vrot.slane %v2132, %v2140
    %v2142 = vlaneseq
    %v2143 = vshrl.u32 %v2142, 7
    %v2144 = vsub.s32 2, %v2143
    %v2145 = vrot.slane %v2132, %v2144
    %v2146 = vlaneseq
    %v2147 = vshrl.u32 %v2146, 7
    %v2148 = vsub.s32 3, %v2147
    %v2149 = vrot.slane %v2132, %v2148
    %v2154 = vsub.f32 %v2067, %v2137
    %v2155 = vsub.f32 %v2069, %v2137
    %v2156 = vsub.f32 %v2071, %v2141
    %v2157 = vsub.f32 %v2073, %v2141
    %v2158 = vsub.f32 %v2075, %v2145
    %v2159 = vsub.f32 %v2077, %v2145
    %v2160 = vsub.f32 %v2079, %v2149
    %v2161 = vsub.f32 %v2081, %v2149
    %v2162 = vmul.f32 %v2154, 1.442695
    %v2163 = vpow.pop %v2162
    %v2164 = vmul.f32 %v2155, 1.442695
    %v2165 = vpow.pop %v2164
    %v2166 = vmul.f32 %v2156, 1.442695
    %v2167 = vpow.pop %v2166
    %v2168 = vmul.f32 %v2157, 1.442695
    %v2169 = vpow.pop %v2168
    %v2170 = vmul.f32 %v2158, 1.442695
    %v2171 = vpow.pop %v2170
    %v2172 = vmul.f32 %v2159, 1.442695
    %v2173 = vpow.pop %v2172
    %v2174 = vmul.f32 %v2160, 1.442695
    %v2175 = vpow.pop %v2174
    %v2176 = vmul.f32 %v2161, 1.442695
    %v2177 = vpow.pop %v2176
    %2186 = vset.pattern.permute.xlu0 0
    %2187 = vperm.xlu0 %2186, %v2163
    %v2188 = vpop.permute.xlu0 %2187
    %2189 = vset.pattern.permute.xlu0 0
    %2190 = vperm.xlu0 %2189, %v2165
    %v2191 = vpop.permute.xlu0 %2190
    %2192 = vset.pattern.permute.xlu0 0
    %2193 = vperm.xlu0 %2192, %v2167
    %v2194 = vpop.permute.xlu0 %2193
    %2195 = vset.pattern.permute.xlu0 0
    %2196 = vperm.xlu0 %2195, %v2169
    %v2197 = vpop.permute.xlu0 %2196
    %2198 = vset.pattern.permute.xlu0 0
    %2199 = vperm.xlu0 %2198, %v2171
    %v2200 = vpop.permute.xlu0 %2199
    %2201 = vset.pattern.permute.xlu0 0
    %2202 = vperm.xlu0 %2201, %v2173
    %v2203 = vpop.permute.xlu0 %2202
    %2204 = vset.pattern.permute.xlu0 0
    %2205 = vperm.xlu0 %2204, %v2175
    %v2206 = vpop.permute.xlu0 %2205
    %2207 = vset.pattern.permute.xlu0 0
    %2208 = vperm.xlu0 %2207, %v2177
    %v2209 = vpop.permute.xlu0 %2208
    %v2210 = vlaneseq
    %v2211 = vshrl.u32 %v2210, 7
    %v2212 = vsub.s32 %v1010, %v2211
    %v2213 = vrot.slane %v2188, %v2212
    %v2214 = vlaneseq
    %v2215 = vshrl.u32 %v2214, 7
    %v2216 = vsub.s32 %v1015, %v2215
    %v2217 = vrot.slane %v2191, %v2216
    %v2218 = vsel %vm1020, %v2217, %v2213
    %v2219 = vlaneseq
    %v2220 = vshrl.u32 %v2219, 7
    %v2221 = vsub.s32 %v1010, %v2220
    %v2222 = vrot.slane %v2194, %v2221
    %v2223 = vlaneseq
    %v2224 = vshrl.u32 %v2223, 7
    %v2225 = vsub.s32 %v1015, %v2224
    %v2226 = vrot.slane %v2197, %v2225
    %v2227 = vsel %vm1020, %v2226, %v2222
    %v2228 = vlaneseq
    %v2229 = vshrl.u32 %v2228, 7
    %v2230 = vsub.s32 %v1010, %v2229
    %v2231 = vrot.slane %v2200, %v2230
    %v2232 = vlaneseq
    %v2233 = vshrl.u32 %v2232, 7
    %v2234 = vsub.s32 %v1015, %v2233
    %v2235 = vrot.slane %v2203, %v2234
    %v2236 = vsel %vm1020, %v2235, %v2231
    %v2237 = vlaneseq
    %v2238 = vshrl.u32 %v2237, 7
    %v2239 = vsub.s32 %v1010, %v2238
    %v2240 = vrot.slane %v2206, %v2239
    %v2241 = vlaneseq
    %v2242 = vshrl.u32 %v2241, 7
    %v2243 = vsub.s32 %v1015, %v2242
    %v2244 = vrot.slane %v2209, %v2243
    %v2245 = vsel %vm1020, %v2244, %v2240
    %v2246 = vsel %vm1049, %v2227, %v2218
    %v2247 = vsel %vm1051, %v2236, %v2246
    %v2248 = vsel %vm1053, %v2245, %v2247
    %v2250 = vsel %vm1056, %v2248, 0.0
    %2251 = vadd.xlane.f32.xlu0 %v2250
    %v2252 = vpop.xlane.xlu0 %2251
    %v2253 = vrcp.pop %v2252
    %v2255 = vlaneseq
    %v2256 = vshrl.u32 %v2255, 7
    %v2257 = vsub.s32 0, %v2256
    %v2258 = vrot.slane %v2253, %v2257
    %v2259 = vlaneseq
    %v2260 = vshrl.u32 %v2259, 7
    %v2261 = vsub.s32 1, %v2260
    %v2262 = vrot.slane %v2253, %v2261
    %v2263 = vlaneseq
    %v2264 = vshrl.u32 %v2263, 7
    %v2265 = vsub.s32 2, %v2264
    %v2266 = vrot.slane %v2253, %v2265
    %v2267 = vlaneseq
    %v2268 = vshrl.u32 %v2267, 7
    %v2269 = vsub.s32 3, %v2268
    %v2270 = vrot.slane %v2253, %v2269
    %v2275 = vmul.f32 %v2163, %v2258
    %v2276 = vmul.f32 %v2165, %v2258
    %v2277 = vmul.f32 %v2167, %v2262
    %v2278 = vmul.f32 %v2169, %v2262
    %v2279 = vmul.f32 %v2171, %v2266
    %v2280 = vmul.f32 %v2173, %v2266
    %v2281 = vmul.f32 %v2175, %v2270
    %v2282 = vmul.f32 %v2177, %v2270
    %2284 = vset.pattern.permute.xlu0 0
    %2285 = vperm.xlu0 %2284, %v2275
    %v2286 = vpop.permute.xlu0 %2285
    %2289 = vset.pattern.permute.xlu0 0
    %2290 = vperm.xlu0 %2289, %v2276
    %v2291 = vpop.permute.xlu0 %2290
    %2294 = vset.pattern.permute.xlu0 0
    %2295 = vperm.xlu0 %2294, %v2277
    %v2296 = vpop.permute.xlu0 %2295
    %2299 = vset.pattern.permute.xlu0 0
    %2300 = vperm.xlu0 %2299, %v2278
    %v2301 = vpop.permute.xlu0 %2300
    %2304 = vset.pattern.permute.xlu0 0
    %2305 = vperm.xlu0 %2304, %v2279
    %v2306 = vpop.permute.xlu0 %2305
    %2309 = vset.pattern.permute.xlu0 0
    %2310 = vperm.xlu0 %2309, %v2280
    %v2311 = vpop.permute.xlu0 %2310
    %2314 = vset.pattern.permute.xlu0 0
    %2315 = vperm.xlu0 %2314, %v2281
    %v2316 = vpop.permute.xlu0 %2315
    %2319 = vset.pattern.permute.xlu0 0
    %2320 = vperm.xlu0 %2319, %v2282
    %v2321 = vpop.permute.xlu0 %2320
    %v2323 = vmul.f32 %v2286, %v48
    %v2324 = vmul.f32 %v2291, %v49
    %v2325 = vmul.f32 %v2296, %v50
    %v2326 = vmul.f32 %v2301, %v51
    %v2327 = vmul.f32 %v2306, %v52
    %v2328 = vmul.f32 %v2311, %v53
    %v2329 = vmul.f32 %v2316, %v54
    %v2330 = vmul.f32 %v2321, %v55
    %v2331 = vadd.f32 %v2323, %v2324
    %v2332 = vrot.slane %v2331, 4
    %v2333 = vadd.f32 %v2331, %v2332
    %v2334 = vrot.slane %v2333, 2
    %v2335 = vadd.f32 %v2333, %v2334
    %v2336 = vrot.slane %v2335, 1
    %v2337 = vadd.f32 %v2335, %v2336
    %v2338 = vadd.f32 %v2325, %v2326
    %v2339 = vrot.slane %v2338, 4
    %v2340 = vadd.f32 %v2338, %v2339
    %v2341 = vrot.slane %v2340, 2
    %v2342 = vadd.f32 %v2340, %v2341
    %v2343 = vrot.slane %v2342, 1
    %v2344 = vadd.f32 %v2342, %v2343
    %v2345 = vadd.f32 %v2327, %v2328
    %v2346 = vrot.slane %v2345, 4
    %v2347 = vadd.f32 %v2345, %v2346
    %v2348 = vrot.slane %v2347, 2
    %v2349 = vadd.f32 %v2347, %v2348
    %v2350 = vrot.slane %v2349, 1
    %v2351 = vadd.f32 %v2349, %v2350
    %v2352 = vadd.f32 %v2329, %v2330
    %v2353 = vrot.slane %v2352, 4
    %v2354 = vadd.f32 %v2352, %v2353
    %v2355 = vrot.slane %v2354, 2
    %v2356 = vadd.f32 %v2354, %v2355
    %v2357 = vrot.slane %v2356, 1
    %v2358 = vadd.f32 %v2356, %v2357
    %2359 = vmatprep.subr.mxu0 0.0
    %2360 = vmatpush1.msra.mxu0 %v231
    %2361 = vmatprep.subr.mxu0 0.0
    %2362 = vmatpush1.msra.mxu0 %v230
    %2363 = vmatprep.subr.mxu0 0.0
    %2364 = vmatpush1.msra.mxu0 %v229
    %2365 = vmatprep.subr.mxu0 0.0
    %2366 = vmatpush1.msra.mxu0 %v228
    %2367 = vmatprep.subr.mxu0 0.0
    %2368 = vmatpush1.msra.mxu0 %v227
    %2369 = vmatprep.subr.mxu0 0.0
    %2370 = vmatpush1.msra.mxu0 %v226
    %2371 = vmatprep.subr.mxu0 0.0
    %2372 = vmatpush1.msra.mxu0 %v225
    %2373 = vmatprep.subr.mxu0 0.0
    %2374 = vmatpush1.msra.mxu0 %v224
    %2375 = vmatprep.subr.mxu0 0.0
    %2376 = vmatpush1.msra.mxu0 %v223
    %2377 = vmatprep.subr.mxu0 0.0
    %2378 = vmatpush1.msra.mxu0 %v222
    %2379 = vmatprep.subr.mxu0 0.0
    %2380 = vmatpush1.msra.mxu0 %v221
    %2381 = vmatprep.subr.mxu0 0.0
    %2382 = vmatpush1.msra.mxu0 %v220
    %2383 = vmatprep.subr.mxu0 0.0
    %2384 = vmatpush1.msra.mxu0 %v219
    %2385 = vmatprep.subr.mxu0 0.0
    %2386 = vmatpush1.msra.mxu0 %v218
    %2387 = vmatprep.subr.mxu0 0.0
    %2388 = vmatpush1.msra.mxu0 %v217
    %2389 = vmatprep.subr.mxu0 0.0
    %2390 = vmatpush1.msra.mxu0 %v216
    %2391 = vmatprep.subr.mxu0 0.0
    %2392 = vmatpush2.msra.mxu0 0.0
    %2393 = vmatprep.subr.mxu0 0.0
    %2394 = vmatpush2.msra.mxu0 0.0
    %2395 = vmatprep.subr.mxu0 0.0
    %2396 = vmatpush2.msra.mxu0 0.0
    %2397 = vmatprep.subr.mxu0 0.0
    %2398 = vmatpush2.msra.mxu0 0.0
    %2399 = vmatprep.subr.mxu0 0.0
    %2400 = vmatpush2.msra.mxu0 0.0
    %2401 = vmatprep.subr.mxu0 0.0
    %2402 = vmatpush2.msra.mxu0 0.0
    %2403 = vmatprep.subr.mxu0 0.0
    %2404 = vmatpush2.msra.mxu0 0.0
    %2405 = vmatprep.subr.mxu0 0.0
    %2406 = vmatpush2.msra.mxu0 0.0
    %2407 = vmatprep.subr.mxu0 0.0
    %2408 = vmatpush2.msra.mxu0 0.0
    %2409 = vmatprep.subr.mxu0 0.0
    %2410 = vmatpush2.msra.mxu0 0.0
    %2411 = vmatprep.subr.mxu0 0.0
    %2412 = vmatpush2.msra.mxu0 0.0
    %2413 = vmatprep.subr.mxu0 0.0
    %2414 = vmatpush2.msra.mxu0 0.0
    %2415 = vmatprep.subr.mxu0 0.0
    %2416 = vmatpush2.msra.mxu0 0.0
    %2417 = vmatprep.subr.mxu0 0.0
    %2418 = vmatpush2.msra.mxu0 0.0
    %2419 = vmatprep.subr.mxu0 0.0
    %2420 = vmatpush2.msra.mxu0 0.0
    %2421 = vmatprep.subr.mxu0 0.0
    %2422 = vmatpush2.msra.mxu0 0.0
    %2423 = vmatprep.mubr.f32.mxu0 0.0
    %2424 = vmatmul.mubr.f32.gmra.mxu0 %v1941
    %v2425 = vpop.f32.mrf.mxu0
    %v2426 = vadd.f32 0.0, %v2425
    %v2427 = vpop.f32.mrf.mxu0
    %2428 = vdwg.mxu0
    %v2433 = vsel %vm1049, %v2344, %v2337
    %v2434 = vsel %vm1051, %v2351, %v2433
    %v2435 = vsel %vm1053, %v2358, %v2434
    %2437 = vmatprep.subr.mxu0 0.0
    %2438 = vmatpush1.msra.mxu0 %v215
    %2439 = vmatprep.subr.mxu0 0.0
    %2440 = vmatpush1.msra.mxu0 %v214
    %2441 = vmatprep.subr.mxu0 0.0
    %2442 = vmatpush1.msra.mxu0 %v213
    %2443 = vmatprep.subr.mxu0 0.0
    %2444 = vmatpush1.msra.mxu0 %v212
    %2445 = vmatprep.subr.mxu0 0.0
    %2446 = vmatpush1.msra.mxu0 %v211
    %2447 = vmatprep.subr.mxu0 0.0
    %2448 = vmatpush1.msra.mxu0 %v210
    %2449 = vmatprep.subr.mxu0 0.0
    %2450 = vmatpush1.msra.mxu0 %v209
    %2451 = vmatprep.subr.mxu0 0.0
    %2452 = vmatpush1.msra.mxu0 %v208
    %2453 = vmatprep.subr.mxu0 0.0
    %2454 = vmatpush1.msra.mxu0 %v207
    %2455 = vmatprep.subr.mxu0 0.0
    %2456 = vmatpush1.msra.mxu0 %v206
    %2457 = vmatprep.subr.mxu0 0.0
    %2458 = vmatpush1.msra.mxu0 %v205
    %2459 = vmatprep.subr.mxu0 0.0
    %2460 = vmatpush1.msra.mxu0 %v204
    %2461 = vmatprep.subr.mxu0 0.0
    %2462 = vmatpush1.msra.mxu0 %v203
    %2463 = vmatprep.subr.mxu0 0.0
    %2464 = vmatpush1.msra.mxu0 %v202
    %2465 = vmatprep.subr.mxu0 0.0
    %2466 = vmatpush1.msra.mxu0 %v201
    %2467 = vmatprep.subr.mxu0 0.0
    %2468 = vmatpush1.msra.mxu0 %v200
    %2469 = vmatprep.subr.mxu0 0.0
    %2470 = vmatpush2.msra.mxu0 0.0
    %2471 = vmatprep.subr.mxu0 0.0
    %2472 = vmatpush2.msra.mxu0 0.0
    %2473 = vmatprep.subr.mxu0 0.0
    %2474 = vmatpush2.msra.mxu0 0.0
    %2475 = vmatprep.subr.mxu0 0.0
    %2476 = vmatpush2.msra.mxu0 0.0
    %2477 = vmatprep.subr.mxu0 0.0
    %2478 = vmatpush2.msra.mxu0 0.0
    %2479 = vmatprep.subr.mxu0 0.0
    %2480 = vmatpush2.msra.mxu0 0.0
    %2481 = vmatprep.subr.mxu0 0.0
    %2482 = vmatpush2.msra.mxu0 0.0
    %2483 = vmatprep.subr.mxu0 0.0
    %2484 = vmatpush2.msra.mxu0 0.0
    %2485 = vmatprep.subr.mxu0 0.0
    %2486 = vmatpush2.msra.mxu0 0.0
    %2487 = vmatprep.subr.mxu0 0.0
    %2488 = vmatpush2.msra.mxu0 0.0
    %2489 = vmatprep.subr.mxu0 0.0
    %2490 = vmatpush2.msra.mxu0 0.0
    %2491 = vmatprep.subr.mxu0 0.0
    %2492 = vmatpush2.msra.mxu0 0.0
    %2493 = vmatprep.subr.mxu0 0.0
    %2494 = vmatpush2.msra.mxu0 0.0
    %2495 = vmatprep.subr.mxu0 0.0
    %2496 = vmatpush2.msra.mxu0 0.0
    %2497 = vmatprep.subr.mxu0 0.0
    %2498 = vmatpush2.msra.mxu0 0.0
    %2499 = vmatprep.subr.mxu0 0.0
    %2500 = vmatpush2.msra.mxu0 0.0
    %2501 = vmatprep.mubr.f32.mxu0 0.0
    %2502 = vmatmul.mubr.f32.gmra.mxu0 %v2435
    %v2503 = vpop.f32.mrf.mxu0
    %v2504 = vadd.f32 %v2426, %v2503
    %v2505 = vpop.f32.mrf.mxu0
    %2506 = vdwg.mxu0
    %v2507 = vtanh.pop %v2504
    %v2508 = vlaneseq
    %v2509 = vshrl.u32 %v2508, 7
    %v2510 = vsub.s32 %v1010, %v2509
    %v2511 = vrot.slane %v2286, %v2510
    %v2512 = vlaneseq
    %v2513 = vshrl.u32 %v2512, 7
    %v2514 = vsub.s32 %v1015, %v2513
    %v2515 = vrot.slane %v2291, %v2514
    %v2516 = vsel %vm1020, %v2515, %v2511
    %v2517 = vlaneseq
    %v2518 = vshrl.u32 %v2517, 7
    %v2519 = vsub.s32 %v1010, %v2518
    %v2520 = vrot.slane %v2296, %v2519
    %v2521 = vlaneseq
    %v2522 = vshrl.u32 %v2521, 7
    %v2523 = vsub.s32 %v1015, %v2522
    %v2524 = vrot.slane %v2301, %v2523
    %v2525 = vsel %vm1020, %v2524, %v2520
    %v2526 = vlaneseq
    %v2527 = vshrl.u32 %v2526, 7
    %v2528 = vsub.s32 %v1010, %v2527
    %v2529 = vrot.slane %v2306, %v2528
    %v2530 = vlaneseq
    %v2531 = vshrl.u32 %v2530, 7
    %v2532 = vsub.s32 %v1015, %v2531
    %v2533 = vrot.slane %v2311, %v2532
    %v2534 = vsel %vm1020, %v2533, %v2529
    %v2535 = vlaneseq
    %v2536 = vshrl.u32 %v2535, 7
    %v2537 = vsub.s32 %v1010, %v2536
    %v2538 = vrot.slane %v2316, %v2537
    %v2539 = vlaneseq
    %v2540 = vshrl.u32 %v2539, 7
    %v2541 = vsub.s32 %v1015, %v2540
    %v2542 = vrot.slane %v2321, %v2541
    %v2543 = vsel %vm1020, %v2542, %v2538
    %2548 = vst.msk [vmem:[#allocation4 + $0x1] sm:$0x1] %vm1475, %v2516
    %2549 = vst.msk [vmem:[#allocation4 + $0x9] sm:$0x1] %vm1475, %v2525
    %2550 = vst.msk [vmem:[#allocation4 + $0x11] sm:$0x1] %vm1475, %v2534
    %2551 = vst.msk [vmem:[#allocation4 + $0x19] sm:$0x1] %vm1475, %v2543
    %2552 = vmatprep.subr.mxu0 %v263
    %2553 = vmatpush1.msra.mxu0 %v262
    %2554 = vmatprep.subr.mxu0 %v261
    %2555 = vmatpush1.msra.mxu0 %v260
    %2556 = vmatprep.subr.mxu0 %v259
    %2557 = vmatpush1.msra.mxu0 %v258
    %2558 = vmatprep.subr.mxu0 %v257
    %2559 = vmatpush1.msra.mxu0 %v256
    %2560 = vmatprep.subr.mxu0 %v255
    %2561 = vmatpush1.msra.mxu0 %v254
    %2562 = vmatprep.subr.mxu0 %v253
    %2563 = vmatpush1.msra.mxu0 %v252
    %2564 = vmatprep.subr.mxu0 %v251
    %2565 = vmatpush1.msra.mxu0 %v250
    %2566 = vmatprep.subr.mxu0 %v249
    %2567 = vmatpush1.msra.mxu0 %v248
    %2568 = vmatprep.subr.mxu0 %v247
    %2569 = vmatpush1.msra.mxu0 %v246
    %2570 = vmatprep.subr.mxu0 %v245
    %2571 = vmatpush1.msra.mxu0 %v244
    %2572 = vmatprep.subr.mxu0 %v243
    %2573 = vmatpush1.msra.mxu0 %v242
    %2574 = vmatprep.subr.mxu0 %v241
    %2575 = vmatpush1.msra.mxu0 %v240
    %2576 = vmatprep.subr.mxu0 %v239
    %2577 = vmatpush1.msra.mxu0 %v238
    %2578 = vmatprep.subr.mxu0 %v237
    %2579 = vmatpush1.msra.mxu0 %v236
    %2580 = vmatprep.subr.mxu0 %v235
    %2581 = vmatpush1.msra.mxu0 %v234
    %2582 = vmatprep.subr.mxu0 %v233
    %2583 = vmatpush1.msra.mxu0 %v232
    %2584 = vmatprep.subr.mxu0 0.0
    %2585 = vmatpush2.msra.mxu0 0.0
    %2586 = vmatprep.subr.mxu0 0.0
    %2587 = vmatpush2.msra.mxu0 0.0
    %2588 = vmatprep.subr.mxu0 0.0
    %2589 = vmatpush2.msra.mxu0 0.0
    %2590 = vmatprep.subr.mxu0 0.0
    %2591 = vmatpush2.msra.mxu0 0.0
    %2592 = vmatprep.subr.mxu0 0.0
    %2593 = vmatpush2.msra.mxu0 0.0
    %2594 = vmatprep.subr.mxu0 0.0
    %2595 = vmatpush2.msra.mxu0 0.0
    %2596 = vmatprep.subr.mxu0 0.0
    %2597 = vmatpush2.msra.mxu0 0.0
    %2598 = vmatprep.subr.mxu0 0.0
    %2599 = vmatpush2.msra.mxu0 0.0
    %2600 = vmatprep.subr.mxu0 0.0
    %2601 = vmatpush2.msra.mxu0 0.0
    %2602 = vmatprep.subr.mxu0 0.0
    %2603 = vmatpush2.msra.mxu0 0.0
    %2604 = vmatprep.subr.mxu0 0.0
    %2605 = vmatpush2.msra.mxu0 0.0
    %2606 = vmatprep.subr.mxu0 0.0
    %2607 = vmatpush2.msra.mxu0 0.0
    %2608 = vmatprep.subr.mxu0 0.0
    %2609 = vmatpush2.msra.mxu0 0.0
    %2610 = vmatprep.subr.mxu0 0.0
    %2611 = vmatpush2.msra.mxu0 0.0
    %2612 = vmatprep.subr.mxu0 0.0
    %2613 = vmatpush2.msra.mxu0 0.0
    %2614 = vmatprep.subr.mxu0 0.0
    %2615 = vmatpush2.msra.mxu0 0.0
    %2616 = vmatprep.mubr.f32.mxu0 0.0
    %2617 = vmatmul.mubr.f32.gmra.mxu0 %v2507
    %v2618 = vpop.f32.mrf.mxu0
    %v2619 = vadd.f32 %v269, %v2618
    %v2620 = vpop.f32.mrf.mxu0
    %v2621 = vadd.f32 %v273, %v2620
    %2622 = vdwg.mxu0
    %v2625 = vcombine.low %v2619, %v2621
    %v2627 = vunpack.c.l.s4 1966171168
    %v2628 = vunpack.c.0.s8 %v2627
    %v2629 = vlaneseq
    %v2630 = vshrl.u32 %v2629, 7
    %v2631 = vsub.s32 %v2628, %v2630
    %v2632 = vrot.slane %v2625, %v2631
    %v2633 = vcombine.high %v2632, %v2632
    %v2635 = vunpack.c.l.s4 1966171168
    %v2636 = vunpack.c.0.s8 %v2635
    %v2637 = vlaneseq
    %v2638 = vshrl.u32 %v2637, 7
    %v2639 = vsub.s32 %v2636, %v2638
    %v2640 = vrot.slane %v2632, %v2639
    %v2642 = vunpack.c.l.s4 1966171168
    %v2643 = vunpack.c.0.s8 %v2642
    %v2644 = vlaneseq
    %v2645 = vshrl.u32 %v2644, 7
    %v2646 = vsub.s32 %v2643, %v2645
    %v2647 = vrot.slane %v2633, %v2646
    %v2648 = vcombine.high %v2640, %v2640
    %v2649 = vcombine.high %v2647, %v2647
    %s2654 = scalar_lea.vmem [#allocation2], 1
    %2655 = vst.msk [vmem:[%s2654] ss:$8 sm:$0x3] %vm1585, %v2640
    %2656 = vst.msk [vmem:[%s2654] ss:$8 sm:$0x0] %vm1585, %v2640
    %s2657 = scalar_lea.vmem [#allocation2], 17
    %2658 = vst.msk [vmem:[%s2657] ss:$8 sm:$0x3] %vm1585, %v2647
    %2659 = vst.msk [vmem:[%s2657] ss:$8 sm:$0x0] %vm1585, %v2647
    %s2660 = scalar_lea.vmem [#allocation2], 33
    %2661 = vst.msk [vmem:[%s2660] ss:$8 sm:$0x3] %vm1585, %v2648
    %2662 = vst.msk [vmem:[%s2660] ss:$8 sm:$0x0] %vm1585, %v2648
    %s2663 = scalar_lea.vmem [#allocation2], 49
    %2664 = vst.msk [vmem:[%s2663] ss:$8 sm:$0x3] %vm1585, %v2649
    %2665 = vst.msk [vmem:[%s2663] ss:$8 sm:$0x0] %vm1585, %v2649
    %2666 = vmatprep.subr.mxu0 %v117
    %2667 = vmatpush1.msra.mxu0 %v116
    %2668 = vmatprep.subr.mxu0 %v113
    %2669 = vmatpush1.msra.mxu0 %v112
    %2670 = vmatprep.subr.mxu0 %v109
    %2671 = vmatpush1.msra.mxu0 %v108
    %2672 = vmatprep.subr.mxu0 %v105
    %2673 = vmatpush1.msra.mxu0 %v104
    %2674 = vmatprep.subr.mxu0 %v101
    %2675 = vmatpush1.msra.mxu0 %v100
    %2676 = vmatprep.subr.mxu0 %v97
    %2677 = vmatpush1.msra.mxu0 %v96
    %2678 = vmatprep.subr.mxu0 %v93
    %2679 = vmatpush1.msra.mxu0 %v92
    %2680 = vmatprep.subr.mxu0 %v89
    %2681 = vmatpush1.msra.mxu0 %v88
    %2682 = vmatprep.subr.mxu0 %v85
    %2683 = vmatpush1.msra.mxu0 %v84
    %2684 = vmatprep.subr.mxu0 %v81
    %2685 = vmatpush1.msra.mxu0 %v80
    %2686 = vmatprep.subr.mxu0 %v77
    %2687 = vmatpush1.msra.mxu0 %v76
    %2688 = vmatprep.subr.mxu0 %v73
    %2689 = vmatpush1.msra.mxu0 %v72
    %2690 = vmatprep.subr.mxu0 %v69
    %2691 = vmatpush1.msra.mxu0 %v68
    %2692 = vmatprep.subr.mxu0 %v65
    %2693 = vmatpush1.msra.mxu0 %v64
    %2694 = vmatprep.subr.mxu0 %v61
    %2695 = vmatpush1.msra.mxu0 %v60
    %2696 = vmatprep.subr.mxu0 %v57
    %2697 = vmatpush1.msra.mxu0 %v56
    %2698 = vmatprep.subr.mxu0 0.0
    %2699 = vmatpush2.msra.mxu0 0.0
    %2700 = vmatprep.subr.mxu0 0.0
    %2701 = vmatpush2.msra.mxu0 0.0
    %2702 = vmatprep.subr.mxu0 0.0
    %2703 = vmatpush2.msra.mxu0 0.0
    %2704 = vmatprep.subr.mxu0 0.0
    %2705 = vmatpush2.msra.mxu0 0.0
    %2706 = vmatprep.subr.mxu0 0.0
    %2707 = vmatpush2.msra.mxu0 0.0
    %2708 = vmatprep.subr.mxu0 0.0
    %2709 = vmatpush2.msra.mxu0 0.0
    %2710 = vmatprep.subr.mxu0 0.0
    %2711 = vmatpush2.msra.mxu0 0.0
    %2712 = vmatprep.subr.mxu0 0.0
    %2713 = vmatpush2.msra.mxu0 0.0
    %2714 = vmatprep.subr.mxu0 0.0
    %2715 = vmatpush2.msra.mxu0 0.0
    %2716 = vmatprep.subr.mxu0 0.0
    %2717 = vmatpush2.msra.mxu0 0.0
    %2718 = vmatprep.subr.mxu0 0.0
    %2719 = vmatpush2.msra.mxu0 0.0
    %2720 = vmatprep.subr.mxu0 0.0
    %2721 = vmatpush2.msra.mxu0 0.0
    %2722 = vmatprep.subr.mxu0 0.0
    %2723 = vmatpush2.msra.mxu0 0.0
    %2724 = vmatprep.subr.mxu0 0.0
    %2725 = vmatpush2.msra.mxu0 0.0
    %2726 = vmatprep.subr.mxu0 0.0
    %2727 = vmatpush2.msra.mxu0 0.0
    %2728 = vmatprep.subr.mxu0 0.0
    %2729 = vmatpush2.msra.mxu0 0.0
    %2730 = vmatprep.mubr.f32.mxu0 0.0
    %2731 = vmatmul.mubr.f32.gmra.mxu0 %v2507
    %v2732 = vpop.f32.mrf.mxu0
    %v2733 = vadd.f32 0.0, %v2732
    %v2734 = vpop.f32.mrf.mxu0
    %v2735 = vadd.f32 0.0, %v2734
    %2736 = vdwg.mxu0
    %2737 = vmatprep.subr.mxu0 %v119
    %2738 = vmatpush1.msra.mxu0 %v118
    %2739 = vmatprep.subr.mxu0 %v115
    %2740 = vmatpush1.msra.mxu0 %v114
    %2741 = vmatprep.subr.mxu0 %v111
    %2742 = vmatpush1.msra.mxu0 %v110
    %2743 = vmatprep.subr.mxu0 %v107
    %2744 = vmatpush1.msra.mxu0 %v106
    %2745 = vmatprep.subr.mxu0 %v103
    %2746 = vmatpush1.msra.mxu0 %v102
    %2747 = vmatprep.subr.mxu0 %v99
    %2748 = vmatpush1.msra.mxu0 %v98
    %2749 = vmatprep.subr.mxu0 %v95
    %2750 = vmatpush1.msra.mxu0 %v94
    %2751 = vmatprep.subr.mxu0 %v91
    %2752 = vmatpush1.msra.mxu0 %v90
    %2753 = vmatprep.subr.mxu0 %v87
    %2754 = vmatpush1.msra.mxu0 %v86
    %2755 = vmatprep.subr.mxu0 %v83
    %2756 = vmatpush1.msra.mxu0 %v82
    %2757 = vmatprep.subr.mxu0 %v79
    %2758 = vmatpush1.msra.mxu0 %v78
    %2759 = vmatprep.subr.mxu0 %v75
    %2760 = vmatpush1.msra.mxu0 %v74
    %2761 = vmatprep.subr.mxu0 %v71
    %2762 = vmatpush1.msra.mxu0 %v70
    %2763 = vmatprep.subr.mxu0 %v67
    %2764 = vmatpush1.msra.mxu0 %v66
    %2765 = vmatprep.subr.mxu0 %v63
    %2766 = vmatpush1.msra.mxu0 %v62
    %2767 = vmatprep.subr.mxu0 %v59
    %2768 = vmatpush1.msra.mxu0 %v58
    %2769 = vmatprep.subr.mxu0 0.0
    %2770 = vmatpush2.msra.mxu0 0.0
    %2771 = vmatprep.subr.mxu0 0.0
    %2772 = vmatpush2.msra.mxu0 0.0
    %2773 = vmatprep.subr.mxu0 0.0
    %2774 = vmatpush2.msra.mxu0 0.0
    %2775 = vmatprep.subr.mxu0 0.0
    %2776 = vmatpush2.msra.mxu0 0.0
    %2777 = vmatprep.subr.mxu0 0.0
    %2778 = vmatpush2.msra.mxu0 0.0
    %2779 = vmatprep.subr.mxu0 0.0
    %2780 = vmatpush2.msra.mxu0 0.0
    %2781 = vmatprep.subr.mxu0 0.0
    %2782 = vmatpush2.msra.mxu0 0.0
    %2783 = vmatprep.subr.mxu0 0.0
    %2784 = vmatpush2.msra.mxu0 0.0
    %2785 = vmatprep.subr.mxu0 0.0
    %2786 = vmatpush2.msra.mxu0 0.0
    %2787 = vmatprep.subr.mxu0 0.0
    %2788 = vmatpush2.msra.mxu0 0.0
    %2789 = vmatprep.subr.mxu0 0.0
    %2790 = vmatpush2.msra.mxu0 0.0
    %2791 = vmatprep.subr.mxu0 0.0
    %2792 = vmatpush2.msra.mxu0 0.0
    %2793 = vmatprep.subr.mxu0 0.0
    %2794 = vmatpush2.msra.mxu0 0.0
    %2795 = vmatprep.subr.mxu0 0.0
    %2796 = vmatpush2.msra.mxu0 0.0
    %2797 = vmatprep.subr.mxu0 0.0
    %2798 = vmatpush2.msra.mxu0 0.0
    %2799 = vmatprep.subr.mxu0 0.0
    %2800 = vmatpush2.msra.mxu0 0.0
    %2801 = vmatprep.mubr.f32.mxu0 0.0
    %2802 = vmatmul.mubr.f32.gmra.mxu0 %v2507
    %v2803 = vpop.f32.mrf.mxu0
    %v2804 = vadd.f32 0.0, %v2803
    %v2805 = vpop.f32.mrf.mxu0
    %v2806 = vadd.f32 0.0, %v2805
    %2807 = vdwg.mxu0
    %v2808 = vadd.f32 %v439, %v2733
    %v2809 = vadd.f32 %v441, %v2735
    %v2810 = vadd.f32 %v528, %v2804
    %v2811 = vadd.f32 %v530, %v2806
    %2812 = vmatprep.subr.mxu0 %v181
    %2813 = vmatpush1.msra.mxu0 %v180
    %2814 = vmatprep.subr.mxu0 %v177
    %2815 = vmatpush1.msra.mxu0 %v176
    %2816 = vmatprep.subr.mxu0 %v173
    %2817 = vmatpush1.msra.mxu0 %v172
    %2818 = vmatprep.subr.mxu0 %v169
    %2819 = vmatpush1.msra.mxu0 %v168
    %2820 = vmatprep.subr.mxu0 %v165
    %2821 = vmatpush1.msra.mxu0 %v164
    %2822 = vmatprep.subr.mxu0 %v161
    %2823 = vmatpush1.msra.mxu0 %v160
    %2824 = vmatprep.subr.mxu0 %v157
    %2825 = vmatpush1.msra.mxu0 %v156
    %2826 = vmatprep.subr.mxu0 %v153
    %2827 = vmatpush1.msra.mxu0 %v152
    %2828 = vmatprep.subr.mxu0 %v149
    %2829 = vmatpush1.msra.mxu0 %v148
    %2830 = vmatprep.subr.mxu0 %v145
    %2831 = vmatpush1.msra.mxu0 %v144
    %2832 = vmatprep.subr.mxu0 %v141
    %2833 = vmatpush1.msra.mxu0 %v140
    %2834 = vmatprep.subr.mxu0 %v137
    %2835 = vmatpush1.msra.mxu0 %v136
    %2836 = vmatprep.subr.mxu0 %v133
    %2837 = vmatpush1.msra.mxu0 %v132
    %2838 = vmatprep.subr.mxu0 %v129
    %2839 = vmatpush1.msra.mxu0 %v128
    %2840 = vmatprep.subr.mxu0 %v125
    %2841 = vmatpush1.msra.mxu0 %v124
    %2842 = vmatprep.subr.mxu0 %v121
    %2843 = vmatpush1.msra.mxu0 %v120
    %2844 = vmatprep.subr.mxu0 0.0
    %2845 = vmatpush2.msra.mxu0 0.0
    %2846 = vmatprep.subr.mxu0 0.0
    %2847 = vmatpush2.msra.mxu0 0.0
    %2848 = vmatprep.subr.mxu0 0.0
    %2849 = vmatpush2.msra.mxu0 0.0
    %2850 = vmatprep.subr.mxu0 0.0
    %2851 = vmatpush2.msra.mxu0 0.0
    %2852 = vmatprep.subr.mxu0 0.0
    %2853 = vmatpush2.msra.mxu0 0.0
    %2854 = vmatprep.subr.mxu0 0.0
    %2855 = vmatpush2.msra.mxu0 0.0
    %2856 = vmatprep.subr.mxu0 0.0
    %2857 = vmatpush2.msra.mxu0 0.0
    %2858 = vmatprep.subr.mxu0 0.0
    %2859 = vmatpush2.msra.mxu0 0.0
    %2860 = vmatprep.subr.mxu0 0.0
    %2861 = vmatpush2.msra.mxu0 0.0
    %2862 = vmatprep.subr.mxu0 0.0
    %2863 = vmatpush2.msra.mxu0 0.0
    %2864 = vmatprep.subr.mxu0 0.0
    %2865 = vmatpush2.msra.mxu0 0.0
    %2866 = vmatprep.subr.mxu0 0.0
    %2867 = vmatpush2.msra.mxu0 0.0
    %2868 = vmatprep.subr.mxu0 0.0
    %2869 = vmatpush2.msra.mxu0 0.0
    %2870 = vmatprep.subr.mxu0 0.0
    %2871 = vmatpush2.msra.mxu0 0.0
    %2872 = vmatprep.subr.mxu0 0.0
    %2873 = vmatpush2.msra.mxu0 0.0
    %2874 = vmatprep.subr.mxu0 0.0
    %2875 = vmatpush2.msra.mxu0 0.0
    %2876 = vmatprep.mubr.f32.mxu0 0.0
    %2877 = vmatmul.mubr.f32.gmra.mxu0 %v1941
    %v2878 = vpop.f32.mrf.mxu0
    %v2879 = vadd.f32 0.0, %v2878
    %v2880 = vpop.f32.mrf.mxu0
    %v2881 = vadd.f32 0.0, %v2880
    %2882 = vdwg.mxu0
    %2883 = vmatprep.subr.mxu0 %v183
    %2884 = vmatpush1.msra.mxu0 %v182
    %2885 = vmatprep.subr.mxu0 %v179
    %2886 = vmatpush1.msra.mxu0 %v178
    %2887 = vmatprep.subr.mxu0 %v175
    %2888 = vmatpush1.msra.mxu0 %v174
    %2889 = vmatprep.subr.mxu0 %v171
    %2890 = vmatpush1.msra.mxu0 %v170
    %2891 = vmatprep.subr.mxu0 %v167
    %2892 = vmatpush1.msra.mxu0 %v166
    %2893 = vmatprep.subr.mxu0 %v163
    %2894 = vmatpush1.msra.mxu0 %v162
    %2895 = vmatprep.subr.mxu0 %v159
    %2896 = vmatpush1.msra.mxu0 %v158
    %2897 = vmatprep.subr.mxu0 %v155
    %2898 = vmatpush1.msra.mxu0 %v154
    %2899 = vmatprep.subr.mxu0 %v151
    %2900 = vmatpush1.msra.mxu0 %v150
    %2901 = vmatprep.subr.mxu0 %v147
    %2902 = vmatpush1.msra.mxu0 %v146
    %2903 = vmatprep.subr.mxu0 %v143
    %2904 = vmatpush1.msra.mxu0 %v142
    %2905 = vmatprep.subr.mxu0 %v139
    %2906 = vmatpush1.msra.mxu0 %v138
    %2907 = vmatprep.subr.mxu0 %v135
    %2908 = vmatpush1.msra.mxu0 %v134
    %2909 = vmatprep.subr.mxu0 %v131
    %2910 = vmatpush1.msra.mxu0 %v130
    %2911 = vmatprep.subr.mxu0 %v127
    %2912 = vmatpush1.msra.mxu0 %v126
    %2913 = vmatprep.subr.mxu0 %v123
    %2914 = vmatpush1.msra.mxu0 %v122
    %2915 = vmatprep.subr.mxu0 0.0
    %2916 = vmatpush2.msra.mxu0 0.0
    %2917 = vmatprep.subr.mxu0 0.0
    %2918 = vmatpush2.msra.mxu0 0.0
    %2919 = vmatprep.subr.mxu0 0.0
    %2920 = vmatpush2.msra.mxu0 0.0
    %2921 = vmatprep.subr.mxu0 0.0
    %2922 = vmatpush2.msra.mxu0 0.0
    %2923 = vmatprep.subr.mxu0 0.0
    %2924 = vmatpush2.msra.mxu0 0.0
    %2925 = vmatprep.subr.mxu0 0.0
    %2926 = vmatpush2.msra.mxu0 0.0
    %2927 = vmatprep.subr.mxu0 0.0
    %2928 = vmatpush2.msra.mxu0 0.0
    %2929 = vmatprep.subr.mxu0 0.0
    %2930 = vmatpush2.msra.mxu0 0.0
    %2931 = vmatprep.subr.mxu0 0.0
    %2932 = vmatpush2.msra.mxu0 0.0
    %2933 = vmatprep.subr.mxu0 0.0
    %2934 = vmatpush2.msra.mxu0 0.0
    %2935 = vmatprep.subr.mxu0 0.0
    %2936 = vmatpush2.msra.mxu0 0.0
    %2937 = vmatprep.subr.mxu0 0.0
    %2938 = vmatpush2.msra.mxu0 0.0
    %2939 = vmatprep.subr.mxu0 0.0
    %2940 = vmatpush2.msra.mxu0 0.0
    %2941 = vmatprep.subr.mxu0 0.0
    %2942 = vmatpush2.msra.mxu0 0.0
    %2943 = vmatprep.subr.mxu0 0.0
    %2944 = vmatpush2.msra.mxu0 0.0
    %2945 = vmatprep.subr.mxu0 0.0
    %2946 = vmatpush2.msra.mxu0 0.0
    %2947 = vmatprep.mubr.f32.mxu0 0.0
    %2948 = vmatmul.mubr.f32.gmra.mxu0 %v1941
    %v2949 = vpop.f32.mrf.mxu0
    %v2950 = vadd.f32 0.0, %v2949
    %v2951 = vpop.f32.mrf.mxu0
    %v2952 = vadd.f32 0.0, %v2951
    %2953 = vdwg.mxu0
    %v2954 = vadd.f32 %v2808, %v2879
    %v2955 = vadd.f32 %v2809, %v2881
    %v2956 = vadd.f32 %v2810, %v2950
    %v2957 = vadd.f32 %v2811, %v2952
    %v2958 = vxor.u32 %v2954, 2147483648
    %v2959 = vmul.f32 %v2958, 1.442695
    %v2960 = vpow.pop %v2959
    %v2961 = vadd.f32 %v2960, 1.0
    %v2962 = vrcp.pop %v2961
    %v2963 = vmul.f32 1.0, %v2962
    %v2964 = vxor.u32 %v2955, 2147483648
    %v2965 = vmul.f32 %v2964, 1.442695
    %v2966 = vpow.pop %v2965
    %v2967 = vadd.f32 %v2966, 1.0
    %v2968 = vrcp.pop %v2967
    %v2969 = vmul.f32 1.0, %v2968
    %v2970 = vtanh.pop %v2956
    %v2971 = vxor.u32 %v2957, 2147483648
    %v2972 = vmul.f32 %v2971, 1.442695
    %v2973 = vpow.pop %v2972
    %v2974 = vadd.f32 %v2973, 1.0
    %v2975 = vrcp.pop %v2974
    %v2976 = vmul.f32 1.0, %v2975
    %v2978 = vrot.slane %v1937, 4
    %v2980 = vmul.f32 %v2969, %v2978
    %v2981 = vmul.f32 %v2963, %v2970
    %v2982 = vadd.f32 %v2980, %v2981
    %v2983 = vtanh.pop %v2982
    %v2984 = vmul.f32 %v2976, %v2983
    %2985 = vmatprep.subr.mxu0 0.0
    %2986 = vmatpush1.msra.mxu0 %v199
    %2987 = vmatprep.subr.mxu0 0.0
    %2988 = vmatpush1.msra.mxu0 %v198
    %2989 = vmatprep.subr.mxu0 0.0
    %2990 = vmatpush1.msra.mxu0 %v197
    %2991 = vmatprep.subr.mxu0 0.0
    %2992 = vmatpush1.msra.mxu0 %v196
    %2993 = vmatprep.subr.mxu0 0.0
    %2994 = vmatpush1.msra.mxu0 %v195
    %2995 = vmatprep.subr.mxu0 0.0
    %2996 = vmatpush1.msra.mxu0 %v194
    %2997 = vmatprep.subr.mxu0 0.0
    %2998 = vmatpush1.msra.mxu0 %v193
    %2999 = vmatprep.subr.mxu0 0.0
    %3000 = vmatpush1.msra.mxu0 %v192
    %3001 = vmatprep.subr.mxu0 0.0
    %3002 = vmatpush1.msra.mxu0 %v191
    %3003 = vmatprep.subr.mxu0 0.0
    %3004 = vmatpush1.msra.mxu0 %v190
    %3005 = vmatprep.subr.mxu0 0.0
    %3006 = vmatpush1.msra.mxu0 %v189
    %3007 = vmatprep.subr.mxu0 0.0
    %3008 = vmatpush1.msra.mxu0 %v188
    %3009 = vmatprep.subr.mxu0 0.0
    %3010 = vmatpush1.msra.mxu0 %v187
    %3011 = vmatprep.subr.mxu0 0.0
    %3012 = vmatpush1.msra.mxu0 %v186
    %3013 = vmatprep.subr.mxu0 0.0
    %3014 = vmatpush1.msra.mxu0 %v185
    %3015 = vmatprep.subr.mxu0 0.0
    %3016 = vmatpush1.msra.mxu0 %v184
    %3017 = vmatprep.subr.mxu0 0.0
    %3018 = vmatpush2.msra.mxu0 0.0
    %3019 = vmatprep.subr.mxu0 0.0
    %3020 = vmatpush2.msra.mxu0 0.0
    %3021 = vmatprep.subr.mxu0 0.0
    %3022 = vmatpush2.msra.mxu0 0.0
    %3023 = vmatprep.subr.mxu0 0.0
    %3024 = vmatpush2.msra.mxu0 0.0
    %3025 = vmatprep.subr.mxu0 0.0
    %3026 = vmatpush2.msra.mxu0 0.0
    %3027 = vmatprep.subr.mxu0 0.0
    %3028 = vmatpush2.msra.mxu0 0.0
    %3029 = vmatprep.subr.mxu0 0.0
    %3030 = vmatpush2.msra.mxu0 0.0
    %3031 = vmatprep.subr.mxu0 0.0
    %3032 = vmatpush2.msra.mxu0 0.0
    %3033 = vmatprep.subr.mxu0 0.0
    %3034 = vmatpush2.msra.mxu0 0.0
    %3035 = vmatprep.subr.mxu0 0.0
    %3036 = vmatpush2.msra.mxu0 0.0
    %3037 = vmatprep.subr.mxu0 0.0
    %3038 = vmatpush2.msra.mxu0 0.0
    %3039 = vmatprep.subr.mxu0 0.0
    %3040 = vmatpush2.msra.mxu0 0.0
    %3041 = vmatprep.subr.mxu0 0.0
    %3042 = vmatpush2.msra.mxu0 0.0
    %3043 = vmatprep.subr.mxu0 0.0
    %3044 = vmatpush2.msra.mxu0 0.0
    %3045 = vmatprep.subr.mxu0 0.0
    %3046 = vmatpush2.msra.mxu0 0.0
    %3047 = vmatprep.subr.mxu0 0.0
    %3048 = vmatpush2.msra.mxu0 0.0
    %3049 = vmatprep.mubr.f32.mxu0 0.0
    %3050 = vmatmul.mubr.f32.gmra.mxu0 %v2984
    %v3051 = vpop.f32.mrf.mxu0
    %v3052 = vadd.f32 0.0, %v3051
    %v3053 = vpop.f32.mrf.mxu0
    %3054 = vdwg.mxu0
    %v3057 = vunpack.c.l.s4 1966171168
    %v3058 = vunpack.c.0.s8 %v3057
    %v3059 = vlaneseq
    %v3060 = vshrl.u32 %v3059, 7
    %v3061 = vsub.s32 %v3058, %v3060
    %v3062 = vrot.slane %v3052, %v3061
    %v3063 = vcombine.high %v3062, %v3062
    %v3065 = vunpack.c.l.s4 1966171168
    %v3066 = vunpack.c.0.s8 %v3065
    %v3067 = vlaneseq
    %v3068 = vshrl.u32 %v3067, 7
    %v3069 = vsub.s32 %v3066, %v3068
    %v3070 = vrot.slane %v3062, %v3069
    %v3072 = vunpack.c.l.s4 1966171168
    %v3073 = vunpack.c.0.s8 %v3072
    %v3074 = vlaneseq
    %v3075 = vshrl.u32 %v3074, 7
    %v3076 = vsub.s32 %v3073, %v3075
    %v3077 = vrot.slane %v3063, %v3076
    %v3078 = vcombine.high %v3070, %v3070
    %v3079 = vcombine.high %v3077, %v3077
    %v3080 = vlaneseq
    %v3081 = vshrl.u32 %v3080, 7
    %v3082 = vsub.s32 0, %v3081
    %v3083 = vrot.slane %v3070, %v3082
    %v3084 = vlaneseq
    %v3085 = vshrl.u32 %v3084, 7
    %v3086 = vsub.s32 0, %v3085
    %v3087 = vrot.slane %v3077, %v3086
    %v3088 = vlaneseq
    %v3089 = vshrl.u32 %v3088, 7
    %v3090 = vsub.s32 0, %v3089
    %v3091 = vrot.slane %v3078, %v3090
    %v3092 = vlaneseq
    %v3093 = vshrl.u32 %v3092, 7
    %v3094 = vsub.s32 0, %v3093
    %v3095 = vrot.slane %v3079, %v3094
    %v3100 = vmul.f32 %v48, %v3083
    %v3101 = vmul.f32 %v49, %v3083
    %v3102 = vmul.f32 %v50, %v3087
    %v3103 = vmul.f32 %v51, %v3087
    %v3104 = vmul.f32 %v52, %v3091
    %v3105 = vmul.f32 %v53, %v3091
    %v3106 = vmul.f32 %v54, %v3095
    %v3107 = vmul.f32 %v55, %v3095
    %3108 = vadd.xlane.f32.xlu0 %v3100
    %v3109 = vpop.xlane.xlu0 %3108
    %3110 = vadd.xlane.f32.xlu0 %v3101
    %v3111 = vpop.xlane.xlu0 %3110
    %3112 = vadd.xlane.f32.xlu0 %v3102
    %v3113 = vpop.xlane.xlu0 %3112
    %3114 = vadd.xlane.f32.xlu0 %v3103
    %v3115 = vpop.xlane.xlu0 %3114
    %3116 = vadd.xlane.f32.xlu0 %v3104
    %v3117 = vpop.xlane.xlu0 %3116
    %3118 = vadd.xlane.f32.xlu0 %v3105
    %v3119 = vpop.xlane.xlu0 %3118
    %3120 = vadd.xlane.f32.xlu0 %v3106
    %v3121 = vpop.xlane.xlu0 %3120
    %3122 = vadd.xlane.f32.xlu0 %v3107
    %v3123 = vpop.xlane.xlu0 %3122
    %v3132 = vlaneseq
    %v3133 = vshrl.u32 %v3132, 7
    %v3134 = vsub.s32 %v1010, %v3133
    %v3135 = vrot.slane %v3109, %v3134
    %v3136 = vlaneseq
    %v3137 = vshrl.u32 %v3136, 7
    %v3138 = vsub.s32 %v1015, %v3137
    %v3139 = vrot.slane %v3111, %v3138
    %v3140 = vsel %vm1020, %v3139, %v3135
    %v3141 = vlaneseq
    %v3142 = vshrl.u32 %v3141, 7
    %v3143 = vsub.s32 %v1010, %v3142
    %v3144 = vrot.slane %v3113, %v3143
    %v3145 = vlaneseq
    %v3146 = vshrl.u32 %v3145, 7
    %v3147 = vsub.s32 %v1015, %v3146
    %v3148 = vrot.slane %v3115, %v3147
    %v3149 = vsel %vm1020, %v3148, %v3144
    %v3150 = vlaneseq
    %v3151 = vshrl.u32 %v3150, 7
    %v3152 = vsub.s32 %v1010, %v3151
    %v3153 = vrot.slane %v3117, %v3152
    %v3154 = vlaneseq
    %v3155 = vshrl.u32 %v3154, 7
    %v3156 = vsub.s32 %v1015, %v3155
    %v3157 = vrot.slane %v3119, %v3156
    %v3158 = vsel %vm1020, %v3157, %v3153
    %v3159 = vlaneseq
    %v3160 = vshrl.u32 %v3159, 7
    %v3161 = vsub.s32 %v1010, %v3160
    %v3162 = vrot.slane %v3121, %v3161
    %v3163 = vlaneseq
    %v3164 = vshrl.u32 %v3163, 7
    %v3165 = vsub.s32 %v1015, %v3164
    %v3166 = vrot.slane %v3123, %v3165
    %v3167 = vsel %vm1020, %v3166, %v3162
    %v3168 = vsel %vm1049, %v3149, %v3140
    %v3169 = vsel %vm1051, %v3158, %v3168
    %v3170 = vsel %vm1053, %v3167, %v3169
    %v3172 = vsel %vm1056, %v3170, -inf
    %3173 = vmax.xlane.f32.xlu0 %v3172
    %v3174 = vpop.xlane.xlu0 %3173
    %v3176 = vlaneseq
    %v3177 = vshrl.u32 %v3176, 7
    %v3178 = vsub.s32 0, %v3177
    %v3179 = vrot.slane %v3174, %v3178
    %v3180 = vlaneseq
    %v3181 = vshrl.u32 %v3180, 7
    %v3182 = vsub.s32 1, %v3181
    %v3183 = vrot.slane %v3174, %v3182
    %v3184 = vlaneseq
    %v3185 = vshrl.u32 %v3184, 7
    %v3186 = vsub.s32 2, %v3185
    %v3187 = vrot.slane %v3174, %v3186
    %v3188 = vlaneseq
    %v3189 = vshrl.u32 %v3188, 7
    %v3190 = vsub.s32 3, %v3189
    %v3191 = vrot.slane %v3174, %v3190
    %v3196 = vsub.f32 %v3109, %v3179
    %v3197 = vsub.f32 %v3111, %v3179
    %v3198 = vsub.f32 %v3113, %v3183
    %v3199 = vsub.f32 %v3115, %v3183
    %v3200 = vsub.f32 %v3117, %v3187
    %v3201 = vsub.f32 %v3119, %v3187
    %v3202 = vsub.f32 %v3121, %v3191
    %v3203 = vsub.f32 %v3123, %v3191
    %v3204 = vmul.f32 %v3196, 1.442695
    %v3205 = vpow.pop %v3204
    %v3206 = vmul.f32 %v3197, 1.442695
    %v3207 = vpow.pop %v3206
    %v3208 = vmul.f32 %v3198, 1.442695
    %v3209 = vpow.pop %v3208
    %v3210 = vmul.f32 %v3199, 1.442695
    %v3211 = vpow.pop %v3210
    %v3212 = vmul.f32 %v3200, 1.442695
    %v3213 = vpow.pop %v3212
    %v3214 = vmul.f32 %v3201, 1.442695
    %v3215 = vpow.pop %v3214
    %v3216 = vmul.f32 %v3202, 1.442695
    %v3217 = vpow.pop %v3216
    %v3218 = vmul.f32 %v3203, 1.442695
    %v3219 = vpow.pop %v3218
    %3228 = vset.pattern.permute.xlu0 0
    %3229 = vperm.xlu0 %3228, %v3205
    %v3230 = vpop.permute.xlu0 %3229
    %3231 = vset.pattern.permute.xlu0 0
    %3232 = vperm.xlu0 %3231, %v3207
    %v3233 = vpop.permute.xlu0 %3232
    %3234 = vset.pattern.permute.xlu0 0
    %3235 = vperm.xlu0 %3234, %v3209
    %v3236 = vpop.permute.xlu0 %3235
    %3237 = vset.pattern.permute.xlu0 0
    %3238 = vperm.xlu0 %3237, %v3211
    %v3239 = vpop.permute.xlu0 %3238
    %3240 = vset.pattern.permute.xlu0 0
    %3241 = vperm.xlu0 %3240, %v3213
    %v3242 = vpop.permute.xlu0 %3241
    %3243 = vset.pattern.permute.xlu0 0
    %3244 = vperm.xlu0 %3243, %v3215
    %v3245 = vpop.permute.xlu0 %3244
    %3246 = vset.pattern.permute.xlu0 0
    %3247 = vperm.xlu0 %3246, %v3217
    %v3248 = vpop.permute.xlu0 %3247
    %3249 = vset.pattern.permute.xlu0 0
    %3250 = vperm.xlu0 %3249, %v3219
    %v3251 = vpop.permute.xlu0 %3250
    %v3252 = vlaneseq
    %v3253 = vshrl.u32 %v3252, 7
    %v3254 = vsub.s32 %v1010, %v3253
    %v3255 = vrot.slane %v3230, %v3254
    %v3256 = vlaneseq
    %v3257 = vshrl.u32 %v3256, 7
    %v3258 = vsub.s32 %v1015, %v3257
    %v3259 = vrot.slane %v3233, %v3258
    %v3260 = vsel %vm1020, %v3259, %v3255
    %v3261 = vlaneseq
    %v3262 = vshrl.u32 %v3261, 7
    %v3263 = vsub.s32 %v1010, %v3262
    %v3264 = vrot.slane %v3236, %v3263
    %v3265 = vlaneseq
    %v3266 = vshrl.u32 %v3265, 7
    %v3267 = vsub.s32 %v1015, %v3266
    %v3268 = vrot.slane %v3239, %v3267
    %v3269 = vsel %vm1020, %v3268, %v3264
    %v3270 = vlaneseq
    %v3271 = vshrl.u32 %v3270, 7
    %v3272 = vsub.s32 %v1010, %v3271
    %v3273 = vrot.slane %v3242, %v3272
    %v3274 = vlaneseq
    %v3275 = vshrl.u32 %v3274, 7
    %v3276 = vsub.s32 %v1015, %v3275
    %v3277 = vrot.slane %v3245, %v3276
    %v3278 = vsel %vm1020, %v3277, %v3273
    %v3279 = vlaneseq
    %v3280 = vshrl.u32 %v3279, 7
    %v3281 = vsub.s32 %v1010, %v3280
    %v3282 = vrot.slane %v3248, %v3281
    %v3283 = vlaneseq
    %v3284 = vshrl.u32 %v3283, 7
    %v3285 = vsub.s32 %v1015, %v3284
    %v3286 = vrot.slane %v3251, %v3285
    %v3287 = vsel %vm1020, %v3286, %v3282
    %v3288 = vsel %vm1049, %v3269, %v3260
    %v3289 = vsel %vm1051, %v3278, %v3288
    %v3290 = vsel %vm1053, %v3287, %v3289
    %v3292 = vsel %vm1056, %v3290, 0.0
    %3293 = vadd.xlane.f32.xlu0 %v3292
    %v3294 = vpop.xlane.xlu0 %3293
    %v3295 = vrcp.pop %v3294
    %v3297 = vlaneseq
    %v3298 = vshrl.u32 %v3297, 7
    %v3299 = vsub.s32 0, %v3298
    %v3300 = vrot.slane %v3295, %v3299
    %v3301 = vlaneseq
    %v3302 = vshrl.u32 %v3301, 7
    %v3303 = vsub.s32 1, %v3302
    %v3304 = vrot.slane %v3295, %v3303
    %v3305 = vlaneseq
    %v3306 = vshrl.u32 %v3305, 7
    %v3307 = vsub.s32 2, %v3306
    %v3308 = vrot.slane %v3295, %v3307
    %v3309 = vlaneseq
    %v3310 = vshrl.u32 %v3309, 7
    %v3311 = vsub.s32 3, %v3310
    %v3312 = vrot.slane %v3295, %v3311
    %v3317 = vmul.f32 %v3205, %v3300
    %v3318 = vmul.f32 %v3207, %v3300
    %v3319 = vmul.f32 %v3209, %v3304
    %v3320 = vmul.f32 %v3211, %v3304
    %v3321 = vmul.f32 %v3213, %v3308
    %v3322 = vmul.f32 %v3215, %v3308
    %v3323 = vmul.f32 %v3217, %v3312
    %v3324 = vmul.f32 %v3219, %v3312
    %3326 = vset.pattern.permute.xlu0 0
    %3327 = vperm.xlu0 %3326, %v3317
    %v3328 = vpop.permute.xlu0 %3327
    %3331 = vset.pattern.permute.xlu0 0
    %3332 = vperm.xlu0 %3331, %v3318
    %v3333 = vpop.permute.xlu0 %3332
    %3336 = vset.pattern.permute.xlu0 0
    %3337 = vperm.xlu0 %3336, %v3319
    %v3338 = vpop.permute.xlu0 %3337
    %3341 = vset.pattern.permute.xlu0 0
    %3342 = vperm.xlu0 %3341, %v3320
    %v3343 = vpop.permute.xlu0 %3342
    %3346 = vset.pattern.permute.xlu0 0
    %3347 = vperm.xlu0 %3346, %v3321
    %v3348 = vpop.permute.xlu0 %3347
    %3351 = vset.pattern.permute.xlu0 0
    %3352 = vperm.xlu0 %3351, %v3322
    %v3353 = vpop.permute.xlu0 %3352
    %3356 = vset.pattern.permute.xlu0 0
    %3357 = vperm.xlu0 %3356, %v3323
    %v3358 = vpop.permute.xlu0 %3357
    %3361 = vset.pattern.permute.xlu0 0
    %3362 = vperm.xlu0 %3361, %v3324
    %v3363 = vpop.permute.xlu0 %3362
    %v3365 = vmul.f32 %v3328, %v48
    %v3366 = vmul.f32 %v3333, %v49
    %v3367 = vmul.f32 %v3338, %v50
    %v3368 = vmul.f32 %v3343, %v51
    %v3369 = vmul.f32 %v3348, %v52
    %v3370 = vmul.f32 %v3353, %v53
    %v3371 = vmul.f32 %v3358, %v54
    %v3372 = vmul.f32 %v3363, %v55
    %v3373 = vadd.f32 %v3365, %v3366
    %v3374 = vrot.slane %v3373, 4
    %v3375 = vadd.f32 %v3373, %v3374
    %v3376 = vrot.slane %v3375, 2
    %v3377 = vadd.f32 %v3375, %v3376
    %v3378 = vrot.slane %v3377, 1
    %v3379 = vadd.f32 %v3377, %v3378
    %v3380 = vadd.f32 %v3367, %v3368
    %v3381 = vrot.slane %v3380, 4
    %v3382 = vadd.f32 %v3380, %v3381
    %v3383 = vrot.slane %v3382, 2
    %v3384 = vadd.f32 %v3382, %v3383
    %v3385 = vrot.slane %v3384, 1
    %v3386 = vadd.f32 %v3384, %v3385
    %v3387 = vadd.f32 %v3369, %v3370
    %v3388 = vrot.slane %v3387, 4
    %v3389 = vadd.f32 %v3387, %v3388
    %v3390 = vrot.slane %v3389, 2
    %v3391 = vadd.f32 %v3389, %v3390
    %v3392 = vrot.slane %v3391, 1
    %v3393 = vadd.f32 %v3391, %v3392
    %v3394 = vadd.f32 %v3371, %v3372
    %v3395 = vrot.slane %v3394, 4
    %v3396 = vadd.f32 %v3394, %v3395
    %v3397 = vrot.slane %v3396, 2
    %v3398 = vadd.f32 %v3396, %v3397
    %v3399 = vrot.slane %v3398, 1
    %v3400 = vadd.f32 %v3398, %v3399
    %3401 = vmatprep.subr.mxu0 0.0
    %3402 = vmatpush1.msra.mxu0 %v231
    %3403 = vmatprep.subr.mxu0 0.0
    %3404 = vmatpush1.msra.mxu0 %v230
    %3405 = vmatprep.subr.mxu0 0.0
    %3406 = vmatpush1.msra.mxu0 %v229
    %3407 = vmatprep.subr.mxu0 0.0
    %3408 = vmatpush1.msra.mxu0 %v228
    %3409 = vmatprep.subr.mxu0 0.0
    %3410 = vmatpush1.msra.mxu0 %v227
    %3411 = vmatprep.subr.mxu0 0.0
    %3412 = vmatpush1.msra.mxu0 %v226
    %3413 = vmatprep.subr.mxu0 0.0
    %3414 = vmatpush1.msra.mxu0 %v225
    %3415 = vmatprep.subr.mxu0 0.0
    %3416 = vmatpush1.msra.mxu0 %v224
    %3417 = vmatprep.subr.mxu0 0.0
    %3418 = vmatpush1.msra.mxu0 %v223
    %3419 = vmatprep.subr.mxu0 0.0
    %3420 = vmatpush1.msra.mxu0 %v222
    %3421 = vmatprep.subr.mxu0 0.0
    %3422 = vmatpush1.msra.mxu0 %v221
    %3423 = vmatprep.subr.mxu0 0.0
    %3424 = vmatpush1.msra.mxu0 %v220
    %3425 = vmatprep.subr.mxu0 0.0
    %3426 = vmatpush1.msra.mxu0 %v219
    %3427 = vmatprep.subr.mxu0 0.0
    %3428 = vmatpush1.msra.mxu0 %v218
    %3429 = vmatprep.subr.mxu0 0.0
    %3430 = vmatpush1.msra.mxu0 %v217
    %3431 = vmatprep.subr.mxu0 0.0
    %3432 = vmatpush1.msra.mxu0 %v216
    %3433 = vmatprep.subr.mxu0 0.0
    %3434 = vmatpush2.msra.mxu0 0.0
    %3435 = vmatprep.subr.mxu0 0.0
    %3436 = vmatpush2.msra.mxu0 0.0
    %3437 = vmatprep.subr.mxu0 0.0
    %3438 = vmatpush2.msra.mxu0 0.0
    %3439 = vmatprep.subr.mxu0 0.0
    %3440 = vmatpush2.msra.mxu0 0.0
    %3441 = vmatprep.subr.mxu0 0.0
    %3442 = vmatpush2.msra.mxu0 0.0
    %3443 = vmatprep.subr.mxu0 0.0
    %3444 = vmatpush2.msra.mxu0 0.0
    %3445 = vmatprep.subr.mxu0 0.0
    %3446 = vmatpush2.msra.mxu0 0.0
    %3447 = vmatprep.subr.mxu0 0.0
    %3448 = vmatpush2.msra.mxu0 0.0
    %3449 = vmatprep.subr.mxu0 0.0
    %3450 = vmatpush2.msra.mxu0 0.0
    %3451 = vmatprep.subr.mxu0 0.0
    %3452 = vmatpush2.msra.mxu0 0.0
    %3453 = vmatprep.subr.mxu0 0.0
    %3454 = vmatpush2.msra.mxu0 0.0
    %3455 = vmatprep.subr.mxu0 0.0
    %3456 = vmatpush2.msra.mxu0 0.0
    %3457 = vmatprep.subr.mxu0 0.0
    %3458 = vmatpush2.msra.mxu0 0.0
    %3459 = vmatprep.subr.mxu0 0.0
    %3460 = vmatpush2.msra.mxu0 0.0
    %3461 = vmatprep.subr.mxu0 0.0
    %3462 = vmatpush2.msra.mxu0 0.0
    %3463 = vmatprep.subr.mxu0 0.0
    %3464 = vmatpush2.msra.mxu0 0.0
    %3465 = vmatprep.mubr.f32.mxu0 0.0
    %3466 = vmatmul.mubr.f32.gmra.mxu0 %v2984
    %v3467 = vpop.f32.mrf.mxu0
    %v3468 = vadd.f32 0.0, %v3467
    %v3469 = vpop.f32.mrf.mxu0
    %3470 = vdwg.mxu0
    %v3475 = vsel %vm1049, %v3386, %v3379
    %v3476 = vsel %vm1051, %v3393, %v3475
    %v3477 = vsel %vm1053, %v3400, %v3476
    %3479 = vmatprep.subr.mxu0 0.0
    %3480 = vmatpush1.msra.mxu0 %v215
    %3481 = vmatprep.subr.mxu0 0.0
    %3482 = vmatpush1.msra.mxu0 %v214
    %3483 = vmatprep.subr.mxu0 0.0
    %3484 = vmatpush1.msra.mxu0 %v213
    %3485 = vmatprep.subr.mxu0 0.0
    %3486 = vmatpush1.msra.mxu0 %v212
    %3487 = vmatprep.subr.mxu0 0.0
    %3488 = vmatpush1.msra.mxu0 %v211
    %3489 = vmatprep.subr.mxu0 0.0
    %3490 = vmatpush1.msra.mxu0 %v210
    %3491 = vmatprep.subr.mxu0 0.0
    %3492 = vmatpush1.msra.mxu0 %v209
    %3493 = vmatprep.subr.mxu0 0.0
    %3494 = vmatpush1.msra.mxu0 %v208
    %3495 = vmatprep.subr.mxu0 0.0
    %3496 = vmatpush1.msra.mxu0 %v207
    %3497 = vmatprep.subr.mxu0 0.0
    %3498 = vmatpush1.msra.mxu0 %v206
    %3499 = vmatprep.subr.mxu0 0.0
    %3500 = vmatpush1.msra.mxu0 %v205
    %3501 = vmatprep.subr.mxu0 0.0
    %3502 = vmatpush1.msra.mxu0 %v204
    %3503 = vmatprep.subr.mxu0 0.0
    %3504 = vmatpush1.msra.mxu0 %v203
    %3505 = vmatprep.subr.mxu0 0.0
    %3506 = vmatpush1.msra.mxu0 %v202
    %3507 = vmatprep.subr.mxu0 0.0
    %3508 = vmatpush1.msra.mxu0 %v201
    %3509 = vmatprep.subr.mxu0 0.0
    %3510 = vmatpush1.msra.mxu0 %v200
    %3511 = vmatprep.subr.mxu0 0.0
    %3512 = vmatpush2.msra.mxu0 0.0
    %3513 = vmatprep.subr.mxu0 0.0
    %3514 = vmatpush2.msra.mxu0 0.0
    %3515 = vmatprep.subr.mxu0 0.0
    %3516 = vmatpush2.msra.mxu0 0.0
    %3517 = vmatprep.subr.mxu0 0.0
    %3518 = vmatpush2.msra.mxu0 0.0
    %3519 = vmatprep.subr.mxu0 0.0
    %3520 = vmatpush2.msra.mxu0 0.0
    %3521 = vmatprep.subr.mxu0 0.0
    %3522 = vmatpush2.msra.mxu0 0.0
    %3523 = vmatprep.subr.mxu0 0.0
    %3524 = vmatpush2.msra.mxu0 0.0
    %3525 = vmatprep.subr.mxu0 0.0
    %3526 = vmatpush2.msra.mxu0 0.0
    %3527 = vmatprep.subr.mxu0 0.0
    %3528 = vmatpush2.msra.mxu0 0.0
    %3529 = vmatprep.subr.mxu0 0.0
    %3530 = vmatpush2.msra.mxu0 0.0
    %3531 = vmatprep.subr.mxu0 0.0
    %3532 = vmatpush2.msra.mxu0 0.0
    %3533 = vmatprep.subr.mxu0 0.0
    %3534 = vmatpush2.msra.mxu0 0.0
    %3535 = vmatprep.subr.mxu0 0.0
    %3536 = vmatpush2.msra.mxu0 0.0
    %3537 = vmatprep.subr.mxu0 0.0
    %3538 = vmatpush2.msra.mxu0 0.0
    %3539 = vmatprep.subr.mxu0 0.0
    %3540 = vmatpush2.msra.mxu0 0.0
    %3541 = vmatprep.subr.mxu0 0.0
    %3542 = vmatpush2.msra.mxu0 0.0
    %3543 = vmatprep.mubr.f32.mxu0 0.0
    %3544 = vmatmul.mubr.f32.gmra.mxu0 %v3477
    %v3545 = vpop.f32.mrf.mxu0
    %v3546 = vadd.f32 %v3468, %v3545
    %v3547 = vpop.f32.mrf.mxu0
    %3548 = vdwg.mxu0
    %v3549 = vtanh.pop %v3546
    %v3550 = vlaneseq
    %v3551 = vshrl.u32 %v3550, 7
    %v3552 = vsub.s32 %v1010, %v3551
    %v3553 = vrot.slane %v3328, %v3552
    %v3554 = vlaneseq
    %v3555 = vshrl.u32 %v3554, 7
    %v3556 = vsub.s32 %v1015, %v3555
    %v3557 = vrot.slane %v3333, %v3556
    %v3558 = vsel %vm1020, %v3557, %v3553
    %v3559 = vlaneseq
    %v3560 = vshrl.u32 %v3559, 7
    %v3561 = vsub.s32 %v1010, %v3560
    %v3562 = vrot.slane %v3338, %v3561
    %v3563 = vlaneseq
    %v3564 = vshrl.u32 %v3563, 7
    %v3565 = vsub.s32 %v1015, %v3564
    %v3566 = vrot.slane %v3343, %v3565
    %v3567 = vsel %vm1020, %v3566, %v3562
    %v3568 = vlaneseq
    %v3569 = vshrl.u32 %v3568, 7
    %v3570 = vsub.s32 %v1010, %v3569
    %v3571 = vrot.slane %v3348, %v3570
    %v3572 = vlaneseq
    %v3573 = vshrl.u32 %v3572, 7
    %v3574 = vsub.s32 %v1015, %v3573
    %v3575 = vrot.slane %v3353, %v3574
    %v3576 = vsel %vm1020, %v3575, %v3571
    %v3577 = vlaneseq
    %v3578 = vshrl.u32 %v3577, 7
    %v3579 = vsub.s32 %v1010, %v3578
    %v3580 = vrot.slane %v3358, %v3579
    %v3581 = vlaneseq
    %v3582 = vshrl.u32 %v3581, 7
    %v3583 = vsub.s32 %v1015, %v3582
    %v3584 = vrot.slane %v3363, %v3583
    %v3585 = vsel %vm1020, %v3584, %v3580
    %3590 = vst.msk [vmem:[#allocation4 + $0x2] sm:$0x1] %vm1475, %v3558
    %3591 = vst.msk [vmem:[#allocation4 + $0xa] sm:$0x1] %vm1475, %v3567
    %3592 = vst.msk [vmem:[#allocation4 + $0x12] sm:$0x1] %vm1475, %v3576
    %3593 = vst.msk [vmem:[#allocation4 + $0x1a] sm:$0x1] %vm1475, %v3585
    %3594 = vmatprep.subr.mxu0 %v263
    %3595 = vmatpush1.msra.mxu0 %v262
    %3596 = vmatprep.subr.mxu0 %v261
    %3597 = vmatpush1.msra.mxu0 %v260
    %3598 = vmatprep.subr.mxu0 %v259
    %3599 = vmatpush1.msra.mxu0 %v258
    %3600 = vmatprep.subr.mxu0 %v257
    %3601 = vmatpush1.msra.mxu0 %v256
    %3602 = vmatprep.subr.mxu0 %v255
    %3603 = vmatpush1.msra.mxu0 %v254
    %3604 = vmatprep.subr.mxu0 %v253
    %3605 = vmatpush1.msra.mxu0 %v252
    %3606 = vmatprep.subr.mxu0 %v251
    %3607 = vmatpush1.msra.mxu0 %v250
    %3608 = vmatprep.subr.mxu0 %v249
    %3609 = vmatpush1.msra.mxu0 %v248
    %3610 = vmatprep.subr.mxu0 %v247
    %3611 = vmatpush1.msra.mxu0 %v246
    %3612 = vmatprep.subr.mxu0 %v245
    %3613 = vmatpush1.msra.mxu0 %v244
    %3614 = vmatprep.subr.mxu0 %v243
    %3615 = vmatpush1.msra.mxu0 %v242
    %3616 = vmatprep.subr.mxu0 %v241
    %3617 = vmatpush1.msra.mxu0 %v240
    %3618 = vmatprep.subr.mxu0 %v239
    %3619 = vmatpush1.msra.mxu0 %v238
    %3620 = vmatprep.subr.mxu0 %v237
    %3621 = vmatpush1.msra.mxu0 %v236
    %3622 = vmatprep.subr.mxu0 %v235
    %3623 = vmatpush1.msra.mxu0 %v234
    %3624 = vmatprep.subr.mxu0 %v233
    %3625 = vmatpush1.msra.mxu0 %v232
    %3626 = vmatprep.subr.mxu0 0.0
    %3627 = vmatpush2.msra.mxu0 0.0
    %3628 = vmatprep.subr.mxu0 0.0
    %3629 = vmatpush2.msra.mxu0 0.0
    %3630 = vmatprep.subr.mxu0 0.0
    %3631 = vmatpush2.msra.mxu0 0.0
    %3632 = vmatprep.subr.mxu0 0.0
    %3633 = vmatpush2.msra.mxu0 0.0
    %3634 = vmatprep.subr.mxu0 0.0
    %3635 = vmatpush2.msra.mxu0 0.0
    %3636 = vmatprep.subr.mxu0 0.0
    %3637 = vmatpush2.msra.mxu0 0.0
    %3638 = vmatprep.subr.mxu0 0.0
    %3639 = vmatpush2.msra.mxu0 0.0
    %3640 = vmatprep.subr.mxu0 0.0
    %3641 = vmatpush2.msra.mxu0 0.0
    %3642 = vmatprep.subr.mxu0 0.0
    %3643 = vmatpush2.msra.mxu0 0.0
    %3644 = vmatprep.subr.mxu0 0.0
    %3645 = vmatpush2.msra.mxu0 0.0
    %3646 = vmatprep.subr.mxu0 0.0
    %3647 = vmatpush2.msra.mxu0 0.0
    %3648 = vmatprep.subr.mxu0 0.0
    %3649 = vmatpush2.msra.mxu0 0.0
    %3650 = vmatprep.subr.mxu0 0.0
    %3651 = vmatpush2.msra.mxu0 0.0
    %3652 = vmatprep.subr.mxu0 0.0
    %3653 = vmatpush2.msra.mxu0 0.0
    %3654 = vmatprep.subr.mxu0 0.0
    %3655 = vmatpush2.msra.mxu0 0.0
    %3656 = vmatprep.subr.mxu0 0.0
    %3657 = vmatpush2.msra.mxu0 0.0
    %3658 = vmatprep.mubr.f32.mxu0 0.0
    %3659 = vmatmul.mubr.f32.gmra.mxu0 %v3549
    %v3660 = vpop.f32.mrf.mxu0
    %v3661 = vadd.f32 %v269, %v3660
    %v3662 = vpop.f32.mrf.mxu0
    %v3663 = vadd.f32 %v273, %v3662
    %3664 = vdwg.mxu0
    %v3667 = vcombine.low %v3661, %v3663
    %v3669 = vunpack.c.l.s4 1966171168
    %v3670 = vunpack.c.0.s8 %v3669
    %v3671 = vlaneseq
    %v3672 = vshrl.u32 %v3671, 7
    %v3673 = vsub.s32 %v3670, %v3672
    %v3674 = vrot.slane %v3667, %v3673
    %v3675 = vcombine.high %v3674, %v3674
    %v3677 = vunpack.c.l.s4 1966171168
    %v3678 = vunpack.c.0.s8 %v3677
    %v3679 = vlaneseq
    %v3680 = vshrl.u32 %v3679, 7
    %v3681 = vsub.s32 %v3678, %v3680
    %v3682 = vrot.slane %v3674, %v3681
    %v3684 = vunpack.c.l.s4 1966171168
    %v3685 = vunpack.c.0.s8 %v3684
    %v3686 = vlaneseq
    %v3687 = vshrl.u32 %v3686, 7
    %v3688 = vsub.s32 %v3685, %v3687
    %v3689 = vrot.slane %v3675, %v3688
    %v3690 = vcombine.high %v3682, %v3682
    %v3691 = vcombine.high %v3689, %v3689
    %s3696 = scalar_lea.vmem [#allocation2], 2
    %3697 = vst.msk [vmem:[%s3696] ss:$8 sm:$0x3] %vm1585, %v3682
    %3698 = vst.msk [vmem:[%s3696] ss:$8 sm:$0x0] %vm1585, %v3682
    %s3699 = scalar_lea.vmem [#allocation2], 18
    %3700 = vst.msk [vmem:[%s3699] ss:$8 sm:$0x3] %vm1585, %v3689
    %3701 = vst.msk [vmem:[%s3699] ss:$8 sm:$0x0] %vm1585, %v3689
    %s3702 = scalar_lea.vmem [#allocation2], 34
    %3703 = vst.msk [vmem:[%s3702] ss:$8 sm:$0x3] %vm1585, %v3690
    %3704 = vst.msk [vmem:[%s3702] ss:$8 sm:$0x0] %vm1585, %v3690
    %s3705 = scalar_lea.vmem [#allocation2], 50
    %3706 = vst.msk [vmem:[%s3705] ss:$8 sm:$0x3] %vm1585, %v3691
    %3707 = vst.msk [vmem:[%s3705] ss:$8 sm:$0x0] %vm1585, %v3691
    %3708 = vmatprep.subr.mxu0 %v117
    %3709 = vmatpush1.msra.mxu0 %v116
    %3710 = vmatprep.subr.mxu0 %v113
    %3711 = vmatpush1.msra.mxu0 %v112
    %3712 = vmatprep.subr.mxu0 %v109
    %3713 = vmatpush1.msra.mxu0 %v108
    %3714 = vmatprep.subr.mxu0 %v105
    %3715 = vmatpush1.msra.mxu0 %v104
    %3716 = vmatprep.subr.mxu0 %v101
    %3717 = vmatpush1.msra.mxu0 %v100
    %3718 = vmatprep.subr.mxu0 %v97
    %3719 = vmatpush1.msra.mxu0 %v96
    %3720 = vmatprep.subr.mxu0 %v93
    %3721 = vmatpush1.msra.mxu0 %v92
    %3722 = vmatprep.subr.mxu0 %v89
    %3723 = vmatpush1.msra.mxu0 %v88
    %3724 = vmatprep.subr.mxu0 %v85
    %3725 = vmatpush1.msra.mxu0 %v84
    %3726 = vmatprep.subr.mxu0 %v81
    %3727 = vmatpush1.msra.mxu0 %v80
    %3728 = vmatprep.subr.mxu0 %v77
    %3729 = vmatpush1.msra.mxu0 %v76
    %3730 = vmatprep.subr.mxu0 %v73
    %3731 = vmatpush1.msra.mxu0 %v72
    %3732 = vmatprep.subr.mxu0 %v69
    %3733 = vmatpush1.msra.mxu0 %v68
    %3734 = vmatprep.subr.mxu0 %v65
    %3735 = vmatpush1.msra.mxu0 %v64
    %3736 = vmatprep.subr.mxu0 %v61
    %3737 = vmatpush1.msra.mxu0 %v60
    %3738 = vmatprep.subr.mxu0 %v57
    %3739 = vmatpush1.msra.mxu0 %v56
    %3740 = vmatprep.subr.mxu0 0.0
    %3741 = vmatpush2.msra.mxu0 0.0
    %3742 = vmatprep.subr.mxu0 0.0
    %3743 = vmatpush2.msra.mxu0 0.0
    %3744 = vmatprep.subr.mxu0 0.0
    %3745 = vmatpush2.msra.mxu0 0.0
    %3746 = vmatprep.subr.mxu0 0.0
    %3747 = vmatpush2.msra.mxu0 0.0
    %3748 = vmatprep.subr.mxu0 0.0
    %3749 = vmatpush2.msra.mxu0 0.0
    %3750 = vmatprep.subr.mxu0 0.0
    %3751 = vmatpush2.msra.mxu0 0.0
    %3752 = vmatprep.subr.mxu0 0.0
    %3753 = vmatpush2.msra.mxu0 0.0
    %3754 = vmatprep.subr.mxu0 0.0
    %3755 = vmatpush2.msra.mxu0 0.0
    %3756 = vmatprep.subr.mxu0 0.0
    %3757 = vmatpush2.msra.mxu0 0.0
    %3758 = vmatprep.subr.mxu0 0.0
    %3759 = vmatpush2.msra.mxu0 0.0
    %3760 = vmatprep.subr.mxu0 0.0
    %3761 = vmatpush2.msra.mxu0 0.0
    %3762 = vmatprep.subr.mxu0 0.0
    %3763 = vmatpush2.msra.mxu0 0.0
    %3764 = vmatprep.subr.mxu0 0.0
    %3765 = vmatpush2.msra.mxu0 0.0
    %3766 = vmatprep.subr.mxu0 0.0
    %3767 = vmatpush2.msra.mxu0 0.0
    %3768 = vmatprep.subr.mxu0 0.0
    %3769 = vmatpush2.msra.mxu0 0.0
    %3770 = vmatprep.subr.mxu0 0.0
    %3771 = vmatpush2.msra.mxu0 0.0
    %3772 = vmatprep.mubr.f32.mxu0 0.0
    %3773 = vmatmul.mubr.f32.gmra.mxu0 %v3549
    %v3774 = vpop.f32.mrf.mxu0
    %v3775 = vadd.f32 0.0, %v3774
    %v3776 = vpop.f32.mrf.mxu0
    %v3777 = vadd.f32 0.0, %v3776
    %3778 = vdwg.mxu0
    %3779 = vmatprep.subr.mxu0 %v119
    %3780 = vmatpush1.msra.mxu0 %v118
    %3781 = vmatprep.subr.mxu0 %v115
    %3782 = vmatpush1.msra.mxu0 %v114
    %3783 = vmatprep.subr.mxu0 %v111
    %3784 = vmatpush1.msra.mxu0 %v110
    %3785 = vmatprep.subr.mxu0 %v107
    %3786 = vmatpush1.msra.mxu0 %v106
    %3787 = vmatprep.subr.mxu0 %v103
    %3788 = vmatpush1.msra.mxu0 %v102
    %3789 = vmatprep.subr.mxu0 %v99
    %3790 = vmatpush1.msra.mxu0 %v98
    %3791 = vmatprep.subr.mxu0 %v95
    %3792 = vmatpush1.msra.mxu0 %v94
    %3793 = vmatprep.subr.mxu0 %v91
    %3794 = vmatpush1.msra.mxu0 %v90
    %3795 = vmatprep.subr.mxu0 %v87
    %3796 = vmatpush1.msra.mxu0 %v86
    %3797 = vmatprep.subr.mxu0 %v83
    %3798 = vmatpush1.msra.mxu0 %v82
    %3799 = vmatprep.subr.mxu0 %v79
    %3800 = vmatpush1.msra.mxu0 %v78
    %3801 = vmatprep.subr.mxu0 %v75
    %3802 = vmatpush1.msra.mxu0 %v74
    %3803 = vmatprep.subr.mxu0 %v71
    %3804 = vmatpush1.msra.mxu0 %v70
    %3805 = vmatprep.subr.mxu0 %v67
    %3806 = vmatpush1.msra.mxu0 %v66
    %3807 = vmatprep.subr.mxu0 %v63
    %3808 = vmatpush1.msra.mxu0 %v62
    %3809 = vmatprep.subr.mxu0 %v59
    %3810 = vmatpush1.msra.mxu0 %v58
    %3811 = vmatprep.subr.mxu0 0.0
    %3812 = vmatpush2.msra.mxu0 0.0
    %3813 = vmatprep.subr.mxu0 0.0
    %3814 = vmatpush2.msra.mxu0 0.0
    %3815 = vmatprep.subr.mxu0 0.0
    %3816 = vmatpush2.msra.mxu0 0.0
    %3817 = vmatprep.subr.mxu0 0.0
    %3818 = vmatpush2.msra.mxu0 0.0
    %3819 = vmatprep.subr.mxu0 0.0
    %3820 = vmatpush2.msra.mxu0 0.0
    %3821 = vmatprep.subr.mxu0 0.0
    %3822 = vmatpush2.msra.mxu0 0.0
    %3823 = vmatprep.subr.mxu0 0.0
    %3824 = vmatpush2.msra.mxu0 0.0
    %3825 = vmatprep.subr.mxu0 0.0
    %3826 = vmatpush2.msra.mxu0 0.0
    %3827 = vmatprep.subr.mxu0 0.0
    %3828 = vmatpush2.msra.mxu0 0.0
    %3829 = vmatprep.subr.mxu0 0.0
    %3830 = vmatpush2.msra.mxu0 0.0
    %3831 = vmatprep.subr.mxu0 0.0
    %3832 = vmatpush2.msra.mxu0 0.0
    %3833 = vmatprep.subr.mxu0 0.0
    %3834 = vmatpush2.msra.mxu0 0.0
    %3835 = vmatprep.subr.mxu0 0.0
    %3836 = vmatpush2.msra.mxu0 0.0
    %3837 = vmatprep.subr.mxu0 0.0
    %3838 = vmatpush2.msra.mxu0 0.0
    %3839 = vmatprep.subr.mxu0 0.0
    %3840 = vmatpush2.msra.mxu0 0.0
    %3841 = vmatprep.subr.mxu0 0.0
    %3842 = vmatpush2.msra.mxu0 0.0
    %3843 = vmatprep.mubr.f32.mxu0 0.0
    %3844 = vmatmul.mubr.f32.gmra.mxu0 %v3549
    %v3845 = vpop.f32.mrf.mxu0
    %v3846 = vadd.f32 0.0, %v3845
    %v3847 = vpop.f32.mrf.mxu0
    %v3848 = vadd.f32 0.0, %v3847
    %3849 = vdwg.mxu0
    %v3854 = vrot.slane %v3775, 4
    %v3855 = vrot.slane %v3777, 4
    %v3856 = vrot.slane %v3846, 4
    %v3857 = vrot.slane %v3848, 4
    %v3862 = vadd.f32 %v439, %v3854
    %v3863 = vadd.f32 %v441, %v3855
    %v3864 = vadd.f32 %v528, %v3856
    %v3865 = vadd.f32 %v530, %v3857
    %3866 = vmatprep.subr.mxu0 %v181
    %3867 = vmatpush1.msra.mxu0 %v180
    %3868 = vmatprep.subr.mxu0 %v177
    %3869 = vmatpush1.msra.mxu0 %v176
    %3870 = vmatprep.subr.mxu0 %v173
    %3871 = vmatpush1.msra.mxu0 %v172
    %3872 = vmatprep.subr.mxu0 %v169
    %3873 = vmatpush1.msra.mxu0 %v168
    %3874 = vmatprep.subr.mxu0 %v165
    %3875 = vmatpush1.msra.mxu0 %v164
    %3876 = vmatprep.subr.mxu0 %v161
    %3877 = vmatpush1.msra.mxu0 %v160
    %3878 = vmatprep.subr.mxu0 %v157
    %3879 = vmatpush1.msra.mxu0 %v156
    %3880 = vmatprep.subr.mxu0 %v153
    %3881 = vmatpush1.msra.mxu0 %v152
    %3882 = vmatprep.subr.mxu0 %v149
    %3883 = vmatpush1.msra.mxu0 %v148
    %3884 = vmatprep.subr.mxu0 %v145
    %3885 = vmatpush1.msra.mxu0 %v144
    %3886 = vmatprep.subr.mxu0 %v141
    %3887 = vmatpush1.msra.mxu0 %v140
    %3888 = vmatprep.subr.mxu0 %v137
    %3889 = vmatpush1.msra.mxu0 %v136
    %3890 = vmatprep.subr.mxu0 %v133
    %3891 = vmatpush1.msra.mxu0 %v132
    %3892 = vmatprep.subr.mxu0 %v129
    %3893 = vmatpush1.msra.mxu0 %v128
    %3894 = vmatprep.subr.mxu0 %v125
    %3895 = vmatpush1.msra.mxu0 %v124
    %3896 = vmatprep.subr.mxu0 %v121
    %3897 = vmatpush1.msra.mxu0 %v120
    %3898 = vmatprep.subr.mxu0 0.0
    %3899 = vmatpush2.msra.mxu0 0.0
    %3900 = vmatprep.subr.mxu0 0.0
    %3901 = vmatpush2.msra.mxu0 0.0
    %3902 = vmatprep.subr.mxu0 0.0
    %3903 = vmatpush2.msra.mxu0 0.0
    %3904 = vmatprep.subr.mxu0 0.0
    %3905 = vmatpush2.msra.mxu0 0.0
    %3906 = vmatprep.subr.mxu0 0.0
    %3907 = vmatpush2.msra.mxu0 0.0
    %3908 = vmatprep.subr.mxu0 0.0
    %3909 = vmatpush2.msra.mxu0 0.0
    %3910 = vmatprep.subr.mxu0 0.0
    %3911 = vmatpush2.msra.mxu0 0.0
    %3912 = vmatprep.subr.mxu0 0.0
    %3913 = vmatpush2.msra.mxu0 0.0
    %3914 = vmatprep.subr.mxu0 0.0
    %3915 = vmatpush2.msra.mxu0 0.0
    %3916 = vmatprep.subr.mxu0 0.0
    %3917 = vmatpush2.msra.mxu0 0.0
    %3918 = vmatprep.subr.mxu0 0.0
    %3919 = vmatpush2.msra.mxu0 0.0
    %3920 = vmatprep.subr.mxu0 0.0
    %3921 = vmatpush2.msra.mxu0 0.0
    %3922 = vmatprep.subr.mxu0 0.0
    %3923 = vmatpush2.msra.mxu0 0.0
    %3924 = vmatprep.subr.mxu0 0.0
    %3925 = vmatpush2.msra.mxu0 0.0
    %3926 = vmatprep.subr.mxu0 0.0
    %3927 = vmatpush2.msra.mxu0 0.0
    %3928 = vmatprep.subr.mxu0 0.0
    %3929 = vmatpush2.msra.mxu0 0.0
    %3930 = vmatprep.mubr.f32.mxu0 0.0
    %3931 = vmatmul.mubr.f32.gmra.mxu0 %v2984
    %v3932 = vpop.f32.mrf.mxu0
    %v3933 = vadd.f32 0.0, %v3932
    %v3934 = vpop.f32.mrf.mxu0
    %v3935 = vadd.f32 0.0, %v3934
    %3936 = vdwg.mxu0
    %3937 = vmatprep.subr.mxu0 %v183
    %3938 = vmatpush1.msra.mxu0 %v182
    %3939 = vmatprep.subr.mxu0 %v179
    %3940 = vmatpush1.msra.mxu0 %v178
    %3941 = vmatprep.subr.mxu0 %v175
    %3942 = vmatpush1.msra.mxu0 %v174
    %3943 = vmatprep.subr.mxu0 %v171
    %3944 = vmatpush1.msra.mxu0 %v170
    %3945 = vmatprep.subr.mxu0 %v167
    %3946 = vmatpush1.msra.mxu0 %v166
    %3947 = vmatprep.subr.mxu0 %v163
    %3948 = vmatpush1.msra.mxu0 %v162
    %3949 = vmatprep.subr.mxu0 %v159
    %3950 = vmatpush1.msra.mxu0 %v158
    %3951 = vmatprep.subr.mxu0 %v155
    %3952 = vmatpush1.msra.mxu0 %v154
    %3953 = vmatprep.subr.mxu0 %v151
    %3954 = vmatpush1.msra.mxu0 %v150
    %3955 = vmatprep.subr.mxu0 %v147
    %3956 = vmatpush1.msra.mxu0 %v146
    %3957 = vmatprep.subr.mxu0 %v143
    %3958 = vmatpush1.msra.mxu0 %v142
    %3959 = vmatprep.subr.mxu0 %v139
    %3960 = vmatpush1.msra.mxu0 %v138
    %3961 = vmatprep.subr.mxu0 %v135
    %3962 = vmatpush1.msra.mxu0 %v134
    %3963 = vmatprep.subr.mxu0 %v131
    %3964 = vmatpush1.msra.mxu0 %v130
    %3965 = vmatprep.subr.mxu0 %v127
    %3966 = vmatpush1.msra.mxu0 %v126
    %3967 = vmatprep.subr.mxu0 %v123
    %3968 = vmatpush1.msra.mxu0 %v122
    %3969 = vmatprep.subr.mxu0 0.0
    %3970 = vmatpush2.msra.mxu0 0.0
    %3971 = vmatprep.subr.mxu0 0.0
    %3972 = vmatpush2.msra.mxu0 0.0
    %3973 = vmatprep.subr.mxu0 0.0
    %3974 = vmatpush2.msra.mxu0 0.0
    %3975 = vmatprep.subr.mxu0 0.0
    %3976 = vmatpush2.msra.mxu0 0.0
    %3977 = vmatprep.subr.mxu0 0.0
    %3978 = vmatpush2.msra.mxu0 0.0
    %3979 = vmatprep.subr.mxu0 0.0
    %3980 = vmatpush2.msra.mxu0 0.0
    %3981 = vmatprep.subr.mxu0 0.0
    %3982 = vmatpush2.msra.mxu0 0.0
    %3983 = vmatprep.subr.mxu0 0.0
    %3984 = vmatpush2.msra.mxu0 0.0
    %3985 = vmatprep.subr.mxu0 0.0
    %3986 = vmatpush2.msra.mxu0 0.0
    %3987 = vmatprep.subr.mxu0 0.0
    %3988 = vmatpush2.msra.mxu0 0.0
    %3989 = vmatprep.subr.mxu0 0.0
    %3990 = vmatpush2.msra.mxu0 0.0
    %3991 = vmatprep.subr.mxu0 0.0
    %3992 = vmatpush2.msra.mxu0 0.0
    %3993 = vmatprep.subr.mxu0 0.0
    %3994 = vmatpush2.msra.mxu0 0.0
    %3995 = vmatprep.subr.mxu0 0.0
    %3996 = vmatpush2.msra.mxu0 0.0
    %3997 = vmatprep.subr.mxu0 0.0
    %3998 = vmatpush2.msra.mxu0 0.0
    %3999 = vmatprep.subr.mxu0 0.0
    %4000 = vmatpush2.msra.mxu0 0.0
    %4001 = vmatprep.mubr.f32.mxu0 0.0
    %4002 = vmatmul.mubr.f32.gmra.mxu0 %v2984
    %v4003 = vpop.f32.mrf.mxu0
    %v4004 = vadd.f32 0.0, %v4003
    %v4005 = vpop.f32.mrf.mxu0
    %v4006 = vadd.f32 0.0, %v4005
    %4007 = vdwg.mxu0
    %v4012 = vrot.slane %v3933, 4
    %v4013 = vrot.slane %v3935, 4
    %v4014 = vrot.slane %v4004, 4
    %v4015 = vrot.slane %v4006, 4
    %v4020 = vadd.f32 %v3862, %v4012
    %v4021 = vadd.f32 %v3863, %v4013
    %v4022 = vadd.f32 %v3864, %v4014
    %v4023 = vadd.f32 %v3865, %v4015
    %v4024 = vxor.u32 %v4020, 2147483648
    %v4025 = vmul.f32 %v4024, 1.442695
    %v4026 = vpow.pop %v4025
    %v4027 = vadd.f32 %v4026, 1.0
    %v4028 = vrcp.pop %v4027
    %v4029 = vmul.f32 1.0, %v4028
    %v4030 = vxor.u32 %v4021, 2147483648
    %v4031 = vmul.f32 %v4030, 1.442695
    %v4032 = vpow.pop %v4031
    %v4033 = vadd.f32 %v4032, 1.0
    %v4034 = vrcp.pop %v4033
    %v4035 = vmul.f32 1.0, %v4034
    %v4036 = vtanh.pop %v4022
    %v4037 = vxor.u32 %v4023, 2147483648
    %v4038 = vmul.f32 %v4037, 1.442695
    %v4039 = vpow.pop %v4038
    %v4040 = vadd.f32 %v4039, 1.0
    %v4041 = vrcp.pop %v4040
    %v4042 = vmul.f32 1.0, %v4041
    %v4044 = vrot.slane %v2982, 4
    %v4046 = vmul.f32 %v4035, %v4044
    %v4047 = vmul.f32 %v4029, %v4036
    %v4048 = vadd.f32 %v4046, %v4047
    %v4049 = vtanh.pop %v4048
    %v4050 = vmul.f32 %v4042, %v4049
    %v4052 = vrot.slane %v4050, 4
    %4054 = vmatprep.subr.mxu0 0.0
    %4055 = vmatpush1.msra.mxu0 %v199
    %4056 = vmatprep.subr.mxu0 0.0
    %4057 = vmatpush1.msra.mxu0 %v198
    %4058 = vmatprep.subr.mxu0 0.0
    %4059 = vmatpush1.msra.mxu0 %v197
    %4060 = vmatprep.subr.mxu0 0.0
    %4061 = vmatpush1.msra.mxu0 %v196
    %4062 = vmatprep.subr.mxu0 0.0
    %4063 = vmatpush1.msra.mxu0 %v195
    %4064 = vmatprep.subr.mxu0 0.0
    %4065 = vmatpush1.msra.mxu0 %v194
    %4066 = vmatprep.subr.mxu0 0.0
    %4067 = vmatpush1.msra.mxu0 %v193
    %4068 = vmatprep.subr.mxu0 0.0
    %4069 = vmatpush1.msra.mxu0 %v192
    %4070 = vmatprep.subr.mxu0 0.0
    %4071 = vmatpush1.msra.mxu0 %v191
    %4072 = vmatprep.subr.mxu0 0.0
    %4073 = vmatpush1.msra.mxu0 %v190
    %4074 = vmatprep.subr.mxu0 0.0
    %4075 = vmatpush1.msra.mxu0 %v189
    %4076 = vmatprep.subr.mxu0 0.0
    %4077 = vmatpush1.msra.mxu0 %v188
    %4078 = vmatprep.subr.mxu0 0.0
    %4079 = vmatpush1.msra.mxu0 %v187
    %4080 = vmatprep.subr.mxu0 0.0
    %4081 = vmatpush1.msra.mxu0 %v186
    %4082 = vmatprep.subr.mxu0 0.0
    %4083 = vmatpush1.msra.mxu0 %v185
    %4084 = vmatprep.subr.mxu0 0.0
    %4085 = vmatpush1.msra.mxu0 %v184
    %4086 = vmatprep.subr.mxu0 0.0
    %4087 = vmatpush2.msra.mxu0 0.0
    %4088 = vmatprep.subr.mxu0 0.0
    %4089 = vmatpush2.msra.mxu0 0.0
    %4090 = vmatprep.subr.mxu0 0.0
    %4091 = vmatpush2.msra.mxu0 0.0
    %4092 = vmatprep.subr.mxu0 0.0
    %4093 = vmatpush2.msra.mxu0 0.0
    %4094 = vmatprep.subr.mxu0 0.0
    %4095 = vmatpush2.msra.mxu0 0.0
    %4096 = vmatprep.subr.mxu0 0.0
    %4097 = vmatpush2.msra.mxu0 0.0
    %4098 = vmatprep.subr.mxu0 0.0
    %4099 = vmatpush2.msra.mxu0 0.0
    %4100 = vmatprep.subr.mxu0 0.0
    %4101 = vmatpush2.msra.mxu0 0.0
    %4102 = vmatprep.subr.mxu0 0.0
    %4103 = vmatpush2.msra.mxu0 0.0
    %4104 = vmatprep.subr.mxu0 0.0
    %4105 = vmatpush2.msra.mxu0 0.0
    %4106 = vmatprep.subr.mxu0 0.0
    %4107 = vmatpush2.msra.mxu0 0.0
    %4108 = vmatprep.subr.mxu0 0.0
    %4109 = vmatpush2.msra.mxu0 0.0
    %4110 = vmatprep.subr.mxu0 0.0
    %4111 = vmatpush2.msra.mxu0 0.0
    %4112 = vmatprep.subr.mxu0 0.0
    %4113 = vmatpush2.msra.mxu0 0.0
    %4114 = vmatprep.subr.mxu0 0.0
    %4115 = vmatpush2.msra.mxu0 0.0
    %4116 = vmatprep.subr.mxu0 0.0
    %4117 = vmatpush2.msra.mxu0 0.0
    %4118 = vmatprep.mubr.f32.mxu0 0.0
    %4119 = vmatmul.mubr.f32.gmra.mxu0 %v4052
    %v4120 = vpop.f32.mrf.mxu0
    %v4121 = vadd.f32 0.0, %v4120
    %v4122 = vpop.f32.mrf.mxu0
    %4123 = vdwg.mxu0
    %v4126 = vunpack.c.l.s4 1966171168
    %v4127 = vunpack.c.0.s8 %v4126
    %v4128 = vlaneseq
    %v4129 = vshrl.u32 %v4128, 7
    %v4130 = vsub.s32 %v4127, %v4129
    %v4131 = vrot.slane %v4121, %v4130
    %v4132 = vcombine.high %v4131, %v4131
    %v4134 = vunpack.c.l.s4 1966171168
    %v4135 = vunpack.c.0.s8 %v4134
    %v4136 = vlaneseq
    %v4137 = vshrl.u32 %v4136, 7
    %v4138 = vsub.s32 %v4135, %v4137
    %v4139 = vrot.slane %v4131, %v4138
    %v4141 = vunpack.c.l.s4 1966171168
    %v4142 = vunpack.c.0.s8 %v4141
    %v4143 = vlaneseq
    %v4144 = vshrl.u32 %v4143, 7
    %v4145 = vsub.s32 %v4142, %v4144
    %v4146 = vrot.slane %v4132, %v4145
    %v4147 = vcombine.high %v4139, %v4139
    %v4148 = vcombine.high %v4146, %v4146
    %v4149 = vlaneseq
    %v4150 = vshrl.u32 %v4149, 7
    %v4151 = vsub.s32 0, %v4150
    %v4152 = vrot.slane %v4139, %v4151
    %v4153 = vlaneseq
    %v4154 = vshrl.u32 %v4153, 7
    %v4155 = vsub.s32 0, %v4154
    %v4156 = vrot.slane %v4146, %v4155
    %v4157 = vlaneseq
    %v4158 = vshrl.u32 %v4157, 7
    %v4159 = vsub.s32 0, %v4158
    %v4160 = vrot.slane %v4147, %v4159
    %v4161 = vlaneseq
    %v4162 = vshrl.u32 %v4161, 7
    %v4163 = vsub.s32 0, %v4162
    %v4164 = vrot.slane %v4148, %v4163
    %v4169 = vmul.f32 %v48, %v4152
    %v4170 = vmul.f32 %v49, %v4152
    %v4171 = vmul.f32 %v50, %v4156
    %v4172 = vmul.f32 %v51, %v4156
    %v4173 = vmul.f32 %v52, %v4160
    %v4174 = vmul.f32 %v53, %v4160
    %v4175 = vmul.f32 %v54, %v4164
    %v4176 = vmul.f32 %v55, %v4164
    %4177 = vadd.xlane.f32.xlu0 %v4169
    %v4178 = vpop.xlane.xlu0 %4177
    %4179 = vadd.xlane.f32.xlu0 %v4170
    %v4180 = vpop.xlane.xlu0 %4179
    %4181 = vadd.xlane.f32.xlu0 %v4171
    %v4182 = vpop.xlane.xlu0 %4181
    %4183 = vadd.xlane.f32.xlu0 %v4172
    %v4184 = vpop.xlane.xlu0 %4183
    %4185 = vadd.xlane.f32.xlu0 %v4173
    %v4186 = vpop.xlane.xlu0 %4185
    %4187 = vadd.xlane.f32.xlu0 %v4174
    %v4188 = vpop.xlane.xlu0 %4187
    %4189 = vadd.xlane.f32.xlu0 %v4175
    %v4190 = vpop.xlane.xlu0 %4189
    %4191 = vadd.xlane.f32.xlu0 %v4176
    %v4192 = vpop.xlane.xlu0 %4191
    %v4201 = vlaneseq
    %v4202 = vshrl.u32 %v4201, 7
    %v4203 = vsub.s32 %v1010, %v4202
    %v4204 = vrot.slane %v4178, %v4203
    %v4205 = vlaneseq
    %v4206 = vshrl.u32 %v4205, 7
    %v4207 = vsub.s32 %v1015, %v4206
    %v4208 = vrot.slane %v4180, %v4207
    %v4209 = vsel %vm1020, %v4208, %v4204
    %v4210 = vlaneseq
    %v4211 = vshrl.u32 %v4210, 7
    %v4212 = vsub.s32 %v1010, %v4211
    %v4213 = vrot.slane %v4182, %v4212
    %v4214 = vlaneseq
    %v4215 = vshrl.u32 %v4214, 7
    %v4216 = vsub.s32 %v1015, %v4215
    %v4217 = vrot.slane %v4184, %v4216
    %v4218 = vsel %vm1020, %v4217, %v4213
    %v4219 = vlaneseq
    %v4220 = vshrl.u32 %v4219, 7
    %v4221 = vsub.s32 %v1010, %v4220
    %v4222 = vrot.slane %v4186, %v4221
    %v4223 = vlaneseq
    %v4224 = vshrl.u32 %v4223, 7
    %v4225 = vsub.s32 %v1015, %v4224
    %v4226 = vrot.slane %v4188, %v4225
    %v4227 = vsel %vm1020, %v4226, %v4222
    %v4228 = vlaneseq
    %v4229 = vshrl.u32 %v4228, 7
    %v4230 = vsub.s32 %v1010, %v4229
    %v4231 = vrot.slane %v4190, %v4230
    %v4232 = vlaneseq
    %v4233 = vshrl.u32 %v4232, 7
    %v4234 = vsub.s32 %v1015, %v4233
    %v4235 = vrot.slane %v4192, %v4234
    %v4236 = vsel %vm1020, %v4235, %v4231
    %v4237 = vsel %vm1049, %v4218, %v4209
    %v4238 = vsel %vm1051, %v4227, %v4237
    %v4239 = vsel %vm1053, %v4236, %v4238
    %v4241 = vsel %vm1056, %v4239, -inf
    %4242 = vmax.xlane.f32.xlu0 %v4241
    %v4243 = vpop.xlane.xlu0 %4242
    %v4245 = vlaneseq
    %v4246 = vshrl.u32 %v4245, 7
    %v4247 = vsub.s32 0, %v4246
    %v4248 = vrot.slane %v4243, %v4247
    %v4249 = vlaneseq
    %v4250 = vshrl.u32 %v4249, 7
    %v4251 = vsub.s32 1, %v4250
    %v4252 = vrot.slane %v4243, %v4251
    %v4253 = vlaneseq
    %v4254 = vshrl.u32 %v4253, 7
    %v4255 = vsub.s32 2, %v4254
    %v4256 = vrot.slane %v4243, %v4255
    %v4257 = vlaneseq
    %v4258 = vshrl.u32 %v4257, 7
    %v4259 = vsub.s32 3, %v4258
    %v4260 = vrot.slane %v4243, %v4259
    %v4265 = vsub.f32 %v4178, %v4248
    %v4266 = vsub.f32 %v4180, %v4248
    %v4267 = vsub.f32 %v4182, %v4252
    %v4268 = vsub.f32 %v4184, %v4252
    %v4269 = vsub.f32 %v4186, %v4256
    %v4270 = vsub.f32 %v4188, %v4256
    %v4271 = vsub.f32 %v4190, %v4260
    %v4272 = vsub.f32 %v4192, %v4260
    %v4273 = vmul.f32 %v4265, 1.442695
    %v4274 = vpow.pop %v4273
    %v4275 = vmul.f32 %v4266, 1.442695
    %v4276 = vpow.pop %v4275
    %v4277 = vmul.f32 %v4267, 1.442695
    %v4278 = vpow.pop %v4277
    %v4279 = vmul.f32 %v4268, 1.442695
    %v4280 = vpow.pop %v4279
    %v4281 = vmul.f32 %v4269, 1.442695
    %v4282 = vpow.pop %v4281
    %v4283 = vmul.f32 %v4270, 1.442695
    %v4284 = vpow.pop %v4283
    %v4285 = vmul.f32 %v4271, 1.442695
    %v4286 = vpow.pop %v4285
    %v4287 = vmul.f32 %v4272, 1.442695
    %v4288 = vpow.pop %v4287
    %4297 = vset.pattern.permute.xlu0 0
    %4298 = vperm.xlu0 %4297, %v4274
    %v4299 = vpop.permute.xlu0 %4298
    %4300 = vset.pattern.permute.xlu0 0
    %4301 = vperm.xlu0 %4300, %v4276
    %v4302 = vpop.permute.xlu0 %4301
    %4303 = vset.pattern.permute.xlu0 0
    %4304 = vperm.xlu0 %4303, %v4278
    %v4305 = vpop.permute.xlu0 %4304
    %4306 = vset.pattern.permute.xlu0 0
    %4307 = vperm.xlu0 %4306, %v4280
    %v4308 = vpop.permute.xlu0 %4307
    %4309 = vset.pattern.permute.xlu0 0
    %4310 = vperm.xlu0 %4309, %v4282
    %v4311 = vpop.permute.xlu0 %4310
    %4312 = vset.pattern.permute.xlu0 0
    %4313 = vperm.xlu0 %4312, %v4284
    %v4314 = vpop.permute.xlu0 %4313
    %4315 = vset.pattern.permute.xlu0 0
    %4316 = vperm.xlu0 %4315, %v4286
    %v4317 = vpop.permute.xlu0 %4316
    %4318 = vset.pattern.permute.xlu0 0
    %4319 = vperm.xlu0 %4318, %v4288
    %v4320 = vpop.permute.xlu0 %4319
    %v4321 = vlaneseq
    %v4322 = vshrl.u32 %v4321, 7
    %v4323 = vsub.s32 %v1010, %v4322
    %v4324 = vrot.slane %v4299, %v4323
    %v4325 = vlaneseq
    %v4326 = vshrl.u32 %v4325, 7
    %v4327 = vsub.s32 %v1015, %v4326
    %v4328 = vrot.slane %v4302, %v4327
    %v4329 = vsel %vm1020, %v4328, %v4324
    %v4330 = vlaneseq
    %v4331 = vshrl.u32 %v4330, 7
    %v4332 = vsub.s32 %v1010, %v4331
    %v4333 = vrot.slane %v4305, %v4332
    %v4334 = vlaneseq
    %v4335 = vshrl.u32 %v4334, 7
    %v4336 = vsub.s32 %v1015, %v4335
    %v4337 = vrot.slane %v4308, %v4336
    %v4338 = vsel %vm1020, %v4337, %v4333
    %v4339 = vlaneseq
    %v4340 = vshrl.u32 %v4339, 7
    %v4341 = vsub.s32 %v1010, %v4340
    %v4342 = vrot.slane %v4311, %v4341
    %v4343 = vlaneseq
    %v4344 = vshrl.u32 %v4343, 7
    %v4345 = vsub.s32 %v1015, %v4344
    %v4346 = vrot.slane %v4314, %v4345
    %v4347 = vsel %vm1020, %v4346, %v4342
    %v4348 = vlaneseq
    %v4349 = vshrl.u32 %v4348, 7
    %v4350 = vsub.s32 %v1010, %v4349
    %v4351 = vrot.slane %v4317, %v4350
    %v4352 = vlaneseq
    %v4353 = vshrl.u32 %v4352, 7
    %v4354 = vsub.s32 %v1015, %v4353
    %v4355 = vrot.slane %v4320, %v4354
    %v4356 = vsel %vm1020, %v4355, %v4351
    %v4357 = vsel %vm1049, %v4338, %v4329
    %v4358 = vsel %vm1051, %v4347, %v4357
    %v4359 = vsel %vm1053, %v4356, %v4358
    %v4361 = vsel %vm1056, %v4359, 0.0
    %4362 = vadd.xlane.f32.xlu0 %v4361
    %v4363 = vpop.xlane.xlu0 %4362
    %v4364 = vrcp.pop %v4363
    %v4366 = vlaneseq
    %v4367 = vshrl.u32 %v4366, 7
    %v4368 = vsub.s32 0, %v4367
    %v4369 = vrot.slane %v4364, %v4368
    %v4370 = vlaneseq
    %v4371 = vshrl.u32 %v4370, 7
    %v4372 = vsub.s32 1, %v4371
    %v4373 = vrot.slane %v4364, %v4372
    %v4374 = vlaneseq
    %v4375 = vshrl.u32 %v4374, 7
    %v4376 = vsub.s32 2, %v4375
    %v4377 = vrot.slane %v4364, %v4376
    %v4378 = vlaneseq
    %v4379 = vshrl.u32 %v4378, 7
    %v4380 = vsub.s32 3, %v4379
    %v4381 = vrot.slane %v4364, %v4380
    %v4386 = vmul.f32 %v4274, %v4369
    %v4387 = vmul.f32 %v4276, %v4369
    %v4388 = vmul.f32 %v4278, %v4373
    %v4389 = vmul.f32 %v4280, %v4373
    %v4390 = vmul.f32 %v4282, %v4377
    %v4391 = vmul.f32 %v4284, %v4377
    %v4392 = vmul.f32 %v4286, %v4381
    %v4393 = vmul.f32 %v4288, %v4381
    %4395 = vset.pattern.permute.xlu0 0
    %4396 = vperm.xlu0 %4395, %v4386
    %v4397 = vpop.permute.xlu0 %4396
    %4400 = vset.pattern.permute.xlu0 0
    %4401 = vperm.xlu0 %4400, %v4387
    %v4402 = vpop.permute.xlu0 %4401
    %4405 = vset.pattern.permute.xlu0 0
    %4406 = vperm.xlu0 %4405, %v4388
    %v4407 = vpop.permute.xlu0 %4406
    %4410 = vset.pattern.permute.xlu0 0
    %4411 = vperm.xlu0 %4410, %v4389
    %v4412 = vpop.permute.xlu0 %4411
    %4415 = vset.pattern.permute.xlu0 0
    %4416 = vperm.xlu0 %4415, %v4390
    %v4417 = vpop.permute.xlu0 %4416
    %4420 = vset.pattern.permute.xlu0 0
    %4421 = vperm.xlu0 %4420, %v4391
    %v4422 = vpop.permute.xlu0 %4421
    %4425 = vset.pattern.permute.xlu0 0
    %4426 = vperm.xlu0 %4425, %v4392
    %v4427 = vpop.permute.xlu0 %4426
    %4430 = vset.pattern.permute.xlu0 0
    %4431 = vperm.xlu0 %4430, %v4393
    %v4432 = vpop.permute.xlu0 %4431
    %v4434 = vmul.f32 %v4397, %v48
    %v4435 = vmul.f32 %v4402, %v49
    %v4436 = vmul.f32 %v4407, %v50
    %v4437 = vmul.f32 %v4412, %v51
    %v4438 = vmul.f32 %v4417, %v52
    %v4439 = vmul.f32 %v4422, %v53
    %v4440 = vmul.f32 %v4427, %v54
    %v4441 = vmul.f32 %v4432, %v55
    %v4442 = vadd.f32 %v4434, %v4435
    %v4443 = vrot.slane %v4442, 4
    %v4444 = vadd.f32 %v4442, %v4443
    %v4445 = vrot.slane %v4444, 2
    %v4446 = vadd.f32 %v4444, %v4445
    %v4447 = vrot.slane %v4446, 1
    %v4448 = vadd.f32 %v4446, %v4447
    %v4449 = vadd.f32 %v4436, %v4437
    %v4450 = vrot.slane %v4449, 4
    %v4451 = vadd.f32 %v4449, %v4450
    %v4452 = vrot.slane %v4451, 2
    %v4453 = vadd.f32 %v4451, %v4452
    %v4454 = vrot.slane %v4453, 1
    %v4455 = vadd.f32 %v4453, %v4454
    %v4456 = vadd.f32 %v4438, %v4439
    %v4457 = vrot.slane %v4456, 4
    %v4458 = vadd.f32 %v4456, %v4457
    %v4459 = vrot.slane %v4458, 2
    %v4460 = vadd.f32 %v4458, %v4459
    %v4461 = vrot.slane %v4460, 1
    %v4462 = vadd.f32 %v4460, %v4461
    %v4463 = vadd.f32 %v4440, %v4441
    %v4464 = vrot.slane %v4463, 4
    %v4465 = vadd.f32 %v4463, %v4464
    %v4466 = vrot.slane %v4465, 2
    %v4467 = vadd.f32 %v4465, %v4466
    %v4468 = vrot.slane %v4467, 1
    %v4469 = vadd.f32 %v4467, %v4468
    %4470 = vmatprep.subr.mxu0 0.0
    %4471 = vmatpush1.msra.mxu0 %v231
    %4472 = vmatprep.subr.mxu0 0.0
    %4473 = vmatpush1.msra.mxu0 %v230
    %4474 = vmatprep.subr.mxu0 0.0
    %4475 = vmatpush1.msra.mxu0 %v229
    %4476 = vmatprep.subr.mxu0 0.0
    %4477 = vmatpush1.msra.mxu0 %v228
    %4478 = vmatprep.subr.mxu0 0.0
    %4479 = vmatpush1.msra.mxu0 %v227
    %4480 = vmatprep.subr.mxu0 0.0
    %4481 = vmatpush1.msra.mxu0 %v226
    %4482 = vmatprep.subr.mxu0 0.0
    %4483 = vmatpush1.msra.mxu0 %v225
    %4484 = vmatprep.subr.mxu0 0.0
    %4485 = vmatpush1.msra.mxu0 %v224
    %4486 = vmatprep.subr.mxu0 0.0
    %4487 = vmatpush1.msra.mxu0 %v223
    %4488 = vmatprep.subr.mxu0 0.0
    %4489 = vmatpush1.msra.mxu0 %v222
    %4490 = vmatprep.subr.mxu0 0.0
    %4491 = vmatpush1.msra.mxu0 %v221
    %4492 = vmatprep.subr.mxu0 0.0
    %4493 = vmatpush1.msra.mxu0 %v220
    %4494 = vmatprep.subr.mxu0 0.0
    %4495 = vmatpush1.msra.mxu0 %v219
    %4496 = vmatprep.subr.mxu0 0.0
    %4497 = vmatpush1.msra.mxu0 %v218
    %4498 = vmatprep.subr.mxu0 0.0
    %4499 = vmatpush1.msra.mxu0 %v217
    %4500 = vmatprep.subr.mxu0 0.0
    %4501 = vmatpush1.msra.mxu0 %v216
    %4502 = vmatprep.subr.mxu0 0.0
    %4503 = vmatpush2.msra.mxu0 0.0
    %4504 = vmatprep.subr.mxu0 0.0
    %4505 = vmatpush2.msra.mxu0 0.0
    %4506 = vmatprep.subr.mxu0 0.0
    %4507 = vmatpush2.msra.mxu0 0.0
    %4508 = vmatprep.subr.mxu0 0.0
    %4509 = vmatpush2.msra.mxu0 0.0
    %4510 = vmatprep.subr.mxu0 0.0
    %4511 = vmatpush2.msra.mxu0 0.0
    %4512 = vmatprep.subr.mxu0 0.0
    %4513 = vmatpush2.msra.mxu0 0.0
    %4514 = vmatprep.subr.mxu0 0.0
    %4515 = vmatpush2.msra.mxu0 0.0
    %4516 = vmatprep.subr.mxu0 0.0
    %4517 = vmatpush2.msra.mxu0 0.0
    %4518 = vmatprep.subr.mxu0 0.0
    %4519 = vmatpush2.msra.mxu0 0.0
    %4520 = vmatprep.subr.mxu0 0.0
    %4521 = vmatpush2.msra.mxu0 0.0
    %4522 = vmatprep.subr.mxu0 0.0
    %4523 = vmatpush2.msra.mxu0 0.0
    %4524 = vmatprep.subr.mxu0 0.0
    %4525 = vmatpush2.msra.mxu0 0.0
    %4526 = vmatprep.subr.mxu0 0.0
    %4527 = vmatpush2.msra.mxu0 0.0
    %4528 = vmatprep.subr.mxu0 0.0
    %4529 = vmatpush2.msra.mxu0 0.0
    %4530 = vmatprep.subr.mxu0 0.0
    %4531 = vmatpush2.msra.mxu0 0.0
    %4532 = vmatprep.subr.mxu0 0.0
    %4533 = vmatpush2.msra.mxu0 0.0
    %4534 = vmatprep.mubr.f32.mxu0 0.0
    %4535 = vmatmul.mubr.f32.gmra.mxu0 %v4052
    %v4536 = vpop.f32.mrf.mxu0
    %v4537 = vadd.f32 0.0, %v4536
    %v4538 = vpop.f32.mrf.mxu0
    %4539 = vdwg.mxu0
    %v4544 = vsel %vm1049, %v4455, %v4448
    %v4545 = vsel %vm1051, %v4462, %v4544
    %v4546 = vsel %vm1053, %v4469, %v4545
    %4548 = vmatprep.subr.mxu0 0.0
    %4549 = vmatpush1.msra.mxu0 %v215
    %4550 = vmatprep.subr.mxu0 0.0
    %4551 = vmatpush1.msra.mxu0 %v214
    %4552 = vmatprep.subr.mxu0 0.0
    %4553 = vmatpush1.msra.mxu0 %v213
    %4554 = vmatprep.subr.mxu0 0.0
    %4555 = vmatpush1.msra.mxu0 %v212
    %4556 = vmatprep.subr.mxu0 0.0
    %4557 = vmatpush1.msra.mxu0 %v211
    %4558 = vmatprep.subr.mxu0 0.0
    %4559 = vmatpush1.msra.mxu0 %v210
    %4560 = vmatprep.subr.mxu0 0.0
    %4561 = vmatpush1.msra.mxu0 %v209
    %4562 = vmatprep.subr.mxu0 0.0
    %4563 = vmatpush1.msra.mxu0 %v208
    %4564 = vmatprep.subr.mxu0 0.0
    %4565 = vmatpush1.msra.mxu0 %v207
    %4566 = vmatprep.subr.mxu0 0.0
    %4567 = vmatpush1.msra.mxu0 %v206
    %4568 = vmatprep.subr.mxu0 0.0
    %4569 = vmatpush1.msra.mxu0 %v205
    %4570 = vmatprep.subr.mxu0 0.0
    %4571 = vmatpush1.msra.mxu0 %v204
    %4572 = vmatprep.subr.mxu0 0.0
    %4573 = vmatpush1.msra.mxu0 %v203
    %4574 = vmatprep.subr.mxu0 0.0
    %4575 = vmatpush1.msra.mxu0 %v202
    %4576 = vmatprep.subr.mxu0 0.0
    %4577 = vmatpush1.msra.mxu0 %v201
    %4578 = vmatprep.subr.mxu0 0.0
    %4579 = vmatpush1.msra.mxu0 %v200
    %4580 = vmatprep.subr.mxu0 0.0
    %4581 = vmatpush2.msra.mxu0 0.0
    %4582 = vmatprep.subr.mxu0 0.0
    %4583 = vmatpush2.msra.mxu0 0.0
    %4584 = vmatprep.subr.mxu0 0.0
    %4585 = vmatpush2.msra.mxu0 0.0
    %4586 = vmatprep.subr.mxu0 0.0
    %4587 = vmatpush2.msra.mxu0 0.0
    %4588 = vmatprep.subr.mxu0 0.0
    %4589 = vmatpush2.msra.mxu0 0.0
    %4590 = vmatprep.subr.mxu0 0.0
    %4591 = vmatpush2.msra.mxu0 0.0
    %4592 = vmatprep.subr.mxu0 0.0
    %4593 = vmatpush2.msra.mxu0 0.0
    %4594 = vmatprep.subr.mxu0 0.0
    %4595 = vmatpush2.msra.mxu0 0.0
    %4596 = vmatprep.subr.mxu0 0.0
    %4597 = vmatpush2.msra.mxu0 0.0
    %4598 = vmatprep.subr.mxu0 0.0
    %4599 = vmatpush2.msra.mxu0 0.0
    %4600 = vmatprep.subr.mxu0 0.0
    %4601 = vmatpush2.msra.mxu0 0.0
    %4602 = vmatprep.subr.mxu0 0.0
    %4603 = vmatpush2.msra.mxu0 0.0
    %4604 = vmatprep.subr.mxu0 0.0
    %4605 = vmatpush2.msra.mxu0 0.0
    %4606 = vmatprep.subr.mxu0 0.0
    %4607 = vmatpush2.msra.mxu0 0.0
    %4608 = vmatprep.subr.mxu0 0.0
    %4609 = vmatpush2.msra.mxu0 0.0
    %4610 = vmatprep.subr.mxu0 0.0
    %4611 = vmatpush2.msra.mxu0 0.0
    %4612 = vmatprep.mubr.f32.mxu0 0.0
    %4613 = vmatmul.mubr.f32.gmra.mxu0 %v4546
    %v4614 = vpop.f32.mrf.mxu0
    %v4615 = vadd.f32 %v4537, %v4614
    %v4616 = vpop.f32.mrf.mxu0
    %4617 = vdwg.mxu0
    %v4618 = vtanh.pop %v4615
    %v4619 = vlaneseq
    %v4620 = vshrl.u32 %v4619, 7
    %v4621 = vsub.s32 %v1010, %v4620
    %v4622 = vrot.slane %v4397, %v4621
    %v4623 = vlaneseq
    %v4624 = vshrl.u32 %v4623, 7
    %v4625 = vsub.s32 %v1015, %v4624
    %v4626 = vrot.slane %v4402, %v4625
    %v4627 = vsel %vm1020, %v4626, %v4622
    %v4628 = vlaneseq
    %v4629 = vshrl.u32 %v4628, 7
    %v4630 = vsub.s32 %v1010, %v4629
    %v4631 = vrot.slane %v4407, %v4630
    %v4632 = vlaneseq
    %v4633 = vshrl.u32 %v4632, 7
    %v4634 = vsub.s32 %v1015, %v4633
    %v4635 = vrot.slane %v4412, %v4634
    %v4636 = vsel %vm1020, %v4635, %v4631
    %v4637 = vlaneseq
    %v4638 = vshrl.u32 %v4637, 7
    %v4639 = vsub.s32 %v1010, %v4638
    %v4640 = vrot.slane %v4417, %v4639
    %v4641 = vlaneseq
    %v4642 = vshrl.u32 %v4641, 7
    %v4643 = vsub.s32 %v1015, %v4642
    %v4644 = vrot.slane %v4422, %v4643
    %v4645 = vsel %vm1020, %v4644, %v4640
    %v4646 = vlaneseq
    %v4647 = vshrl.u32 %v4646, 7
    %v4648 = vsub.s32 %v1010, %v4647
    %v4649 = vrot.slane %v4427, %v4648
    %v4650 = vlaneseq
    %v4651 = vshrl.u32 %v4650, 7
    %v4652 = vsub.s32 %v1015, %v4651
    %v4653 = vrot.slane %v4432, %v4652
    %v4654 = vsel %vm1020, %v4653, %v4649
    %4659 = vst.msk [vmem:[#allocation4 + $0x3] sm:$0x1] %vm1475, %v4627
    %4660 = vst.msk [vmem:[#allocation4 + $0xb] sm:$0x1] %vm1475, %v4636
    %4661 = vst.msk [vmem:[#allocation4 + $0x13] sm:$0x1] %vm1475, %v4645
    %4662 = vst.msk [vmem:[#allocation4 + $0x1b] sm:$0x1] %vm1475, %v4654
    %4663 = vmatprep.subr.mxu0 %v263
    %4664 = vmatpush1.msra.mxu0 %v262
    %4665 = vmatprep.subr.mxu0 %v261
    %4666 = vmatpush1.msra.mxu0 %v260
    %4667 = vmatprep.subr.mxu0 %v259
    %4668 = vmatpush1.msra.mxu0 %v258
    %4669 = vmatprep.subr.mxu0 %v257
    %4670 = vmatpush1.msra.mxu0 %v256
    %4671 = vmatprep.subr.mxu0 %v255
    %4672 = vmatpush1.msra.mxu0 %v254
    %4673 = vmatprep.subr.mxu0 %v253
    %4674 = vmatpush1.msra.mxu0 %v252
    %4675 = vmatprep.subr.mxu0 %v251
    %4676 = vmatpush1.msra.mxu0 %v250
    %4677 = vmatprep.subr.mxu0 %v249
    %4678 = vmatpush1.msra.mxu0 %v248
    %4679 = vmatprep.subr.mxu0 %v247
    %4680 = vmatpush1.msra.mxu0 %v246
    %4681 = vmatprep.subr.mxu0 %v245
    %4682 = vmatpush1.msra.mxu0 %v244
    %4683 = vmatprep.subr.mxu0 %v243
    %4684 = vmatpush1.msra.mxu0 %v242
    %4685 = vmatprep.subr.mxu0 %v241
    %4686 = vmatpush1.msra.mxu0 %v240
    %4687 = vmatprep.subr.mxu0 %v239
    %4688 = vmatpush1.msra.mxu0 %v238
    %4689 = vmatprep.subr.mxu0 %v237
    %4690 = vmatpush1.msra.mxu0 %v236
    %4691 = vmatprep.subr.mxu0 %v235
    %4692 = vmatpush1.msra.mxu0 %v234
    %4693 = vmatprep.subr.mxu0 %v233
    %4694 = vmatpush1.msra.mxu0 %v232
    %4695 = vmatprep.subr.mxu0 0.0
    %4696 = vmatpush2.msra.mxu0 0.0
    %4697 = vmatprep.subr.mxu0 0.0
    %4698 = vmatpush2.msra.mxu0 0.0
    %4699 = vmatprep.subr.mxu0 0.0
    %4700 = vmatpush2.msra.mxu0 0.0
    %4701 = vmatprep.subr.mxu0 0.0
    %4702 = vmatpush2.msra.mxu0 0.0
    %4703 = vmatprep.subr.mxu0 0.0
    %4704 = vmatpush2.msra.mxu0 0.0
    %4705 = vmatprep.subr.mxu0 0.0
    %4706 = vmatpush2.msra.mxu0 0.0
    %4707 = vmatprep.subr.mxu0 0.0
    %4708 = vmatpush2.msra.mxu0 0.0
    %4709 = vmatprep.subr.mxu0 0.0
    %4710 = vmatpush2.msra.mxu0 0.0
    %4711 = vmatprep.subr.mxu0 0.0
    %4712 = vmatpush2.msra.mxu0 0.0
    %4713 = vmatprep.subr.mxu0 0.0
    %4714 = vmatpush2.msra.mxu0 0.0
    %4715 = vmatprep.subr.mxu0 0.0
    %4716 = vmatpush2.msra.mxu0 0.0
    %4717 = vmatprep.subr.mxu0 0.0
    %4718 = vmatpush2.msra.mxu0 0.0
    %4719 = vmatprep.subr.mxu0 0.0
    %4720 = vmatpush2.msra.mxu0 0.0
    %4721 = vmatprep.subr.mxu0 0.0
    %4722 = vmatpush2.msra.mxu0 0.0
    %4723 = vmatprep.subr.mxu0 0.0
    %4724 = vmatpush2.msra.mxu0 0.0
    %4725 = vmatprep.subr.mxu0 0.0
    %4726 = vmatpush2.msra.mxu0 0.0
    %4727 = vmatprep.mubr.f32.mxu0 0.0
    %4728 = vmatmul.mubr.f32.gmra.mxu0 %v4618
    %v4729 = vpop.f32.mrf.mxu0
    %v4730 = vadd.f32 %v269, %v4729
    %v4731 = vpop.f32.mrf.mxu0
    %v4732 = vadd.f32 %v273, %v4731
    %4733 = vdwg.mxu0
    %v4736 = vcombine.low %v4730, %v4732
    %v4738 = vunpack.c.l.s4 1966171168
    %v4739 = vunpack.c.0.s8 %v4738
    %v4740 = vlaneseq
    %v4741 = vshrl.u32 %v4740, 7
    %v4742 = vsub.s32 %v4739, %v4741
    %v4743 = vrot.slane %v4736, %v4742
    %v4744 = vcombine.high %v4743, %v4743
    %v4746 = vunpack.c.l.s4 1966171168
    %v4747 = vunpack.c.0.s8 %v4746
    %v4748 = vlaneseq
    %v4749 = vshrl.u32 %v4748, 7
    %v4750 = vsub.s32 %v4747, %v4749
    %v4751 = vrot.slane %v4743, %v4750
    %v4753 = vunpack.c.l.s4 1966171168
    %v4754 = vunpack.c.0.s8 %v4753
    %v4755 = vlaneseq
    %v4756 = vshrl.u32 %v4755, 7
    %v4757 = vsub.s32 %v4754, %v4756
    %v4758 = vrot.slane %v4744, %v4757
    %v4759 = vcombine.high %v4751, %v4751
    %v4760 = vcombine.high %v4758, %v4758
    %s4765 = scalar_lea.vmem [#allocation2], 3
    %4766 = vst.msk [vmem:[%s4765] ss:$8 sm:$0x3] %vm1585, %v4751
    %4767 = vst.msk [vmem:[%s4765] ss:$8 sm:$0x0] %vm1585, %v4751
    %s4768 = scalar_lea.vmem [#allocation2], 19
    %4769 = vst.msk [vmem:[%s4768] ss:$8 sm:$0x3] %vm1585, %v4758
    %4770 = vst.msk [vmem:[%s4768] ss:$8 sm:$0x0] %vm1585, %v4758
    %s4771 = scalar_lea.vmem [#allocation2], 35
    %4772 = vst.msk [vmem:[%s4771] ss:$8 sm:$0x3] %vm1585, %v4759
    %4773 = vst.msk [vmem:[%s4771] ss:$8 sm:$0x0] %vm1585, %v4759
    %s4774 = scalar_lea.vmem [#allocation2], 51
    %4775 = vst.msk [vmem:[%s4774] ss:$8 sm:$0x3] %vm1585, %v4760
    %4776 = vst.msk [vmem:[%s4774] ss:$8 sm:$0x0] %vm1585, %v4760
    %4777 = vmatprep.subr.mxu0 %v117
    %4778 = vmatpush1.msra.mxu0 %v116
    %4779 = vmatprep.subr.mxu0 %v113
    %4780 = vmatpush1.msra.mxu0 %v112
    %4781 = vmatprep.subr.mxu0 %v109
    %4782 = vmatpush1.msra.mxu0 %v108
    %4783 = vmatprep.subr.mxu0 %v105
    %4784 = vmatpush1.msra.mxu0 %v104
    %4785 = vmatprep.subr.mxu0 %v101
    %4786 = vmatpush1.msra.mxu0 %v100
    %4787 = vmatprep.subr.mxu0 %v97
    %4788 = vmatpush1.msra.mxu0 %v96
    %4789 = vmatprep.subr.mxu0 %v93
    %4790 = vmatpush1.msra.mxu0 %v92
    %4791 = vmatprep.subr.mxu0 %v89
    %4792 = vmatpush1.msra.mxu0 %v88
    %4793 = vmatprep.subr.mxu0 %v85
    %4794 = vmatpush1.msra.mxu0 %v84
    %4795 = vmatprep.subr.mxu0 %v81
    %4796 = vmatpush1.msra.mxu0 %v80
    %4797 = vmatprep.subr.mxu0 %v77
    %4798 = vmatpush1.msra.mxu0 %v76
    %4799 = vmatprep.subr.mxu0 %v73
    %4800 = vmatpush1.msra.mxu0 %v72
    %4801 = vmatprep.subr.mxu0 %v69
    %4802 = vmatpush1.msra.mxu0 %v68
    %4803 = vmatprep.subr.mxu0 %v65
    %4804 = vmatpush1.msra.mxu0 %v64
    %4805 = vmatprep.subr.mxu0 %v61
    %4806 = vmatpush1.msra.mxu0 %v60
    %4807 = vmatprep.subr.mxu0 %v57
    %4808 = vmatpush1.msra.mxu0 %v56
    %4809 = vmatprep.subr.mxu0 0.0
    %4810 = vmatpush2.msra.mxu0 0.0
    %4811 = vmatprep.subr.mxu0 0.0
    %4812 = vmatpush2.msra.mxu0 0.0
    %4813 = vmatprep.subr.mxu0 0.0
    %4814 = vmatpush2.msra.mxu0 0.0
    %4815 = vmatprep.subr.mxu0 0.0
    %4816 = vmatpush2.msra.mxu0 0.0
    %4817 = vmatprep.subr.mxu0 0.0
    %4818 = vmatpush2.msra.mxu0 0.0
    %4819 = vmatprep.subr.mxu0 0.0
    %4820 = vmatpush2.msra.mxu0 0.0
    %4821 = vmatprep.subr.mxu0 0.0
    %4822 = vmatpush2.msra.mxu0 0.0
    %4823 = vmatprep.subr.mxu0 0.0
    %4824 = vmatpush2.msra.mxu0 0.0
    %4825 = vmatprep.subr.mxu0 0.0
    %4826 = vmatpush2.msra.mxu0 0.0
    %4827 = vmatprep.subr.mxu0 0.0
    %4828 = vmatpush2.msra.mxu0 0.0
    %4829 = vmatprep.subr.mxu0 0.0
    %4830 = vmatpush2.msra.mxu0 0.0
    %4831 = vmatprep.subr.mxu0 0.0
    %4832 = vmatpush2.msra.mxu0 0.0
    %4833 = vmatprep.subr.mxu0 0.0
    %4834 = vmatpush2.msra.mxu0 0.0
    %4835 = vmatprep.subr.mxu0 0.0
    %4836 = vmatpush2.msra.mxu0 0.0
    %4837 = vmatprep.subr.mxu0 0.0
    %4838 = vmatpush2.msra.mxu0 0.0
    %4839 = vmatprep.subr.mxu0 0.0
    %4840 = vmatpush2.msra.mxu0 0.0
    %4841 = vmatprep.mubr.f32.mxu0 0.0
    %4842 = vmatmul.mubr.f32.gmra.mxu0 %v4618
    %v4843 = vpop.f32.mrf.mxu0
    %v4844 = vadd.f32 0.0, %v4843
    %v4845 = vpop.f32.mrf.mxu0
    %v4846 = vadd.f32 0.0, %v4845
    %4847 = vdwg.mxu0
    %4848 = vmatprep.subr.mxu0 %v119
    %4849 = vmatpush1.msra.mxu0 %v118
    %4850 = vmatprep.subr.mxu0 %v115
    %4851 = vmatpush1.msra.mxu0 %v114
    %4852 = vmatprep.subr.mxu0 %v111
    %4853 = vmatpush1.msra.mxu0 %v110
    %4854 = vmatprep.subr.mxu0 %v107
    %4855 = vmatpush1.msra.mxu0 %v106
    %4856 = vmatprep.subr.mxu0 %v103
    %4857 = vmatpush1.msra.mxu0 %v102
    %4858 = vmatprep.subr.mxu0 %v99
    %4859 = vmatpush1.msra.mxu0 %v98
    %4860 = vmatprep.subr.mxu0 %v95
    %4861 = vmatpush1.msra.mxu0 %v94
    %4862 = vmatprep.subr.mxu0 %v91
    %4863 = vmatpush1.msra.mxu0 %v90
    %4864 = vmatprep.subr.mxu0 %v87
    %4865 = vmatpush1.msra.mxu0 %v86
    %4866 = vmatprep.subr.mxu0 %v83
    %4867 = vmatpush1.msra.mxu0 %v82
    %4868 = vmatprep.subr.mxu0 %v79
    %4869 = vmatpush1.msra.mxu0 %v78
    %4870 = vmatprep.subr.mxu0 %v75
    %4871 = vmatpush1.msra.mxu0 %v74
    %4872 = vmatprep.subr.mxu0 %v71
    %4873 = vmatpush1.msra.mxu0 %v70
    %4874 = vmatprep.subr.mxu0 %v67
    %4875 = vmatpush1.msra.mxu0 %v66
    %4876 = vmatprep.subr.mxu0 %v63
    %4877 = vmatpush1.msra.mxu0 %v62
    %4878 = vmatprep.subr.mxu0 %v59
    %4879 = vmatpush1.msra.mxu0 %v58
    %4880 = vmatprep.subr.mxu0 0.0
    %4881 = vmatpush2.msra.mxu0 0.0
    %4882 = vmatprep.subr.mxu0 0.0
    %4883 = vmatpush2.msra.mxu0 0.0
    %4884 = vmatprep.subr.mxu0 0.0
    %4885 = vmatpush2.msra.mxu0 0.0
    %4886 = vmatprep.subr.mxu0 0.0
    %4887 = vmatpush2.msra.mxu0 0.0
    %4888 = vmatprep.subr.mxu0 0.0
    %4889 = vmatpush2.msra.mxu0 0.0
    %4890 = vmatprep.subr.mxu0 0.0
    %4891 = vmatpush2.msra.mxu0 0.0
    %4892 = vmatprep.subr.mxu0 0.0
    %4893 = vmatpush2.msra.mxu0 0.0
    %4894 = vmatprep.subr.mxu0 0.0
    %4895 = vmatpush2.msra.mxu0 0.0
    %4896 = vmatprep.subr.mxu0 0.0
    %4897 = vmatpush2.msra.mxu0 0.0
    %4898 = vmatprep.subr.mxu0 0.0
    %4899 = vmatpush2.msra.mxu0 0.0
    %4900 = vmatprep.subr.mxu0 0.0
    %4901 = vmatpush2.msra.mxu0 0.0
    %4902 = vmatprep.subr.mxu0 0.0
    %4903 = vmatpush2.msra.mxu0 0.0
    %4904 = vmatprep.subr.mxu0 0.0
    %4905 = vmatpush2.msra.mxu0 0.0
    %4906 = vmatprep.subr.mxu0 0.0
    %4907 = vmatpush2.msra.mxu0 0.0
    %4908 = vmatprep.subr.mxu0 0.0
    %4909 = vmatpush2.msra.mxu0 0.0
    %4910 = vmatprep.subr.mxu0 0.0
    %4911 = vmatpush2.msra.mxu0 0.0
    %4912 = vmatprep.mubr.f32.mxu0 0.0
    %4913 = vmatmul.mubr.f32.gmra.mxu0 %v4618
    %v4914 = vpop.f32.mrf.mxu0
    %v4915 = vadd.f32 0.0, %v4914
    %v4916 = vpop.f32.mrf.mxu0
    %v4917 = vadd.f32 0.0, %v4916
    %4918 = vdwg.mxu0
    %v4919 = vadd.f32 %v445, %v4844
    %v4920 = vadd.f32 %v447, %v4846
    %v4921 = vadd.f32 %v534, %v4915
    %v4922 = vadd.f32 %v536, %v4917
    %4923 = vmatprep.subr.mxu0 %v181
    %4924 = vmatpush1.msra.mxu0 %v180
    %4925 = vmatprep.subr.mxu0 %v177
    %4926 = vmatpush1.msra.mxu0 %v176
    %4927 = vmatprep.subr.mxu0 %v173
    %4928 = vmatpush1.msra.mxu0 %v172
    %4929 = vmatprep.subr.mxu0 %v169
    %4930 = vmatpush1.msra.mxu0 %v168
    %4931 = vmatprep.subr.mxu0 %v165
    %4932 = vmatpush1.msra.mxu0 %v164
    %4933 = vmatprep.subr.mxu0 %v161
    %4934 = vmatpush1.msra.mxu0 %v160
    %4935 = vmatprep.subr.mxu0 %v157
    %4936 = vmatpush1.msra.mxu0 %v156
    %4937 = vmatprep.subr.mxu0 %v153
    %4938 = vmatpush1.msra.mxu0 %v152
    %4939 = vmatprep.subr.mxu0 %v149
    %4940 = vmatpush1.msra.mxu0 %v148
    %4941 = vmatprep.subr.mxu0 %v145
    %4942 = vmatpush1.msra.mxu0 %v144
    %4943 = vmatprep.subr.mxu0 %v141
    %4944 = vmatpush1.msra.mxu0 %v140
    %4945 = vmatprep.subr.mxu0 %v137
    %4946 = vmatpush1.msra.mxu0 %v136
    %4947 = vmatprep.subr.mxu0 %v133
    %4948 = vmatpush1.msra.mxu0 %v132
    %4949 = vmatprep.subr.mxu0 %v129
    %4950 = vmatpush1.msra.mxu0 %v128
    %4951 = vmatprep.subr.mxu0 %v125
    %4952 = vmatpush1.msra.mxu0 %v124
    %4953 = vmatprep.subr.mxu0 %v121
    %4954 = vmatpush1.msra.mxu0 %v120
    %4955 = vmatprep.subr.mxu0 0.0
    %4956 = vmatpush2.msra.mxu0 0.0
    %4957 = vmatprep.subr.mxu0 0.0
    %4958 = vmatpush2.msra.mxu0 0.0
    %4959 = vmatprep.subr.mxu0 0.0
    %4960 = vmatpush2.msra.mxu0 0.0
    %4961 = vmatprep.subr.mxu0 0.0
    %4962 = vmatpush2.msra.mxu0 0.0
    %4963 = vmatprep.subr.mxu0 0.0
    %4964 = vmatpush2.msra.mxu0 0.0
    %4965 = vmatprep.subr.mxu0 0.0
    %4966 = vmatpush2.msra.mxu0 0.0
    %4967 = vmatprep.subr.mxu0 0.0
    %4968 = vmatpush2.msra.mxu0 0.0
    %4969 = vmatprep.subr.mxu0 0.0
    %4970 = vmatpush2.msra.mxu0 0.0
    %4971 = vmatprep.subr.mxu0 0.0
    %4972 = vmatpush2.msra.mxu0 0.0
    %4973 = vmatprep.subr.mxu0 0.0
    %4974 = vmatpush2.msra.mxu0 0.0
    %4975 = vmatprep.subr.mxu0 0.0
    %4976 = vmatpush2.msra.mxu0 0.0
    %4977 = vmatprep.subr.mxu0 0.0
    %4978 = vmatpush2.msra.mxu0 0.0
    %4979 = vmatprep.subr.mxu0 0.0
    %4980 = vmatpush2.msra.mxu0 0.0
    %4981 = vmatprep.subr.mxu0 0.0
    %4982 = vmatpush2.msra.mxu0 0.0
    %4983 = vmatprep.subr.mxu0 0.0
    %4984 = vmatpush2.msra.mxu0 0.0
    %4985 = vmatprep.subr.mxu0 0.0
    %4986 = vmatpush2.msra.mxu0 0.0
    %4987 = vmatprep.mubr.f32.mxu0 0.0
    %4988 = vmatmul.mubr.f32.gmra.mxu0 %v4052
    %v4989 = vpop.f32.mrf.mxu0
    %v4990 = vadd.f32 0.0, %v4989
    %v4991 = vpop.f32.mrf.mxu0
    %v4992 = vadd.f32 0.0, %v4991
    %4993 = vdwg.mxu0
    %4994 = vmatprep.subr.mxu0 %v183
    %4995 = vmatpush1.msra.mxu0 %v182
    %4996 = vmatprep.subr.mxu0 %v179
    %4997 = vmatpush1.msra.mxu0 %v178
    %4998 = vmatprep.subr.mxu0 %v175
    %4999 = vmatpush1.msra.mxu0 %v174
    %5000 = vmatprep.subr.mxu0 %v171
    %5001 = vmatpush1.msra.mxu0 %v170
    %5002 = vmatprep.subr.mxu0 %v167
    %5003 = vmatpush1.msra.mxu0 %v166
    %5004 = vmatprep.subr.mxu0 %v163
    %5005 = vmatpush1.msra.mxu0 %v162
    %5006 = vmatprep.subr.mxu0 %v159
    %5007 = vmatpush1.msra.mxu0 %v158
    %5008 = vmatprep.subr.mxu0 %v155
    %5009 = vmatpush1.msra.mxu0 %v154
    %5010 = vmatprep.subr.mxu0 %v151
    %5011 = vmatpush1.msra.mxu0 %v150
    %5012 = vmatprep.subr.mxu0 %v147
    %5013 = vmatpush1.msra.mxu0 %v146
    %5014 = vmatprep.subr.mxu0 %v143
    %5015 = vmatpush1.msra.mxu0 %v142
    %5016 = vmatprep.subr.mxu0 %v139
    %5017 = vmatpush1.msra.mxu0 %v138
    %5018 = vmatprep.subr.mxu0 %v135
    %5019 = vmatpush1.msra.mxu0 %v134
    %5020 = vmatprep.subr.mxu0 %v131
    %5021 = vmatpush1.msra.mxu0 %v130
    %5022 = vmatprep.subr.mxu0 %v127
    %5023 = vmatpush1.msra.mxu0 %v126
    %5024 = vmatprep.subr.mxu0 %v123
    %5025 = vmatpush1.msra.mxu0 %v122
    %5026 = vmatprep.subr.mxu0 0.0
    %5027 = vmatpush2.msra.mxu0 0.0
    %5028 = vmatprep.subr.mxu0 0.0
    %5029 = vmatpush2.msra.mxu0 0.0
    %5030 = vmatprep.subr.mxu0 0.0
    %5031 = vmatpush2.msra.mxu0 0.0
    %5032 = vmatprep.subr.mxu0 0.0
    %5033 = vmatpush2.msra.mxu0 0.0
    %5034 = vmatprep.subr.mxu0 0.0
    %5035 = vmatpush2.msra.mxu0 0.0
    %5036 = vmatprep.subr.mxu0 0.0
    %5037 = vmatpush2.msra.mxu0 0.0
    %5038 = vmatprep.subr.mxu0 0.0
    %5039 = vmatpush2.msra.mxu0 0.0
    %5040 = vmatprep.subr.mxu0 0.0
    %5041 = vmatpush2.msra.mxu0 0.0
    %5042 = vmatprep.subr.mxu0 0.0
    %5043 = vmatpush2.msra.mxu0 0.0
    %5044 = vmatprep.subr.mxu0 0.0
    %5045 = vmatpush2.msra.mxu0 0.0
    %5046 = vmatprep.subr.mxu0 0.0
    %5047 = vmatpush2.msra.mxu0 0.0
    %5048 = vmatprep.subr.mxu0 0.0
    %5049 = vmatpush2.msra.mxu0 0.0
    %5050 = vmatprep.subr.mxu0 0.0
    %5051 = vmatpush2.msra.mxu0 0.0
    %5052 = vmatprep.subr.mxu0 0.0
    %5053 = vmatpush2.msra.mxu0 0.0
    %5054 = vmatprep.subr.mxu0 0.0
    %5055 = vmatpush2.msra.mxu0 0.0
    %5056 = vmatprep.subr.mxu0 0.0
    %5057 = vmatpush2.msra.mxu0 0.0
    %5058 = vmatprep.mubr.f32.mxu0 0.0
    %5059 = vmatmul.mubr.f32.gmra.mxu0 %v4052
    %v5060 = vpop.f32.mrf.mxu0
    %v5061 = vadd.f32 0.0, %v5060
    %v5062 = vpop.f32.mrf.mxu0
    %v5063 = vadd.f32 0.0, %v5062
    %5064 = vdwg.mxu0
    %v5065 = vadd.f32 %v4919, %v4990
    %v5066 = vadd.f32 %v4920, %v4992
    %v5067 = vadd.f32 %v4921, %v5061
    %v5068 = vadd.f32 %v4922, %v5063
    %v5069 = vxor.u32 %v5065, 2147483648
    %v5070 = vmul.f32 %v5069, 1.442695
    %v5071 = vpow.pop %v5070
    %v5072 = vadd.f32 %v5071, 1.0
    %v5073 = vrcp.pop %v5072
    %v5074 = vmul.f32 1.0, %v5073
    %v5075 = vxor.u32 %v5066, 2147483648
    %v5076 = vmul.f32 %v5075, 1.442695
    %v5077 = vpow.pop %v5076
    %v5078 = vadd.f32 %v5077, 1.0
    %v5079 = vrcp.pop %v5078
    %v5080 = vmul.f32 1.0, %v5079
    %v5081 = vtanh.pop %v5067
    %v5082 = vxor.u32 %v5068, 2147483648
    %v5083 = vmul.f32 %v5082, 1.442695
    %v5084 = vpow.pop %v5083
    %v5085 = vadd.f32 %v5084, 1.0
    %v5086 = vrcp.pop %v5085
    %v5087 = vmul.f32 1.0, %v5086
    %v5089 = vrot.slane %v4048, 4
    %v5091 = vmul.f32 %v5080, %v5089
    %v5092 = vmul.f32 %v5074, %v5081
    %v5093 = vadd.f32 %v5091, %v5092
    %v5094 = vtanh.pop %v5093
    %v5095 = vmul.f32 %v5087, %v5094
    %5096 = vmatprep.subr.mxu0 0.0
    %5097 = vmatpush1.msra.mxu0 %v199
    %5098 = vmatprep.subr.mxu0 0.0
    %5099 = vmatpush1.msra.mxu0 %v198
    %5100 = vmatprep.subr.mxu0 0.0
    %5101 = vmatpush1.msra.mxu0 %v197
    %5102 = vmatprep.subr.mxu0 0.0
    %5103 = vmatpush1.msra.mxu0 %v196
    %5104 = vmatprep.subr.mxu0 0.0
    %5105 = vmatpush1.msra.mxu0 %v195
    %5106 = vmatprep.subr.mxu0 0.0
    %5107 = vmatpush1.msra.mxu0 %v194
    %5108 = vmatprep.subr.mxu0 0.0
    %5109 = vmatpush1.msra.mxu0 %v193
    %5110 = vmatprep.subr.mxu0 0.0
    %5111 = vmatpush1.msra.mxu0 %v192
    %5112 = vmatprep.subr.mxu0 0.0
    %5113 = vmatpush1.msra.mxu0 %v191
    %5114 = vmatprep.subr.mxu0 0.0
    %5115 = vmatpush1.msra.mxu0 %v190
    %5116 = vmatprep.subr.mxu0 0.0
    %5117 = vmatpush1.msra.mxu0 %v189
    %5118 = vmatprep.subr.mxu0 0.0
    %5119 = vmatpush1.msra.mxu0 %v188
    %5120 = vmatprep.subr.mxu0 0.0
    %5121 = vmatpush1.msra.mxu0 %v187
    %5122 = vmatprep.subr.mxu0 0.0
    %5123 = vmatpush1.msra.mxu0 %v186
    %5124 = vmatprep.subr.mxu0 0.0
    %5125 = vmatpush1.msra.mxu0 %v185
    %5126 = vmatprep.subr.mxu0 0.0
    %5127 = vmatpush1.msra.mxu0 %v184
    %5128 = vmatprep.subr.mxu0 0.0
    %5129 = vmatpush2.msra.mxu0 0.0
    %5130 = vmatprep.subr.mxu0 0.0
    %5131 = vmatpush2.msra.mxu0 0.0
    %5132 = vmatprep.subr.mxu0 0.0
    %5133 = vmatpush2.msra.mxu0 0.0
    %5134 = vmatprep.subr.mxu0 0.0
    %5135 = vmatpush2.msra.mxu0 0.0
    %5136 = vmatprep.subr.mxu0 0.0
    %5137 = vmatpush2.msra.mxu0 0.0
    %5138 = vmatprep.subr.mxu0 0.0
    %5139 = vmatpush2.msra.mxu0 0.0
    %5140 = vmatprep.subr.mxu0 0.0
    %5141 = vmatpush2.msra.mxu0 0.0
    %5142 = vmatprep.subr.mxu0 0.0
    %5143 = vmatpush2.msra.mxu0 0.0
    %5144 = vmatprep.subr.mxu0 0.0
    %5145 = vmatpush2.msra.mxu0 0.0
    %5146 = vmatprep.subr.mxu0 0.0
    %5147 = vmatpush2.msra.mxu0 0.0
    %5148 = vmatprep.subr.mxu0 0.0
    %5149 = vmatpush2.msra.mxu0 0.0
    %5150 = vmatprep.subr.mxu0 0.0
    %5151 = vmatpush2.msra.mxu0 0.0
    %5152 = vmatprep.subr.mxu0 0.0
    %5153 = vmatpush2.msra.mxu0 0.0
    %5154 = vmatprep.subr.mxu0 0.0
    %5155 = vmatpush2.msra.mxu0 0.0
    %5156 = vmatprep.subr.mxu0 0.0
    %5157 = vmatpush2.msra.mxu0 0.0
    %5158 = vmatprep.subr.mxu0 0.0
    %5159 = vmatpush2.msra.mxu0 0.0
    %5160 = vmatprep.mubr.f32.mxu0 0.0
    %5161 = vmatmul.mubr.f32.gmra.mxu0 %v5095
    %v5162 = vpop.f32.mrf.mxu0
    %v5163 = vadd.f32 0.0, %v5162
    %v5164 = vpop.f32.mrf.mxu0
    %5165 = vdwg.mxu0
    %v5168 = vunpack.c.l.s4 1966171168
    %v5169 = vunpack.c.0.s8 %v5168
    %v5170 = vlaneseq
    %v5171 = vshrl.u32 %v5170, 7
    %v5172 = vsub.s32 %v5169, %v5171
    %v5173 = vrot.slane %v5163, %v5172
    %v5174 = vcombine.high %v5173, %v5173
    %v5176 = vunpack.c.l.s4 1966171168
    %v5177 = vunpack.c.0.s8 %v5176
    %v5178 = vlaneseq
    %v5179 = vshrl.u32 %v5178, 7
    %v5180 = vsub.s32 %v5177, %v5179
    %v5181 = vrot.slane %v5173, %v5180
    %v5183 = vunpack.c.l.s4 1966171168
    %v5184 = vunpack.c.0.s8 %v5183
    %v5185 = vlaneseq
    %v5186 = vshrl.u32 %v5185, 7
    %v5187 = vsub.s32 %v5184, %v5186
    %v5188 = vrot.slane %v5174, %v5187
    %v5189 = vcombine.high %v5181, %v5181
    %v5190 = vcombine.high %v5188, %v5188
    %v5191 = vlaneseq
    %v5192 = vshrl.u32 %v5191, 7
    %v5193 = vsub.s32 0, %v5192
    %v5194 = vrot.slane %v5181, %v5193
    %v5195 = vlaneseq
    %v5196 = vshrl.u32 %v5195, 7
    %v5197 = vsub.s32 0, %v5196
    %v5198 = vrot.slane %v5188, %v5197
    %v5199 = vlaneseq
    %v5200 = vshrl.u32 %v5199, 7
    %v5201 = vsub.s32 0, %v5200
    %v5202 = vrot.slane %v5189, %v5201
    %v5203 = vlaneseq
    %v5204 = vshrl.u32 %v5203, 7
    %v5205 = vsub.s32 0, %v5204
    %v5206 = vrot.slane %v5190, %v5205
    %v5211 = vmul.f32 %v48, %v5194
    %v5212 = vmul.f32 %v49, %v5194
    %v5213 = vmul.f32 %v50, %v5198
    %v5214 = vmul.f32 %v51, %v5198
    %v5215 = vmul.f32 %v52, %v5202
    %v5216 = vmul.f32 %v53, %v5202
    %v5217 = vmul.f32 %v54, %v5206
    %v5218 = vmul.f32 %v55, %v5206
    %5219 = vadd.xlane.f32.xlu0 %v5211
    %v5220 = vpop.xlane.xlu0 %5219
    %5221 = vadd.xlane.f32.xlu0 %v5212
    %v5222 = vpop.xlane.xlu0 %5221
    %5223 = vadd.xlane.f32.xlu0 %v5213
    %v5224 = vpop.xlane.xlu0 %5223
    %5225 = vadd.xlane.f32.xlu0 %v5214
    %v5226 = vpop.xlane.xlu0 %5225
    %5227 = vadd.xlane.f32.xlu0 %v5215
    %v5228 = vpop.xlane.xlu0 %5227
    %5229 = vadd.xlane.f32.xlu0 %v5216
    %v5230 = vpop.xlane.xlu0 %5229
    %5231 = vadd.xlane.f32.xlu0 %v5217
    %v5232 = vpop.xlane.xlu0 %5231
    %5233 = vadd.xlane.f32.xlu0 %v5218
    %v5234 = vpop.xlane.xlu0 %5233
    %v5243 = vlaneseq
    %v5244 = vshrl.u32 %v5243, 7
    %v5245 = vsub.s32 %v1010, %v5244
    %v5246 = vrot.slane %v5220, %v5245
    %v5247 = vlaneseq
    %v5248 = vshrl.u32 %v5247, 7
    %v5249 = vsub.s32 %v1015, %v5248
    %v5250 = vrot.slane %v5222, %v5249
    %v5251 = vsel %vm1020, %v5250, %v5246
    %v5252 = vlaneseq
    %v5253 = vshrl.u32 %v5252, 7
    %v5254 = vsub.s32 %v1010, %v5253
    %v5255 = vrot.slane %v5224, %v5254
    %v5256 = vlaneseq
    %v5257 = vshrl.u32 %v5256, 7
    %v5258 = vsub.s32 %v1015, %v5257
    %v5259 = vrot.slane %v5226, %v5258
    %v5260 = vsel %vm1020, %v5259, %v5255
    %v5261 = vlaneseq
    %v5262 = vshrl.u32 %v5261, 7
    %v5263 = vsub.s32 %v1010, %v5262
    %v5264 = vrot.slane %v5228, %v5263
    %v5265 = vlaneseq
    %v5266 = vshrl.u32 %v5265, 7
    %v5267 = vsub.s32 %v1015, %v5266
    %v5268 = vrot.slane %v5230, %v5267
    %v5269 = vsel %vm1020, %v5268, %v5264
    %v5270 = vlaneseq
    %v5271 = vshrl.u32 %v5270, 7
    %v5272 = vsub.s32 %v1010, %v5271
    %v5273 = vrot.slane %v5232, %v5272
    %v5274 = vlaneseq
    %v5275 = vshrl.u32 %v5274, 7
    %v5276 = vsub.s32 %v1015, %v5275
    %v5277 = vrot.slane %v5234, %v5276
    %v5278 = vsel %vm1020, %v5277, %v5273
    %v5279 = vsel %vm1049, %v5260, %v5251
    %v5280 = vsel %vm1051, %v5269, %v5279
    %v5281 = vsel %vm1053, %v5278, %v5280
    %v5283 = vsel %vm1056, %v5281, -inf
    %5284 = vmax.xlane.f32.xlu0 %v5283
    %v5285 = vpop.xlane.xlu0 %5284
    %v5287 = vlaneseq
    %v5288 = vshrl.u32 %v5287, 7
    %v5289 = vsub.s32 0, %v5288
    %v5290 = vrot.slane %v5285, %v5289
    %v5291 = vlaneseq
    %v5292 = vshrl.u32 %v5291, 7
    %v5293 = vsub.s32 1, %v5292
    %v5294 = vrot.slane %v5285, %v5293
    %v5295 = vlaneseq
    %v5296 = vshrl.u32 %v5295, 7
    %v5297 = vsub.s32 2, %v5296
    %v5298 = vrot.slane %v5285, %v5297
    %v5299 = vlaneseq
    %v5300 = vshrl.u32 %v5299, 7
    %v5301 = vsub.s32 3, %v5300
    %v5302 = vrot.slane %v5285, %v5301
    %v5307 = vsub.f32 %v5220, %v5290
    %v5308 = vsub.f32 %v5222, %v5290
    %v5309 = vsub.f32 %v5224, %v5294
    %v5310 = vsub.f32 %v5226, %v5294
    %v5311 = vsub.f32 %v5228, %v5298
    %v5312 = vsub.f32 %v5230, %v5298
    %v5313 = vsub.f32 %v5232, %v5302
    %v5314 = vsub.f32 %v5234, %v5302
    %v5315 = vmul.f32 %v5307, 1.442695
    %v5316 = vpow.pop %v5315
    %v5317 = vmul.f32 %v5308, 1.442695
    %v5318 = vpow.pop %v5317
    %v5319 = vmul.f32 %v5309, 1.442695
    %v5320 = vpow.pop %v5319
    %v5321 = vmul.f32 %v5310, 1.442695
    %v5322 = vpow.pop %v5321
    %v5323 = vmul.f32 %v5311, 1.442695
    %v5324 = vpow.pop %v5323
    %v5325 = vmul.f32 %v5312, 1.442695
    %v5326 = vpow.pop %v5325
    %v5327 = vmul.f32 %v5313, 1.442695
    %v5328 = vpow.pop %v5327
    %v5329 = vmul.f32 %v5314, 1.442695
    %v5330 = vpow.pop %v5329
    %5339 = vset.pattern.permute.xlu0 0
    %5340 = vperm.xlu0 %5339, %v5316
    %v5341 = vpop.permute.xlu0 %5340
    %5342 = vset.pattern.permute.xlu0 0
    %5343 = vperm.xlu0 %5342, %v5318
    %v5344 = vpop.permute.xlu0 %5343
    %5345 = vset.pattern.permute.xlu0 0
    %5346 = vperm.xlu0 %5345, %v5320
    %v5347 = vpop.permute.xlu0 %5346
    %5348 = vset.pattern.permute.xlu0 0
    %5349 = vperm.xlu0 %5348, %v5322
    %v5350 = vpop.permute.xlu0 %5349
    %5351 = vset.pattern.permute.xlu0 0
    %5352 = vperm.xlu0 %5351, %v5324
    %v5353 = vpop.permute.xlu0 %5352
    %5354 = vset.pattern.permute.xlu0 0
    %5355 = vperm.xlu0 %5354, %v5326
    %v5356 = vpop.permute.xlu0 %5355
    %5357 = vset.pattern.permute.xlu0 0
    %5358 = vperm.xlu0 %5357, %v5328
    %v5359 = vpop.permute.xlu0 %5358
    %5360 = vset.pattern.permute.xlu0 0
    %5361 = vperm.xlu0 %5360, %v5330
    %v5362 = vpop.permute.xlu0 %5361
    %v5363 = vlaneseq
    %v5364 = vshrl.u32 %v5363, 7
    %v5365 = vsub.s32 %v1010, %v5364
    %v5366 = vrot.slane %v5341, %v5365
    %v5367 = vlaneseq
    %v5368 = vshrl.u32 %v5367, 7
    %v5369 = vsub.s32 %v1015, %v5368
    %v5370 = vrot.slane %v5344, %v5369
    %v5371 = vsel %vm1020, %v5370, %v5366
    %v5372 = vlaneseq
    %v5373 = vshrl.u32 %v5372, 7
    %v5374 = vsub.s32 %v1010, %v5373
    %v5375 = vrot.slane %v5347, %v5374
    %v5376 = vlaneseq
    %v5377 = vshrl.u32 %v5376, 7
    %v5378 = vsub.s32 %v1015, %v5377
    %v5379 = vrot.slane %v5350, %v5378
    %v5380 = vsel %vm1020, %v5379, %v5375
    %v5381 = vlaneseq
    %v5382 = vshrl.u32 %v5381, 7
    %v5383 = vsub.s32 %v1010, %v5382
    %v5384 = vrot.slane %v5353, %v5383
    %v5385 = vlaneseq
    %v5386 = vshrl.u32 %v5385, 7
    %v5387 = vsub.s32 %v1015, %v5386
    %v5388 = vrot.slane %v5356, %v5387
    %v5389 = vsel %vm1020, %v5388, %v5384
    %v5390 = vlaneseq
    %v5391 = vshrl.u32 %v5390, 7
    %v5392 = vsub.s32 %v1010, %v5391
    %v5393 = vrot.slane %v5359, %v5392
    %v5394 = vlaneseq
    %v5395 = vshrl.u32 %v5394, 7
    %v5396 = vsub.s32 %v1015, %v5395
    %v5397 = vrot.slane %v5362, %v5396
    %v5398 = vsel %vm1020, %v5397, %v5393
    %v5399 = vsel %vm1049, %v5380, %v5371
    %v5400 = vsel %vm1051, %v5389, %v5399
    %v5401 = vsel %vm1053, %v5398, %v5400
    %v5403 = vsel %vm1056, %v5401, 0.0
    %5404 = vadd.xlane.f32.xlu0 %v5403
    %v5405 = vpop.xlane.xlu0 %5404
    %v5406 = vrcp.pop %v5405
    %v5408 = vlaneseq
    %v5409 = vshrl.u32 %v5408, 7
    %v5410 = vsub.s32 0, %v5409
    %v5411 = vrot.slane %v5406, %v5410
    %v5412 = vlaneseq
    %v5413 = vshrl.u32 %v5412, 7
    %v5414 = vsub.s32 1, %v5413
    %v5415 = vrot.slane %v5406, %v5414
    %v5416 = vlaneseq
    %v5417 = vshrl.u32 %v5416, 7
    %v5418 = vsub.s32 2, %v5417
    %v5419 = vrot.slane %v5406, %v5418
    %v5420 = vlaneseq
    %v5421 = vshrl.u32 %v5420, 7
    %v5422 = vsub.s32 3, %v5421
    %v5423 = vrot.slane %v5406, %v5422
    %v5428 = vmul.f32 %v5316, %v5411
    %v5429 = vmul.f32 %v5318, %v5411
    %v5430 = vmul.f32 %v5320, %v5415
    %v5431 = vmul.f32 %v5322, %v5415
    %v5432 = vmul.f32 %v5324, %v5419
    %v5433 = vmul.f32 %v5326, %v5419
    %v5434 = vmul.f32 %v5328, %v5423
    %v5435 = vmul.f32 %v5330, %v5423
    %5437 = vset.pattern.permute.xlu0 0
    %5438 = vperm.xlu0 %5437, %v5428
    %v5439 = vpop.permute.xlu0 %5438
    %5442 = vset.pattern.permute.xlu0 0
    %5443 = vperm.xlu0 %5442, %v5429
    %v5444 = vpop.permute.xlu0 %5443
    %5447 = vset.pattern.permute.xlu0 0
    %5448 = vperm.xlu0 %5447, %v5430
    %v5449 = vpop.permute.xlu0 %5448
    %5452 = vset.pattern.permute.xlu0 0
    %5453 = vperm.xlu0 %5452, %v5431
    %v5454 = vpop.permute.xlu0 %5453
    %5457 = vset.pattern.permute.xlu0 0
    %5458 = vperm.xlu0 %5457, %v5432
    %v5459 = vpop.permute.xlu0 %5458
    %5462 = vset.pattern.permute.xlu0 0
    %5463 = vperm.xlu0 %5462, %v5433
    %v5464 = vpop.permute.xlu0 %5463
    %5467 = vset.pattern.permute.xlu0 0
    %5468 = vperm.xlu0 %5467, %v5434
    %v5469 = vpop.permute.xlu0 %5468
    %5472 = vset.pattern.permute.xlu0 0
    %5473 = vperm.xlu0 %5472, %v5435
    %v5474 = vpop.permute.xlu0 %5473
    %v5476 = vmul.f32 %v5439, %v48
    %v5477 = vmul.f32 %v5444, %v49
    %v5478 = vmul.f32 %v5449, %v50
    %v5479 = vmul.f32 %v5454, %v51
    %v5480 = vmul.f32 %v5459, %v52
    %v5481 = vmul.f32 %v5464, %v53
    %v5482 = vmul.f32 %v5469, %v54
    %v5483 = vmul.f32 %v5474, %v55
    %v5484 = vadd.f32 %v5476, %v5477
    %v5485 = vrot.slane %v5484, 4
    %v5486 = vadd.f32 %v5484, %v5485
    %v5487 = vrot.slane %v5486, 2
    %v5488 = vadd.f32 %v5486, %v5487
    %v5489 = vrot.slane %v5488, 1
    %v5490 = vadd.f32 %v5488, %v5489
    %v5491 = vadd.f32 %v5478, %v5479
    %v5492 = vrot.slane %v5491, 4
    %v5493 = vadd.f32 %v5491, %v5492
    %v5494 = vrot.slane %v5493, 2
    %v5495 = vadd.f32 %v5493, %v5494
    %v5496 = vrot.slane %v5495, 1
    %v5497 = vadd.f32 %v5495, %v5496
    %v5498 = vadd.f32 %v5480, %v5481
    %v5499 = vrot.slane %v5498, 4
    %v5500 = vadd.f32 %v5498, %v5499
    %v5501 = vrot.slane %v5500, 2
    %v5502 = vadd.f32 %v5500, %v5501
    %v5503 = vrot.slane %v5502, 1
    %v5504 = vadd.f32 %v5502, %v5503
    %v5505 = vadd.f32 %v5482, %v5483
    %v5506 = vrot.slane %v5505, 4
    %v5507 = vadd.f32 %v5505, %v5506
    %v5508 = vrot.slane %v5507, 2
    %v5509 = vadd.f32 %v5507, %v5508
    %v5510 = vrot.slane %v5509, 1
    %v5511 = vadd.f32 %v5509, %v5510
    %5512 = vmatprep.subr.mxu0 0.0
    %5513 = vmatpush1.msra.mxu0 %v231
    %5514 = vmatprep.subr.mxu0 0.0
    %5515 = vmatpush1.msra.mxu0 %v230
    %5516 = vmatprep.subr.mxu0 0.0
    %5517 = vmatpush1.msra.mxu0 %v229
    %5518 = vmatprep.subr.mxu0 0.0
    %5519 = vmatpush1.msra.mxu0 %v228
    %5520 = vmatprep.subr.mxu0 0.0
    %5521 = vmatpush1.msra.mxu0 %v227
    %5522 = vmatprep.subr.mxu0 0.0
    %5523 = vmatpush1.msra.mxu0 %v226
    %5524 = vmatprep.subr.mxu0 0.0
    %5525 = vmatpush1.msra.mxu0 %v225
    %5526 = vmatprep.subr.mxu0 0.0
    %5527 = vmatpush1.msra.mxu0 %v224
    %5528 = vmatprep.subr.mxu0 0.0
    %5529 = vmatpush1.msra.mxu0 %v223
    %5530 = vmatprep.subr.mxu0 0.0
    %5531 = vmatpush1.msra.mxu0 %v222
    %5532 = vmatprep.subr.mxu0 0.0
    %5533 = vmatpush1.msra.mxu0 %v221
    %5534 = vmatprep.subr.mxu0 0.0
    %5535 = vmatpush1.msra.mxu0 %v220
    %5536 = vmatprep.subr.mxu0 0.0
    %5537 = vmatpush1.msra.mxu0 %v219
    %5538 = vmatprep.subr.mxu0 0.0
    %5539 = vmatpush1.msra.mxu0 %v218
    %5540 = vmatprep.subr.mxu0 0.0
    %5541 = vmatpush1.msra.mxu0 %v217
    %5542 = vmatprep.subr.mxu0 0.0
    %5543 = vmatpush1.msra.mxu0 %v216
    %5544 = vmatprep.subr.mxu0 0.0
    %5545 = vmatpush2.msra.mxu0 0.0
    %5546 = vmatprep.subr.mxu0 0.0
    %5547 = vmatpush2.msra.mxu0 0.0
    %5548 = vmatprep.subr.mxu0 0.0
    %5549 = vmatpush2.msra.mxu0 0.0
    %5550 = vmatprep.subr.mxu0 0.0
    %5551 = vmatpush2.msra.mxu0 0.0
    %5552 = vmatprep.subr.mxu0 0.0
    %5553 = vmatpush2.msra.mxu0 0.0
    %5554 = vmatprep.subr.mxu0 0.0
    %5555 = vmatpush2.msra.mxu0 0.0
    %5556 = vmatprep.subr.mxu0 0.0
    %5557 = vmatpush2.msra.mxu0 0.0
    %5558 = vmatprep.subr.mxu0 0.0
    %5559 = vmatpush2.msra.mxu0 0.0
    %5560 = vmatprep.subr.mxu0 0.0
    %5561 = vmatpush2.msra.mxu0 0.0
    %5562 = vmatprep.subr.mxu0 0.0
    %5563 = vmatpush2.msra.mxu0 0.0
    %5564 = vmatprep.subr.mxu0 0.0
    %5565 = vmatpush2.msra.mxu0 0.0
    %5566 = vmatprep.subr.mxu0 0.0
    %5567 = vmatpush2.msra.mxu0 0.0
    %5568 = vmatprep.subr.mxu0 0.0
    %5569 = vmatpush2.msra.mxu0 0.0
    %5570 = vmatprep.subr.mxu0 0.0
    %5571 = vmatpush2.msra.mxu0 0.0
    %5572 = vmatprep.subr.mxu0 0.0
    %5573 = vmatpush2.msra.mxu0 0.0
    %5574 = vmatprep.subr.mxu0 0.0
    %5575 = vmatpush2.msra.mxu0 0.0
    %5576 = vmatprep.mubr.f32.mxu0 0.0
    %5577 = vmatmul.mubr.f32.gmra.mxu0 %v5095
    %v5578 = vpop.f32.mrf.mxu0
    %v5579 = vadd.f32 0.0, %v5578
    %v5580 = vpop.f32.mrf.mxu0
    %5581 = vdwg.mxu0
    %v5586 = vsel %vm1049, %v5497, %v5490
    %v5587 = vsel %vm1051, %v5504, %v5586
    %v5588 = vsel %vm1053, %v5511, %v5587
    %5590 = vmatprep.subr.mxu0 0.0
    %5591 = vmatpush1.msra.mxu0 %v215
    %5592 = vmatprep.subr.mxu0 0.0
    %5593 = vmatpush1.msra.mxu0 %v214
    %5594 = vmatprep.subr.mxu0 0.0
    %5595 = vmatpush1.msra.mxu0 %v213
    %5596 = vmatprep.subr.mxu0 0.0
    %5597 = vmatpush1.msra.mxu0 %v212
    %5598 = vmatprep.subr.mxu0 0.0
    %5599 = vmatpush1.msra.mxu0 %v211
    %5600 = vmatprep.subr.mxu0 0.0
    %5601 = vmatpush1.msra.mxu0 %v210
    %5602 = vmatprep.subr.mxu0 0.0
    %5603 = vmatpush1.msra.mxu0 %v209
    %5604 = vmatprep.subr.mxu0 0.0
    %5605 = vmatpush1.msra.mxu0 %v208
    %5606 = vmatprep.subr.mxu0 0.0
    %5607 = vmatpush1.msra.mxu0 %v207
    %5608 = vmatprep.subr.mxu0 0.0
    %5609 = vmatpush1.msra.mxu0 %v206
    %5610 = vmatprep.subr.mxu0 0.0
    %5611 = vmatpush1.msra.mxu0 %v205
    %5612 = vmatprep.subr.mxu0 0.0
    %5613 = vmatpush1.msra.mxu0 %v204
    %5614 = vmatprep.subr.mxu0 0.0
    %5615 = vmatpush1.msra.mxu0 %v203
    %5616 = vmatprep.subr.mxu0 0.0
    %5617 = vmatpush1.msra.mxu0 %v202
    %5618 = vmatprep.subr.mxu0 0.0
    %5619 = vmatpush1.msra.mxu0 %v201
    %5620 = vmatprep.subr.mxu0 0.0
    %5621 = vmatpush1.msra.mxu0 %v200
    %5622 = vmatprep.subr.mxu0 0.0
    %5623 = vmatpush2.msra.mxu0 0.0
    %5624 = vmatprep.subr.mxu0 0.0
    %5625 = vmatpush2.msra.mxu0 0.0
    %5626 = vmatprep.subr.mxu0 0.0
    %5627 = vmatpush2.msra.mxu0 0.0
    %5628 = vmatprep.subr.mxu0 0.0
    %5629 = vmatpush2.msra.mxu0 0.0
    %5630 = vmatprep.subr.mxu0 0.0
    %5631 = vmatpush2.msra.mxu0 0.0
    %5632 = vmatprep.subr.mxu0 0.0
    %5633 = vmatpush2.msra.mxu0 0.0
    %5634 = vmatprep.subr.mxu0 0.0
    %5635 = vmatpush2.msra.mxu0 0.0
    %5636 = vmatprep.subr.mxu0 0.0
    %5637 = vmatpush2.msra.mxu0 0.0
    %5638 = vmatprep.subr.mxu0 0.0
    %5639 = vmatpush2.msra.mxu0 0.0
    %5640 = vmatprep.subr.mxu0 0.0
    %5641 = vmatpush2.msra.mxu0 0.0
    %5642 = vmatprep.subr.mxu0 0.0
    %5643 = vmatpush2.msra.mxu0 0.0
    %5644 = vmatprep.subr.mxu0 0.0
    %5645 = vmatpush2.msra.mxu0 0.0
    %5646 = vmatprep.subr.mxu0 0.0
    %5647 = vmatpush2.msra.mxu0 0.0
    %5648 = vmatprep.subr.mxu0 0.0
    %5649 = vmatpush2.msra.mxu0 0.0
    %5650 = vmatprep.subr.mxu0 0.0
    %5651 = vmatpush2.msra.mxu0 0.0
    %5652 = vmatprep.subr.mxu0 0.0
    %5653 = vmatpush2.msra.mxu0 0.0
    %5654 = vmatprep.mubr.f32.mxu0 0.0
    %5655 = vmatmul.mubr.f32.gmra.mxu0 %v5588
    %v5656 = vpop.f32.mrf.mxu0
    %v5657 = vadd.f32 %v5579, %v5656
    %v5658 = vpop.f32.mrf.mxu0
    %5659 = vdwg.mxu0
    %v5660 = vtanh.pop %v5657
    %v5661 = vlaneseq
    %v5662 = vshrl.u32 %v5661, 7
    %v5663 = vsub.s32 %v1010, %v5662
    %v5664 = vrot.slane %v5439, %v5663
    %v5665 = vlaneseq
    %v5666 = vshrl.u32 %v5665, 7
    %v5667 = vsub.s32 %v1015, %v5666
    %v5668 = vrot.slane %v5444, %v5667
    %v5669 = vsel %vm1020, %v5668, %v5664
    %v5670 = vlaneseq
    %v5671 = vshrl.u32 %v5670, 7
    %v5672 = vsub.s32 %v1010, %v5671
    %v5673 = vrot.slane %v5449, %v5672
    %v5674 = vlaneseq
    %v5675 = vshrl.u32 %v5674, 7
    %v5676 = vsub.s32 %v1015, %v5675
    %v5677 = vrot.slane %v5454, %v5676
    %v5678 = vsel %vm1020, %v5677, %v5673
    %v5679 = vlaneseq
    %v5680 = vshrl.u32 %v5679, 7
    %v5681 = vsub.s32 %v1010, %v5680
    %v5682 = vrot.slane %v5459, %v5681
    %v5683 = vlaneseq
    %v5684 = vshrl.u32 %v5683, 7
    %v5685 = vsub.s32 %v1015, %v5684
    %v5686 = vrot.slane %v5464, %v5685
    %v5687 = vsel %vm1020, %v5686, %v5682
    %v5688 = vlaneseq
    %v5689 = vshrl.u32 %v5688, 7
    %v5690 = vsub.s32 %v1010, %v5689
    %v5691 = vrot.slane %v5469, %v5690
    %v5692 = vlaneseq
    %v5693 = vshrl.u32 %v5692, 7
    %v5694 = vsub.s32 %v1015, %v5693
    %v5695 = vrot.slane %v5474, %v5694
    %v5696 = vsel %vm1020, %v5695, %v5691
    %5701 = vst.msk [vmem:[#allocation4 + $0x4] sm:$0x1] %vm1475, %v5669
    %5702 = vst.msk [vmem:[#allocation4 + $0xc] sm:$0x1] %vm1475, %v5678
    %5703 = vst.msk [vmem:[#allocation4 + $0x14] sm:$0x1] %vm1475, %v5687
    %5704 = vst.msk [vmem:[#allocation4 + $0x1c] sm:$0x1] %vm1475, %v5696
    %5705 = vmatprep.subr.mxu0 %v263
    %5706 = vmatpush1.msra.mxu0 %v262
    %5707 = vmatprep.subr.mxu0 %v261
    %5708 = vmatpush1.msra.mxu0 %v260
    %5709 = vmatprep.subr.mxu0 %v259
    %5710 = vmatpush1.msra.mxu0 %v258
    %5711 = vmatprep.subr.mxu0 %v257
    %5712 = vmatpush1.msra.mxu0 %v256
    %5713 = vmatprep.subr.mxu0 %v255
    %5714 = vmatpush1.msra.mxu0 %v254
    %5715 = vmatprep.subr.mxu0 %v253
    %5716 = vmatpush1.msra.mxu0 %v252
    %5717 = vmatprep.subr.mxu0 %v251
    %5718 = vmatpush1.msra.mxu0 %v250
    %5719 = vmatprep.subr.mxu0 %v249
    %5720 = vmatpush1.msra.mxu0 %v248
    %5721 = vmatprep.subr.mxu0 %v247
    %5722 = vmatpush1.msra.mxu0 %v246
    %5723 = vmatprep.subr.mxu0 %v245
    %5724 = vmatpush1.msra.mxu0 %v244
    %5725 = vmatprep.subr.mxu0 %v243
    %5726 = vmatpush1.msra.mxu0 %v242
    %5727 = vmatprep.subr.mxu0 %v241
    %5728 = vmatpush1.msra.mxu0 %v240
    %5729 = vmatprep.subr.mxu0 %v239
    %5730 = vmatpush1.msra.mxu0 %v238
    %5731 = vmatprep.subr.mxu0 %v237
    %5732 = vmatpush1.msra.mxu0 %v236
    %5733 = vmatprep.subr.mxu0 %v235
    %5734 = vmatpush1.msra.mxu0 %v234
    %5735 = vmatprep.subr.mxu0 %v233
    %5736 = vmatpush1.msra.mxu0 %v232
    %5737 = vmatprep.subr.mxu0 0.0
    %5738 = vmatpush2.msra.mxu0 0.0
    %5739 = vmatprep.subr.mxu0 0.0
    %5740 = vmatpush2.msra.mxu0 0.0
    %5741 = vmatprep.subr.mxu0 0.0
    %5742 = vmatpush2.msra.mxu0 0.0
    %5743 = vmatprep.subr.mxu0 0.0
    %5744 = vmatpush2.msra.mxu0 0.0
    %5745 = vmatprep.subr.mxu0 0.0
    %5746 = vmatpush2.msra.mxu0 0.0
    %5747 = vmatprep.subr.mxu0 0.0
    %5748 = vmatpush2.msra.mxu0 0.0
    %5749 = vmatprep.subr.mxu0 0.0
    %5750 = vmatpush2.msra.mxu0 0.0
    %5751 = vmatprep.subr.mxu0 0.0
    %5752 = vmatpush2.msra.mxu0 0.0
    %5753 = vmatprep.subr.mxu0 0.0
    %5754 = vmatpush2.msra.mxu0 0.0
    %5755 = vmatprep.subr.mxu0 0.0
    %5756 = vmatpush2.msra.mxu0 0.0
    %5757 = vmatprep.subr.mxu0 0.0
    %5758 = vmatpush2.msra.mxu0 0.0
    %5759 = vmatprep.subr.mxu0 0.0
    %5760 = vmatpush2.msra.mxu0 0.0
    %5761 = vmatprep.subr.mxu0 0.0
    %5762 = vmatpush2.msra.mxu0 0.0
    %5763 = vmatprep.subr.mxu0 0.0
    %5764 = vmatpush2.msra.mxu0 0.0
    %5765 = vmatprep.subr.mxu0 0.0
    %5766 = vmatpush2.msra.mxu0 0.0
    %5767 = vmatprep.subr.mxu0 0.0
    %5768 = vmatpush2.msra.mxu0 0.0
    %5769 = vmatprep.mubr.f32.mxu0 0.0
    %5770 = vmatmul.mubr.f32.gmra.mxu0 %v5660
    %v5771 = vpop.f32.mrf.mxu0
    %v5772 = vadd.f32 %v269, %v5771
    %v5773 = vpop.f32.mrf.mxu0
    %v5774 = vadd.f32 %v273, %v5773
    %5775 = vdwg.mxu0
    %v5778 = vcombine.low %v5772, %v5774
    %v5780 = vunpack.c.l.s4 1966171168
    %v5781 = vunpack.c.0.s8 %v5780
    %v5782 = vlaneseq
    %v5783 = vshrl.u32 %v5782, 7
    %v5784 = vsub.s32 %v5781, %v5783
    %v5785 = vrot.slane %v5778, %v5784
    %v5786 = vcombine.high %v5785, %v5785
    %v5788 = vunpack.c.l.s4 1966171168
    %v5789 = vunpack.c.0.s8 %v5788
    %v5790 = vlaneseq
    %v5791 = vshrl.u32 %v5790, 7
    %v5792 = vsub.s32 %v5789, %v5791
    %v5793 = vrot.slane %v5785, %v5792
    %v5795 = vunpack.c.l.s4 1966171168
    %v5796 = vunpack.c.0.s8 %v5795
    %v5797 = vlaneseq
    %v5798 = vshrl.u32 %v5797, 7
    %v5799 = vsub.s32 %v5796, %v5798
    %v5800 = vrot.slane %v5786, %v5799
    %v5801 = vcombine.high %v5793, %v5793
    %v5802 = vcombine.high %v5800, %v5800
    %s5807 = scalar_lea.vmem [#allocation2], 4
    %5808 = vst.msk [vmem:[%s5807] ss:$8 sm:$0x3] %vm1585, %v5793
    %5809 = vst.msk [vmem:[%s5807] ss:$8 sm:$0x0] %vm1585, %v5793
    %s5810 = scalar_lea.vmem [#allocation2], 20
    %5811 = vst.msk [vmem:[%s5810] ss:$8 sm:$0x3] %vm1585, %v5800
    %5812 = vst.msk [vmem:[%s5810] ss:$8 sm:$0x0] %vm1585, %v5800
    %s5813 = scalar_lea.vmem [#allocation2], 36
    %5814 = vst.msk [vmem:[%s5813] ss:$8 sm:$0x3] %vm1585, %v5801
    %5815 = vst.msk [vmem:[%s5813] ss:$8 sm:$0x0] %vm1585, %v5801
    %s5816 = scalar_lea.vmem [#allocation2], 52
    %5817 = vst.msk [vmem:[%s5816] ss:$8 sm:$0x3] %vm1585, %v5802
    %5818 = vst.msk [vmem:[%s5816] ss:$8 sm:$0x0] %vm1585, %v5802
    %5819 = vmatprep.subr.mxu0 %v117
    %5820 = vmatpush1.msra.mxu0 %v116
    %5821 = vmatprep.subr.mxu0 %v113
    %5822 = vmatpush1.msra.mxu0 %v112
    %5823 = vmatprep.subr.mxu0 %v109
    %5824 = vmatpush1.msra.mxu0 %v108
    %5825 = vmatprep.subr.mxu0 %v105
    %5826 = vmatpush1.msra.mxu0 %v104
    %5827 = vmatprep.subr.mxu0 %v101
    %5828 = vmatpush1.msra.mxu0 %v100
    %5829 = vmatprep.subr.mxu0 %v97
    %5830 = vmatpush1.msra.mxu0 %v96
    %5831 = vmatprep.subr.mxu0 %v93
    %5832 = vmatpush1.msra.mxu0 %v92
    %5833 = vmatprep.subr.mxu0 %v89
    %5834 = vmatpush1.msra.mxu0 %v88
    %5835 = vmatprep.subr.mxu0 %v85
    %5836 = vmatpush1.msra.mxu0 %v84
    %5837 = vmatprep.subr.mxu0 %v81
    %5838 = vmatpush1.msra.mxu0 %v80
    %5839 = vmatprep.subr.mxu0 %v77
    %5840 = vmatpush1.msra.mxu0 %v76
    %5841 = vmatprep.subr.mxu0 %v73
    %5842 = vmatpush1.msra.mxu0 %v72
    %5843 = vmatprep.subr.mxu0 %v69
    %5844 = vmatpush1.msra.mxu0 %v68
    %5845 = vmatprep.subr.mxu0 %v65
    %5846 = vmatpush1.msra.mxu0 %v64
    %5847 = vmatprep.subr.mxu0 %v61
    %5848 = vmatpush1.msra.mxu0 %v60
    %5849 = vmatprep.subr.mxu0 %v57
    %5850 = vmatpush1.msra.mxu0 %v56
    %5851 = vmatprep.subr.mxu0 0.0
    %5852 = vmatpush2.msra.mxu0 0.0
    %5853 = vmatprep.subr.mxu0 0.0
    %5854 = vmatpush2.msra.mxu0 0.0
    %5855 = vmatprep.subr.mxu0 0.0
    %5856 = vmatpush2.msra.mxu0 0.0
    %5857 = vmatprep.subr.mxu0 0.0
    %5858 = vmatpush2.msra.mxu0 0.0
    %5859 = vmatprep.subr.mxu0 0.0
    %5860 = vmatpush2.msra.mxu0 0.0
    %5861 = vmatprep.subr.mxu0 0.0
    %5862 = vmatpush2.msra.mxu0 0.0
    %5863 = vmatprep.subr.mxu0 0.0
    %5864 = vmatpush2.msra.mxu0 0.0
    %5865 = vmatprep.subr.mxu0 0.0
    %5866 = vmatpush2.msra.mxu0 0.0
    %5867 = vmatprep.subr.mxu0 0.0
    %5868 = vmatpush2.msra.mxu0 0.0
    %5869 = vmatprep.subr.mxu0 0.0
    %5870 = vmatpush2.msra.mxu0 0.0
    %5871 = vmatprep.subr.mxu0 0.0
    %5872 = vmatpush2.msra.mxu0 0.0
    %5873 = vmatprep.subr.mxu0 0.0
    %5874 = vmatpush2.msra.mxu0 0.0
    %5875 = vmatprep.subr.mxu0 0.0
    %5876 = vmatpush2.msra.mxu0 0.0
    %5877 = vmatprep.subr.mxu0 0.0
    %5878 = vmatpush2.msra.mxu0 0.0
    %5879 = vmatprep.subr.mxu0 0.0
    %5880 = vmatpush2.msra.mxu0 0.0
    %5881 = vmatprep.subr.mxu0 0.0
    %5882 = vmatpush2.msra.mxu0 0.0
    %5883 = vmatprep.mubr.f32.mxu0 0.0
    %5884 = vmatmul.mubr.f32.gmra.mxu0 %v5660
    %v5885 = vpop.f32.mrf.mxu0
    %v5886 = vadd.f32 0.0, %v5885
    %v5887 = vpop.f32.mrf.mxu0
    %v5888 = vadd.f32 0.0, %v5887
    %5889 = vdwg.mxu0
    %5890 = vmatprep.subr.mxu0 %v119
    %5891 = vmatpush1.msra.mxu0 %v118
    %5892 = vmatprep.subr.mxu0 %v115
    %5893 = vmatpush1.msra.mxu0 %v114
    %5894 = vmatprep.subr.mxu0 %v111
    %5895 = vmatpush1.msra.mxu0 %v110
    %5896 = vmatprep.subr.mxu0 %v107
    %5897 = vmatpush1.msra.mxu0 %v106
    %5898 = vmatprep.subr.mxu0 %v103
    %5899 = vmatpush1.msra.mxu0 %v102
    %5900 = vmatprep.subr.mxu0 %v99
    %5901 = vmatpush1.msra.mxu0 %v98
    %5902 = vmatprep.subr.mxu0 %v95
    %5903 = vmatpush1.msra.mxu0 %v94
    %5904 = vmatprep.subr.mxu0 %v91
    %5905 = vmatpush1.msra.mxu0 %v90
    %5906 = vmatprep.subr.mxu0 %v87
    %5907 = vmatpush1.msra.mxu0 %v86
    %5908 = vmatprep.subr.mxu0 %v83
    %5909 = vmatpush1.msra.mxu0 %v82
    %5910 = vmatprep.subr.mxu0 %v79
    %5911 = vmatpush1.msra.mxu0 %v78
    %5912 = vmatprep.subr.mxu0 %v75
    %5913 = vmatpush1.msra.mxu0 %v74
    %5914 = vmatprep.subr.mxu0 %v71
    %5915 = vmatpush1.msra.mxu0 %v70
    %5916 = vmatprep.subr.mxu0 %v67
    %5917 = vmatpush1.msra.mxu0 %v66
    %5918 = vmatprep.subr.mxu0 %v63
    %5919 = vmatpush1.msra.mxu0 %v62
    %5920 = vmatprep.subr.mxu0 %v59
    %5921 = vmatpush1.msra.mxu0 %v58
    %5922 = vmatprep.subr.mxu0 0.0
    %5923 = vmatpush2.msra.mxu0 0.0
    %5924 = vmatprep.subr.mxu0 0.0
    %5925 = vmatpush2.msra.mxu0 0.0
    %5926 = vmatprep.subr.mxu0 0.0
    %5927 = vmatpush2.msra.mxu0 0.0
    %5928 = vmatprep.subr.mxu0 0.0
    %5929 = vmatpush2.msra.mxu0 0.0
    %5930 = vmatprep.subr.mxu0 0.0
    %5931 = vmatpush2.msra.mxu0 0.0
    %5932 = vmatprep.subr.mxu0 0.0
    %5933 = vmatpush2.msra.mxu0 0.0
    %5934 = vmatprep.subr.mxu0 0.0
    %5935 = vmatpush2.msra.mxu0 0.0
    %5936 = vmatprep.subr.mxu0 0.0
    %5937 = vmatpush2.msra.mxu0 0.0
    %5938 = vmatprep.subr.mxu0 0.0
    %5939 = vmatpush2.msra.mxu0 0.0
    %5940 = vmatprep.subr.mxu0 0.0
    %5941 = vmatpush2.msra.mxu0 0.0
    %5942 = vmatprep.subr.mxu0 0.0
    %5943 = vmatpush2.msra.mxu0 0.0
    %5944 = vmatprep.subr.mxu0 0.0
    %5945 = vmatpush2.msra.mxu0 0.0
    %5946 = vmatprep.subr.mxu0 0.0
    %5947 = vmatpush2.msra.mxu0 0.0
    %5948 = vmatprep.subr.mxu0 0.0
    %5949 = vmatpush2.msra.mxu0 0.0
    %5950 = vmatprep.subr.mxu0 0.0
    %5951 = vmatpush2.msra.mxu0 0.0
    %5952 = vmatprep.subr.mxu0 0.0
    %5953 = vmatpush2.msra.mxu0 0.0
    %5954 = vmatprep.mubr.f32.mxu0 0.0
    %5955 = vmatmul.mubr.f32.gmra.mxu0 %v5660
    %v5956 = vpop.f32.mrf.mxu0
    %v5957 = vadd.f32 0.0, %v5956
    %v5958 = vpop.f32.mrf.mxu0
    %v5959 = vadd.f32 0.0, %v5958
    %5960 = vdwg.mxu0
    %v5965 = vrot.slane %v5886, 4
    %v5966 = vrot.slane %v5888, 4
    %v5967 = vrot.slane %v5957, 4
    %v5968 = vrot.slane %v5959, 4
    %v5973 = vadd.f32 %v445, %v5965
    %v5974 = vadd.f32 %v447, %v5966
    %v5975 = vadd.f32 %v534, %v5967
    %v5976 = vadd.f32 %v536, %v5968
    %5977 = vmatprep.subr.mxu0 %v181
    %5978 = vmatpush1.msra.mxu0 %v180
    %5979 = vmatprep.subr.mxu0 %v177
    %5980 = vmatpush1.msra.mxu0 %v176
    %5981 = vmatprep.subr.mxu0 %v173
    %5982 = vmatpush1.msra.mxu0 %v172
    %5983 = vmatprep.subr.mxu0 %v169
    %5984 = vmatpush1.msra.mxu0 %v168
    %5985 = vmatprep.subr.mxu0 %v165
    %5986 = vmatpush1.msra.mxu0 %v164
    %5987 = vmatprep.subr.mxu0 %v161
    %5988 = vmatpush1.msra.mxu0 %v160
    %5989 = vmatprep.subr.mxu0 %v157
    %5990 = vmatpush1.msra.mxu0 %v156
    %5991 = vmatprep.subr.mxu0 %v153
    %5992 = vmatpush1.msra.mxu0 %v152
    %5993 = vmatprep.subr.mxu0 %v149
    %5994 = vmatpush1.msra.mxu0 %v148
    %5995 = vmatprep.subr.mxu0 %v145
    %5996 = vmatpush1.msra.mxu0 %v144
    %5997 = vmatprep.subr.mxu0 %v141
    %5998 = vmatpush1.msra.mxu0 %v140
    %5999 = vmatprep.subr.mxu0 %v137
    %6000 = vmatpush1.msra.mxu0 %v136
    %6001 = vmatprep.subr.mxu0 %v133
    %6002 = vmatpush1.msra.mxu0 %v132
    %6003 = vmatprep.subr.mxu0 %v129
    %6004 = vmatpush1.msra.mxu0 %v128
    %6005 = vmatprep.subr.mxu0 %v125
    %6006 = vmatpush1.msra.mxu0 %v124
    %6007 = vmatprep.subr.mxu0 %v121
    %6008 = vmatpush1.msra.mxu0 %v120
    %6009 = vmatprep.subr.mxu0 0.0
    %6010 = vmatpush2.msra.mxu0 0.0
    %6011 = vmatprep.subr.mxu0 0.0
    %6012 = vmatpush2.msra.mxu0 0.0
    %6013 = vmatprep.subr.mxu0 0.0
    %6014 = vmatpush2.msra.mxu0 0.0
    %6015 = vmatprep.subr.mxu0 0.0
    %6016 = vmatpush2.msra.mxu0 0.0
    %6017 = vmatprep.subr.mxu0 0.0
    %6018 = vmatpush2.msra.mxu0 0.0
    %6019 = vmatprep.subr.mxu0 0.0
    %6020 = vmatpush2.msra.mxu0 0.0
    %6021 = vmatprep.subr.mxu0 0.0
    %6022 = vmatpush2.msra.mxu0 0.0
    %6023 = vmatprep.subr.mxu0 0.0
    %6024 = vmatpush2.msra.mxu0 0.0
    %6025 = vmatprep.subr.mxu0 0.0
    %6026 = vmatpush2.msra.mxu0 0.0
    %6027 = vmatprep.subr.mxu0 0.0
    %6028 = vmatpush2.msra.mxu0 0.0
    %6029 = vmatprep.subr.mxu0 0.0
    %6030 = vmatpush2.msra.mxu0 0.0
    %6031 = vmatprep.subr.mxu0 0.0
    %6032 = vmatpush2.msra.mxu0 0.0
    %6033 = vmatprep.subr.mxu0 0.0
    %6034 = vmatpush2.msra.mxu0 0.0
    %6035 = vmatprep.subr.mxu0 0.0
    %6036 = vmatpush2.msra.mxu0 0.0
    %6037 = vmatprep.subr.mxu0 0.0
    %6038 = vmatpush2.msra.mxu0 0.0
    %6039 = vmatprep.subr.mxu0 0.0
    %6040 = vmatpush2.msra.mxu0 0.0
    %6041 = vmatprep.mubr.f32.mxu0 0.0
    %6042 = vmatmul.mubr.f32.gmra.mxu0 %v5095
    %v6043 = vpop.f32.mrf.mxu0
    %v6044 = vadd.f32 0.0, %v6043
    %v6045 = vpop.f32.mrf.mxu0
    %v6046 = vadd.f32 0.0, %v6045
    %6047 = vdwg.mxu0
    %6048 = vmatprep.subr.mxu0 %v183
    %6049 = vmatpush1.msra.mxu0 %v182
    %6050 = vmatprep.subr.mxu0 %v179
    %6051 = vmatpush1.msra.mxu0 %v178
    %6052 = vmatprep.subr.mxu0 %v175
    %6053 = vmatpush1.msra.mxu0 %v174
    %6054 = vmatprep.subr.mxu0 %v171
    %6055 = vmatpush1.msra.mxu0 %v170
    %6056 = vmatprep.subr.mxu0 %v167
    %6057 = vmatpush1.msra.mxu0 %v166
    %6058 = vmatprep.subr.mxu0 %v163
    %6059 = vmatpush1.msra.mxu0 %v162
    %6060 = vmatprep.subr.mxu0 %v159
    %6061 = vmatpush1.msra.mxu0 %v158
    %6062 = vmatprep.subr.mxu0 %v155
    %6063 = vmatpush1.msra.mxu0 %v154
    %6064 = vmatprep.subr.mxu0 %v151
    %6065 = vmatpush1.msra.mxu0 %v150
    %6066 = vmatprep.subr.mxu0 %v147
    %6067 = vmatpush1.msra.mxu0 %v146
    %6068 = vmatprep.subr.mxu0 %v143
    %6069 = vmatpush1.msra.mxu0 %v142
    %6070 = vmatprep.subr.mxu0 %v139
    %6071 = vmatpush1.msra.mxu0 %v138
    %6072 = vmatprep.subr.mxu0 %v135
    %6073 = vmatpush1.msra.mxu0 %v134
    %6074 = vmatprep.subr.mxu0 %v131
    %6075 = vmatpush1.msra.mxu0 %v130
    %6076 = vmatprep.subr.mxu0 %v127
    %6077 = vmatpush1.msra.mxu0 %v126
    %6078 = vmatprep.subr.mxu0 %v123
    %6079 = vmatpush1.msra.mxu0 %v122
    %6080 = vmatprep.subr.mxu0 0.0
    %6081 = vmatpush2.msra.mxu0 0.0
    %6082 = vmatprep.subr.mxu0 0.0
    %6083 = vmatpush2.msra.mxu0 0.0
    %6084 = vmatprep.subr.mxu0 0.0
    %6085 = vmatpush2.msra.mxu0 0.0
    %6086 = vmatprep.subr.mxu0 0.0
    %6087 = vmatpush2.msra.mxu0 0.0
    %6088 = vmatprep.subr.mxu0 0.0
    %6089 = vmatpush2.msra.mxu0 0.0
    %6090 = vmatprep.subr.mxu0 0.0
    %6091 = vmatpush2.msra.mxu0 0.0
    %6092 = vmatprep.subr.mxu0 0.0
    %6093 = vmatpush2.msra.mxu0 0.0
    %6094 = vmatprep.subr.mxu0 0.0
    %6095 = vmatpush2.msra.mxu0 0.0
    %6096 = vmatprep.subr.mxu0 0.0
    %6097 = vmatpush2.msra.mxu0 0.0
    %6098 = vmatprep.subr.mxu0 0.0
    %6099 = vmatpush2.msra.mxu0 0.0
    %6100 = vmatprep.subr.mxu0 0.0
    %6101 = vmatpush2.msra.mxu0 0.0
    %6102 = vmatprep.subr.mxu0 0.0
    %6103 = vmatpush2.msra.mxu0 0.0
    %6104 = vmatprep.subr.mxu0 0.0
    %6105 = vmatpush2.msra.mxu0 0.0
    %6106 = vmatprep.subr.mxu0 0.0
    %6107 = vmatpush2.msra.mxu0 0.0
    %6108 = vmatprep.subr.mxu0 0.0
    %6109 = vmatpush2.msra.mxu0 0.0
    %6110 = vmatprep.subr.mxu0 0.0
    %6111 = vmatpush2.msra.mxu0 0.0
    %6112 = vmatprep.mubr.f32.mxu0 0.0
    %6113 = vmatmul.mubr.f32.gmra.mxu0 %v5095
    %v6114 = vpop.f32.mrf.mxu0
    %v6115 = vadd.f32 0.0, %v6114
    %v6116 = vpop.f32.mrf.mxu0
    %v6117 = vadd.f32 0.0, %v6116
    %6118 = vdwg.mxu0
    %v6123 = vrot.slane %v6044, 4
    %v6124 = vrot.slane %v6046, 4
    %v6125 = vrot.slane %v6115, 4
    %v6126 = vrot.slane %v6117, 4
    %v6131 = vadd.f32 %v5973, %v6123
    %v6132 = vadd.f32 %v5974, %v6124
    %v6133 = vadd.f32 %v5975, %v6125
    %v6134 = vadd.f32 %v5976, %v6126
    %v6135 = vxor.u32 %v6131, 2147483648
    %v6136 = vmul.f32 %v6135, 1.442695
    %v6137 = vpow.pop %v6136
    %v6138 = vadd.f32 %v6137, 1.0
    %v6139 = vrcp.pop %v6138
    %v6140 = vmul.f32 1.0, %v6139
    %v6141 = vxor.u32 %v6132, 2147483648
    %v6142 = vmul.f32 %v6141, 1.442695
    %v6143 = vpow.pop %v6142
    %v6144 = vadd.f32 %v6143, 1.0
    %v6145 = vrcp.pop %v6144
    %v6146 = vmul.f32 1.0, %v6145
    %v6147 = vtanh.pop %v6133
    %v6148 = vxor.u32 %v6134, 2147483648
    %v6149 = vmul.f32 %v6148, 1.442695
    %v6150 = vpow.pop %v6149
    %v6151 = vadd.f32 %v6150, 1.0
    %v6152 = vrcp.pop %v6151
    %v6153 = vmul.f32 1.0, %v6152
    %v6155 = vrot.slane %v5093, 4
    %v6157 = vmul.f32 %v6146, %v6155
    %v6158 = vmul.f32 %v6140, %v6147
    %v6159 = vadd.f32 %v6157, %v6158
    %v6160 = vtanh.pop %v6159
    %v6161 = vmul.f32 %v6153, %v6160
    %v6163 = vrot.slane %v6161, 4
    %6165 = vmatprep.subr.mxu0 0.0
    %6166 = vmatpush1.msra.mxu0 %v199
    %6167 = vmatprep.subr.mxu0 0.0
    %6168 = vmatpush1.msra.mxu0 %v198
    %6169 = vmatprep.subr.mxu0 0.0
    %6170 = vmatpush1.msra.mxu0 %v197
    %6171 = vmatprep.subr.mxu0 0.0
    %6172 = vmatpush1.msra.mxu0 %v196
    %6173 = vmatprep.subr.mxu0 0.0
    %6174 = vmatpush1.msra.mxu0 %v195
    %6175 = vmatprep.subr.mxu0 0.0
    %6176 = vmatpush1.msra.mxu0 %v194
    %6177 = vmatprep.subr.mxu0 0.0
    %6178 = vmatpush1.msra.mxu0 %v193
    %6179 = vmatprep.subr.mxu0 0.0
    %6180 = vmatpush1.msra.mxu0 %v192
    %6181 = vmatprep.subr.mxu0 0.0
    %6182 = vmatpush1.msra.mxu0 %v191
    %6183 = vmatprep.subr.mxu0 0.0
    %6184 = vmatpush1.msra.mxu0 %v190
    %6185 = vmatprep.subr.mxu0 0.0
    %6186 = vmatpush1.msra.mxu0 %v189
    %6187 = vmatprep.subr.mxu0 0.0
    %6188 = vmatpush1.msra.mxu0 %v188
    %6189 = vmatprep.subr.mxu0 0.0
    %6190 = vmatpush1.msra.mxu0 %v187
    %6191 = vmatprep.subr.mxu0 0.0
    %6192 = vmatpush1.msra.mxu0 %v186
    %6193 = vmatprep.subr.mxu0 0.0
    %6194 = vmatpush1.msra.mxu0 %v185
    %6195 = vmatprep.subr.mxu0 0.0
    %6196 = vmatpush1.msra.mxu0 %v184
    %6197 = vmatprep.subr.mxu0 0.0
    %6198 = vmatpush2.msra.mxu0 0.0
    %6199 = vmatprep.subr.mxu0 0.0
    %6200 = vmatpush2.msra.mxu0 0.0
    %6201 = vmatprep.subr.mxu0 0.0
    %6202 = vmatpush2.msra.mxu0 0.0
    %6203 = vmatprep.subr.mxu0 0.0
    %6204 = vmatpush2.msra.mxu0 0.0
    %6205 = vmatprep.subr.mxu0 0.0
    %6206 = vmatpush2.msra.mxu0 0.0
    %6207 = vmatprep.subr.mxu0 0.0
    %6208 = vmatpush2.msra.mxu0 0.0
    %6209 = vmatprep.subr.mxu0 0.0
    %6210 = vmatpush2.msra.mxu0 0.0
    %6211 = vmatprep.subr.mxu0 0.0
    %6212 = vmatpush2.msra.mxu0 0.0
    %6213 = vmatprep.subr.mxu0 0.0
    %6214 = vmatpush2.msra.mxu0 0.0
    %6215 = vmatprep.subr.mxu0 0.0
    %6216 = vmatpush2.msra.mxu0 0.0
    %6217 = vmatprep.subr.mxu0 0.0
    %6218 = vmatpush2.msra.mxu0 0.0
    %6219 = vmatprep.subr.mxu0 0.0
    %6220 = vmatpush2.msra.mxu0 0.0
    %6221 = vmatprep.subr.mxu0 0.0
    %6222 = vmatpush2.msra.mxu0 0.0
    %6223 = vmatprep.subr.mxu0 0.0
    %6224 = vmatpush2.msra.mxu0 0.0
    %6225 = vmatprep.subr.mxu0 0.0
    %6226 = vmatpush2.msra.mxu0 0.0
    %6227 = vmatprep.subr.mxu0 0.0
    %6228 = vmatpush2.msra.mxu0 0.0
    %6229 = vmatprep.mubr.f32.mxu0 0.0
    %6230 = vmatmul.mubr.f32.gmra.mxu0 %v6163
    %v6231 = vpop.f32.mrf.mxu0
    %v6232 = vadd.f32 0.0, %v6231
    %v6233 = vpop.f32.mrf.mxu0
    %6234 = vdwg.mxu0
    %v6237 = vunpack.c.l.s4 1966171168
    %v6238 = vunpack.c.0.s8 %v6237
    %v6239 = vlaneseq
    %v6240 = vshrl.u32 %v6239, 7
    %v6241 = vsub.s32 %v6238, %v6240
    %v6242 = vrot.slane %v6232, %v6241
    %v6243 = vcombine.high %v6242, %v6242
    %v6245 = vunpack.c.l.s4 1966171168
    %v6246 = vunpack.c.0.s8 %v6245
    %v6247 = vlaneseq
    %v6248 = vshrl.u32 %v6247, 7
    %v6249 = vsub.s32 %v6246, %v6248
    %v6250 = vrot.slane %v6242, %v6249
    %v6252 = vunpack.c.l.s4 1966171168
    %v6253 = vunpack.c.0.s8 %v6252
    %v6254 = vlaneseq
    %v6255 = vshrl.u32 %v6254, 7
    %v6256 = vsub.s32 %v6253, %v6255
    %v6257 = vrot.slane %v6243, %v6256
    %v6258 = vcombine.high %v6250, %v6250
    %v6259 = vcombine.high %v6257, %v6257
    %v6260 = vlaneseq
    %v6261 = vshrl.u32 %v6260, 7
    %v6262 = vsub.s32 0, %v6261
    %v6263 = vrot.slane %v6250, %v6262
    %v6264 = vlaneseq
    %v6265 = vshrl.u32 %v6264, 7
    %v6266 = vsub.s32 0, %v6265
    %v6267 = vrot.slane %v6257, %v6266
    %v6268 = vlaneseq
    %v6269 = vshrl.u32 %v6268, 7
    %v6270 = vsub.s32 0, %v6269
    %v6271 = vrot.slane %v6258, %v6270
    %v6272 = vlaneseq
    %v6273 = vshrl.u32 %v6272, 7
    %v6274 = vsub.s32 0, %v6273
    %v6275 = vrot.slane %v6259, %v6274
    %v6280 = vmul.f32 %v48, %v6263
    %v6281 = vmul.f32 %v49, %v6263
    %v6282 = vmul.f32 %v50, %v6267
    %v6283 = vmul.f32 %v51, %v6267
    %v6284 = vmul.f32 %v52, %v6271
    %v6285 = vmul.f32 %v53, %v6271
    %v6286 = vmul.f32 %v54, %v6275
    %v6287 = vmul.f32 %v55, %v6275
    %6288 = vadd.xlane.f32.xlu0 %v6280
    %v6289 = vpop.xlane.xlu0 %6288
    %6290 = vadd.xlane.f32.xlu0 %v6281
    %v6291 = vpop.xlane.xlu0 %6290
    %6292 = vadd.xlane.f32.xlu0 %v6282
    %v6293 = vpop.xlane.xlu0 %6292
    %6294 = vadd.xlane.f32.xlu0 %v6283
    %v6295 = vpop.xlane.xlu0 %6294
    %6296 = vadd.xlane.f32.xlu0 %v6284
    %v6297 = vpop.xlane.xlu0 %6296
    %6298 = vadd.xlane.f32.xlu0 %v6285
    %v6299 = vpop.xlane.xlu0 %6298
    %6300 = vadd.xlane.f32.xlu0 %v6286
    %v6301 = vpop.xlane.xlu0 %6300
    %6302 = vadd.xlane.f32.xlu0 %v6287
    %v6303 = vpop.xlane.xlu0 %6302
    %v6312 = vlaneseq
    %v6313 = vshrl.u32 %v6312, 7
    %v6314 = vsub.s32 %v1010, %v6313
    %v6315 = vrot.slane %v6289, %v6314
    %v6316 = vlaneseq
    %v6317 = vshrl.u32 %v6316, 7
    %v6318 = vsub.s32 %v1015, %v6317
    %v6319 = vrot.slane %v6291, %v6318
    %v6320 = vsel %vm1020, %v6319, %v6315
    %v6321 = vlaneseq
    %v6322 = vshrl.u32 %v6321, 7
    %v6323 = vsub.s32 %v1010, %v6322
    %v6324 = vrot.slane %v6293, %v6323
    %v6325 = vlaneseq
    %v6326 = vshrl.u32 %v6325, 7
    %v6327 = vsub.s32 %v1015, %v6326
    %v6328 = vrot.slane %v6295, %v6327
    %v6329 = vsel %vm1020, %v6328, %v6324
    %v6330 = vlaneseq
    %v6331 = vshrl.u32 %v6330, 7
    %v6332 = vsub.s32 %v1010, %v6331
    %v6333 = vrot.slane %v6297, %v6332
    %v6334 = vlaneseq
    %v6335 = vshrl.u32 %v6334, 7
    %v6336 = vsub.s32 %v1015, %v6335
    %v6337 = vrot.slane %v6299, %v6336
    %v6338 = vsel %vm1020, %v6337, %v6333
    %v6339 = vlaneseq
    %v6340 = vshrl.u32 %v6339, 7
    %v6341 = vsub.s32 %v1010, %v6340
    %v6342 = vrot.slane %v6301, %v6341
    %v6343 = vlaneseq
    %v6344 = vshrl.u32 %v6343, 7
    %v6345 = vsub.s32 %v1015, %v6344
    %v6346 = vrot.slane %v6303, %v6345
    %v6347 = vsel %vm1020, %v6346, %v6342
    %v6348 = vsel %vm1049, %v6329, %v6320
    %v6349 = vsel %vm1051, %v6338, %v6348
    %v6350 = vsel %vm1053, %v6347, %v6349
    %v6352 = vsel %vm1056, %v6350, -inf
    %6353 = vmax.xlane.f32.xlu0 %v6352
    %v6354 = vpop.xlane.xlu0 %6353
    %v6356 = vlaneseq
    %v6357 = vshrl.u32 %v6356, 7
    %v6358 = vsub.s32 0, %v6357
    %v6359 = vrot.slane %v6354, %v6358
    %v6360 = vlaneseq
    %v6361 = vshrl.u32 %v6360, 7
    %v6362 = vsub.s32 1, %v6361
    %v6363 = vrot.slane %v6354, %v6362
    %v6364 = vlaneseq
    %v6365 = vshrl.u32 %v6364, 7
    %v6366 = vsub.s32 2, %v6365
    %v6367 = vrot.slane %v6354, %v6366
    %v6368 = vlaneseq
    %v6369 = vshrl.u32 %v6368, 7
    %v6370 = vsub.s32 3, %v6369
    %v6371 = vrot.slane %v6354, %v6370
    %v6376 = vsub.f32 %v6289, %v6359
    %v6377 = vsub.f32 %v6291, %v6359
    %v6378 = vsub.f32 %v6293, %v6363
    %v6379 = vsub.f32 %v6295, %v6363
    %v6380 = vsub.f32 %v6297, %v6367
    %v6381 = vsub.f32 %v6299, %v6367
    %v6382 = vsub.f32 %v6301, %v6371
    %v6383 = vsub.f32 %v6303, %v6371
    %v6384 = vmul.f32 %v6376, 1.442695
    %v6385 = vpow.pop %v6384
    %v6386 = vmul.f32 %v6377, 1.442695
    %v6387 = vpow.pop %v6386
    %v6388 = vmul.f32 %v6378, 1.442695
    %v6389 = vpow.pop %v6388
    %v6390 = vmul.f32 %v6379, 1.442695
    %v6391 = vpow.pop %v6390
    %v6392 = vmul.f32 %v6380, 1.442695
    %v6393 = vpow.pop %v6392
    %v6394 = vmul.f32 %v6381, 1.442695
    %v6395 = vpow.pop %v6394
    %v6396 = vmul.f32 %v6382, 1.442695
    %v6397 = vpow.pop %v6396
    %v6398 = vmul.f32 %v6383, 1.442695
    %v6399 = vpow.pop %v6398
    %6408 = vset.pattern.permute.xlu0 0
    %6409 = vperm.xlu0 %6408, %v6385
    %v6410 = vpop.permute.xlu0 %6409
    %6411 = vset.pattern.permute.xlu0 0
    %6412 = vperm.xlu0 %6411, %v6387
    %v6413 = vpop.permute.xlu0 %6412
    %6414 = vset.pattern.permute.xlu0 0
    %6415 = vperm.xlu0 %6414, %v6389
    %v6416 = vpop.permute.xlu0 %6415
    %6417 = vset.pattern.permute.xlu0 0
    %6418 = vperm.xlu0 %6417, %v6391
    %v6419 = vpop.permute.xlu0 %6418
    %6420 = vset.pattern.permute.xlu0 0
    %6421 = vperm.xlu0 %6420, %v6393
    %v6422 = vpop.permute.xlu0 %6421
    %6423 = vset.pattern.permute.xlu0 0
    %6424 = vperm.xlu0 %6423, %v6395
    %v6425 = vpop.permute.xlu0 %6424
    %6426 = vset.pattern.permute.xlu0 0
    %6427 = vperm.xlu0 %6426, %v6397
    %v6428 = vpop.permute.xlu0 %6427
    %6429 = vset.pattern.permute.xlu0 0
    %6430 = vperm.xlu0 %6429, %v6399
    %v6431 = vpop.permute.xlu0 %6430
    %v6432 = vlaneseq
    %v6433 = vshrl.u32 %v6432, 7
    %v6434 = vsub.s32 %v1010, %v6433
    %v6435 = vrot.slane %v6410, %v6434
    %v6436 = vlaneseq
    %v6437 = vshrl.u32 %v6436, 7
    %v6438 = vsub.s32 %v1015, %v6437
    %v6439 = vrot.slane %v6413, %v6438
    %v6440 = vsel %vm1020, %v6439, %v6435
    %v6441 = vlaneseq
    %v6442 = vshrl.u32 %v6441, 7
    %v6443 = vsub.s32 %v1010, %v6442
    %v6444 = vrot.slane %v6416, %v6443
    %v6445 = vlaneseq
    %v6446 = vshrl.u32 %v6445, 7
    %v6447 = vsub.s32 %v1015, %v6446
    %v6448 = vrot.slane %v6419, %v6447
    %v6449 = vsel %vm1020, %v6448, %v6444
    %v6450 = vlaneseq
    %v6451 = vshrl.u32 %v6450, 7
    %v6452 = vsub.s32 %v1010, %v6451
    %v6453 = vrot.slane %v6422, %v6452
    %v6454 = vlaneseq
    %v6455 = vshrl.u32 %v6454, 7
    %v6456 = vsub.s32 %v1015, %v6455
    %v6457 = vrot.slane %v6425, %v6456
    %v6458 = vsel %vm1020, %v6457, %v6453
    %v6459 = vlaneseq
    %v6460 = vshrl.u32 %v6459, 7
    %v6461 = vsub.s32 %v1010, %v6460
    %v6462 = vrot.slane %v6428, %v6461
    %v6463 = vlaneseq
    %v6464 = vshrl.u32 %v6463, 7
    %v6465 = vsub.s32 %v1015, %v6464
    %v6466 = vrot.slane %v6431, %v6465
    %v6467 = vsel %vm1020, %v6466, %v6462
    %v6468 = vsel %vm1049, %v6449, %v6440
    %v6469 = vsel %vm1051, %v6458, %v6468
    %v6470 = vsel %vm1053, %v6467, %v6469
    %v6472 = vsel %vm1056, %v6470, 0.0
    %6473 = vadd.xlane.f32.xlu0 %v6472
    %v6474 = vpop.xlane.xlu0 %6473
    %v6475 = vrcp.pop %v6474
    %v6477 = vlaneseq
    %v6478 = vshrl.u32 %v6477, 7
    %v6479 = vsub.s32 0, %v6478
    %v6480 = vrot.slane %v6475, %v6479
    %v6481 = vlaneseq
    %v6482 = vshrl.u32 %v6481, 7
    %v6483 = vsub.s32 1, %v6482
    %v6484 = vrot.slane %v6475, %v6483
    %v6485 = vlaneseq
    %v6486 = vshrl.u32 %v6485, 7
    %v6487 = vsub.s32 2, %v6486
    %v6488 = vrot.slane %v6475, %v6487
    %v6489 = vlaneseq
    %v6490 = vshrl.u32 %v6489, 7
    %v6491 = vsub.s32 3, %v6490
    %v6492 = vrot.slane %v6475, %v6491
    %v6497 = vmul.f32 %v6385, %v6480
    %v6498 = vmul.f32 %v6387, %v6480
    %v6499 = vmul.f32 %v6389, %v6484
    %v6500 = vmul.f32 %v6391, %v6484
    %v6501 = vmul.f32 %v6393, %v6488
    %v6502 = vmul.f32 %v6395, %v6488
    %v6503 = vmul.f32 %v6397, %v6492
    %v6504 = vmul.f32 %v6399, %v6492
    %6506 = vset.pattern.permute.xlu0 0
    %6507 = vperm.xlu0 %6506, %v6497
    %v6508 = vpop.permute.xlu0 %6507
    %6511 = vset.pattern.permute.xlu0 0
    %6512 = vperm.xlu0 %6511, %v6498
    %v6513 = vpop.permute.xlu0 %6512
    %6516 = vset.pattern.permute.xlu0 0
    %6517 = vperm.xlu0 %6516, %v6499
    %v6518 = vpop.permute.xlu0 %6517
    %6521 = vset.pattern.permute.xlu0 0
    %6522 = vperm.xlu0 %6521, %v6500
    %v6523 = vpop.permute.xlu0 %6522
    %6526 = vset.pattern.permute.xlu0 0
    %6527 = vperm.xlu0 %6526, %v6501
    %v6528 = vpop.permute.xlu0 %6527
    %6531 = vset.pattern.permute.xlu0 0
    %6532 = vperm.xlu0 %6531, %v6502
    %v6533 = vpop.permute.xlu0 %6532
    %6536 = vset.pattern.permute.xlu0 0
    %6537 = vperm.xlu0 %6536, %v6503
    %v6538 = vpop.permute.xlu0 %6537
    %6541 = vset.pattern.permute.xlu0 0
    %6542 = vperm.xlu0 %6541, %v6504
    %v6543 = vpop.permute.xlu0 %6542
    %v6545 = vmul.f32 %v6508, %v48
    %v6546 = vmul.f32 %v6513, %v49
    %v6547 = vmul.f32 %v6518, %v50
    %v6548 = vmul.f32 %v6523, %v51
    %v6549 = vmul.f32 %v6528, %v52
    %v6550 = vmul.f32 %v6533, %v53
    %v6551 = vmul.f32 %v6538, %v54
    %v6552 = vmul.f32 %v6543, %v55
    %v6553 = vadd.f32 %v6545, %v6546
    %v6554 = vrot.slane %v6553, 4
    %v6555 = vadd.f32 %v6553, %v6554
    %v6556 = vrot.slane %v6555, 2
    %v6557 = vadd.f32 %v6555, %v6556
    %v6558 = vrot.slane %v6557, 1
    %v6559 = vadd.f32 %v6557, %v6558
    %v6560 = vadd.f32 %v6547, %v6548
    %v6561 = vrot.slane %v6560, 4
    %v6562 = vadd.f32 %v6560, %v6561
    %v6563 = vrot.slane %v6562, 2
    %v6564 = vadd.f32 %v6562, %v6563
    %v6565 = vrot.slane %v6564, 1
    %v6566 = vadd.f32 %v6564, %v6565
    %v6567 = vadd.f32 %v6549, %v6550
    %v6568 = vrot.slane %v6567, 4
    %v6569 = vadd.f32 %v6567, %v6568
    %v6570 = vrot.slane %v6569, 2
    %v6571 = vadd.f32 %v6569, %v6570
    %v6572 = vrot.slane %v6571, 1
    %v6573 = vadd.f32 %v6571, %v6572
    %v6574 = vadd.f32 %v6551, %v6552
    %v6575 = vrot.slane %v6574, 4
    %v6576 = vadd.f32 %v6574, %v6575
    %v6577 = vrot.slane %v6576, 2
    %v6578 = vadd.f32 %v6576, %v6577
    %v6579 = vrot.slane %v6578, 1
    %v6580 = vadd.f32 %v6578, %v6579
    %6581 = vmatprep.subr.mxu0 0.0
    %6582 = vmatpush1.msra.mxu0 %v231
    %6583 = vmatprep.subr.mxu0 0.0
    %6584 = vmatpush1.msra.mxu0 %v230
    %6585 = vmatprep.subr.mxu0 0.0
    %6586 = vmatpush1.msra.mxu0 %v229
    %6587 = vmatprep.subr.mxu0 0.0
    %6588 = vmatpush1.msra.mxu0 %v228
    %6589 = vmatprep.subr.mxu0 0.0
    %6590 = vmatpush1.msra.mxu0 %v227
    %6591 = vmatprep.subr.mxu0 0.0
    %6592 = vmatpush1.msra.mxu0 %v226
    %6593 = vmatprep.subr.mxu0 0.0
    %6594 = vmatpush1.msra.mxu0 %v225
    %6595 = vmatprep.subr.mxu0 0.0
    %6596 = vmatpush1.msra.mxu0 %v224
    %6597 = vmatprep.subr.mxu0 0.0
    %6598 = vmatpush1.msra.mxu0 %v223
    %6599 = vmatprep.subr.mxu0 0.0
    %6600 = vmatpush1.msra.mxu0 %v222
    %6601 = vmatprep.subr.mxu0 0.0
    %6602 = vmatpush1.msra.mxu0 %v221
    %6603 = vmatprep.subr.mxu0 0.0
    %6604 = vmatpush1.msra.mxu0 %v220
    %6605 = vmatprep.subr.mxu0 0.0
    %6606 = vmatpush1.msra.mxu0 %v219
    %6607 = vmatprep.subr.mxu0 0.0
    %6608 = vmatpush1.msra.mxu0 %v218
    %6609 = vmatprep.subr.mxu0 0.0
    %6610 = vmatpush1.msra.mxu0 %v217
    %6611 = vmatprep.subr.mxu0 0.0
    %6612 = vmatpush1.msra.mxu0 %v216
    %6613 = vmatprep.subr.mxu0 0.0
    %6614 = vmatpush2.msra.mxu0 0.0
    %6615 = vmatprep.subr.mxu0 0.0
    %6616 = vmatpush2.msra.mxu0 0.0
    %6617 = vmatprep.subr.mxu0 0.0
    %6618 = vmatpush2.msra.mxu0 0.0
    %6619 = vmatprep.subr.mxu0 0.0
    %6620 = vmatpush2.msra.mxu0 0.0
    %6621 = vmatprep.subr.mxu0 0.0
    %6622 = vmatpush2.msra.mxu0 0.0
    %6623 = vmatprep.subr.mxu0 0.0
    %6624 = vmatpush2.msra.mxu0 0.0
    %6625 = vmatprep.subr.mxu0 0.0
    %6626 = vmatpush2.msra.mxu0 0.0
    %6627 = vmatprep.subr.mxu0 0.0
    %6628 = vmatpush2.msra.mxu0 0.0
    %6629 = vmatprep.subr.mxu0 0.0
    %6630 = vmatpush2.msra.mxu0 0.0
    %6631 = vmatprep.subr.mxu0 0.0
    %6632 = vmatpush2.msra.mxu0 0.0
    %6633 = vmatprep.subr.mxu0 0.0
    %6634 = vmatpush2.msra.mxu0 0.0
    %6635 = vmatprep.subr.mxu0 0.0
    %6636 = vmatpush2.msra.mxu0 0.0
    %6637 = vmatprep.subr.mxu0 0.0
    %6638 = vmatpush2.msra.mxu0 0.0
    %6639 = vmatprep.subr.mxu0 0.0
    %6640 = vmatpush2.msra.mxu0 0.0
    %6641 = vmatprep.subr.mxu0 0.0
    %6642 = vmatpush2.msra.mxu0 0.0
    %6643 = vmatprep.subr.mxu0 0.0
    %6644 = vmatpush2.msra.mxu0 0.0
    %6645 = vmatprep.mubr.f32.mxu0 0.0
    %6646 = vmatmul.mubr.f32.gmra.mxu0 %v6163
    %v6647 = vpop.f32.mrf.mxu0
    %v6648 = vadd.f32 0.0, %v6647
    %v6649 = vpop.f32.mrf.mxu0
    %6650 = vdwg.mxu0
    %v6655 = vsel %vm1049, %v6566, %v6559
    %v6656 = vsel %vm1051, %v6573, %v6655
    %v6657 = vsel %vm1053, %v6580, %v6656
    %6659 = vmatprep.subr.mxu0 0.0
    %6660 = vmatpush1.msra.mxu0 %v215
    %6661 = vmatprep.subr.mxu0 0.0
    %6662 = vmatpush1.msra.mxu0 %v214
    %6663 = vmatprep.subr.mxu0 0.0
    %6664 = vmatpush1.msra.mxu0 %v213
    %6665 = vmatprep.subr.mxu0 0.0
    %6666 = vmatpush1.msra.mxu0 %v212
    %6667 = vmatprep.subr.mxu0 0.0
    %6668 = vmatpush1.msra.mxu0 %v211
    %6669 = vmatprep.subr.mxu0 0.0
    %6670 = vmatpush1.msra.mxu0 %v210
    %6671 = vmatprep.subr.mxu0 0.0
    %6672 = vmatpush1.msra.mxu0 %v209
    %6673 = vmatprep.subr.mxu0 0.0
    %6674 = vmatpush1.msra.mxu0 %v208
    %6675 = vmatprep.subr.mxu0 0.0
    %6676 = vmatpush1.msra.mxu0 %v207
    %6677 = vmatprep.subr.mxu0 0.0
    %6678 = vmatpush1.msra.mxu0 %v206
    %6679 = vmatprep.subr.mxu0 0.0
    %6680 = vmatpush1.msra.mxu0 %v205
    %6681 = vmatprep.subr.mxu0 0.0
    %6682 = vmatpush1.msra.mxu0 %v204
    %6683 = vmatprep.subr.mxu0 0.0
    %6684 = vmatpush1.msra.mxu0 %v203
    %6685 = vmatprep.subr.mxu0 0.0
    %6686 = vmatpush1.msra.mxu0 %v202
    %6687 = vmatprep.subr.mxu0 0.0
    %6688 = vmatpush1.msra.mxu0 %v201
    %6689 = vmatprep.subr.mxu0 0.0
    %6690 = vmatpush1.msra.mxu0 %v200
    %6691 = vmatprep.subr.mxu0 0.0
    %6692 = vmatpush2.msra.mxu0 0.0
    %6693 = vmatprep.subr.mxu0 0.0
    %6694 = vmatpush2.msra.mxu0 0.0
    %6695 = vmatprep.subr.mxu0 0.0
    %6696 = vmatpush2.msra.mxu0 0.0
    %6697 = vmatprep.subr.mxu0 0.0
    %6698 = vmatpush2.msra.mxu0 0.0
    %6699 = vmatprep.subr.mxu0 0.0
    %6700 = vmatpush2.msra.mxu0 0.0
    %6701 = vmatprep.subr.mxu0 0.0
    %6702 = vmatpush2.msra.mxu0 0.0
    %6703 = vmatprep.subr.mxu0 0.0
    %6704 = vmatpush2.msra.mxu0 0.0
    %6705 = vmatprep.subr.mxu0 0.0
    %6706 = vmatpush2.msra.mxu0 0.0
    %6707 = vmatprep.subr.mxu0 0.0
    %6708 = vmatpush2.msra.mxu0 0.0
    %6709 = vmatprep.subr.mxu0 0.0
    %6710 = vmatpush2.msra.mxu0 0.0
    %6711 = vmatprep.subr.mxu0 0.0
    %6712 = vmatpush2.msra.mxu0 0.0
    %6713 = vmatprep.subr.mxu0 0.0
    %6714 = vmatpush2.msra.mxu0 0.0
    %6715 = vmatprep.subr.mxu0 0.0
    %6716 = vmatpush2.msra.mxu0 0.0
    %6717 = vmatprep.subr.mxu0 0.0
    %6718 = vmatpush2.msra.mxu0 0.0
    %6719 = vmatprep.subr.mxu0 0.0
    %6720 = vmatpush2.msra.mxu0 0.0
    %6721 = vmatprep.subr.mxu0 0.0
    %6722 = vmatpush2.msra.mxu0 0.0
    %6723 = vmatprep.mubr.f32.mxu0 0.0
    %6724 = vmatmul.mubr.f32.gmra.mxu0 %v6657
    %v6725 = vpop.f32.mrf.mxu0
    %v6726 = vadd.f32 %v6648, %v6725
    %v6727 = vpop.f32.mrf.mxu0
    %6728 = vdwg.mxu0
    %v6729 = vtanh.pop %v6726
    %v6730 = vlaneseq
    %v6731 = vshrl.u32 %v6730, 7
    %v6732 = vsub.s32 %v1010, %v6731
    %v6733 = vrot.slane %v6508, %v6732
    %v6734 = vlaneseq
    %v6735 = vshrl.u32 %v6734, 7
    %v6736 = vsub.s32 %v1015, %v6735
    %v6737 = vrot.slane %v6513, %v6736
    %v6738 = vsel %vm1020, %v6737, %v6733
    %v6739 = vlaneseq
    %v6740 = vshrl.u32 %v6739, 7
    %v6741 = vsub.s32 %v1010, %v6740
    %v6742 = vrot.slane %v6518, %v6741
    %v6743 = vlaneseq
    %v6744 = vshrl.u32 %v6743, 7
    %v6745 = vsub.s32 %v1015, %v6744
    %v6746 = vrot.slane %v6523, %v6745
    %v6747 = vsel %vm1020, %v6746, %v6742
    %v6748 = vlaneseq
    %v6749 = vshrl.u32 %v6748, 7
    %v6750 = vsub.s32 %v1010, %v6749
    %v6751 = vrot.slane %v6528, %v6750
    %v6752 = vlaneseq
    %v6753 = vshrl.u32 %v6752, 7
    %v6754 = vsub.s32 %v1015, %v6753
    %v6755 = vrot.slane %v6533, %v6754
    %v6756 = vsel %vm1020, %v6755, %v6751
    %v6757 = vlaneseq
    %v6758 = vshrl.u32 %v6757, 7
    %v6759 = vsub.s32 %v1010, %v6758
    %v6760 = vrot.slane %v6538, %v6759
    %v6761 = vlaneseq
    %v6762 = vshrl.u32 %v6761, 7
    %v6763 = vsub.s32 %v1015, %v6762
    %v6764 = vrot.slane %v6543, %v6763
    %v6765 = vsel %vm1020, %v6764, %v6760
    %6770 = vst.msk [vmem:[#allocation4 + $0x5] sm:$0x1] %vm1475, %v6738
    %6771 = vst.msk [vmem:[#allocation4 + $0xd] sm:$0x1] %vm1475, %v6747
    %6772 = vst.msk [vmem:[#allocation4 + $0x15] sm:$0x1] %vm1475, %v6756
    %6773 = vst.msk [vmem:[#allocation4 + $0x1d] sm:$0x1] %vm1475, %v6765
    %6774 = vmatprep.subr.mxu0 %v263
    %6775 = vmatpush1.msra.mxu0 %v262
    %6776 = vmatprep.subr.mxu0 %v261
    %6777 = vmatpush1.msra.mxu0 %v260
    %6778 = vmatprep.subr.mxu0 %v259
    %6779 = vmatpush1.msra.mxu0 %v258
    %6780 = vmatprep.subr.mxu0 %v257
    %6781 = vmatpush1.msra.mxu0 %v256
    %6782 = vmatprep.subr.mxu0 %v255
    %6783 = vmatpush1.msra.mxu0 %v254
    %6784 = vmatprep.subr.mxu0 %v253
    %6785 = vmatpush1.msra.mxu0 %v252
    %6786 = vmatprep.subr.mxu0 %v251
    %6787 = vmatpush1.msra.mxu0 %v250
    %6788 = vmatprep.subr.mxu0 %v249
    %6789 = vmatpush1.msra.mxu0 %v248
    %6790 = vmatprep.subr.mxu0 %v247
    %6791 = vmatpush1.msra.mxu0 %v246
    %6792 = vmatprep.subr.mxu0 %v245
    %6793 = vmatpush1.msra.mxu0 %v244
    %6794 = vmatprep.subr.mxu0 %v243
    %6795 = vmatpush1.msra.mxu0 %v242
    %6796 = vmatprep.subr.mxu0 %v241
    %6797 = vmatpush1.msra.mxu0 %v240
    %6798 = vmatprep.subr.mxu0 %v239
    %6799 = vmatpush1.msra.mxu0 %v238
    %6800 = vmatprep.subr.mxu0 %v237
    %6801 = vmatpush1.msra.mxu0 %v236
    %6802 = vmatprep.subr.mxu0 %v235
    %6803 = vmatpush1.msra.mxu0 %v234
    %6804 = vmatprep.subr.mxu0 %v233
    %6805 = vmatpush1.msra.mxu0 %v232
    %6806 = vmatprep.subr.mxu0 0.0
    %6807 = vmatpush2.msra.mxu0 0.0
    %6808 = vmatprep.subr.mxu0 0.0
    %6809 = vmatpush2.msra.mxu0 0.0
    %6810 = vmatprep.subr.mxu0 0.0
    %6811 = vmatpush2.msra.mxu0 0.0
    %6812 = vmatprep.subr.mxu0 0.0
    %6813 = vmatpush2.msra.mxu0 0.0
    %6814 = vmatprep.subr.mxu0 0.0
    %6815 = vmatpush2.msra.mxu0 0.0
    %6816 = vmatprep.subr.mxu0 0.0
    %6817 = vmatpush2.msra.mxu0 0.0
    %6818 = vmatprep.subr.mxu0 0.0
    %6819 = vmatpush2.msra.mxu0 0.0
    %6820 = vmatprep.subr.mxu0 0.0
    %6821 = vmatpush2.msra.mxu0 0.0
    %6822 = vmatprep.subr.mxu0 0.0
    %6823 = vmatpush2.msra.mxu0 0.0
    %6824 = vmatprep.subr.mxu0 0.0
    %6825 = vmatpush2.msra.mxu0 0.0
    %6826 = vmatprep.subr.mxu0 0.0
    %6827 = vmatpush2.msra.mxu0 0.0
    %6828 = vmatprep.subr.mxu0 0.0
    %6829 = vmatpush2.msra.mxu0 0.0
    %6830 = vmatprep.subr.mxu0 0.0
    %6831 = vmatpush2.msra.mxu0 0.0
    %6832 = vmatprep.subr.mxu0 0.0
    %6833 = vmatpush2.msra.mxu0 0.0
    %6834 = vmatprep.subr.mxu0 0.0
    %6835 = vmatpush2.msra.mxu0 0.0
    %6836 = vmatprep.subr.mxu0 0.0
    %6837 = vmatpush2.msra.mxu0 0.0
    %6838 = vmatprep.mubr.f32.mxu0 0.0
    %6839 = vmatmul.mubr.f32.gmra.mxu0 %v6729
    %v6840 = vpop.f32.mrf.mxu0
    %v6841 = vadd.f32 %v269, %v6840
    %v6842 = vpop.f32.mrf.mxu0
    %v6843 = vadd.f32 %v273, %v6842
    %6844 = vdwg.mxu0
    %v6847 = vcombine.low %v6841, %v6843
    %v6849 = vunpack.c.l.s4 1966171168
    %v6850 = vunpack.c.0.s8 %v6849
    %v6851 = vlaneseq
    %v6852 = vshrl.u32 %v6851, 7
    %v6853 = vsub.s32 %v6850, %v6852
    %v6854 = vrot.slane %v6847, %v6853
    %v6855 = vcombine.high %v6854, %v6854
    %v6857 = vunpack.c.l.s4 1966171168
    %v6858 = vunpack.c.0.s8 %v6857
    %v6859 = vlaneseq
    %v6860 = vshrl.u32 %v6859, 7
    %v6861 = vsub.s32 %v6858, %v6860
    %v6862 = vrot.slane %v6854, %v6861
    %v6864 = vunpack.c.l.s4 1966171168
    %v6865 = vunpack.c.0.s8 %v6864
    %v6866 = vlaneseq
    %v6867 = vshrl.u32 %v6866, 7
    %v6868 = vsub.s32 %v6865, %v6867
    %v6869 = vrot.slane %v6855, %v6868
    %v6870 = vcombine.high %v6862, %v6862
    %v6871 = vcombine.high %v6869, %v6869
    %s6876 = scalar_lea.vmem [#allocation2], 5
    %6877 = vst.msk [vmem:[%s6876] ss:$8 sm:$0x3] %vm1585, %v6862
    %6878 = vst.msk [vmem:[%s6876] ss:$8 sm:$0x0] %vm1585, %v6862
    %s6879 = scalar_lea.vmem [#allocation2], 21
    %6880 = vst.msk [vmem:[%s6879] ss:$8 sm:$0x3] %vm1585, %v6869
    %6881 = vst.msk [vmem:[%s6879] ss:$8 sm:$0x0] %vm1585, %v6869
    %s6882 = scalar_lea.vmem [#allocation2], 37
    %6883 = vst.msk [vmem:[%s6882] ss:$8 sm:$0x3] %vm1585, %v6870
    %6884 = vst.msk [vmem:[%s6882] ss:$8 sm:$0x0] %vm1585, %v6870
    %s6885 = scalar_lea.vmem [#allocation2], 53
    %6886 = vst.msk [vmem:[%s6885] ss:$8 sm:$0x3] %vm1585, %v6871
    %6887 = vst.msk [vmem:[%s6885] ss:$8 sm:$0x0] %vm1585, %v6871
    %6888 = vmatprep.subr.mxu0 %v117
    %6889 = vmatpush1.msra.mxu0 %v116
    %6890 = vmatprep.subr.mxu0 %v113
    %6891 = vmatpush1.msra.mxu0 %v112
    %6892 = vmatprep.subr.mxu0 %v109
    %6893 = vmatpush1.msra.mxu0 %v108
    %6894 = vmatprep.subr.mxu0 %v105
    %6895 = vmatpush1.msra.mxu0 %v104
    %6896 = vmatprep.subr.mxu0 %v101
    %6897 = vmatpush1.msra.mxu0 %v100
    %6898 = vmatprep.subr.mxu0 %v97
    %6899 = vmatpush1.msra.mxu0 %v96
    %6900 = vmatprep.subr.mxu0 %v93
    %6901 = vmatpush1.msra.mxu0 %v92
    %6902 = vmatprep.subr.mxu0 %v89
    %6903 = vmatpush1.msra.mxu0 %v88
    %6904 = vmatprep.subr.mxu0 %v85
    %6905 = vmatpush1.msra.mxu0 %v84
    %6906 = vmatprep.subr.mxu0 %v81
    %6907 = vmatpush1.msra.mxu0 %v80
    %6908 = vmatprep.subr.mxu0 %v77
    %6909 = vmatpush1.msra.mxu0 %v76
    %6910 = vmatprep.subr.mxu0 %v73
    %6911 = vmatpush1.msra.mxu0 %v72
    %6912 = vmatprep.subr.mxu0 %v69
    %6913 = vmatpush1.msra.mxu0 %v68
    %6914 = vmatprep.subr.mxu0 %v65
    %6915 = vmatpush1.msra.mxu0 %v64
    %6916 = vmatprep.subr.mxu0 %v61
    %6917 = vmatpush1.msra.mxu0 %v60
    %6918 = vmatprep.subr.mxu0 %v57
    %6919 = vmatpush1.msra.mxu0 %v56
    %6920 = vmatprep.subr.mxu0 0.0
    %6921 = vmatpush2.msra.mxu0 0.0
    %6922 = vmatprep.subr.mxu0 0.0
    %6923 = vmatpush2.msra.mxu0 0.0
    %6924 = vmatprep.subr.mxu0 0.0
    %6925 = vmatpush2.msra.mxu0 0.0
    %6926 = vmatprep.subr.mxu0 0.0
    %6927 = vmatpush2.msra.mxu0 0.0
    %6928 = vmatprep.subr.mxu0 0.0
    %6929 = vmatpush2.msra.mxu0 0.0
    %6930 = vmatprep.subr.mxu0 0.0
    %6931 = vmatpush2.msra.mxu0 0.0
    %6932 = vmatprep.subr.mxu0 0.0
    %6933 = vmatpush2.msra.mxu0 0.0
    %6934 = vmatprep.subr.mxu0 0.0
    %6935 = vmatpush2.msra.mxu0 0.0
    %6936 = vmatprep.subr.mxu0 0.0
    %6937 = vmatpush2.msra.mxu0 0.0
    %6938 = vmatprep.subr.mxu0 0.0
    %6939 = vmatpush2.msra.mxu0 0.0
    %6940 = vmatprep.subr.mxu0 0.0
    %6941 = vmatpush2.msra.mxu0 0.0
    %6942 = vmatprep.subr.mxu0 0.0
    %6943 = vmatpush2.msra.mxu0 0.0
    %6944 = vmatprep.subr.mxu0 0.0
    %6945 = vmatpush2.msra.mxu0 0.0
    %6946 = vmatprep.subr.mxu0 0.0
    %6947 = vmatpush2.msra.mxu0 0.0
    %6948 = vmatprep.subr.mxu0 0.0
    %6949 = vmatpush2.msra.mxu0 0.0
    %6950 = vmatprep.subr.mxu0 0.0
    %6951 = vmatpush2.msra.mxu0 0.0
    %6952 = vmatprep.mubr.f32.mxu0 0.0
    %6953 = vmatmul.mubr.f32.gmra.mxu0 %v6729
    %v6954 = vpop.f32.mrf.mxu0
    %v6955 = vadd.f32 0.0, %v6954
    %v6956 = vpop.f32.mrf.mxu0
    %v6957 = vadd.f32 0.0, %v6956
    %6958 = vdwg.mxu0
    %6959 = vmatprep.subr.mxu0 %v119
    %6960 = vmatpush1.msra.mxu0 %v118
    %6961 = vmatprep.subr.mxu0 %v115
    %6962 = vmatpush1.msra.mxu0 %v114
    %6963 = vmatprep.subr.mxu0 %v111
    %6964 = vmatpush1.msra.mxu0 %v110
    %6965 = vmatprep.subr.mxu0 %v107
    %6966 = vmatpush1.msra.mxu0 %v106
    %6967 = vmatprep.subr.mxu0 %v103
    %6968 = vmatpush1.msra.mxu0 %v102
    %6969 = vmatprep.subr.mxu0 %v99
    %6970 = vmatpush1.msra.mxu0 %v98
    %6971 = vmatprep.subr.mxu0 %v95
    %6972 = vmatpush1.msra.mxu0 %v94
    %6973 = vmatprep.subr.mxu0 %v91
    %6974 = vmatpush1.msra.mxu0 %v90
    %6975 = vmatprep.subr.mxu0 %v87
    %6976 = vmatpush1.msra.mxu0 %v86
    %6977 = vmatprep.subr.mxu0 %v83
    %6978 = vmatpush1.msra.mxu0 %v82
    %6979 = vmatprep.subr.mxu0 %v79
    %6980 = vmatpush1.msra.mxu0 %v78
    %6981 = vmatprep.subr.mxu0 %v75
    %6982 = vmatpush1.msra.mxu0 %v74
    %6983 = vmatprep.subr.mxu0 %v71
    %6984 = vmatpush1.msra.mxu0 %v70
    %6985 = vmatprep.subr.mxu0 %v67
    %6986 = vmatpush1.msra.mxu0 %v66
    %6987 = vmatprep.subr.mxu0 %v63
    %6988 = vmatpush1.msra.mxu0 %v62
    %6989 = vmatprep.subr.mxu0 %v59
    %6990 = vmatpush1.msra.mxu0 %v58
    %6991 = vmatprep.subr.mxu0 0.0
    %6992 = vmatpush2.msra.mxu0 0.0
    %6993 = vmatprep.subr.mxu0 0.0
    %6994 = vmatpush2.msra.mxu0 0.0
    %6995 = vmatprep.subr.mxu0 0.0
    %6996 = vmatpush2.msra.mxu0 0.0
    %6997 = vmatprep.subr.mxu0 0.0
    %6998 = vmatpush2.msra.mxu0 0.0
    %6999 = vmatprep.subr.mxu0 0.0
    %7000 = vmatpush2.msra.mxu0 0.0
    %7001 = vmatprep.subr.mxu0 0.0
    %7002 = vmatpush2.msra.mxu0 0.0
    %7003 = vmatprep.subr.mxu0 0.0
    %7004 = vmatpush2.msra.mxu0 0.0
    %7005 = vmatprep.subr.mxu0 0.0
    %7006 = vmatpush2.msra.mxu0 0.0
    %7007 = vmatprep.subr.mxu0 0.0
    %7008 = vmatpush2.msra.mxu0 0.0
    %7009 = vmatprep.subr.mxu0 0.0
    %7010 = vmatpush2.msra.mxu0 0.0
    %7011 = vmatprep.subr.mxu0 0.0
    %7012 = vmatpush2.msra.mxu0 0.0
    %7013 = vmatprep.subr.mxu0 0.0
    %7014 = vmatpush2.msra.mxu0 0.0
    %7015 = vmatprep.subr.mxu0 0.0
    %7016 = vmatpush2.msra.mxu0 0.0
    %7017 = vmatprep.subr.mxu0 0.0
    %7018 = vmatpush2.msra.mxu0 0.0
    %7019 = vmatprep.subr.mxu0 0.0
    %7020 = vmatpush2.msra.mxu0 0.0
    %7021 = vmatprep.subr.mxu0 0.0
    %7022 = vmatpush2.msra.mxu0 0.0
    %7023 = vmatprep.mubr.f32.mxu0 0.0
    %7024 = vmatmul.mubr.f32.gmra.mxu0 %v6729
    %v7025 = vpop.f32.mrf.mxu0
    %v7026 = vadd.f32 0.0, %v7025
    %v7027 = vpop.f32.mrf.mxu0
    %v7028 = vadd.f32 0.0, %v7027
    %7029 = vdwg.mxu0
    %v7030 = vadd.f32 %v451, %v6955
    %v7031 = vadd.f32 %v453, %v6957
    %v7032 = vadd.f32 %v540, %v7026
    %v7033 = vadd.f32 %v542, %v7028
    %7034 = vmatprep.subr.mxu0 %v181
    %7035 = vmatpush1.msra.mxu0 %v180
    %7036 = vmatprep.subr.mxu0 %v177
    %7037 = vmatpush1.msra.mxu0 %v176
    %7038 = vmatprep.subr.mxu0 %v173
    %7039 = vmatpush1.msra.mxu0 %v172
    %7040 = vmatprep.subr.mxu0 %v169
    %7041 = vmatpush1.msra.mxu0 %v168
    %7042 = vmatprep.subr.mxu0 %v165
    %7043 = vmatpush1.msra.mxu0 %v164
    %7044 = vmatprep.subr.mxu0 %v161
    %7045 = vmatpush1.msra.mxu0 %v160
    %7046 = vmatprep.subr.mxu0 %v157
    %7047 = vmatpush1.msra.mxu0 %v156
    %7048 = vmatprep.subr.mxu0 %v153
    %7049 = vmatpush1.msra.mxu0 %v152
    %7050 = vmatprep.subr.mxu0 %v149
    %7051 = vmatpush1.msra.mxu0 %v148
    %7052 = vmatprep.subr.mxu0 %v145
    %7053 = vmatpush1.msra.mxu0 %v144
    %7054 = vmatprep.subr.mxu0 %v141
    %7055 = vmatpush1.msra.mxu0 %v140
    %7056 = vmatprep.subr.mxu0 %v137
    %7057 = vmatpush1.msra.mxu0 %v136
    %7058 = vmatprep.subr.mxu0 %v133
    %7059 = vmatpush1.msra.mxu0 %v132
    %7060 = vmatprep.subr.mxu0 %v129
    %7061 = vmatpush1.msra.mxu0 %v128
    %7062 = vmatprep.subr.mxu0 %v125
    %7063 = vmatpush1.msra.mxu0 %v124
    %7064 = vmatprep.subr.mxu0 %v121
    %7065 = vmatpush1.msra.mxu0 %v120
    %7066 = vmatprep.subr.mxu0 0.0
    %7067 = vmatpush2.msra.mxu0 0.0
    %7068 = vmatprep.subr.mxu0 0.0
    %7069 = vmatpush2.msra.mxu0 0.0
    %7070 = vmatprep.subr.mxu0 0.0
    %7071 = vmatpush2.msra.mxu0 0.0
    %7072 = vmatprep.subr.mxu0 0.0
    %7073 = vmatpush2.msra.mxu0 0.0
    %7074 = vmatprep.subr.mxu0 0.0
    %7075 = vmatpush2.msra.mxu0 0.0
    %7076 = vmatprep.subr.mxu0 0.0
    %7077 = vmatpush2.msra.mxu0 0.0
    %7078 = vmatprep.subr.mxu0 0.0
    %7079 = vmatpush2.msra.mxu0 0.0
    %7080 = vmatprep.subr.mxu0 0.0
    %7081 = vmatpush2.msra.mxu0 0.0
    %7082 = vmatprep.subr.mxu0 0.0
    %7083 = vmatpush2.msra.mxu0 0.0
    %7084 = vmatprep.subr.mxu0 0.0
    %7085 = vmatpush2.msra.mxu0 0.0
    %7086 = vmatprep.subr.mxu0 0.0
    %7087 = vmatpush2.msra.mxu0 0.0
    %7088 = vmatprep.subr.mxu0 0.0
    %7089 = vmatpush2.msra.mxu0 0.0
    %7090 = vmatprep.subr.mxu0 0.0
    %7091 = vmatpush2.msra.mxu0 0.0
    %7092 = vmatprep.subr.mxu0 0.0
    %7093 = vmatpush2.msra.mxu0 0.0
    %7094 = vmatprep.subr.mxu0 0.0
    %7095 = vmatpush2.msra.mxu0 0.0
    %7096 = vmatprep.subr.mxu0 0.0
    %7097 = vmatpush2.msra.mxu0 0.0
    %7098 = vmatprep.mubr.f32.mxu0 0.0
    %7099 = vmatmul.mubr.f32.gmra.mxu0 %v6163
    %v7100 = vpop.f32.mrf.mxu0
    %v7101 = vadd.f32 0.0, %v7100
    %v7102 = vpop.f32.mrf.mxu0
    %v7103 = vadd.f32 0.0, %v7102
    %7104 = vdwg.mxu0
    %7105 = vmatprep.subr.mxu0 %v183
    %7106 = vmatpush1.msra.mxu0 %v182
    %7107 = vmatprep.subr.mxu0 %v179
    %7108 = vmatpush1.msra.mxu0 %v178
    %7109 = vmatprep.subr.mxu0 %v175
    %7110 = vmatpush1.msra.mxu0 %v174
    %7111 = vmatprep.subr.mxu0 %v171
    %7112 = vmatpush1.msra.mxu0 %v170
    %7113 = vmatprep.subr.mxu0 %v167
    %7114 = vmatpush1.msra.mxu0 %v166
    %7115 = vmatprep.subr.mxu0 %v163
    %7116 = vmatpush1.msra.mxu0 %v162
    %7117 = vmatprep.subr.mxu0 %v159
    %7118 = vmatpush1.msra.mxu0 %v158
    %7119 = vmatprep.subr.mxu0 %v155
    %7120 = vmatpush1.msra.mxu0 %v154
    %7121 = vmatprep.subr.mxu0 %v151
    %7122 = vmatpush1.msra.mxu0 %v150
    %7123 = vmatprep.subr.mxu0 %v147
    %7124 = vmatpush1.msra.mxu0 %v146
    %7125 = vmatprep.subr.mxu0 %v143
    %7126 = vmatpush1.msra.mxu0 %v142
    %7127 = vmatprep.subr.mxu0 %v139
    %7128 = vmatpush1.msra.mxu0 %v138
    %7129 = vmatprep.subr.mxu0 %v135
    %7130 = vmatpush1.msra.mxu0 %v134
    %7131 = vmatprep.subr.mxu0 %v131
    %7132 = vmatpush1.msra.mxu0 %v130
    %7133 = vmatprep.subr.mxu0 %v127
    %7134 = vmatpush1.msra.mxu0 %v126
    %7135 = vmatprep.subr.mxu0 %v123
    %7136 = vmatpush1.msra.mxu0 %v122
    %7137 = vmatprep.subr.mxu0 0.0
    %7138 = vmatpush2.msra.mxu0 0.0
    %7139 = vmatprep.subr.mxu0 0.0
    %7140 = vmatpush2.msra.mxu0 0.0
    %7141 = vmatprep.subr.mxu0 0.0
    %7142 = vmatpush2.msra.mxu0 0.0
    %7143 = vmatprep.subr.mxu0 0.0
    %7144 = vmatpush2.msra.mxu0 0.0
    %7145 = vmatprep.subr.mxu0 0.0
    %7146 = vmatpush2.msra.mxu0 0.0
    %7147 = vmatprep.subr.mxu0 0.0
    %7148 = vmatpush2.msra.mxu0 0.0
    %7149 = vmatprep.subr.mxu0 0.0
    %7150 = vmatpush2.msra.mxu0 0.0
    %7151 = vmatprep.subr.mxu0 0.0
    %7152 = vmatpush2.msra.mxu0 0.0
    %7153 = vmatprep.subr.mxu0 0.0
    %7154 = vmatpush2.msra.mxu0 0.0
    %7155 = vmatprep.subr.mxu0 0.0
    %7156 = vmatpush2.msra.mxu0 0.0
    %7157 = vmatprep.subr.mxu0 0.0
    %7158 = vmatpush2.msra.mxu0 0.0
    %7159 = vmatprep.subr.mxu0 0.0
    %7160 = vmatpush2.msra.mxu0 0.0
    %7161 = vmatprep.subr.mxu0 0.0
    %7162 = vmatpush2.msra.mxu0 0.0
    %7163 = vmatprep.subr.mxu0 0.0
    %7164 = vmatpush2.msra.mxu0 0.0
    %7165 = vmatprep.subr.mxu0 0.0
    %7166 = vmatpush2.msra.mxu0 0.0
    %7167 = vmatprep.subr.mxu0 0.0
    %7168 = vmatpush2.msra.mxu0 0.0
    %7169 = vmatprep.mubr.f32.mxu0 0.0
    %7170 = vmatmul.mubr.f32.gmra.mxu0 %v6163
    %v7171 = vpop.f32.mrf.mxu0
    %v7172 = vadd.f32 0.0, %v7171
    %v7173 = vpop.f32.mrf.mxu0
    %v7174 = vadd.f32 0.0, %v7173
    %7175 = vdwg.mxu0
    %v7176 = vadd.f32 %v7030, %v7101
    %v7177 = vadd.f32 %v7031, %v7103
    %v7178 = vadd.f32 %v7032, %v7172
    %v7179 = vadd.f32 %v7033, %v7174
    %v7180 = vxor.u32 %v7176, 2147483648
    %v7181 = vmul.f32 %v7180, 1.442695
    %v7182 = vpow.pop %v7181
    %v7183 = vadd.f32 %v7182, 1.0
    %v7184 = vrcp.pop %v7183
    %v7185 = vmul.f32 1.0, %v7184
    %v7186 = vxor.u32 %v7177, 2147483648
    %v7187 = vmul.f32 %v7186, 1.442695
    %v7188 = vpow.pop %v7187
    %v7189 = vadd.f32 %v7188, 1.0
    %v7190 = vrcp.pop %v7189
    %v7191 = vmul.f32 1.0, %v7190
    %v7192 = vtanh.pop %v7178
    %v7193 = vxor.u32 %v7179, 2147483648
    %v7194 = vmul.f32 %v7193, 1.442695
    %v7195 = vpow.pop %v7194
    %v7196 = vadd.f32 %v7195, 1.0
    %v7197 = vrcp.pop %v7196
    %v7198 = vmul.f32 1.0, %v7197
    %v7200 = vrot.slane %v6159, 4
    %v7202 = vmul.f32 %v7191, %v7200
    %v7203 = vmul.f32 %v7185, %v7192
    %v7204 = vadd.f32 %v7202, %v7203
    %v7205 = vtanh.pop %v7204
    %v7206 = vmul.f32 %v7198, %v7205
    %7207 = vmatprep.subr.mxu0 0.0
    %7208 = vmatpush1.msra.mxu0 %v199
    %7209 = vmatprep.subr.mxu0 0.0
    %7210 = vmatpush1.msra.mxu0 %v198
    %7211 = vmatprep.subr.mxu0 0.0
    %7212 = vmatpush1.msra.mxu0 %v197
    %7213 = vmatprep.subr.mxu0 0.0
    %7214 = vmatpush1.msra.mxu0 %v196
    %7215 = vmatprep.subr.mxu0 0.0
    %7216 = vmatpush1.msra.mxu0 %v195
    %7217 = vmatprep.subr.mxu0 0.0
    %7218 = vmatpush1.msra.mxu0 %v194
    %7219 = vmatprep.subr.mxu0 0.0
    %7220 = vmatpush1.msra.mxu0 %v193
    %7221 = vmatprep.subr.mxu0 0.0
    %7222 = vmatpush1.msra.mxu0 %v192
    %7223 = vmatprep.subr.mxu0 0.0
    %7224 = vmatpush1.msra.mxu0 %v191
    %7225 = vmatprep.subr.mxu0 0.0
    %7226 = vmatpush1.msra.mxu0 %v190
    %7227 = vmatprep.subr.mxu0 0.0
    %7228 = vmatpush1.msra.mxu0 %v189
    %7229 = vmatprep.subr.mxu0 0.0
    %7230 = vmatpush1.msra.mxu0 %v188
    %7231 = vmatprep.subr.mxu0 0.0
    %7232 = vmatpush1.msra.mxu0 %v187
    %7233 = vmatprep.subr.mxu0 0.0
    %7234 = vmatpush1.msra.mxu0 %v186
    %7235 = vmatprep.subr.mxu0 0.0
    %7236 = vmatpush1.msra.mxu0 %v185
    %7237 = vmatprep.subr.mxu0 0.0
    %7238 = vmatpush1.msra.mxu0 %v184
    %7239 = vmatprep.subr.mxu0 0.0
    %7240 = vmatpush2.msra.mxu0 0.0
    %7241 = vmatprep.subr.mxu0 0.0
    %7242 = vmatpush2.msra.mxu0 0.0
    %7243 = vmatprep.subr.mxu0 0.0
    %7244 = vmatpush2.msra.mxu0 0.0
    %7245 = vmatprep.subr.mxu0 0.0
    %7246 = vmatpush2.msra.mxu0 0.0
    %7247 = vmatprep.subr.mxu0 0.0
    %7248 = vmatpush2.msra.mxu0 0.0
    %7249 = vmatprep.subr.mxu0 0.0
    %7250 = vmatpush2.msra.mxu0 0.0
    %7251 = vmatprep.subr.mxu0 0.0
    %7252 = vmatpush2.msra.mxu0 0.0
    %7253 = vmatprep.subr.mxu0 0.0
    %7254 = vmatpush2.msra.mxu0 0.0
    %7255 = vmatprep.subr.mxu0 0.0
    %7256 = vmatpush2.msra.mxu0 0.0
    %7257 = vmatprep.subr.mxu0 0.0
    %7258 = vmatpush2.msra.mxu0 0.0
    %7259 = vmatprep.subr.mxu0 0.0
    %7260 = vmatpush2.msra.mxu0 0.0
    %7261 = vmatprep.subr.mxu0 0.0
    %7262 = vmatpush2.msra.mxu0 0.0
    %7263 = vmatprep.subr.mxu0 0.0
    %7264 = vmatpush2.msra.mxu0 0.0
    %7265 = vmatprep.subr.mxu0 0.0
    %7266 = vmatpush2.msra.mxu0 0.0
    %7267 = vmatprep.subr.mxu0 0.0
    %7268 = vmatpush2.msra.mxu0 0.0
    %7269 = vmatprep.subr.mxu0 0.0
    %7270 = vmatpush2.msra.mxu0 0.0
    %7271 = vmatprep.mubr.f32.mxu0 0.0
    %7272 = vmatmul.mubr.f32.gmra.mxu0 %v7206
    %v7273 = vpop.f32.mrf.mxu0
    %v7274 = vadd.f32 0.0, %v7273
    %v7275 = vpop.f32.mrf.mxu0
    %7276 = vdwg.mxu0
    %v7279 = vunpack.c.l.s4 1966171168
    %v7280 = vunpack.c.0.s8 %v7279
    %v7281 = vlaneseq
    %v7282 = vshrl.u32 %v7281, 7
    %v7283 = vsub.s32 %v7280, %v7282
    %v7284 = vrot.slane %v7274, %v7283
    %v7285 = vcombine.high %v7284, %v7284
    %v7287 = vunpack.c.l.s4 1966171168
    %v7288 = vunpack.c.0.s8 %v7287
    %v7289 = vlaneseq
    %v7290 = vshrl.u32 %v7289, 7
    %v7291 = vsub.s32 %v7288, %v7290
    %v7292 = vrot.slane %v7284, %v7291
    %v7294 = vunpack.c.l.s4 1966171168
    %v7295 = vunpack.c.0.s8 %v7294
    %v7296 = vlaneseq
    %v7297 = vshrl.u32 %v7296, 7
    %v7298 = vsub.s32 %v7295, %v7297
    %v7299 = vrot.slane %v7285, %v7298
    %v7300 = vcombine.high %v7292, %v7292
    %v7301 = vcombine.high %v7299, %v7299
    %v7302 = vlaneseq
    %v7303 = vshrl.u32 %v7302, 7
    %v7304 = vsub.s32 0, %v7303
    %v7305 = vrot.slane %v7292, %v7304
    %v7306 = vlaneseq
    %v7307 = vshrl.u32 %v7306, 7
    %v7308 = vsub.s32 0, %v7307
    %v7309 = vrot.slane %v7299, %v7308
    %v7310 = vlaneseq
    %v7311 = vshrl.u32 %v7310, 7
    %v7312 = vsub.s32 0, %v7311
    %v7313 = vrot.slane %v7300, %v7312
    %v7314 = vlaneseq
    %v7315 = vshrl.u32 %v7314, 7
    %v7316 = vsub.s32 0, %v7315
    %v7317 = vrot.slane %v7301, %v7316
    %v7322 = vmul.f32 %v48, %v7305
    %v7323 = vmul.f32 %v49, %v7305
    %v7324 = vmul.f32 %v50, %v7309
    %v7325 = vmul.f32 %v51, %v7309
    %v7326 = vmul.f32 %v52, %v7313
    %v7327 = vmul.f32 %v53, %v7313
    %v7328 = vmul.f32 %v54, %v7317
    %v7329 = vmul.f32 %v55, %v7317
    %7330 = vadd.xlane.f32.xlu0 %v7322
    %v7331 = vpop.xlane.xlu0 %7330
    %7332 = vadd.xlane.f32.xlu0 %v7323
    %v7333 = vpop.xlane.xlu0 %7332
    %7334 = vadd.xlane.f32.xlu0 %v7324
    %v7335 = vpop.xlane.xlu0 %7334
    %7336 = vadd.xlane.f32.xlu0 %v7325
    %v7337 = vpop.xlane.xlu0 %7336
    %7338 = vadd.xlane.f32.xlu0 %v7326
    %v7339 = vpop.xlane.xlu0 %7338
    %7340 = vadd.xlane.f32.xlu0 %v7327
    %v7341 = vpop.xlane.xlu0 %7340
    %7342 = vadd.xlane.f32.xlu0 %v7328
    %v7343 = vpop.xlane.xlu0 %7342
    %7344 = vadd.xlane.f32.xlu0 %v7329
    %v7345 = vpop.xlane.xlu0 %7344
    %v7354 = vlaneseq
    %v7355 = vshrl.u32 %v7354, 7
    %v7356 = vsub.s32 %v1010, %v7355
    %v7357 = vrot.slane %v7331, %v7356
    %v7358 = vlaneseq
    %v7359 = vshrl.u32 %v7358, 7
    %v7360 = vsub.s32 %v1015, %v7359
    %v7361 = vrot.slane %v7333, %v7360
    %v7362 = vsel %vm1020, %v7361, %v7357
    %v7363 = vlaneseq
    %v7364 = vshrl.u32 %v7363, 7
    %v7365 = vsub.s32 %v1010, %v7364
    %v7366 = vrot.slane %v7335, %v7365
    %v7367 = vlaneseq
    %v7368 = vshrl.u32 %v7367, 7
    %v7369 = vsub.s32 %v1015, %v7368
    %v7370 = vrot.slane %v7337, %v7369
    %v7371 = vsel %vm1020, %v7370, %v7366
    %v7372 = vlaneseq
    %v7373 = vshrl.u32 %v7372, 7
    %v7374 = vsub.s32 %v1010, %v7373
    %v7375 = vrot.slane %v7339, %v7374
    %v7376 = vlaneseq
    %v7377 = vshrl.u32 %v7376, 7
    %v7378 = vsub.s32 %v1015, %v7377
    %v7379 = vrot.slane %v7341, %v7378
    %v7380 = vsel %vm1020, %v7379, %v7375
    %v7381 = vlaneseq
    %v7382 = vshrl.u32 %v7381, 7
    %v7383 = vsub.s32 %v1010, %v7382
    %v7384 = vrot.slane %v7343, %v7383
    %v7385 = vlaneseq
    %v7386 = vshrl.u32 %v7385, 7
    %v7387 = vsub.s32 %v1015, %v7386
    %v7388 = vrot.slane %v7345, %v7387
    %v7389 = vsel %vm1020, %v7388, %v7384
    %v7390 = vsel %vm1049, %v7371, %v7362
    %v7391 = vsel %vm1051, %v7380, %v7390
    %v7392 = vsel %vm1053, %v7389, %v7391
    %v7394 = vsel %vm1056, %v7392, -inf
    %7395 = vmax.xlane.f32.xlu0 %v7394
    %v7396 = vpop.xlane.xlu0 %7395
    %v7398 = vlaneseq
    %v7399 = vshrl.u32 %v7398, 7
    %v7400 = vsub.s32 0, %v7399
    %v7401 = vrot.slane %v7396, %v7400
    %v7402 = vlaneseq
    %v7403 = vshrl.u32 %v7402, 7
    %v7404 = vsub.s32 1, %v7403
    %v7405 = vrot.slane %v7396, %v7404
    %v7406 = vlaneseq
    %v7407 = vshrl.u32 %v7406, 7
    %v7408 = vsub.s32 2, %v7407
    %v7409 = vrot.slane %v7396, %v7408
    %v7410 = vlaneseq
    %v7411 = vshrl.u32 %v7410, 7
    %v7412 = vsub.s32 3, %v7411
    %v7413 = vrot.slane %v7396, %v7412
    %v7418 = vsub.f32 %v7331, %v7401
    %v7419 = vsub.f32 %v7333, %v7401
    %v7420 = vsub.f32 %v7335, %v7405
    %v7421 = vsub.f32 %v7337, %v7405
    %v7422 = vsub.f32 %v7339, %v7409
    %v7423 = vsub.f32 %v7341, %v7409
    %v7424 = vsub.f32 %v7343, %v7413
    %v7425 = vsub.f32 %v7345, %v7413
    %v7426 = vmul.f32 %v7418, 1.442695
    %v7427 = vpow.pop %v7426
    %v7428 = vmul.f32 %v7419, 1.442695
    %v7429 = vpow.pop %v7428
    %v7430 = vmul.f32 %v7420, 1.442695
    %v7431 = vpow.pop %v7430
    %v7432 = vmul.f32 %v7421, 1.442695
    %v7433 = vpow.pop %v7432
    %v7434 = vmul.f32 %v7422, 1.442695
    %v7435 = vpow.pop %v7434
    %v7436 = vmul.f32 %v7423, 1.442695
    %v7437 = vpow.pop %v7436
    %v7438 = vmul.f32 %v7424, 1.442695
    %v7439 = vpow.pop %v7438
    %v7440 = vmul.f32 %v7425, 1.442695
    %v7441 = vpow.pop %v7440
    %7450 = vset.pattern.permute.xlu0 0
    %7451 = vperm.xlu0 %7450, %v7427
    %v7452 = vpop.permute.xlu0 %7451
    %7453 = vset.pattern.permute.xlu0 0
    %7454 = vperm.xlu0 %7453, %v7429
    %v7455 = vpop.permute.xlu0 %7454
    %7456 = vset.pattern.permute.xlu0 0
    %7457 = vperm.xlu0 %7456, %v7431
    %v7458 = vpop.permute.xlu0 %7457
    %7459 = vset.pattern.permute.xlu0 0
    %7460 = vperm.xlu0 %7459, %v7433
    %v7461 = vpop.permute.xlu0 %7460
    %7462 = vset.pattern.permute.xlu0 0
    %7463 = vperm.xlu0 %7462, %v7435
    %v7464 = vpop.permute.xlu0 %7463
    %7465 = vset.pattern.permute.xlu0 0
    %7466 = vperm.xlu0 %7465, %v7437
    %v7467 = vpop.permute.xlu0 %7466
    %7468 = vset.pattern.permute.xlu0 0
    %7469 = vperm.xlu0 %7468, %v7439
    %v7470 = vpop.permute.xlu0 %7469
    %7471 = vset.pattern.permute.xlu0 0
    %7472 = vperm.xlu0 %7471, %v7441
    %v7473 = vpop.permute.xlu0 %7472
    %v7474 = vlaneseq
    %v7475 = vshrl.u32 %v7474, 7
    %v7476 = vsub.s32 %v1010, %v7475
    %v7477 = vrot.slane %v7452, %v7476
    %v7478 = vlaneseq
    %v7479 = vshrl.u32 %v7478, 7
    %v7480 = vsub.s32 %v1015, %v7479
    %v7481 = vrot.slane %v7455, %v7480
    %v7482 = vsel %vm1020, %v7481, %v7477
    %v7483 = vlaneseq
    %v7484 = vshrl.u32 %v7483, 7
    %v7485 = vsub.s32 %v1010, %v7484
    %v7486 = vrot.slane %v7458, %v7485
    %v7487 = vlaneseq
    %v7488 = vshrl.u32 %v7487, 7
    %v7489 = vsub.s32 %v1015, %v7488
    %v7490 = vrot.slane %v7461, %v7489
    %v7491 = vsel %vm1020, %v7490, %v7486
    %v7492 = vlaneseq
    %v7493 = vshrl.u32 %v7492, 7
    %v7494 = vsub.s32 %v1010, %v7493
    %v7495 = vrot.slane %v7464, %v7494
    %v7496 = vlaneseq
    %v7497 = vshrl.u32 %v7496, 7
    %v7498 = vsub.s32 %v1015, %v7497
    %v7499 = vrot.slane %v7467, %v7498
    %v7500 = vsel %vm1020, %v7499, %v7495
    %v7501 = vlaneseq
    %v7502 = vshrl.u32 %v7501, 7
    %v7503 = vsub.s32 %v1010, %v7502
    %v7504 = vrot.slane %v7470, %v7503
    %v7505 = vlaneseq
    %v7506 = vshrl.u32 %v7505, 7
    %v7507 = vsub.s32 %v1015, %v7506
    %v7508 = vrot.slane %v7473, %v7507
    %v7509 = vsel %vm1020, %v7508, %v7504
    %v7510 = vsel %vm1049, %v7491, %v7482
    %v7511 = vsel %vm1051, %v7500, %v7510
    %v7512 = vsel %vm1053, %v7509, %v7511
    %v7514 = vsel %vm1056, %v7512, 0.0
    %7515 = vadd.xlane.f32.xlu0 %v7514
    %v7516 = vpop.xlane.xlu0 %7515
    %v7517 = vrcp.pop %v7516
    %v7519 = vlaneseq
    %v7520 = vshrl.u32 %v7519, 7
    %v7521 = vsub.s32 0, %v7520
    %v7522 = vrot.slane %v7517, %v7521
    %v7523 = vlaneseq
    %v7524 = vshrl.u32 %v7523, 7
    %v7525 = vsub.s32 1, %v7524
    %v7526 = vrot.slane %v7517, %v7525
    %v7527 = vlaneseq
    %v7528 = vshrl.u32 %v7527, 7
    %v7529 = vsub.s32 2, %v7528
    %v7530 = vrot.slane %v7517, %v7529
    %v7531 = vlaneseq
    %v7532 = vshrl.u32 %v7531, 7
    %v7533 = vsub.s32 3, %v7532
    %v7534 = vrot.slane %v7517, %v7533
    %v7539 = vmul.f32 %v7427, %v7522
    %v7540 = vmul.f32 %v7429, %v7522
    %v7541 = vmul.f32 %v7431, %v7526
    %v7542 = vmul.f32 %v7433, %v7526
    %v7543 = vmul.f32 %v7435, %v7530
    %v7544 = vmul.f32 %v7437, %v7530
    %v7545 = vmul.f32 %v7439, %v7534
    %v7546 = vmul.f32 %v7441, %v7534
    %7548 = vset.pattern.permute.xlu0 0
    %7549 = vperm.xlu0 %7548, %v7539
    %v7550 = vpop.permute.xlu0 %7549
    %7553 = vset.pattern.permute.xlu0 0
    %7554 = vperm.xlu0 %7553, %v7540
    %v7555 = vpop.permute.xlu0 %7554
    %7558 = vset.pattern.permute.xlu0 0
    %7559 = vperm.xlu0 %7558, %v7541
    %v7560 = vpop.permute.xlu0 %7559
    %7563 = vset.pattern.permute.xlu0 0
    %7564 = vperm.xlu0 %7563, %v7542
    %v7565 = vpop.permute.xlu0 %7564
    %7568 = vset.pattern.permute.xlu0 0
    %7569 = vperm.xlu0 %7568, %v7543
    %v7570 = vpop.permute.xlu0 %7569
    %7573 = vset.pattern.permute.xlu0 0
    %7574 = vperm.xlu0 %7573, %v7544
    %v7575 = vpop.permute.xlu0 %7574
    %7578 = vset.pattern.permute.xlu0 0
    %7579 = vperm.xlu0 %7578, %v7545
    %v7580 = vpop.permute.xlu0 %7579
    %7583 = vset.pattern.permute.xlu0 0
    %7584 = vperm.xlu0 %7583, %v7546
    %v7585 = vpop.permute.xlu0 %7584
    %v7587 = vmul.f32 %v7550, %v48
    %v7588 = vmul.f32 %v7555, %v49
    %v7589 = vmul.f32 %v7560, %v50
    %v7590 = vmul.f32 %v7565, %v51
    %v7591 = vmul.f32 %v7570, %v52
    %v7592 = vmul.f32 %v7575, %v53
    %v7593 = vmul.f32 %v7580, %v54
    %v7594 = vmul.f32 %v7585, %v55
    %v7595 = vadd.f32 %v7587, %v7588
    %v7596 = vrot.slane %v7595, 4
    %v7597 = vadd.f32 %v7595, %v7596
    %v7598 = vrot.slane %v7597, 2
    %v7599 = vadd.f32 %v7597, %v7598
    %v7600 = vrot.slane %v7599, 1
    %v7601 = vadd.f32 %v7599, %v7600
    %v7602 = vadd.f32 %v7589, %v7590
    %v7603 = vrot.slane %v7602, 4
    %v7604 = vadd.f32 %v7602, %v7603
    %v7605 = vrot.slane %v7604, 2
    %v7606 = vadd.f32 %v7604, %v7605
    %v7607 = vrot.slane %v7606, 1
    %v7608 = vadd.f32 %v7606, %v7607
    %v7609 = vadd.f32 %v7591, %v7592
    %v7610 = vrot.slane %v7609, 4
    %v7611 = vadd.f32 %v7609, %v7610
    %v7612 = vrot.slane %v7611, 2
    %v7613 = vadd.f32 %v7611, %v7612
    %v7614 = vrot.slane %v7613, 1
    %v7615 = vadd.f32 %v7613, %v7614
    %v7616 = vadd.f32 %v7593, %v7594
    %v7617 = vrot.slane %v7616, 4
    %v7618 = vadd.f32 %v7616, %v7617
    %v7619 = vrot.slane %v7618, 2
    %v7620 = vadd.f32 %v7618, %v7619
    %v7621 = vrot.slane %v7620, 1
    %v7622 = vadd.f32 %v7620, %v7621
    %7623 = vmatprep.subr.mxu0 0.0
    %7624 = vmatpush1.msra.mxu0 %v231
    %7625 = vmatprep.subr.mxu0 0.0
    %7626 = vmatpush1.msra.mxu0 %v230
    %7627 = vmatprep.subr.mxu0 0.0
    %7628 = vmatpush1.msra.mxu0 %v229
    %7629 = vmatprep.subr.mxu0 0.0
    %7630 = vmatpush1.msra.mxu0 %v228
    %7631 = vmatprep.subr.mxu0 0.0
    %7632 = vmatpush1.msra.mxu0 %v227
    %7633 = vmatprep.subr.mxu0 0.0
    %7634 = vmatpush1.msra.mxu0 %v226
    %7635 = vmatprep.subr.mxu0 0.0
    %7636 = vmatpush1.msra.mxu0 %v225
    %7637 = vmatprep.subr.mxu0 0.0
    %7638 = vmatpush1.msra.mxu0 %v224
    %7639 = vmatprep.subr.mxu0 0.0
    %7640 = vmatpush1.msra.mxu0 %v223
    %7641 = vmatprep.subr.mxu0 0.0
    %7642 = vmatpush1.msra.mxu0 %v222
    %7643 = vmatprep.subr.mxu0 0.0
    %7644 = vmatpush1.msra.mxu0 %v221
    %7645 = vmatprep.subr.mxu0 0.0
    %7646 = vmatpush1.msra.mxu0 %v220
    %7647 = vmatprep.subr.mxu0 0.0
    %7648 = vmatpush1.msra.mxu0 %v219
    %7649 = vmatprep.subr.mxu0 0.0
    %7650 = vmatpush1.msra.mxu0 %v218
    %7651 = vmatprep.subr.mxu0 0.0
    %7652 = vmatpush1.msra.mxu0 %v217
    %7653 = vmatprep.subr.mxu0 0.0
    %7654 = vmatpush1.msra.mxu0 %v216
    %7655 = vmatprep.subr.mxu0 0.0
    %7656 = vmatpush2.msra.mxu0 0.0
    %7657 = vmatprep.subr.mxu0 0.0
    %7658 = vmatpush2.msra.mxu0 0.0
    %7659 = vmatprep.subr.mxu0 0.0
    %7660 = vmatpush2.msra.mxu0 0.0
    %7661 = vmatprep.subr.mxu0 0.0
    %7662 = vmatpush2.msra.mxu0 0.0
    %7663 = vmatprep.subr.mxu0 0.0
    %7664 = vmatpush2.msra.mxu0 0.0
    %7665 = vmatprep.subr.mxu0 0.0
    %7666 = vmatpush2.msra.mxu0 0.0
    %7667 = vmatprep.subr.mxu0 0.0
    %7668 = vmatpush2.msra.mxu0 0.0
    %7669 = vmatprep.subr.mxu0 0.0
    %7670 = vmatpush2.msra.mxu0 0.0
    %7671 = vmatprep.subr.mxu0 0.0
    %7672 = vmatpush2.msra.mxu0 0.0
    %7673 = vmatprep.subr.mxu0 0.0
    %7674 = vmatpush2.msra.mxu0 0.0
    %7675 = vmatprep.subr.mxu0 0.0
    %7676 = vmatpush2.msra.mxu0 0.0
    %7677 = vmatprep.subr.mxu0 0.0
    %7678 = vmatpush2.msra.mxu0 0.0
    %7679 = vmatprep.subr.mxu0 0.0
    %7680 = vmatpush2.msra.mxu0 0.0
    %7681 = vmatprep.subr.mxu0 0.0
    %7682 = vmatpush2.msra.mxu0 0.0
    %7683 = vmatprep.subr.mxu0 0.0
    %7684 = vmatpush2.msra.mxu0 0.0
    %7685 = vmatprep.subr.mxu0 0.0
    %7686 = vmatpush2.msra.mxu0 0.0
    %7687 = vmatprep.mubr.f32.mxu0 0.0
    %7688 = vmatmul.mubr.f32.gmra.mxu0 %v7206
    %v7689 = vpop.f32.mrf.mxu0
    %v7690 = vadd.f32 0.0, %v7689
    %v7691 = vpop.f32.mrf.mxu0
    %7692 = vdwg.mxu0
    %v7697 = vsel %vm1049, %v7608, %v7601
    %v7698 = vsel %vm1051, %v7615, %v7697
    %v7699 = vsel %vm1053, %v7622, %v7698
    %7701 = vmatprep.subr.mxu0 0.0
    %7702 = vmatpush1.msra.mxu0 %v215
    %7703 = vmatprep.subr.mxu0 0.0
    %7704 = vmatpush1.msra.mxu0 %v214
    %7705 = vmatprep.subr.mxu0 0.0
    %7706 = vmatpush1.msra.mxu0 %v213
    %7707 = vmatprep.subr.mxu0 0.0
    %7708 = vmatpush1.msra.mxu0 %v212
    %7709 = vmatprep.subr.mxu0 0.0
    %7710 = vmatpush1.msra.mxu0 %v211
    %7711 = vmatprep.subr.mxu0 0.0
    %7712 = vmatpush1.msra.mxu0 %v210
    %7713 = vmatprep.subr.mxu0 0.0
    %7714 = vmatpush1.msra.mxu0 %v209
    %7715 = vmatprep.subr.mxu0 0.0
    %7716 = vmatpush1.msra.mxu0 %v208
    %7717 = vmatprep.subr.mxu0 0.0
    %7718 = vmatpush1.msra.mxu0 %v207
    %7719 = vmatprep.subr.mxu0 0.0
    %7720 = vmatpush1.msra.mxu0 %v206
    %7721 = vmatprep.subr.mxu0 0.0
    %7722 = vmatpush1.msra.mxu0 %v205
    %7723 = vmatprep.subr.mxu0 0.0
    %7724 = vmatpush1.msra.mxu0 %v204
    %7725 = vmatprep.subr.mxu0 0.0
    %7726 = vmatpush1.msra.mxu0 %v203
    %7727 = vmatprep.subr.mxu0 0.0
    %7728 = vmatpush1.msra.mxu0 %v202
    %7729 = vmatprep.subr.mxu0 0.0
    %7730 = vmatpush1.msra.mxu0 %v201
    %7731 = vmatprep.subr.mxu0 0.0
    %7732 = vmatpush1.msra.mxu0 %v200
    %7733 = vmatprep.subr.mxu0 0.0
    %7734 = vmatpush2.msra.mxu0 0.0
    %7735 = vmatprep.subr.mxu0 0.0
    %7736 = vmatpush2.msra.mxu0 0.0
    %7737 = vmatprep.subr.mxu0 0.0
    %7738 = vmatpush2.msra.mxu0 0.0
    %7739 = vmatprep.subr.mxu0 0.0
    %7740 = vmatpush2.msra.mxu0 0.0
    %7741 = vmatprep.subr.mxu0 0.0
    %7742 = vmatpush2.msra.mxu0 0.0
    %7743 = vmatprep.subr.mxu0 0.0
    %7744 = vmatpush2.msra.mxu0 0.0
    %7745 = vmatprep.subr.mxu0 0.0
    %7746 = vmatpush2.msra.mxu0 0.0
    %7747 = vmatprep.subr.mxu0 0.0
    %7748 = vmatpush2.msra.mxu0 0.0
    %7749 = vmatprep.subr.mxu0 0.0
    %7750 = vmatpush2.msra.mxu0 0.0
    %7751 = vmatprep.subr.mxu0 0.0
    %7752 = vmatpush2.msra.mxu0 0.0
    %7753 = vmatprep.subr.mxu0 0.0
    %7754 = vmatpush2.msra.mxu0 0.0
    %7755 = vmatprep.subr.mxu0 0.0
    %7756 = vmatpush2.msra.mxu0 0.0
    %7757 = vmatprep.subr.mxu0 0.0
    %7758 = vmatpush2.msra.mxu0 0.0
    %7759 = vmatprep.subr.mxu0 0.0
    %7760 = vmatpush2.msra.mxu0 0.0
    %7761 = vmatprep.subr.mxu0 0.0
    %7762 = vmatpush2.msra.mxu0 0.0
    %7763 = vmatprep.subr.mxu0 0.0
    %7764 = vmatpush2.msra.mxu0 0.0
    %7765 = vmatprep.mubr.f32.mxu0 0.0
    %7766 = vmatmul.mubr.f32.gmra.mxu0 %v7699
    %v7767 = vpop.f32.mrf.mxu0
    %v7768 = vadd.f32 %v7690, %v7767
    %v7769 = vpop.f32.mrf.mxu0
    %7770 = vdwg.mxu0
    %v7771 = vtanh.pop %v7768
    %v7772 = vlaneseq
    %v7773 = vshrl.u32 %v7772, 7
    %v7774 = vsub.s32 %v1010, %v7773
    %v7775 = vrot.slane %v7550, %v7774
    %v7776 = vlaneseq
    %v7777 = vshrl.u32 %v7776, 7
    %v7778 = vsub.s32 %v1015, %v7777
    %v7779 = vrot.slane %v7555, %v7778
    %v7780 = vsel %vm1020, %v7779, %v7775
    %v7781 = vlaneseq
    %v7782 = vshrl.u32 %v7781, 7
    %v7783 = vsub.s32 %v1010, %v7782
    %v7784 = vrot.slane %v7560, %v7783
    %v7785 = vlaneseq
    %v7786 = vshrl.u32 %v7785, 7
    %v7787 = vsub.s32 %v1015, %v7786
    %v7788 = vrot.slane %v7565, %v7787
    %v7789 = vsel %vm1020, %v7788, %v7784
    %v7790 = vlaneseq
    %v7791 = vshrl.u32 %v7790, 7
    %v7792 = vsub.s32 %v1010, %v7791
    %v7793 = vrot.slane %v7570, %v7792
    %v7794 = vlaneseq
    %v7795 = vshrl.u32 %v7794, 7
    %v7796 = vsub.s32 %v1015, %v7795
    %v7797 = vrot.slane %v7575, %v7796
    %v7798 = vsel %vm1020, %v7797, %v7793
    %v7799 = vlaneseq
    %v7800 = vshrl.u32 %v7799, 7
    %v7801 = vsub.s32 %v1010, %v7800
    %v7802 = vrot.slane %v7580, %v7801
    %v7803 = vlaneseq
    %v7804 = vshrl.u32 %v7803, 7
    %v7805 = vsub.s32 %v1015, %v7804
    %v7806 = vrot.slane %v7585, %v7805
    %v7807 = vsel %vm1020, %v7806, %v7802
    %7812 = vst.msk [vmem:[#allocation4 + $0x6] sm:$0x1] %vm1475, %v7780
    %7813 = vst.msk [vmem:[#allocation4 + $0xe] sm:$0x1] %vm1475, %v7789
    %7814 = vst.msk [vmem:[#allocation4 + $0x16] sm:$0x1] %vm1475, %v7798
    %7815 = vst.msk [vmem:[#allocation4 + $0x1e] sm:$0x1] %vm1475, %v7807
    %7816 = vmatprep.subr.mxu0 %v263
    %7817 = vmatpush1.msra.mxu0 %v262
    %7818 = vmatprep.subr.mxu0 %v261
    %7819 = vmatpush1.msra.mxu0 %v260
    %7820 = vmatprep.subr.mxu0 %v259
    %7821 = vmatpush1.msra.mxu0 %v258
    %7822 = vmatprep.subr.mxu0 %v257
    %7823 = vmatpush1.msra.mxu0 %v256
    %7824 = vmatprep.subr.mxu0 %v255
    %7825 = vmatpush1.msra.mxu0 %v254
    %7826 = vmatprep.subr.mxu0 %v253
    %7827 = vmatpush1.msra.mxu0 %v252
    %7828 = vmatprep.subr.mxu0 %v251
    %7829 = vmatpush1.msra.mxu0 %v250
    %7830 = vmatprep.subr.mxu0 %v249
    %7831 = vmatpush1.msra.mxu0 %v248
    %7832 = vmatprep.subr.mxu0 %v247
    %7833 = vmatpush1.msra.mxu0 %v246
    %7834 = vmatprep.subr.mxu0 %v245
    %7835 = vmatpush1.msra.mxu0 %v244
    %7836 = vmatprep.subr.mxu0 %v243
    %7837 = vmatpush1.msra.mxu0 %v242
    %7838 = vmatprep.subr.mxu0 %v241
    %7839 = vmatpush1.msra.mxu0 %v240
    %7840 = vmatprep.subr.mxu0 %v239
    %7841 = vmatpush1.msra.mxu0 %v238
    %7842 = vmatprep.subr.mxu0 %v237
    %7843 = vmatpush1.msra.mxu0 %v236
    %7844 = vmatprep.subr.mxu0 %v235
    %7845 = vmatpush1.msra.mxu0 %v234
    %7846 = vmatprep.subr.mxu0 %v233
    %7847 = vmatpush1.msra.mxu0 %v232
    %7848 = vmatprep.subr.mxu0 0.0
    %7849 = vmatpush2.msra.mxu0 0.0
    %7850 = vmatprep.subr.mxu0 0.0
    %7851 = vmatpush2.msra.mxu0 0.0
    %7852 = vmatprep.subr.mxu0 0.0
    %7853 = vmatpush2.msra.mxu0 0.0
    %7854 = vmatprep.subr.mxu0 0.0
    %7855 = vmatpush2.msra.mxu0 0.0
    %7856 = vmatprep.subr.mxu0 0.0
    %7857 = vmatpush2.msra.mxu0 0.0
    %7858 = vmatprep.subr.mxu0 0.0
    %7859 = vmatpush2.msra.mxu0 0.0
    %7860 = vmatprep.subr.mxu0 0.0
    %7861 = vmatpush2.msra.mxu0 0.0
    %7862 = vmatprep.subr.mxu0 0.0
    %7863 = vmatpush2.msra.mxu0 0.0
    %7864 = vmatprep.subr.mxu0 0.0
    %7865 = vmatpush2.msra.mxu0 0.0
    %7866 = vmatprep.subr.mxu0 0.0
    %7867 = vmatpush2.msra.mxu0 0.0
    %7868 = vmatprep.subr.mxu0 0.0
    %7869 = vmatpush2.msra.mxu0 0.0
    %7870 = vmatprep.subr.mxu0 0.0
    %7871 = vmatpush2.msra.mxu0 0.0
    %7872 = vmatprep.subr.mxu0 0.0
    %7873 = vmatpush2.msra.mxu0 0.0
    %7874 = vmatprep.subr.mxu0 0.0
    %7875 = vmatpush2.msra.mxu0 0.0
    %7876 = vmatprep.subr.mxu0 0.0
    %7877 = vmatpush2.msra.mxu0 0.0
    %7878 = vmatprep.subr.mxu0 0.0
    %7879 = vmatpush2.msra.mxu0 0.0
    %7880 = vmatprep.mubr.f32.mxu0 0.0
    %7881 = vmatmul.mubr.f32.gmra.mxu0 %v7771
    %v7882 = vpop.f32.mrf.mxu0
    %v7883 = vadd.f32 %v269, %v7882
    %v7884 = vpop.f32.mrf.mxu0
    %v7885 = vadd.f32 %v273, %v7884
    %7886 = vdwg.mxu0
    %v7889 = vcombine.low %v7883, %v7885
    %v7891 = vunpack.c.l.s4 1966171168
    %v7892 = vunpack.c.0.s8 %v7891
    %v7893 = vlaneseq
    %v7894 = vshrl.u32 %v7893, 7
    %v7895 = vsub.s32 %v7892, %v7894
    %v7896 = vrot.slane %v7889, %v7895
    %v7897 = vcombine.high %v7896, %v7896
    %v7899 = vunpack.c.l.s4 1966171168
    %v7900 = vunpack.c.0.s8 %v7899
    %v7901 = vlaneseq
    %v7902 = vshrl.u32 %v7901, 7
    %v7903 = vsub.s32 %v7900, %v7902
    %v7904 = vrot.slane %v7896, %v7903
    %v7906 = vunpack.c.l.s4 1966171168
    %v7907 = vunpack.c.0.s8 %v7906
    %v7908 = vlaneseq
    %v7909 = vshrl.u32 %v7908, 7
    %v7910 = vsub.s32 %v7907, %v7909
    %v7911 = vrot.slane %v7897, %v7910
    %v7912 = vcombine.high %v7904, %v7904
    %v7913 = vcombine.high %v7911, %v7911
    %s7918 = scalar_lea.vmem [#allocation2], 6
    %7919 = vst.msk [vmem:[%s7918] ss:$8 sm:$0x3] %vm1585, %v7904
    %7920 = vst.msk [vmem:[%s7918] ss:$8 sm:$0x0] %vm1585, %v7904
    %s7921 = scalar_lea.vmem [#allocation2], 22
    %7922 = vst.msk [vmem:[%s7921] ss:$8 sm:$0x3] %vm1585, %v7911
    %7923 = vst.msk [vmem:[%s7921] ss:$8 sm:$0x0] %vm1585, %v7911
    %s7924 = scalar_lea.vmem [#allocation2], 38
    %7925 = vst.msk [vmem:[%s7924] ss:$8 sm:$0x3] %vm1585, %v7912
    %7926 = vst.msk [vmem:[%s7924] ss:$8 sm:$0x0] %vm1585, %v7912
    %s7927 = scalar_lea.vmem [#allocation2], 54
    %7928 = vst.msk [vmem:[%s7927] ss:$8 sm:$0x3] %vm1585, %v7913
    %7929 = vst.msk [vmem:[%s7927] ss:$8 sm:$0x0] %vm1585, %v7913
    %7930 = vmatprep.subr.mxu0 %v117
    %7931 = vmatpush1.msra.mxu0 %v116
    %7932 = vmatprep.subr.mxu0 %v113
    %7933 = vmatpush1.msra.mxu0 %v112
    %7934 = vmatprep.subr.mxu0 %v109
    %7935 = vmatpush1.msra.mxu0 %v108
    %7936 = vmatprep.subr.mxu0 %v105
    %7937 = vmatpush1.msra.mxu0 %v104
    %7938 = vmatprep.subr.mxu0 %v101
    %7939 = vmatpush1.msra.mxu0 %v100
    %7940 = vmatprep.subr.mxu0 %v97
    %7941 = vmatpush1.msra.mxu0 %v96
    %7942 = vmatprep.subr.mxu0 %v93
    %7943 = vmatpush1.msra.mxu0 %v92
    %7944 = vmatprep.subr.mxu0 %v89
    %7945 = vmatpush1.msra.mxu0 %v88
    %7946 = vmatprep.subr.mxu0 %v85
    %7947 = vmatpush1.msra.mxu0 %v84
    %7948 = vmatprep.subr.mxu0 %v81
    %7949 = vmatpush1.msra.mxu0 %v80
    %7950 = vmatprep.subr.mxu0 %v77
    %7951 = vmatpush1.msra.mxu0 %v76
    %7952 = vmatprep.subr.mxu0 %v73
    %7953 = vmatpush1.msra.mxu0 %v72
    %7954 = vmatprep.subr.mxu0 %v69
    %7955 = vmatpush1.msra.mxu0 %v68
    %7956 = vmatprep.subr.mxu0 %v65
    %7957 = vmatpush1.msra.mxu0 %v64
    %7958 = vmatprep.subr.mxu0 %v61
    %7959 = vmatpush1.msra.mxu0 %v60
    %7960 = vmatprep.subr.mxu0 %v57
    %7961 = vmatpush1.msra.mxu0 %v56
    %7962 = vmatprep.subr.mxu0 0.0
    %7963 = vmatpush2.msra.mxu0 0.0
    %7964 = vmatprep.subr.mxu0 0.0
    %7965 = vmatpush2.msra.mxu0 0.0
    %7966 = vmatprep.subr.mxu0 0.0
    %7967 = vmatpush2.msra.mxu0 0.0
    %7968 = vmatprep.subr.mxu0 0.0
    %7969 = vmatpush2.msra.mxu0 0.0
    %7970 = vmatprep.subr.mxu0 0.0
    %7971 = vmatpush2.msra.mxu0 0.0
    %7972 = vmatprep.subr.mxu0 0.0
    %7973 = vmatpush2.msra.mxu0 0.0
    %7974 = vmatprep.subr.mxu0 0.0
    %7975 = vmatpush2.msra.mxu0 0.0
    %7976 = vmatprep.subr.mxu0 0.0
    %7977 = vmatpush2.msra.mxu0 0.0
    %7978 = vmatprep.subr.mxu0 0.0
    %7979 = vmatpush2.msra.mxu0 0.0
    %7980 = vmatprep.subr.mxu0 0.0
    %7981 = vmatpush2.msra.mxu0 0.0
    %7982 = vmatprep.subr.mxu0 0.0
    %7983 = vmatpush2.msra.mxu0 0.0
    %7984 = vmatprep.subr.mxu0 0.0
    %7985 = vmatpush2.msra.mxu0 0.0
    %7986 = vmatprep.subr.mxu0 0.0
    %7987 = vmatpush2.msra.mxu0 0.0
    %7988 = vmatprep.subr.mxu0 0.0
    %7989 = vmatpush2.msra.mxu0 0.0
    %7990 = vmatprep.subr.mxu0 0.0
    %7991 = vmatpush2.msra.mxu0 0.0
    %7992 = vmatprep.subr.mxu0 0.0
    %7993 = vmatpush2.msra.mxu0 0.0
    %7994 = vmatprep.mubr.f32.mxu0 0.0
    %7995 = vmatmul.mubr.f32.gmra.mxu0 %v7771
    %v7996 = vpop.f32.mrf.mxu0
    %v7997 = vadd.f32 0.0, %v7996
    %v7998 = vpop.f32.mrf.mxu0
    %v7999 = vadd.f32 0.0, %v7998
    %8000 = vdwg.mxu0
    %8001 = vmatprep.subr.mxu0 %v119
    %8002 = vmatpush1.msra.mxu0 %v118
    %8003 = vmatprep.subr.mxu0 %v115
    %8004 = vmatpush1.msra.mxu0 %v114
    %8005 = vmatprep.subr.mxu0 %v111
    %8006 = vmatpush1.msra.mxu0 %v110
    %8007 = vmatprep.subr.mxu0 %v107
    %8008 = vmatpush1.msra.mxu0 %v106
    %8009 = vmatprep.subr.mxu0 %v103
    %8010 = vmatpush1.msra.mxu0 %v102
    %8011 = vmatprep.subr.mxu0 %v99
    %8012 = vmatpush1.msra.mxu0 %v98
    %8013 = vmatprep.subr.mxu0 %v95
    %8014 = vmatpush1.msra.mxu0 %v94
    %8015 = vmatprep.subr.mxu0 %v91
    %8016 = vmatpush1.msra.mxu0 %v90
    %8017 = vmatprep.subr.mxu0 %v87
    %8018 = vmatpush1.msra.mxu0 %v86
    %8019 = vmatprep.subr.mxu0 %v83
    %8020 = vmatpush1.msra.mxu0 %v82
    %8021 = vmatprep.subr.mxu0 %v79
    %8022 = vmatpush1.msra.mxu0 %v78
    %8023 = vmatprep.subr.mxu0 %v75
    %8024 = vmatpush1.msra.mxu0 %v74
    %8025 = vmatprep.subr.mxu0 %v71
    %8026 = vmatpush1.msra.mxu0 %v70
    %8027 = vmatprep.subr.mxu0 %v67
    %8028 = vmatpush1.msra.mxu0 %v66
    %8029 = vmatprep.subr.mxu0 %v63
    %8030 = vmatpush1.msra.mxu0 %v62
    %8031 = vmatprep.subr.mxu0 %v59
    %8032 = vmatpush1.msra.mxu0 %v58
    %8033 = vmatprep.subr.mxu0 0.0
    %8034 = vmatpush2.msra.mxu0 0.0
    %8035 = vmatprep.subr.mxu0 0.0
    %8036 = vmatpush2.msra.mxu0 0.0
    %8037 = vmatprep.subr.mxu0 0.0
    %8038 = vmatpush2.msra.mxu0 0.0
    %8039 = vmatprep.subr.mxu0 0.0
    %8040 = vmatpush2.msra.mxu0 0.0
    %8041 = vmatprep.subr.mxu0 0.0
    %8042 = vmatpush2.msra.mxu0 0.0
    %8043 = vmatprep.subr.mxu0 0.0
    %8044 = vmatpush2.msra.mxu0 0.0
    %8045 = vmatprep.subr.mxu0 0.0
    %8046 = vmatpush2.msra.mxu0 0.0
    %8047 = vmatprep.subr.mxu0 0.0
    %8048 = vmatpush2.msra.mxu0 0.0
    %8049 = vmatprep.subr.mxu0 0.0
    %8050 = vmatpush2.msra.mxu0 0.0
    %8051 = vmatprep.subr.mxu0 0.0
    %8052 = vmatpush2.msra.mxu0 0.0
    %8053 = vmatprep.subr.mxu0 0.0
    %8054 = vmatpush2.msra.mxu0 0.0
    %8055 = vmatprep.subr.mxu0 0.0
    %8056 = vmatpush2.msra.mxu0 0.0
    %8057 = vmatprep.subr.mxu0 0.0
    %8058 = vmatpush2.msra.mxu0 0.0
    %8059 = vmatprep.subr.mxu0 0.0
    %8060 = vmatpush2.msra.mxu0 0.0
    %8061 = vmatprep.subr.mxu0 0.0
    %8062 = vmatpush2.msra.mxu0 0.0
    %8063 = vmatprep.subr.mxu0 0.0
    %8064 = vmatpush2.msra.mxu0 0.0
    %8065 = vmatprep.mubr.f32.mxu0 0.0
    %8066 = vmatmul.mubr.f32.gmra.mxu0 %v7771
    %v8067 = vpop.f32.mrf.mxu0
    %v8068 = vadd.f32 0.0, %v8067
    %v8069 = vpop.f32.mrf.mxu0
    %v8070 = vadd.f32 0.0, %v8069
    %8071 = vdwg.mxu0
    %v8076 = vrot.slane %v7997, 4
    %v8077 = vrot.slane %v7999, 4
    %v8078 = vrot.slane %v8068, 4
    %v8079 = vrot.slane %v8070, 4
    %v8084 = vadd.f32 %v451, %v8076
    %v8085 = vadd.f32 %v453, %v8077
    %v8086 = vadd.f32 %v540, %v8078
    %v8087 = vadd.f32 %v542, %v8079
    %8088 = vmatprep.subr.mxu0 %v181
    %8089 = vmatpush1.msra.mxu0 %v180
    %8090 = vmatprep.subr.mxu0 %v177
    %8091 = vmatpush1.msra.mxu0 %v176
    %8092 = vmatprep.subr.mxu0 %v173
    %8093 = vmatpush1.msra.mxu0 %v172
    %8094 = vmatprep.subr.mxu0 %v169
    %8095 = vmatpush1.msra.mxu0 %v168
    %8096 = vmatprep.subr.mxu0 %v165
    %8097 = vmatpush1.msra.mxu0 %v164
    %8098 = vmatprep.subr.mxu0 %v161
    %8099 = vmatpush1.msra.mxu0 %v160
    %8100 = vmatprep.subr.mxu0 %v157
    %8101 = vmatpush1.msra.mxu0 %v156
    %8102 = vmatprep.subr.mxu0 %v153
    %8103 = vmatpush1.msra.mxu0 %v152
    %8104 = vmatprep.subr.mxu0 %v149
    %8105 = vmatpush1.msra.mxu0 %v148
    %8106 = vmatprep.subr.mxu0 %v145
    %8107 = vmatpush1.msra.mxu0 %v144
    %8108 = vmatprep.subr.mxu0 %v141
    %8109 = vmatpush1.msra.mxu0 %v140
    %8110 = vmatprep.subr.mxu0 %v137
    %8111 = vmatpush1.msra.mxu0 %v136
    %8112 = vmatprep.subr.mxu0 %v133
    %8113 = vmatpush1.msra.mxu0 %v132
    %8114 = vmatprep.subr.mxu0 %v129
    %8115 = vmatpush1.msra.mxu0 %v128
    %8116 = vmatprep.subr.mxu0 %v125
    %8117 = vmatpush1.msra.mxu0 %v124
    %8118 = vmatprep.subr.mxu0 %v121
    %8119 = vmatpush1.msra.mxu0 %v120
    %8120 = vmatprep.subr.mxu0 0.0
    %8121 = vmatpush2.msra.mxu0 0.0
    %8122 = vmatprep.subr.mxu0 0.0
    %8123 = vmatpush2.msra.mxu0 0.0
    %8124 = vmatprep.subr.mxu0 0.0
    %8125 = vmatpush2.msra.mxu0 0.0
    %8126 = vmatprep.subr.mxu0 0.0
    %8127 = vmatpush2.msra.mxu0 0.0
    %8128 = vmatprep.subr.mxu0 0.0
    %8129 = vmatpush2.msra.mxu0 0.0
    %8130 = vmatprep.subr.mxu0 0.0
    %8131 = vmatpush2.msra.mxu0 0.0
    %8132 = vmatprep.subr.mxu0 0.0
    %8133 = vmatpush2.msra.mxu0 0.0
    %8134 = vmatprep.subr.mxu0 0.0
    %8135 = vmatpush2.msra.mxu0 0.0
    %8136 = vmatprep.subr.mxu0 0.0
    %8137 = vmatpush2.msra.mxu0 0.0
    %8138 = vmatprep.subr.mxu0 0.0
    %8139 = vmatpush2.msra.mxu0 0.0
    %8140 = vmatprep.subr.mxu0 0.0
    %8141 = vmatpush2.msra.mxu0 0.0
    %8142 = vmatprep.subr.mxu0 0.0
    %8143 = vmatpush2.msra.mxu0 0.0
    %8144 = vmatprep.subr.mxu0 0.0
    %8145 = vmatpush2.msra.mxu0 0.0
    %8146 = vmatprep.subr.mxu0 0.0
    %8147 = vmatpush2.msra.mxu0 0.0
    %8148 = vmatprep.subr.mxu0 0.0
    %8149 = vmatpush2.msra.mxu0 0.0
    %8150 = vmatprep.subr.mxu0 0.0
    %8151 = vmatpush2.msra.mxu0 0.0
    %8152 = vmatprep.mubr.f32.mxu0 0.0
    %8153 = vmatmul.mubr.f32.gmra.mxu0 %v7206
    %v8154 = vpop.f32.mrf.mxu0
    %v8155 = vadd.f32 0.0, %v8154
    %v8156 = vpop.f32.mrf.mxu0
    %v8157 = vadd.f32 0.0, %v8156
    %8158 = vdwg.mxu0
    %8159 = vmatprep.subr.mxu0 %v183
    %8160 = vmatpush1.msra.mxu0 %v182
    %8161 = vmatprep.subr.mxu0 %v179
    %8162 = vmatpush1.msra.mxu0 %v178
    %8163 = vmatprep.subr.mxu0 %v175
    %8164 = vmatpush1.msra.mxu0 %v174
    %8165 = vmatprep.subr.mxu0 %v171
    %8166 = vmatpush1.msra.mxu0 %v170
    %8167 = vmatprep.subr.mxu0 %v167
    %8168 = vmatpush1.msra.mxu0 %v166
    %8169 = vmatprep.subr.mxu0 %v163
    %8170 = vmatpush1.msra.mxu0 %v162
    %8171 = vmatprep.subr.mxu0 %v159
    %8172 = vmatpush1.msra.mxu0 %v158
    %8173 = vmatprep.subr.mxu0 %v155
    %8174 = vmatpush1.msra.mxu0 %v154
    %8175 = vmatprep.subr.mxu0 %v151
    %8176 = vmatpush1.msra.mxu0 %v150
    %8177 = vmatprep.subr.mxu0 %v147
    %8178 = vmatpush1.msra.mxu0 %v146
    %8179 = vmatprep.subr.mxu0 %v143
    %8180 = vmatpush1.msra.mxu0 %v142
    %8181 = vmatprep.subr.mxu0 %v139
    %8182 = vmatpush1.msra.mxu0 %v138
    %8183 = vmatprep.subr.mxu0 %v135
    %8184 = vmatpush1.msra.mxu0 %v134
    %8185 = vmatprep.subr.mxu0 %v131
    %8186 = vmatpush1.msra.mxu0 %v130
    %8187 = vmatprep.subr.mxu0 %v127
    %8188 = vmatpush1.msra.mxu0 %v126
    %8189 = vmatprep.subr.mxu0 %v123
    %8190 = vmatpush1.msra.mxu0 %v122
    %8191 = vmatprep.subr.mxu0 0.0
    %8192 = vmatpush2.msra.mxu0 0.0
    %8193 = vmatprep.subr.mxu0 0.0
    %8194 = vmatpush2.msra.mxu0 0.0
    %8195 = vmatprep.subr.mxu0 0.0
    %8196 = vmatpush2.msra.mxu0 0.0
    %8197 = vmatprep.subr.mxu0 0.0
    %8198 = vmatpush2.msra.mxu0 0.0
    %8199 = vmatprep.subr.mxu0 0.0
    %8200 = vmatpush2.msra.mxu0 0.0
    %8201 = vmatprep.subr.mxu0 0.0
    %8202 = vmatpush2.msra.mxu0 0.0
    %8203 = vmatprep.subr.mxu0 0.0
    %8204 = vmatpush2.msra.mxu0 0.0
    %8205 = vmatprep.subr.mxu0 0.0
    %8206 = vmatpush2.msra.mxu0 0.0
    %8207 = vmatprep.subr.mxu0 0.0
    %8208 = vmatpush2.msra.mxu0 0.0
    %8209 = vmatprep.subr.mxu0 0.0
    %8210 = vmatpush2.msra.mxu0 0.0
    %8211 = vmatprep.subr.mxu0 0.0
    %8212 = vmatpush2.msra.mxu0 0.0
    %8213 = vmatprep.subr.mxu0 0.0
    %8214 = vmatpush2.msra.mxu0 0.0
    %8215 = vmatprep.subr.mxu0 0.0
    %8216 = vmatpush2.msra.mxu0 0.0
    %8217 = vmatprep.subr.mxu0 0.0
    %8218 = vmatpush2.msra.mxu0 0.0
    %8219 = vmatprep.subr.mxu0 0.0
    %8220 = vmatpush2.msra.mxu0 0.0
    %8221 = vmatprep.subr.mxu0 0.0
    %8222 = vmatpush2.msra.mxu0 0.0
    %8223 = vmatprep.mubr.f32.mxu0 0.0
    %8224 = vmatmul.mubr.f32.gmra.mxu0 %v7206
    %v8225 = vpop.f32.mrf.mxu0
    %v8226 = vadd.f32 0.0, %v8225
    %v8227 = vpop.f32.mrf.mxu0
    %v8228 = vadd.f32 0.0, %v8227
    %8229 = vdwg.mxu0
    %v8234 = vrot.slane %v8155, 4
    %v8235 = vrot.slane %v8157, 4
    %v8236 = vrot.slane %v8226, 4
    %v8237 = vrot.slane %v8228, 4
    %v8242 = vadd.f32 %v8084, %v8234
    %v8243 = vadd.f32 %v8085, %v8235
    %v8244 = vadd.f32 %v8086, %v8236
    %v8245 = vadd.f32 %v8087, %v8237
    %v8246 = vxor.u32 %v8242, 2147483648
    %v8247 = vmul.f32 %v8246, 1.442695
    %v8248 = vpow.pop %v8247
    %v8249 = vadd.f32 %v8248, 1.0
    %v8250 = vrcp.pop %v8249
    %v8251 = vmul.f32 1.0, %v8250
    %v8252 = vxor.u32 %v8243, 2147483648
    %v8253 = vmul.f32 %v8252, 1.442695
    %v8254 = vpow.pop %v8253
    %v8255 = vadd.f32 %v8254, 1.0
    %v8256 = vrcp.pop %v8255
    %v8257 = vmul.f32 1.0, %v8256
    %v8258 = vtanh.pop %v8244
    %v8259 = vxor.u32 %v8245, 2147483648
    %v8260 = vmul.f32 %v8259, 1.442695
    %v8261 = vpow.pop %v8260
    %v8262 = vadd.f32 %v8261, 1.0
    %v8263 = vrcp.pop %v8262
    %v8264 = vmul.f32 1.0, %v8263
    %v8266 = vrot.slane %v7204, 4
    %v8268 = vmul.f32 %v8257, %v8266
    %v8269 = vmul.f32 %v8251, %v8258
    %v8270 = vadd.f32 %v8268, %v8269
    %v8271 = vtanh.pop %v8270
    %v8272 = vmul.f32 %v8264, %v8271
    %v8274 = vrot.slane %v8272, 4
    %8276 = vmatprep.subr.mxu0 0.0
    %8277 = vmatpush1.msra.mxu0 %v199
    %8278 = vmatprep.subr.mxu0 0.0
    %8279 = vmatpush1.msra.mxu0 %v198
    %8280 = vmatprep.subr.mxu0 0.0
    %8281 = vmatpush1.msra.mxu0 %v197
    %8282 = vmatprep.subr.mxu0 0.0
    %8283 = vmatpush1.msra.mxu0 %v196
    %8284 = vmatprep.subr.mxu0 0.0
    %8285 = vmatpush1.msra.mxu0 %v195
    %8286 = vmatprep.subr.mxu0 0.0
    %8287 = vmatpush1.msra.mxu0 %v194
    %8288 = vmatprep.subr.mxu0 0.0
    %8289 = vmatpush1.msra.mxu0 %v193
    %8290 = vmatprep.subr.mxu0 0.0
    %8291 = vmatpush1.msra.mxu0 %v192
    %8292 = vmatprep.subr.mxu0 0.0
    %8293 = vmatpush1.msra.mxu0 %v191
    %8294 = vmatprep.subr.mxu0 0.0
    %8295 = vmatpush1.msra.mxu0 %v190
    %8296 = vmatprep.subr.mxu0 0.0
    %8297 = vmatpush1.msra.mxu0 %v189
    %8298 = vmatprep.subr.mxu0 0.0
    %8299 = vmatpush1.msra.mxu0 %v188
    %8300 = vmatprep.subr.mxu0 0.0
    %8301 = vmatpush1.msra.mxu0 %v187
    %8302 = vmatprep.subr.mxu0 0.0
    %8303 = vmatpush1.msra.mxu0 %v186
    %8304 = vmatprep.subr.mxu0 0.0
    %8305 = vmatpush1.msra.mxu0 %v185
    %8306 = vmatprep.subr.mxu0 0.0
    %8307 = vmatpush1.msra.mxu0 %v184
    %8308 = vmatprep.subr.mxu0 0.0
    %8309 = vmatpush2.msra.mxu0 0.0
    %8310 = vmatprep.subr.mxu0 0.0
    %8311 = vmatpush2.msra.mxu0 0.0
    %8312 = vmatprep.subr.mxu0 0.0
    %8313 = vmatpush2.msra.mxu0 0.0
    %8314 = vmatprep.subr.mxu0 0.0
    %8315 = vmatpush2.msra.mxu0 0.0
    %8316 = vmatprep.subr.mxu0 0.0
    %8317 = vmatpush2.msra.mxu0 0.0
    %8318 = vmatprep.subr.mxu0 0.0
    %8319 = vmatpush2.msra.mxu0 0.0
    %8320 = vmatprep.subr.mxu0 0.0
    %8321 = vmatpush2.msra.mxu0 0.0
    %8322 = vmatprep.subr.mxu0 0.0
    %8323 = vmatpush2.msra.mxu0 0.0
    %8324 = vmatprep.subr.mxu0 0.0
    %8325 = vmatpush2.msra.mxu0 0.0
    %8326 = vmatprep.subr.mxu0 0.0
    %8327 = vmatpush2.msra.mxu0 0.0
    %8328 = vmatprep.subr.mxu0 0.0
    %8329 = vmatpush2.msra.mxu0 0.0
    %8330 = vmatprep.subr.mxu0 0.0
    %8331 = vmatpush2.msra.mxu0 0.0
    %8332 = vmatprep.subr.mxu0 0.0
    %8333 = vmatpush2.msra.mxu0 0.0
    %8334 = vmatprep.subr.mxu0 0.0
    %8335 = vmatpush2.msra.mxu0 0.0
    %8336 = vmatprep.subr.mxu0 0.0
    %8337 = vmatpush2.msra.mxu0 0.0
    %8338 = vmatprep.subr.mxu0 0.0
    %8339 = vmatpush2.msra.mxu0 0.0
    %8340 = vmatprep.mubr.f32.mxu0 0.0
    %8341 = vmatmul.mubr.f32.gmra.mxu0 %v8274
    %v8342 = vpop.f32.mrf.mxu0
    %v8343 = vadd.f32 0.0, %v8342
    %v8344 = vpop.f32.mrf.mxu0
    %8345 = vdwg.mxu0
    %v8348 = vunpack.c.l.s4 1966171168
    %v8349 = vunpack.c.0.s8 %v8348
    %v8350 = vlaneseq
    %v8351 = vshrl.u32 %v8350, 7
    %v8352 = vsub.s32 %v8349, %v8351
    %v8353 = vrot.slane %v8343, %v8352
    %v8354 = vcombine.high %v8353, %v8353
    %v8356 = vunpack.c.l.s4 1966171168
    %v8357 = vunpack.c.0.s8 %v8356
    %v8358 = vlaneseq
    %v8359 = vshrl.u32 %v8358, 7
    %v8360 = vsub.s32 %v8357, %v8359
    %v8361 = vrot.slane %v8353, %v8360
    %v8363 = vunpack.c.l.s4 1966171168
    %v8364 = vunpack.c.0.s8 %v8363
    %v8365 = vlaneseq
    %v8366 = vshrl.u32 %v8365, 7
    %v8367 = vsub.s32 %v8364, %v8366
    %v8368 = vrot.slane %v8354, %v8367
    %v8369 = vcombine.high %v8361, %v8361
    %v8370 = vcombine.high %v8368, %v8368
    %v8371 = vlaneseq
    %v8372 = vshrl.u32 %v8371, 7
    %v8373 = vsub.s32 0, %v8372
    %v8374 = vrot.slane %v8361, %v8373
    %v8375 = vlaneseq
    %v8376 = vshrl.u32 %v8375, 7
    %v8377 = vsub.s32 0, %v8376
    %v8378 = vrot.slane %v8368, %v8377
    %v8379 = vlaneseq
    %v8380 = vshrl.u32 %v8379, 7
    %v8381 = vsub.s32 0, %v8380
    %v8382 = vrot.slane %v8369, %v8381
    %v8383 = vlaneseq
    %v8384 = vshrl.u32 %v8383, 7
    %v8385 = vsub.s32 0, %v8384
    %v8386 = vrot.slane %v8370, %v8385
    %v8391 = vmul.f32 %v48, %v8374
    %v8392 = vmul.f32 %v49, %v8374
    %v8393 = vmul.f32 %v50, %v8378
    %v8394 = vmul.f32 %v51, %v8378
    %v8395 = vmul.f32 %v52, %v8382
    %v8396 = vmul.f32 %v53, %v8382
    %v8397 = vmul.f32 %v54, %v8386
    %v8398 = vmul.f32 %v55, %v8386
    %8399 = vadd.xlane.f32.xlu0 %v8391
    %v8400 = vpop.xlane.xlu0 %8399
    %8401 = vadd.xlane.f32.xlu0 %v8392
    %v8402 = vpop.xlane.xlu0 %8401
    %8403 = vadd.xlane.f32.xlu0 %v8393
    %v8404 = vpop.xlane.xlu0 %8403
    %8405 = vadd.xlane.f32.xlu0 %v8394
    %v8406 = vpop.xlane.xlu0 %8405
    %8407 = vadd.xlane.f32.xlu0 %v8395
    %v8408 = vpop.xlane.xlu0 %8407
    %8409 = vadd.xlane.f32.xlu0 %v8396
    %v8410 = vpop.xlane.xlu0 %8409
    %8411 = vadd.xlane.f32.xlu0 %v8397
    %v8412 = vpop.xlane.xlu0 %8411
    %8413 = vadd.xlane.f32.xlu0 %v8398
    %v8414 = vpop.xlane.xlu0 %8413
    %v8423 = vlaneseq
    %v8424 = vshrl.u32 %v8423, 7
    %v8425 = vsub.s32 %v1010, %v8424
    %v8426 = vrot.slane %v8400, %v8425
    %v8427 = vlaneseq
    %v8428 = vshrl.u32 %v8427, 7
    %v8429 = vsub.s32 %v1015, %v8428
    %v8430 = vrot.slane %v8402, %v8429
    %v8431 = vsel %vm1020, %v8430, %v8426
    %v8432 = vlaneseq
    %v8433 = vshrl.u32 %v8432, 7
    %v8434 = vsub.s32 %v1010, %v8433
    %v8435 = vrot.slane %v8404, %v8434
    %v8436 = vlaneseq
    %v8437 = vshrl.u32 %v8436, 7
    %v8438 = vsub.s32 %v1015, %v8437
    %v8439 = vrot.slane %v8406, %v8438
    %v8440 = vsel %vm1020, %v8439, %v8435
    %v8441 = vlaneseq
    %v8442 = vshrl.u32 %v8441, 7
    %v8443 = vsub.s32 %v1010, %v8442
    %v8444 = vrot.slane %v8408, %v8443
    %v8445 = vlaneseq
    %v8446 = vshrl.u32 %v8445, 7
    %v8447 = vsub.s32 %v1015, %v8446
    %v8448 = vrot.slane %v8410, %v8447
    %v8449 = vsel %vm1020, %v8448, %v8444
    %v8450 = vlaneseq
    %v8451 = vshrl.u32 %v8450, 7
    %v8452 = vsub.s32 %v1010, %v8451
    %v8453 = vrot.slane %v8412, %v8452
    %v8454 = vlaneseq
    %v8455 = vshrl.u32 %v8454, 7
    %v8456 = vsub.s32 %v1015, %v8455
    %v8457 = vrot.slane %v8414, %v8456
    %v8458 = vsel %vm1020, %v8457, %v8453
    %v8459 = vsel %vm1049, %v8440, %v8431
    %v8460 = vsel %vm1051, %v8449, %v8459
    %v8461 = vsel %vm1053, %v8458, %v8460
    %v8463 = vsel %vm1056, %v8461, -inf
    %8464 = vmax.xlane.f32.xlu0 %v8463
    %v8465 = vpop.xlane.xlu0 %8464
    %v8467 = vlaneseq
    %v8468 = vshrl.u32 %v8467, 7
    %v8469 = vsub.s32 0, %v8468
    %v8470 = vrot.slane %v8465, %v8469
    %v8471 = vlaneseq
    %v8472 = vshrl.u32 %v8471, 7
    %v8473 = vsub.s32 1, %v8472
    %v8474 = vrot.slane %v8465, %v8473
    %v8475 = vlaneseq
    %v8476 = vshrl.u32 %v8475, 7
    %v8477 = vsub.s32 2, %v8476
    %v8478 = vrot.slane %v8465, %v8477
    %v8479 = vlaneseq
    %v8480 = vshrl.u32 %v8479, 7
    %v8481 = vsub.s32 3, %v8480
    %v8482 = vrot.slane %v8465, %v8481
    %v8487 = vsub.f32 %v8400, %v8470
    %v8488 = vsub.f32 %v8402, %v8470
    %v8489 = vsub.f32 %v8404, %v8474
    %v8490 = vsub.f32 %v8406, %v8474
    %v8491 = vsub.f32 %v8408, %v8478
    %v8492 = vsub.f32 %v8410, %v8478
    %v8493 = vsub.f32 %v8412, %v8482
    %v8494 = vsub.f32 %v8414, %v8482
    %v8495 = vmul.f32 %v8487, 1.442695
    %v8496 = vpow.pop %v8495
    %v8497 = vmul.f32 %v8488, 1.442695
    %v8498 = vpow.pop %v8497
    %v8499 = vmul.f32 %v8489, 1.442695
    %v8500 = vpow.pop %v8499
    %v8501 = vmul.f32 %v8490, 1.442695
    %v8502 = vpow.pop %v8501
    %v8503 = vmul.f32 %v8491, 1.442695
    %v8504 = vpow.pop %v8503
    %v8505 = vmul.f32 %v8492, 1.442695
    %v8506 = vpow.pop %v8505
    %v8507 = vmul.f32 %v8493, 1.442695
    %v8508 = vpow.pop %v8507
    %v8509 = vmul.f32 %v8494, 1.442695
    %v8510 = vpow.pop %v8509
    %8519 = vset.pattern.permute.xlu0 0
    %8520 = vperm.xlu0 %8519, %v8496
    %v8521 = vpop.permute.xlu0 %8520
    %8522 = vset.pattern.permute.xlu0 0
    %8523 = vperm.xlu0 %8522, %v8498
    %v8524 = vpop.permute.xlu0 %8523
    %8525 = vset.pattern.permute.xlu0 0
    %8526 = vperm.xlu0 %8525, %v8500
    %v8527 = vpop.permute.xlu0 %8526
    %8528 = vset.pattern.permute.xlu0 0
    %8529 = vperm.xlu0 %8528, %v8502
    %v8530 = vpop.permute.xlu0 %8529
    %8531 = vset.pattern.permute.xlu0 0
    %8532 = vperm.xlu0 %8531, %v8504
    %v8533 = vpop.permute.xlu0 %8532
    %8534 = vset.pattern.permute.xlu0 0
    %8535 = vperm.xlu0 %8534, %v8506
    %v8536 = vpop.permute.xlu0 %8535
    %8537 = vset.pattern.permute.xlu0 0
    %8538 = vperm.xlu0 %8537, %v8508
    %v8539 = vpop.permute.xlu0 %8538
    %8540 = vset.pattern.permute.xlu0 0
    %8541 = vperm.xlu0 %8540, %v8510
    %v8542 = vpop.permute.xlu0 %8541
    %v8543 = vlaneseq
    %v8544 = vshrl.u32 %v8543, 7
    %v8545 = vsub.s32 %v1010, %v8544
    %v8546 = vrot.slane %v8521, %v8545
    %v8547 = vlaneseq
    %v8548 = vshrl.u32 %v8547, 7
    %v8549 = vsub.s32 %v1015, %v8548
    %v8550 = vrot.slane %v8524, %v8549
    %v8551 = vsel %vm1020, %v8550, %v8546
    %v8552 = vlaneseq
    %v8553 = vshrl.u32 %v8552, 7
    %v8554 = vsub.s32 %v1010, %v8553
    %v8555 = vrot.slane %v8527, %v8554
    %v8556 = vlaneseq
    %v8557 = vshrl.u32 %v8556, 7
    %v8558 = vsub.s32 %v1015, %v8557
    %v8559 = vrot.slane %v8530, %v8558
    %v8560 = vsel %vm1020, %v8559, %v8555
    %v8561 = vlaneseq
    %v8562 = vshrl.u32 %v8561, 7
    %v8563 = vsub.s32 %v1010, %v8562
    %v8564 = vrot.slane %v8533, %v8563
    %v8565 = vlaneseq
    %v8566 = vshrl.u32 %v8565, 7
    %v8567 = vsub.s32 %v1015, %v8566
    %v8568 = vrot.slane %v8536, %v8567
    %v8569 = vsel %vm1020, %v8568, %v8564
    %v8570 = vlaneseq
    %v8571 = vshrl.u32 %v8570, 7
    %v8572 = vsub.s32 %v1010, %v8571
    %v8573 = vrot.slane %v8539, %v8572
    %v8574 = vlaneseq
    %v8575 = vshrl.u32 %v8574, 7
    %v8576 = vsub.s32 %v1015, %v8575
    %v8577 = vrot.slane %v8542, %v8576
    %v8578 = vsel %vm1020, %v8577, %v8573
    %v8579 = vsel %vm1049, %v8560, %v8551
    %v8580 = vsel %vm1051, %v8569, %v8579
    %v8581 = vsel %vm1053, %v8578, %v8580
    %v8583 = vsel %vm1056, %v8581, 0.0
    %8584 = vadd.xlane.f32.xlu0 %v8583
    %v8585 = vpop.xlane.xlu0 %8584
    %v8586 = vrcp.pop %v8585
    %v8588 = vlaneseq
    %v8589 = vshrl.u32 %v8588, 7
    %v8590 = vsub.s32 0, %v8589
    %v8591 = vrot.slane %v8586, %v8590
    %v8592 = vlaneseq
    %v8593 = vshrl.u32 %v8592, 7
    %v8594 = vsub.s32 1, %v8593
    %v8595 = vrot.slane %v8586, %v8594
    %v8596 = vlaneseq
    %v8597 = vshrl.u32 %v8596, 7
    %v8598 = vsub.s32 2, %v8597
    %v8599 = vrot.slane %v8586, %v8598
    %v8600 = vlaneseq
    %v8601 = vshrl.u32 %v8600, 7
    %v8602 = vsub.s32 3, %v8601
    %v8603 = vrot.slane %v8586, %v8602
    %v8608 = vmul.f32 %v8496, %v8591
    %v8609 = vmul.f32 %v8498, %v8591
    %v8610 = vmul.f32 %v8500, %v8595
    %v8611 = vmul.f32 %v8502, %v8595
    %v8612 = vmul.f32 %v8504, %v8599
    %v8613 = vmul.f32 %v8506, %v8599
    %v8614 = vmul.f32 %v8508, %v8603
    %v8615 = vmul.f32 %v8510, %v8603
    %8617 = vset.pattern.permute.xlu0 0
    %8618 = vperm.xlu0 %8617, %v8608
    %v8619 = vpop.permute.xlu0 %8618
    %8622 = vset.pattern.permute.xlu0 0
    %8623 = vperm.xlu0 %8622, %v8609
    %v8624 = vpop.permute.xlu0 %8623
    %8627 = vset.pattern.permute.xlu0 0
    %8628 = vperm.xlu0 %8627, %v8610
    %v8629 = vpop.permute.xlu0 %8628
    %8632 = vset.pattern.permute.xlu0 0
    %8633 = vperm.xlu0 %8632, %v8611
    %v8634 = vpop.permute.xlu0 %8633
    %8637 = vset.pattern.permute.xlu0 0
    %8638 = vperm.xlu0 %8637, %v8612
    %v8639 = vpop.permute.xlu0 %8638
    %8642 = vset.pattern.permute.xlu0 0
    %8643 = vperm.xlu0 %8642, %v8613
    %v8644 = vpop.permute.xlu0 %8643
    %8647 = vset.pattern.permute.xlu0 0
    %8648 = vperm.xlu0 %8647, %v8614
    %v8649 = vpop.permute.xlu0 %8648
    %8652 = vset.pattern.permute.xlu0 0
    %8653 = vperm.xlu0 %8652, %v8615
    %v8654 = vpop.permute.xlu0 %8653
    %v8656 = vmul.f32 %v8619, %v48
    %v8657 = vmul.f32 %v8624, %v49
    %v8658 = vmul.f32 %v8629, %v50
    %v8659 = vmul.f32 %v8634, %v51
    %v8660 = vmul.f32 %v8639, %v52
    %v8661 = vmul.f32 %v8644, %v53
    %v8662 = vmul.f32 %v8649, %v54
    %v8663 = vmul.f32 %v8654, %v55
    %v8664 = vadd.f32 %v8656, %v8657
    %v8665 = vrot.slane %v8664, 4
    %v8666 = vadd.f32 %v8664, %v8665
    %v8667 = vrot.slane %v8666, 2
    %v8668 = vadd.f32 %v8666, %v8667
    %v8669 = vrot.slane %v8668, 1
    %v8670 = vadd.f32 %v8668, %v8669
    %v8671 = vadd.f32 %v8658, %v8659
    %v8672 = vrot.slane %v8671, 4
    %v8673 = vadd.f32 %v8671, %v8672
    %v8674 = vrot.slane %v8673, 2
    %v8675 = vadd.f32 %v8673, %v8674
    %v8676 = vrot.slane %v8675, 1
    %v8677 = vadd.f32 %v8675, %v8676
    %v8678 = vadd.f32 %v8660, %v8661
    %v8679 = vrot.slane %v8678, 4
    %v8680 = vadd.f32 %v8678, %v8679
    %v8681 = vrot.slane %v8680, 2
    %v8682 = vadd.f32 %v8680, %v8681
    %v8683 = vrot.slane %v8682, 1
    %v8684 = vadd.f32 %v8682, %v8683
    %v8685 = vadd.f32 %v8662, %v8663
    %v8686 = vrot.slane %v8685, 4
    %v8687 = vadd.f32 %v8685, %v8686
    %v8688 = vrot.slane %v8687, 2
    %v8689 = vadd.f32 %v8687, %v8688
    %v8690 = vrot.slane %v8689, 1
    %v8691 = vadd.f32 %v8689, %v8690
    %8692 = vmatprep.subr.mxu0 0.0
    %8693 = vmatpush1.msra.mxu0 %v231
    %8694 = vmatprep.subr.mxu0 0.0
    %8695 = vmatpush1.msra.mxu0 %v230
    %8696 = vmatprep.subr.mxu0 0.0
    %8697 = vmatpush1.msra.mxu0 %v229
    %8698 = vmatprep.subr.mxu0 0.0
    %8699 = vmatpush1.msra.mxu0 %v228
    %8700 = vmatprep.subr.mxu0 0.0
    %8701 = vmatpush1.msra.mxu0 %v227
    %8702 = vmatprep.subr.mxu0 0.0
    %8703 = vmatpush1.msra.mxu0 %v226
    %8704 = vmatprep.subr.mxu0 0.0
    %8705 = vmatpush1.msra.mxu0 %v225
    %8706 = vmatprep.subr.mxu0 0.0
    %8707 = vmatpush1.msra.mxu0 %v224
    %8708 = vmatprep.subr.mxu0 0.0
    %8709 = vmatpush1.msra.mxu0 %v223
    %8710 = vmatprep.subr.mxu0 0.0
    %8711 = vmatpush1.msra.mxu0 %v222
    %8712 = vmatprep.subr.mxu0 0.0
    %8713 = vmatpush1.msra.mxu0 %v221
    %8714 = vmatprep.subr.mxu0 0.0
    %8715 = vmatpush1.msra.mxu0 %v220
    %8716 = vmatprep.subr.mxu0 0.0
    %8717 = vmatpush1.msra.mxu0 %v219
    %8718 = vmatprep.subr.mxu0 0.0
    %8719 = vmatpush1.msra.mxu0 %v218
    %8720 = vmatprep.subr.mxu0 0.0
    %8721 = vmatpush1.msra.mxu0 %v217
    %8722 = vmatprep.subr.mxu0 0.0
    %8723 = vmatpush1.msra.mxu0 %v216
    %8724 = vmatprep.subr.mxu0 0.0
    %8725 = vmatpush2.msra.mxu0 0.0
    %8726 = vmatprep.subr.mxu0 0.0
    %8727 = vmatpush2.msra.mxu0 0.0
    %8728 = vmatprep.subr.mxu0 0.0
    %8729 = vmatpush2.msra.mxu0 0.0
    %8730 = vmatprep.subr.mxu0 0.0
    %8731 = vmatpush2.msra.mxu0 0.0
    %8732 = vmatprep.subr.mxu0 0.0
    %8733 = vmatpush2.msra.mxu0 0.0
    %8734 = vmatprep.subr.mxu0 0.0
    %8735 = vmatpush2.msra.mxu0 0.0
    %8736 = vmatprep.subr.mxu0 0.0
    %8737 = vmatpush2.msra.mxu0 0.0
    %8738 = vmatprep.subr.mxu0 0.0
    %8739 = vmatpush2.msra.mxu0 0.0
    %8740 = vmatprep.subr.mxu0 0.0
    %8741 = vmatpush2.msra.mxu0 0.0
    %8742 = vmatprep.subr.mxu0 0.0
    %8743 = vmatpush2.msra.mxu0 0.0
    %8744 = vmatprep.subr.mxu0 0.0
    %8745 = vmatpush2.msra.mxu0 0.0
    %8746 = vmatprep.subr.mxu0 0.0
    %8747 = vmatpush2.msra.mxu0 0.0
    %8748 = vmatprep.subr.mxu0 0.0
    %8749 = vmatpush2.msra.mxu0 0.0
    %8750 = vmatprep.subr.mxu0 0.0
    %8751 = vmatpush2.msra.mxu0 0.0
    %8752 = vmatprep.subr.mxu0 0.0
    %8753 = vmatpush2.msra.mxu0 0.0
    %8754 = vmatprep.subr.mxu0 0.0
    %8755 = vmatpush2.msra.mxu0 0.0
    %8756 = vmatprep.mubr.f32.mxu0 0.0
    %8757 = vmatmul.mubr.f32.gmra.mxu0 %v8274
    %v8758 = vpop.f32.mrf.mxu0
    %v8759 = vadd.f32 0.0, %v8758
    %v8760 = vpop.f32.mrf.mxu0
    %8761 = vdwg.mxu0
    %v8766 = vsel %vm1049, %v8677, %v8670
    %v8767 = vsel %vm1051, %v8684, %v8766
    %v8768 = vsel %vm1053, %v8691, %v8767
    %8770 = vmatprep.subr.mxu0 0.0
    %8771 = vmatpush1.msra.mxu0 %v215
    %8772 = vmatprep.subr.mxu0 0.0
    %8773 = vmatpush1.msra.mxu0 %v214
    %8774 = vmatprep.subr.mxu0 0.0
    %8775 = vmatpush1.msra.mxu0 %v213
    %8776 = vmatprep.subr.mxu0 0.0
    %8777 = vmatpush1.msra.mxu0 %v212
    %8778 = vmatprep.subr.mxu0 0.0
    %8779 = vmatpush1.msra.mxu0 %v211
    %8780 = vmatprep.subr.mxu0 0.0
    %8781 = vmatpush1.msra.mxu0 %v210
    %8782 = vmatprep.subr.mxu0 0.0
    %8783 = vmatpush1.msra.mxu0 %v209
    %8784 = vmatprep.subr.mxu0 0.0
    %8785 = vmatpush1.msra.mxu0 %v208
    %8786 = vmatprep.subr.mxu0 0.0
    %8787 = vmatpush1.msra.mxu0 %v207
    %8788 = vmatprep.subr.mxu0 0.0
    %8789 = vmatpush1.msra.mxu0 %v206
    %8790 = vmatprep.subr.mxu0 0.0
    %8791 = vmatpush1.msra.mxu0 %v205
    %8792 = vmatprep.subr.mxu0 0.0
    %8793 = vmatpush1.msra.mxu0 %v204
    %8794 = vmatprep.subr.mxu0 0.0
    %8795 = vmatpush1.msra.mxu0 %v203
    %8796 = vmatprep.subr.mxu0 0.0
    %8797 = vmatpush1.msra.mxu0 %v202
    %8798 = vmatprep.subr.mxu0 0.0
    %8799 = vmatpush1.msra.mxu0 %v201
    %8800 = vmatprep.subr.mxu0 0.0
    %8801 = vmatpush1.msra.mxu0 %v200
    %8802 = vmatprep.subr.mxu0 0.0
    %8803 = vmatpush2.msra.mxu0 0.0
    %8804 = vmatprep.subr.mxu0 0.0
    %8805 = vmatpush2.msra.mxu0 0.0
    %8806 = vmatprep.subr.mxu0 0.0
    %8807 = vmatpush2.msra.mxu0 0.0
    %8808 = vmatprep.subr.mxu0 0.0
    %8809 = vmatpush2.msra.mxu0 0.0
    %8810 = vmatprep.subr.mxu0 0.0
    %8811 = vmatpush2.msra.mxu0 0.0
    %8812 = vmatprep.subr.mxu0 0.0
    %8813 = vmatpush2.msra.mxu0 0.0
    %8814 = vmatprep.subr.mxu0 0.0
    %8815 = vmatpush2.msra.mxu0 0.0
    %8816 = vmatprep.subr.mxu0 0.0
    %8817 = vmatpush2.msra.mxu0 0.0
    %8818 = vmatprep.subr.mxu0 0.0
    %8819 = vmatpush2.msra.mxu0 0.0
    %8820 = vmatprep.subr.mxu0 0.0
    %8821 = vmatpush2.msra.mxu0 0.0
    %8822 = vmatprep.subr.mxu0 0.0
    %8823 = vmatpush2.msra.mxu0 0.0
    %8824 = vmatprep.subr.mxu0 0.0
    %8825 = vmatpush2.msra.mxu0 0.0
    %8826 = vmatprep.subr.mxu0 0.0
    %8827 = vmatpush2.msra.mxu0 0.0
    %8828 = vmatprep.subr.mxu0 0.0
    %8829 = vmatpush2.msra.mxu0 0.0
    %8830 = vmatprep.subr.mxu0 0.0
    %8831 = vmatpush2.msra.mxu0 0.0
    %8832 = vmatprep.subr.mxu0 0.0
    %8833 = vmatpush2.msra.mxu0 0.0
    %8834 = vmatprep.mubr.f32.mxu0 0.0
    %8835 = vmatmul.mubr.f32.gmra.mxu0 %v8768
    %v8836 = vpop.f32.mrf.mxu0
    %v8837 = vadd.f32 %v8759, %v8836
    %v8838 = vpop.f32.mrf.mxu0
    %8839 = vdwg.mxu0
    %v8840 = vtanh.pop %v8837
    %v8841 = vlaneseq
    %v8842 = vshrl.u32 %v8841, 7
    %v8843 = vsub.s32 %v1010, %v8842
    %v8844 = vrot.slane %v8619, %v8843
    %v8845 = vlaneseq
    %v8846 = vshrl.u32 %v8845, 7
    %v8847 = vsub.s32 %v1015, %v8846
    %v8848 = vrot.slane %v8624, %v8847
    %v8849 = vsel %vm1020, %v8848, %v8844
    %v8850 = vlaneseq
    %v8851 = vshrl.u32 %v8850, 7
    %v8852 = vsub.s32 %v1010, %v8851
    %v8853 = vrot.slane %v8629, %v8852
    %v8854 = vlaneseq
    %v8855 = vshrl.u32 %v8854, 7
    %v8856 = vsub.s32 %v1015, %v8855
    %v8857 = vrot.slane %v8634, %v8856
    %v8858 = vsel %vm1020, %v8857, %v8853
    %v8859 = vlaneseq
    %v8860 = vshrl.u32 %v8859, 7
    %v8861 = vsub.s32 %v1010, %v8860
    %v8862 = vrot.slane %v8639, %v8861
    %v8863 = vlaneseq
    %v8864 = vshrl.u32 %v8863, 7
    %v8865 = vsub.s32 %v1015, %v8864
    %v8866 = vrot.slane %v8644, %v8865
    %v8867 = vsel %vm1020, %v8866, %v8862
    %v8868 = vlaneseq
    %v8869 = vshrl.u32 %v8868, 7
    %v8870 = vsub.s32 %v1010, %v8869
    %v8871 = vrot.slane %v8649, %v8870
    %v8872 = vlaneseq
    %v8873 = vshrl.u32 %v8872, 7
    %v8874 = vsub.s32 %v1015, %v8873
    %v8875 = vrot.slane %v8654, %v8874
    %v8876 = vsel %vm1020, %v8875, %v8871
    %8881 = vst.msk [vmem:[#allocation4 + $0x7] sm:$0x1] %vm1475, %v8849
    %8882 = vst.msk [vmem:[#allocation4 + $0xf] sm:$0x1] %vm1475, %v8858
    %8883 = vst.msk [vmem:[#allocation4 + $0x17] sm:$0x1] %vm1475, %v8867
    %8884 = vst.msk [vmem:[#allocation4 + $0x1f] sm:$0x1] %vm1475, %v8876
    %8885 = vmatprep.subr.mxu0 %v263
    %8886 = vmatpush1.msra.mxu0 %v262
    %8887 = vmatprep.subr.mxu0 %v261
    %8888 = vmatpush1.msra.mxu0 %v260
    %8889 = vmatprep.subr.mxu0 %v259
    %8890 = vmatpush1.msra.mxu0 %v258
    %8891 = vmatprep.subr.mxu0 %v257
    %8892 = vmatpush1.msra.mxu0 %v256
    %8893 = vmatprep.subr.mxu0 %v255
    %8894 = vmatpush1.msra.mxu0 %v254
    %8895 = vmatprep.subr.mxu0 %v253
    %8896 = vmatpush1.msra.mxu0 %v252
    %8897 = vmatprep.subr.mxu0 %v251
    %8898 = vmatpush1.msra.mxu0 %v250
    %8899 = vmatprep.subr.mxu0 %v249
    %8900 = vmatpush1.msra.mxu0 %v248
    %8901 = vmatprep.subr.mxu0 %v247
    %8902 = vmatpush1.msra.mxu0 %v246
    %8903 = vmatprep.subr.mxu0 %v245
    %8904 = vmatpush1.msra.mxu0 %v244
    %8905 = vmatprep.subr.mxu0 %v243
    %8906 = vmatpush1.msra.mxu0 %v242
    %8907 = vmatprep.subr.mxu0 %v241
    %8908 = vmatpush1.msra.mxu0 %v240
    %8909 = vmatprep.subr.mxu0 %v239
    %8910 = vmatpush1.msra.mxu0 %v238
    %8911 = vmatprep.subr.mxu0 %v237
    %8912 = vmatpush1.msra.mxu0 %v236
    %8913 = vmatprep.subr.mxu0 %v235
    %8914 = vmatpush1.msra.mxu0 %v234
    %8915 = vmatprep.subr.mxu0 %v233
    %8916 = vmatpush1.msra.mxu0 %v232
    %8917 = vmatprep.subr.mxu0 0.0
    %8918 = vmatpush2.msra.mxu0 0.0
    %8919 = vmatprep.subr.mxu0 0.0
    %8920 = vmatpush2.msra.mxu0 0.0
    %8921 = vmatprep.subr.mxu0 0.0
    %8922 = vmatpush2.msra.mxu0 0.0
    %8923 = vmatprep.subr.mxu0 0.0
    %8924 = vmatpush2.msra.mxu0 0.0
    %8925 = vmatprep.subr.mxu0 0.0
    %8926 = vmatpush2.msra.mxu0 0.0
    %8927 = vmatprep.subr.mxu0 0.0
    %8928 = vmatpush2.msra.mxu0 0.0
    %8929 = vmatprep.subr.mxu0 0.0
    %8930 = vmatpush2.msra.mxu0 0.0
    %8931 = vmatprep.subr.mxu0 0.0
    %8932 = vmatpush2.msra.mxu0 0.0
    %8933 = vmatprep.subr.mxu0 0.0
    %8934 = vmatpush2.msra.mxu0 0.0
    %8935 = vmatprep.subr.mxu0 0.0
    %8936 = vmatpush2.msra.mxu0 0.0
    %8937 = vmatprep.subr.mxu0 0.0
    %8938 = vmatpush2.msra.mxu0 0.0
    %8939 = vmatprep.subr.mxu0 0.0
    %8940 = vmatpush2.msra.mxu0 0.0
    %8941 = vmatprep.subr.mxu0 0.0
    %8942 = vmatpush2.msra.mxu0 0.0
    %8943 = vmatprep.subr.mxu0 0.0
    %8944 = vmatpush2.msra.mxu0 0.0
    %8945 = vmatprep.subr.mxu0 0.0
    %8946 = vmatpush2.msra.mxu0 0.0
    %8947 = vmatprep.subr.mxu0 0.0
    %8948 = vmatpush2.msra.mxu0 0.0
    %8949 = vmatprep.mubr.f32.mxu0 0.0
    %8950 = vmatmul.mubr.f32.gmra.mxu0 %v8840
    %v8951 = vpop.f32.mrf.mxu0
    %v8952 = vadd.f32 %v269, %v8951
    %v8953 = vpop.f32.mrf.mxu0
    %v8954 = vadd.f32 %v273, %v8953
    %8955 = vdwg.mxu0
    %v8958 = vcombine.low %v8952, %v8954
    %v8960 = vunpack.c.l.s4 1966171168
    %v8961 = vunpack.c.0.s8 %v8960
    %v8962 = vlaneseq
    %v8963 = vshrl.u32 %v8962, 7
    %v8964 = vsub.s32 %v8961, %v8963
    %v8965 = vrot.slane %v8958, %v8964
    %v8966 = vcombine.high %v8965, %v8965
    %v8968 = vunpack.c.l.s4 1966171168
    %v8969 = vunpack.c.0.s8 %v8968
    %v8970 = vlaneseq
    %v8971 = vshrl.u32 %v8970, 7
    %v8972 = vsub.s32 %v8969, %v8971
    %v8973 = vrot.slane %v8965, %v8972
    %v8975 = vunpack.c.l.s4 1966171168
    %v8976 = vunpack.c.0.s8 %v8975
    %v8977 = vlaneseq
    %v8978 = vshrl.u32 %v8977, 7
    %v8979 = vsub.s32 %v8976, %v8978
    %v8980 = vrot.slane %v8966, %v8979
    %v8981 = vcombine.high %v8973, %v8973
    %v8982 = vcombine.high %v8980, %v8980
    %s8987 = scalar_lea.vmem [#allocation2], 7
    %8988 = vst.msk [vmem:[%s8987] ss:$8 sm:$0x3] %vm1585, %v8973
    %8989 = vst.msk [vmem:[%s8987] ss:$8 sm:$0x0] %vm1585, %v8973
    %s8990 = scalar_lea.vmem [#allocation2], 23
    %8991 = vst.msk [vmem:[%s8990] ss:$8 sm:$0x3] %vm1585, %v8980
    %8992 = vst.msk [vmem:[%s8990] ss:$8 sm:$0x0] %vm1585, %v8980
    %s8993 = scalar_lea.vmem [#allocation2], 39
    %8994 = vst.msk [vmem:[%s8993] ss:$8 sm:$0x3] %vm1585, %v8981
    %8995 = vst.msk [vmem:[%s8993] ss:$8 sm:$0x0] %vm1585, %v8981
    %s8996 = scalar_lea.vmem [#allocation2], 55
    %8997 = vst.msk [vmem:[%s8996] ss:$8 sm:$0x3] %vm1585, %v8982
    %8998 = vst.msk [vmem:[%s8996] ss:$8 sm:$0x0] %vm1585, %v8982
    // Predicated region
    $region54: #{lstm_decoder_forward.1} parent=1 // pred_check
      _
    $region55: #{lstm_decoder_forward.1} parent=1 // pred_check_branch
      %9000 = sbr.rel (0) target = $region57
    $region56: #{lstm_decoder_forward.1} parent=1 // pred_region
      %s9002 = ssub.s32 1024, 1024
      %9003 = vsyncadd [#allocation3], %s9002
      %s9004 = sshll.u32 [#allocation2], 4
      %s9005 = int_to_ptr.vmem [resolvable:$true] %s9004
      %9010 = dma.vmem_to_hbm [thread:$0]  %s9005, 1024, %s13, [#allocation3], 256, 256, 16
    $region57: #{lstm_decoder_forward.1} parent=1 // pred_fallthru
      _
    // Predicated region
    $region58: #{lstm_decoder_forward.1} parent=1 // pred_check
      _
    $region59: #{lstm_decoder_forward.1} parent=1 // pred_check_branch
      %9012 = sbr.rel (0) target = $region61
    $region60: #{lstm_decoder_forward.1} parent=1 // pred_region
      %s9014 = ssub.s32 512, 512
      %9015 = vsyncadd [#allocation5], %s9014
      %s9016 = sshll.u32 [#allocation4], 4
      %s9017 = int_to_ptr.vmem [resolvable:$true] %s9016
      %9022 = dma.vmem_to_hbm [thread:$0]  %s9017, 512, %s14, [#allocation5], 128, 128, 8
    $region61: #{lstm_decoder_forward.1} parent=1 // pred_fallthru
      _
    // Predicated region
    $region62: #{lstm_decoder_forward.1} parent=1 // pred_check
      _
    $region63: #{lstm_decoder_forward.1} parent=1 // pred_check_branch
      %9024 = sbr.rel (0) target = $region65
    $region64: #{lstm_decoder_forward.1} parent=1 // pred_region
      %9025 = dma.done [#allocation3], 1024
    $region65: #{lstm_decoder_forward.1} parent=1 // pred_fallthru
      _
    // Predicated region
    $region66: #{lstm_decoder_forward.1} parent=1 // pred_check
      _
    $region67: #{lstm_decoder_forward.1} parent=1 // pred_check_branch
      %9027 = sbr.rel (0) target = $region69
    $region68: #{lstm_decoder_forward.1} parent=1 // pred_region
      %9028 = dma.done [#allocation5], 512
    $region69: #{lstm_decoder_forward.1} parent=1 // pred_fallthru
      _
    %9029 = vsyncpa [#allocation3], 1
    %9030 = vsyncpa [#allocation5], 1

</llo_original>
